<compile_context>
chip_gen: v7x
topology: tpu7x:2x2x1
jax: 0.10.0
libtpu: 0.0.40
codegen_flags: <defaults>
</compile_context>

<pallas_src>
import numpy as np
import jax
import jax.numpy as jnp
from jax.experimental import pallas as pl
from jax.experimental.pallas import tpu as pltpu

D_IN = 5          # raw input features
D_IN_PAD = 8      # feature dim zero-padded to a full sublane tile
D_MODEL = 20      # d_model of the transformer encoder layer
D_FF = 2048       # PyTorch TransformerEncoderLayer default dim_feedforward
EPS = 1e-5        # LayerNorm eps (PyTorch default)

# Row offsets inside the packed (WM_ROWS, D_MODEL) matrix slab.  Every matrix
# starts at a multiple of 8 rows so in-kernel ref slices stay sublane-aligned.
WE_OFF = 0        # Dense_expand.weight^T, zero-padded from 5 to 8 rows
WQ_OFF = 8        # attention Q projection (pre-scaled by 1/sqrt(d_model))
WK_OFF = 32
WV_OFF = 56
WO_OFF = 80
WM_ROWS = 104

# Row indices inside the packed (VEC_ROWS, D_MODEL) bias/scale slab.
(V_BE, V_BQ, V_BK, V_BV, V_BO,
 V_G1, V_BT1, V_B2, V_G2, V_BT2, V_WR, V_BR) = range(12)
VEC_ROWS = 12


def _layernorm(x, gamma, beta):
    mu = jnp.mean(x, axis=-1, keepdims=True)
    var = jnp.mean((x - mu) ** 2, axis=-1, keepdims=True)
    return (x - mu) * jax.lax.rsqrt(var + EPS) * gamma + beta


def _gelu_exact(x):
    # nn.GELU() default is the exact erf form
    return 0.5 * x * (1.0 + jax.lax.erf(x * (1.0 / np.sqrt(2.0))))


def classifier_kernel(x_ref, wm_ref, vec_ref, w1_ref, b1_ref, w2t_ref, o_ref):
    bb, s, d_in_p = x_ref.shape
    m = bb * s
    x2d = x_ref[...].reshape(m, d_in_p)            # (M, 8): M = BB*S tokens

    vec = vec_ref[...]                             # (12, 20) packed vectors
    be = vec[V_BE:V_BE + 1, :]
    bq = vec[V_BQ:V_BQ + 1, :]
    bk = vec[V_BK:V_BK + 1, :]
    bv = vec[V_BV:V_BV + 1, :]
    bo = vec[V_BO:V_BO + 1, :]
    g1 = vec[V_G1:V_G1 + 1, :]
    bt1 = vec[V_BT1:V_BT1 + 1, :]
    b2 = vec[V_B2:V_B2 + 1, :]
    g2 = vec[V_G2:V_G2 + 1, :]
    bt2 = vec[V_BT2:V_BT2 + 1, :]
    wr_row = vec[V_WR:V_WR + 1, :]                 # Dense_reduce.weight as row
    br = vec[V_BR:V_BR + 1, 0:1]                   # Dense_reduce.bias scalar

    # Dense_expand (5 -> 20, feature dim zero-padded to 8) + tanh.
    # TODO(synk): nn.Dropout(p=0.005) has no deterministic Pallas equivalent;
    #             implemented as identity (eval/inference semantics).
    h = jnp.tanh(jnp.dot(x2d, wm_ref[WE_OFF:WE_OFF + D_IN_PAD, :],
                         preferred_element_type=jnp.float32) + be)

    # ---- TransformerEncoderLayer (post-norm, nhead=1, relu FF) ----
    # wq/bq were pre-scaled by 1/sqrt(D_MODEL) in the wrapper.
    q = jnp.dot(h, wm_ref[WQ_OFF:WQ_OFF + D_MODEL, :],
                preferred_element_type=jnp.float32) + bq
    k = jnp.dot(h, wm_ref[WK_OFF:WK_OFF + D_MODEL, :],
                preferred_element_type=jnp.float32) + bk
    v = jnp.dot(h, wm_ref[WV_OFF:WV_OFF + D_MODEL, :],
                preferred_element_type=jnp.float32) + bv

    # Attention is per sequence: batched einsums on the (BB, S, D) view so the
    # softmax never mixes rows from different sequences.
    qb = q.reshape(bb, s, D_MODEL)
    kb = k.reshape(bb, s, D_MODEL)
    vb = v.reshape(bb, s, D_MODEL)
    scores = jnp.einsum('bqd,bkd->bqk', qb, kb,
                        preferred_element_type=jnp.float32)
    scores = scores - jnp.max(scores, axis=-1, keepdims=True)
    p = jnp.exp(scores)
    p = p / jnp.sum(p, axis=-1, keepdims=True)     # exact divide (1e-4 check)
    attn = jnp.einsum('bqk,bkd->bqd', p, vb,
                      preferred_element_type=jnp.float32).reshape(m, D_MODEL)
    attn = jnp.dot(attn, wm_ref[WO_OFF:WO_OFF + D_MODEL, :],
                   preferred_element_type=jnp.float32) + bo
    h = _layernorm(h + attn, g1, bt1)

    # Feed-forward (relu, PyTorch default). Both FF weights are lane-dense
    # (20, 2048); the second matmul contracts the last dims (ff @ w2t^T) so no
    # lane-sparse (2048, 20) tile ever sits in VMEM.
    ff = jnp.maximum(
        jnp.dot(h, w1_ref[...], preferred_element_type=jnp.float32)
        + b1_ref[...], 0.0)
    ff = jax.lax.dot_general(ff, w2t_ref[...], (((1,), (1,)), ((), ())),
                             preferred_element_type=jnp.float32) + b2
    h = _layernorm(h + ff, g2, bt2)

    # GELU (exact erf), Dense_reduce (20 -> 1), tanh, sigmoid.  The reduce is
    # computed directly as a (1, M) row (wr_row @ h^T) so the final store is a
    # single lane-dense slab instead of M masked single-lane stores.
    h = _gelu_exact(h)
    r = jax.lax.dot_general(wr_row, h, (((1,), (1,)), ((), ())),
                            preferred_element_type=jnp.float32) + br   # (1, M)
    o_ref[...] = jax.nn.sigmoid(jnp.tanh(r))


def _pack_params(params):
    """Fold the attention scale and pack the 20 small params into 2 slabs."""
    (we, be, wq, bq, wk, bk, wv, bv, wo, bo,
     g1, bt1, w1, b1, w2, b2, g2, bt2, wr, br) = params
    scale = jnp.float32(1.0 / np.sqrt(D_MODEL))

    wm = jnp.zeros((WM_ROWS, D_MODEL), jnp.float32)
    wm = wm.at[WE_OFF:WE_OFF + D_IN].set(we)
    wm = wm.at[WQ_OFF:WQ_OFF + D_MODEL].set(wq * scale)
    wm = wm.at[WK_OFF:WK_OFF + D_MODEL].set(wk)
    wm = wm.at[WV_OFF:WV_OFF + D_MODEL].set(wv)
    wm = wm.at[WO_OFF:WO_OFF + D_MODEL].set(wo)

    vec = jnp.concatenate(
        [be, bq * scale, bk, bv, bo, g1, bt1, b2, g2, bt2,
         wr.T, jnp.broadcast_to(br, (1, D_MODEL))], axis=0)   # (12, 20)

    w2t = w2.T     # (D_MODEL, D_FF) = (20, 2048): lane-dense second FF weight
    return wm, vec.astype(jnp.float32), w1, b1, w2t


def diabetes_classifier(x, params, block_batch=None):
    B, S, _ = x.shape
    if block_batch is None:
        # BB*S >= 128 rows per step for MXU-row density; demo sizes keep >= 2
        # grid steps so the "parallel" axis splits across both v7x TCs.
        block_batch = max(1, min(B, pl.cdiv(128, S)))
    bb = block_batch
    grid_b = pl.cdiv(B, bb)
    b_pad = grid_b * bb
    m = bb * S

    wm, vec, w1, b1, w2t = _pack_params(params)

    # Zero-pad batch to a multiple of BB and features 5 -> 8 (sublane tile).
    x_p = jnp.pad(x.astype(jnp.float32),
                  ((0, b_pad - B), (0, 0), (0, D_IN_PAD - D_IN)))

    in_specs = [
        pl.BlockSpec((bb, S, D_IN_PAD), lambda b: (b, 0, 0)),
        pl.BlockSpec(wm.shape, lambda b: (0, 0)),
        pl.BlockSpec(vec.shape, lambda b: (0, 0)),
        pl.BlockSpec(w1.shape, lambda b: (0, 0)),
        pl.BlockSpec(b1.shape, lambda b: (0, 0)),
        pl.BlockSpec(w2t.shape, lambda b: (0, 0)),
    ]
    # Lane-dense output: one (1, BB*S) row per grid step.
    out_spec = pl.BlockSpec((None, 1, m), lambda b: (b, 0, 0))

    out = pl.pallas_call(
        classifier_kernel,
        out_shape=jax.ShapeDtypeStruct((grid_b, 1, m), jnp.float32),
        grid=(grid_b,),
        in_specs=in_specs,
        out_specs=out_spec,
        compiler_params=pltpu.CompilerParams(
            dimension_semantics=("parallel",)),
    )(x_p, wm, vec, w1, b1, w2t)

    # (grid_b, 1, BB*S) -> (B_pad, S) -> (B, S, 1)
    return out.reshape(b_pad, S)[:B].reshape(B, S, 1)


def reference_forward(x, params):
    (we, be, wq, bq, wk, bk, wv, bv, wo, bo,
     g1, bt1, w1, b1, w2, b2, g2, bt2, wr, br) = params

    def one(xs):
        h = jnp.tanh(xs @ we + be)
        q = (h @ wq + bq) / np.sqrt(D_MODEL)
        k = h @ wk + bk
        v = h @ wv + bv
        p = jax.nn.softmax(q @ k.T, axis=-1)
        attn = (p @ v) @ wo + bo
        h = _layernorm(h + attn, g1, bt1)
        ff = jnp.maximum(h @ w1 + b1, 0.0) @ w2 + b2
        h = _layernorm(h + ff, g2, bt2)
        h = _gelu_exact(h)
        return jax.nn.sigmoid(jnp.tanh(h @ wr + br))

    return jax.vmap(one)(x)


def init_params(key):
    ks = jax.random.split(key, 12)

    def u(k, shape, fan_in):
        bound = 1.0 / np.sqrt(fan_in)
        return jax.random.uniform(k, shape, jnp.float32, -bound, bound)

    we = u(ks[0], (D_IN, D_MODEL), D_IN)              # Dense_expand.weight^T
    be = u(ks[1], (1, D_MODEL), D_IN)                 # Dense_expand.bias
    wq = u(ks[2], (D_MODEL, D_MODEL), D_MODEL)        # in_proj (Q chunk)^T
    bq = jnp.zeros((1, D_MODEL), jnp.float32)
    wk = u(ks[3], (D_MODEL, D_MODEL), D_MODEL)        # in_proj (K chunk)^T
    bk = jnp.zeros((1, D_MODEL), jnp.float32)
    wv = u(ks[4], (D_MODEL, D_MODEL), D_MODEL)        # in_proj (V chunk)^T
    bv = jnp.zeros((1, D_MODEL), jnp.float32)
    wo = u(ks[5], (D_MODEL, D_MODEL), D_MODEL)        # out_proj.weight^T
    bo = jnp.zeros((1, D_MODEL), jnp.float32)
    g1 = jnp.ones((1, D_MODEL), jnp.float32)
    bt1 = jnp.zeros((1, D_MODEL), jnp.float32)
    w1 = u(ks[6], (D_MODEL, D_FF), D_MODEL)           # linear1.weight^T
    b1 = u(ks[7], (1, D_FF), D_MODEL)
    w2 = u(ks[8], (D_FF, D_MODEL), D_FF)              # linear2.weight^T
    b2 = u(ks[9], (1, D_MODEL), D_FF)
    g2 = jnp.ones((1, D_MODEL), jnp.float32)
    bt2 = jnp.zeros((1, D_MODEL), jnp.float32)
    wr = u(ks[10], (D_MODEL, 1), D_MODEL)             # Dense_reduce.weight^T
    br = u(ks[11], (1, 1), D_MODEL)
    return (we, be, wq, bq, wk, bk, wv, bv, wo, bo,
            g1, bt1, w1, b1, w2, b2, g2, bt2, wr, br)


if __name__ == "__main__":
    key = jax.random.PRNGKey(0)
    k_x, k_p = jax.random.split(key)

    B = 32   # sequences; BB=16 -> 2 parallel grid steps (both v7x TCs busy)
    S = 8    # sequence length; BB*S = 128 MXU rows per step
    x = jax.random.normal(k_x, (B, S, D_IN), jnp.float32)
    params = init_params(k_p)

    out = diabetes_classifier(x, params, block_batch=16)
    out = jax.block_until_ready(out)

    ref = jax.block_until_ready(reference_forward(x, params))
    assert out.shape == (B, S, 1), out.shape
    np.testing.assert_allclose(np.asarray(out), np.asarray(ref), rtol=1e-4, atol=1e-4)

    print("KERNEL_OK")
</pallas_src>

<mosaic_0001>
module attributes {stable_mosaic.version = 11 : i64} {
  func.func @classifier_kernel(%arg0: i32, %arg1: memref<16x8x8xf32, #tpu.memory_space<vmem>>, %arg2: memref<104x20xf32, #tpu.memory_space<vmem>>, %arg3: memref<12x20xf32, #tpu.memory_space<vmem>>, %arg4: memref<20x2048xf32, #tpu.memory_space<vmem>>, %arg5: memref<1x2048xf32, #tpu.memory_space<vmem>>, %arg6: memref<20x2048xf32, #tpu.memory_space<vmem>>, %arg7: memref<1x1x128xf32, #tpu.memory_space<vmem>>) attributes {dimension_semantics = [#tpu.dimension_semantics<parallel>], iteration_bounds = array<i64: 2>, scalar_prefetch = 0 : i64, scratch_operands = 0 : i64, tpu.core_type = #tpu.core_type<tc>, window_params = [{transform_indices = @transform_0, window_bounds = array<i64: 16, 8, 8>}, {pipeline_mode = #tpu.pipeline_mode<synchronous>, transform_indices = @transform_1, window_bounds = array<i64: 104, 20>}, {pipeline_mode = #tpu.pipeline_mode<synchronous>, transform_indices = @transform_2, window_bounds = array<i64: 12, 20>}, {pipeline_mode = #tpu.pipeline_mode<synchronous>, transform_indices = @transform_3, window_bounds = array<i64: 20, 2048>}, {pipeline_mode = #tpu.pipeline_mode<synchronous>, transform_indices = @transform_4, window_bounds = array<i64: 1, 2048>}, {pipeline_mode = #tpu.pipeline_mode<synchronous>, transform_indices = @transform_5, window_bounds = array<i64: 20, 2048>}, {transform_indices = @transform_6, window_bounds = array<i64: 1, 1, 128>}]} {
    %c0 = arith.constant 0 : index
    %c0_0 = arith.constant 0 : index
    %c0_1 = arith.constant 0 : index
    %0 = vector.load %arg1[%c0, %c0_0, %c0_1] : memref<16x8x8xf32, #tpu.memory_space<vmem>>, vector<16x8x8xf32>
    %1 = vector.shape_cast %0 : vector<16x8x8xf32> to vector<128x8xf32>
    %c0_2 = arith.constant 0 : index
    %c0_3 = arith.constant 0 : index
    %2 = vector.load %arg3[%c0_2, %c0_3] : memref<12x20xf32, #tpu.memory_space<vmem>>, vector<12x20xf32>
    %3 = vector.extract_strided_slice %2 {offsets = [0, 0], sizes = [1, 20], strides = [1, 1]} : vector<12x20xf32> to vector<1x20xf32>
    %4 = vector.extract_strided_slice %2 {offsets = [1, 0], sizes = [1, 20], strides = [1, 1]} : vector<12x20xf32> to vector<1x20xf32>
    %5 = vector.extract_strided_slice %2 {offsets = [2, 0], sizes = [1, 20], strides = [1, 1]} : vector<12x20xf32> to vector<1x20xf32>
    %6 = vector.extract_strided_slice %2 {offsets = [3, 0], sizes = [1, 20], strides = [1, 1]} : vector<12x20xf32> to vector<1x20xf32>
    %7 = vector.extract_strided_slice %2 {offsets = [4, 0], sizes = [1, 20], strides = [1, 1]} : vector<12x20xf32> to vector<1x20xf32>
    %8 = vector.extract_strided_slice %2 {offsets = [5, 0], sizes = [1, 20], strides = [1, 1]} : vector<12x20xf32> to vector<1x20xf32>
    %9 = vector.extract_strided_slice %2 {offsets = [6, 0], sizes = [1, 20], strides = [1, 1]} : vector<12x20xf32> to vector<1x20xf32>
    %10 = vector.extract_strided_slice %2 {offsets = [7, 0], sizes = [1, 20], strides = [1, 1]} : vector<12x20xf32> to vector<1x20xf32>
    %11 = vector.extract_strided_slice %2 {offsets = [8, 0], sizes = [1, 20], strides = [1, 1]} : vector<12x20xf32> to vector<1x20xf32>
    %12 = vector.extract_strided_slice %2 {offsets = [9, 0], sizes = [1, 20], strides = [1, 1]} : vector<12x20xf32> to vector<1x20xf32>
    %13 = vector.extract_strided_slice %2 {offsets = [10, 0], sizes = [1, 20], strides = [1, 1]} : vector<12x20xf32> to vector<1x20xf32>
    %14 = vector.extract_strided_slice %2 {offsets = [11, 0], sizes = [1, 1], strides = [1, 1]} : vector<12x20xf32> to vector<1x1xf32>
    %c0_4 = arith.constant 0 : index
    %c0_5 = arith.constant 0 : index
    %15 = vector.load %arg2[%c0_4, %c0_5] : memref<104x20xf32, #tpu.memory_space<vmem>>, vector<8x20xf32>
    %cst = arith.constant dense<0.000000e+00> : vector<128x20xf32>
    %16 = tpu.matmul %1, %15, %cst {dimension_numbers = #tpu.dot_dimension_numbers<[1], [0], [0], [1], [0, 0, 1, 1], [], []>} : vector<128x8xf32>, vector<8x20xf32>, vector<128x20xf32> -> vector<128x20xf32>
    %17 = vector.broadcast %3 : vector<1x20xf32> to vector<128x20xf32>
    %18 = arith.addf %16, %17 : vector<128x20xf32>
    %19 = math.tanh %18 : vector<128x20xf32>
    %c8 = arith.constant 8 : index
    %c0_6 = arith.constant 0 : index
    %20 = vector.load %arg2[%c8, %c0_6] : memref<104x20xf32, #tpu.memory_space<vmem>>, vector<20x20xf32>
    %cst_7 = arith.constant dense<0.000000e+00> : vector<128x20xf32>
    %21 = tpu.matmul %19, %20, %cst_7 {dimension_numbers = #tpu.dot_dimension_numbers<[1], [0], [0], [1], [0, 0, 1, 1], [], []>} : vector<128x20xf32>, vector<20x20xf32>, vector<128x20xf32> -> vector<128x20xf32>
    %22 = vector.broadcast %4 : vector<1x20xf32> to vector<128x20xf32>
    %23 = arith.addf %21, %22 : vector<128x20xf32>
    %c32 = arith.constant 32 : index
    %c0_8 = arith.constant 0 : index
    %24 = vector.load %arg2[%c32, %c0_8] : memref<104x20xf32, #tpu.memory_space<vmem>>, vector<20x20xf32>
    %cst_9 = arith.constant dense<0.000000e+00> : vector<128x20xf32>
    %25 = tpu.matmul %19, %24, %cst_9 {dimension_numbers = #tpu.dot_dimension_numbers<[1], [0], [0], [1], [0, 0, 1, 1], [], []>} : vector<128x20xf32>, vector<20x20xf32>, vector<128x20xf32> -> vector<128x20xf32>
    %26 = vector.broadcast %5 : vector<1x20xf32> to vector<128x20xf32>
    %27 = arith.addf %25, %26 : vector<128x20xf32>
    %c56 = arith.constant 56 : index
    %c0_10 = arith.constant 0 : index
    %28 = vector.load %arg2[%c56, %c0_10] : memref<104x20xf32, #tpu.memory_space<vmem>>, vector<20x20xf32>
    %cst_11 = arith.constant dense<0.000000e+00> : vector<128x20xf32>
    %29 = tpu.matmul %19, %28, %cst_11 {dimension_numbers = #tpu.dot_dimension_numbers<[1], [0], [0], [1], [0, 0, 1, 1], [], []>} : vector<128x20xf32>, vector<20x20xf32>, vector<128x20xf32> -> vector<128x20xf32>
    %30 = vector.broadcast %6 : vector<1x20xf32> to vector<128x20xf32>
    %31 = arith.addf %29, %30 : vector<128x20xf32>
    %32 = vector.shape_cast %23 : vector<128x20xf32> to vector<16x8x20xf32>
    %33 = vector.shape_cast %27 : vector<128x20xf32> to vector<16x8x20xf32>
    %34 = vector.shape_cast %31 : vector<128x20xf32> to vector<16x8x20xf32>
    "tpu.trace_start"() <{level = 10 : i32, message = "bqd,bkd->bqk"}> : () -> ()
    %cst_12 = arith.constant dense<0.000000e+00> : vector<16x8x8xf32>
    %35 = tpu.matmul %32, %33, %cst_12 {dimension_numbers = #tpu.dot_dimension_numbers<[2], [2], [1], [1], [0, 0, 0, 1, 1, 1], [0], [0]>} : vector<16x8x20xf32>, vector<16x8x20xf32>, vector<16x8x8xf32> -> vector<16x8x8xf32>
    "tpu.trace_stop"() : () -> ()
    %cst_13 = arith.constant dense<0xFF800000> : vector<16x8xf32>
    %36 = vector.multi_reduction <maximumf>, %35, %cst_13 [2] : vector<16x8x8xf32> to vector<16x8xf32>
    %37 = vector.shape_cast %36 : vector<16x8xf32> to vector<16x8x1xf32>
    %38 = vector.broadcast %37 : vector<16x8x1xf32> to vector<16x8x8xf32>
    %39 = arith.subf %35, %38 : vector<16x8x8xf32>
    %40 = math.exp %39 : vector<16x8x8xf32>
    %cst_14 = arith.constant dense<0.000000e+00> : vector<16x8xf32>
    %41 = vector.multi_reduction <add>, %40, %cst_14 [2] : vector<16x8x8xf32> to vector<16x8xf32>
    %42 = vector.shape_cast %41 : vector<16x8xf32> to vector<16x8x1xf32>
    %43 = vector.broadcast %42 : vector<16x8x1xf32> to vector<16x8x8xf32>
    %44 = arith.divf %40, %43 : vector<16x8x8xf32>
    "tpu.trace_start"() <{level = 10 : i32, message = "bqk,bkd->bqd"}> : () -> ()
    %cst_15 = arith.constant dense<0.000000e+00> : vector<16x8x20xf32>
    %45 = tpu.matmul %44, %34, %cst_15 {dimension_numbers = #tpu.dot_dimension_numbers<[2], [1], [1], [2], [0, 0, 0, 1, 1, 2], [0], [0]>} : vector<16x8x8xf32>, vector<16x8x20xf32>, vector<16x8x20xf32> -> vector<16x8x20xf32>
    "tpu.trace_stop"() : () -> ()
    %46 = vector.shape_cast %45 : vector<16x8x20xf32> to vector<128x20xf32>
    %c80 = arith.constant 80 : index
    %c0_16 = arith.constant 0 : index
    %47 = vector.load %arg2[%c80, %c0_16] : memref<104x20xf32, #tpu.memory_space<vmem>>, vector<20x20xf32>
    %cst_17 = arith.constant dense<0.000000e+00> : vector<128x20xf32>
    %48 = tpu.matmul %46, %47, %cst_17 {dimension_numbers = #tpu.dot_dimension_numbers<[1], [0], [0], [1], [0, 0, 1, 1], [], []>} : vector<128x20xf32>, vector<20x20xf32>, vector<128x20xf32> -> vector<128x20xf32>
    %49 = vector.broadcast %7 : vector<1x20xf32> to vector<128x20xf32>
    %50 = arith.addf %48, %49 : vector<128x20xf32>
    %51 = arith.addf %19, %50 : vector<128x20xf32>
    %cst_18 = arith.constant dense<0.000000e+00> : vector<128xf32>
    %52 = vector.multi_reduction <add>, %51, %cst_18 [1] : vector<128x20xf32> to vector<128xf32>
    %53 = vector.shape_cast %52 : vector<128xf32> to vector<128x1xf32>
    %cst_19 = arith.constant 2.000000e+01 : f32
    %54 = vector.broadcast %cst_19 : f32 to vector<128x1xf32>
    %55 = arith.divf %53, %54 : vector<128x1xf32>
    %56 = vector.broadcast %55 : vector<128x1xf32> to vector<128x20xf32>
    %57 = arith.subf %51, %56 : vector<128x20xf32>
    %58 = arith.mulf %57, %57 : vector<128x20xf32>
    %cst_20 = arith.constant dense<0.000000e+00> : vector<128xf32>
    %59 = vector.multi_reduction <add>, %58, %cst_20 [1] : vector<128x20xf32> to vector<128xf32>
    %60 = vector.shape_cast %59 : vector<128xf32> to vector<128x1xf32>
    %cst_21 = arith.constant 2.000000e+01 : f32
    %61 = vector.broadcast %cst_21 : f32 to vector<128x1xf32>
    %62 = arith.divf %60, %61 : vector<128x1xf32>
    %63 = vector.broadcast %55 : vector<128x1xf32> to vector<128x20xf32>
    %64 = arith.subf %51, %63 : vector<128x20xf32>
    %cst_22 = arith.constant 9.99999974E-6 : f32
    %65 = vector.broadcast %cst_22 : f32 to vector<128x1xf32>
    %66 = arith.addf %62, %65 : vector<128x1xf32>
    %67 = math.rsqrt %66 : vector<128x1xf32>
    %68 = vector.broadcast %67 : vector<128x1xf32> to vector<128x20xf32>
    %69 = arith.mulf %64, %68 : vector<128x20xf32>
    %70 = vector.broadcast %8 : vector<1x20xf32> to vector<128x20xf32>
    %71 = arith.mulf %69, %70 : vector<128x20xf32>
    %72 = vector.broadcast %9 : vector<1x20xf32> to vector<128x20xf32>
    %73 = arith.addf %71, %72 : vector<128x20xf32>
    %c0_23 = arith.constant 0 : index
    %c0_24 = arith.constant 0 : index
    %74 = vector.load %arg4[%c0_23, %c0_24] : memref<20x2048xf32, #tpu.memory_space<vmem>>, vector<20x2048xf32>
    %cst_25 = arith.constant dense<0.000000e+00> : vector<128x2048xf32>
    %75 = tpu.matmul %73, %74, %cst_25 {dimension_numbers = #tpu.dot_dimension_numbers<[1], [0], [0], [1], [0, 0, 1, 1], [], []>} : vector<128x20xf32>, vector<20x2048xf32>, vector<128x2048xf32> -> vector<128x2048xf32>
    %c0_26 = arith.constant 0 : index
    %c0_27 = arith.constant 0 : index
    %76 = vector.load %arg5[%c0_26, %c0_27] : memref<1x2048xf32, #tpu.memory_space<vmem>>, vector<1x2048xf32>
    %77 = vector.broadcast %76 : vector<1x2048xf32> to vector<128x2048xf32>
    %78 = arith.addf %75, %77 : vector<128x2048xf32>
    %cst_28 = arith.constant 0.000000e+00 : f32
    %79 = vector.broadcast %cst_28 : f32 to vector<128x2048xf32>
    %80 = arith.maximumf %78, %79 : vector<128x2048xf32>
    %c0_29 = arith.constant 0 : index
    %c0_30 = arith.constant 0 : index
    %81 = vector.load %arg6[%c0_29, %c0_30] : memref<20x2048xf32, #tpu.memory_space<vmem>>, vector<20x2048xf32>
    %cst_31 = arith.constant dense<0.000000e+00> : vector<128x20xf32>
    %82 = tpu.matmul %80, %81, %cst_31 {dimension_numbers = #tpu.dot_dimension_numbers<[1], [1], [0], [0], [0, 0, 1, 0], [], []>} : vector<128x2048xf32>, vector<20x2048xf32>, vector<128x20xf32> -> vector<128x20xf32>
    %83 = vector.broadcast %10 : vector<1x20xf32> to vector<128x20xf32>
    %84 = arith.addf %82, %83 : vector<128x20xf32>
    %85 = arith.addf %73, %84 : vector<128x20xf32>
    %cst_32 = arith.constant dense<0.000000e+00> : vector<128xf32>
    %86 = vector.multi_reduction <add>, %85, %cst_32 [1] : vector<128x20xf32> to vector<128xf32>
    %87 = vector.shape_cast %86 : vector<128xf32> to vector<128x1xf32>
    %cst_33 = arith.constant 2.000000e+01 : f32
    %88 = vector.broadcast %cst_33 : f32 to vector<128x1xf32>
    %89 = arith.divf %87, %88 : vector<128x1xf32>
    %90 = vector.broadcast %89 : vector<128x1xf32> to vector<128x20xf32>
    %91 = arith.subf %85, %90 : vector<128x20xf32>
    %92 = arith.mulf %91, %91 : vector<128x20xf32>
    %cst_34 = arith.constant dense<0.000000e+00> : vector<128xf32>
    %93 = vector.multi_reduction <add>, %92, %cst_34 [1] : vector<128x20xf32> to vector<128xf32>
    %94 = vector.shape_cast %93 : vector<128xf32> to vector<128x1xf32>
    %cst_35 = arith.constant 2.000000e+01 : f32
    %95 = vector.broadcast %cst_35 : f32 to vector<128x1xf32>
    %96 = arith.divf %94, %95 : vector<128x1xf32>
    %97 = vector.broadcast %89 : vector<128x1xf32> to vector<128x20xf32>
    %98 = arith.subf %85, %97 : vector<128x20xf32>
    %cst_36 = arith.constant 9.99999974E-6 : f32
    %99 = vector.broadcast %cst_36 : f32 to vector<128x1xf32>
    %100 = arith.addf %96, %99 : vector<128x1xf32>
    %101 = math.rsqrt %100 : vector<128x1xf32>
    %102 = vector.broadcast %101 : vector<128x1xf32> to vector<128x20xf32>
    %103 = arith.mulf %98, %102 : vector<128x20xf32>
    %104 = vector.broadcast %11 : vector<1x20xf32> to vector<128x20xf32>
    %105 = arith.mulf %103, %104 : vector<128x20xf32>
    %106 = vector.broadcast %12 : vector<1x20xf32> to vector<128x20xf32>
    %107 = arith.addf %105, %106 : vector<128x20xf32>
    %cst_37 = arith.constant 5.000000e-01 : f32
    %108 = vector.broadcast %cst_37 : f32 to vector<128x20xf32>
    %109 = arith.mulf %108, %107 : vector<128x20xf32>
    %cst_38 = arith.constant 0.707106769 : f32
    %110 = vector.broadcast %cst_38 : f32 to vector<128x20xf32>
    %111 = arith.mulf %107, %110 : vector<128x20xf32>
    %112 = math.erf %111 : vector<128x20xf32>
    %cst_39 = arith.constant 1.000000e+00 : f32
    %113 = vector.broadcast %cst_39 : f32 to vector<128x20xf32>
    %114 = arith.addf %113, %112 : vector<128x20xf32>
    %115 = arith.mulf %109, %114 : vector<128x20xf32>
    %cst_40 = arith.constant dense<0.000000e+00> : vector<1x128xf32>
    %116 = tpu.matmul %13, %115, %cst_40 {dimension_numbers = #tpu.dot_dimension_numbers<[1], [1], [0], [0], [0, 0, 1, 0], [], []>} : vector<1x20xf32>, vector<128x20xf32>, vector<1x128xf32> -> vector<1x128xf32>
    %117 = vector.broadcast %14 : vector<1x1xf32> to vector<1x128xf32>
    %118 = arith.addf %116, %117 : vector<1x128xf32>
    %119 = math.tanh %118 : vector<1x128xf32>
    %120 = arith.negf %119 : vector<1x128xf32>
    %121 = math.exp %120 : vector<1x128xf32>
    %cst_41 = arith.constant 1.000000e+00 : f32
    %122 = vector.broadcast %cst_41 : f32 to vector<1x128xf32>
    %123 = arith.addf %122, %121 : vector<1x128xf32>
    %124 = arith.divf %122, %123 : vector<1x128xf32>
    %c0_42 = arith.constant 0 : index
    %c0_43 = arith.constant 0 : index
    %c0_44 = arith.constant 0 : index
    %125 = vector.load %arg7[%c0_42, %c0_43, %c0_44] : memref<1x1x128xf32, #tpu.memory_space<vmem>>, vector<1x1x128xf32>
    %126 = vector.shape_cast %125 : vector<1x1x128xf32> to vector<1x128xf32>
    %127 = vector.shape_cast %124 : vector<1x128xf32> to vector<1x1x128xf32>
    tpu.vector_store %arg7[%c0_42, %c0_43, %c0_44], %127 {strides = array<i32>} : memref<1x1x128xf32, #tpu.memory_space<vmem>>, vector<1x1x128xf32>,
    return
  }
  func.func @transform_0(%arg0: i32) -> (i32, i32, i32) {
    %c0_i32 = arith.constant 0 : i32
    %c0_i32_0 = arith.constant 0 : i32
    %c0_i32_1 = arith.constant 0 : i32
    return %arg0, %c0_i32, %c0_i32_0 : i32, i32, i32
  }
  func.func @transform_1(%arg0: i32) -> (i32, i32) {
    %c0_i32 = arith.constant 0 : i32
    %c0_i32_0 = arith.constant 0 : i32
    %c0_i32_1 = arith.constant 0 : i32
    return %c0_i32, %c0_i32_0 : i32, i32
  }
  func.func @transform_2(%arg0: i32) -> (i32, i32) {
    %c0_i32 = arith.constant 0 : i32
    %c0_i32_0 = arith.constant 0 : i32
    %c0_i32_1 = arith.constant 0 : i32
    return %c0_i32, %c0_i32_0 : i32, i32
  }
  func.func @transform_3(%arg0: i32) -> (i32, i32) {
    %c0_i32 = arith.constant 0 : i32
    %c0_i32_0 = arith.constant 0 : i32
    %c0_i32_1 = arith.constant 0 : i32
    return %c0_i32, %c0_i32_0 : i32, i32
  }
  func.func @transform_4(%arg0: i32) -> (i32, i32) {
    %c0_i32 = arith.constant 0 : i32
    %c0_i32_0 = arith.constant 0 : i32
    %c0_i32_1 = arith.constant 0 : i32
    return %c0_i32, %c0_i32_0 : i32, i32
  }
  func.func @transform_5(%arg0: i32) -> (i32, i32) {
    %c0_i32 = arith.constant 0 : i32
    %c0_i32_0 = arith.constant 0 : i32
    %c0_i32_1 = arith.constant 0 : i32
    return %c0_i32, %c0_i32_0 : i32, i32
  }
  func.func @transform_6(%arg0: i32) -> (i32, i32, i32) {
    %c0_i32 = arith.constant 0 : i32
    %c0_i32_0 = arith.constant 0 : i32
    %c0_i32_1 = arith.constant 0 : i32
    return %arg0, %c0_i32, %c0_i32_0 : i32, i32, i32
  }
}

</mosaic_0001>

<llo_original>
// kernel: tpu_custom_call.1
$region0: #{tpu_custom_call.1}
  #allocation0 [shape = 'u32[]', space=smem, size = 0x4, offset = 0x4, fixed_abs, tag = 'smem constant byte address 0x4 - core index']
  #allocation1 [shape = 'u32[144,128]{1,0:T(1,128)}', space=vmem, size = 0x12000, scoped, tag = 'internal scratch']
  %s0 = inlined_call_operand.vmem [shape: f32[32,8,8], index: 0, kind: input, shape index: {}]
  %s1 = inlined_call_operand.vmem [shape: f32[104,20], index: 1, kind: input, shape index: {}]
  %s2 = inlined_call_operand.vmem [shape: f32[12,20], index: 2, kind: input, shape index: {}]
  %s3 = inlined_call_operand.vmem [shape: f32[20,2048], index: 3, kind: input, shape index: {}]
  %s4 = inlined_call_operand.vmem [shape: f32[1,2048], index: 4, kind: input, shape index: {}]
  %s5 = inlined_call_operand.hbm [shape: f32[20,2048], index: 5, kind: input, shape index: {}]
  %s6 = inlined_call_operand.hbm [shape: f32[2,1,128], index: 6, kind: output, shape index: {}]
  %s7 = sld [smem:[#allocation0]]
  $region61: #{tpu_custom_call.1} parent=0
    _
  %s9 = ssub.s32 1, %s7
  %s10 = scalar_select 0, %s9, %s7
  $region1: #{tpu_custom_call.1} parent=0
    #allocation2 [shape = 'u8[196608]{0}', space=vmem, size = 0x30000, scoped, tag = 'input window, operand 5, single buffered']
    #allocation3 [shape = 's32[2]{0}', space=sflag, size = 0x8, scoped, tag = 'scoped memory for tpu_custom_call.1']
    #allocation4 [shape = 's32[2]{0}', space=sflag, size = 0x8, scoped, tag = 'scoped memory for tpu_custom_call.1']
    #allocation5 [shape = 'u8[1024]{0}', space=vmem, size = 0x400, scoped, tag = 'output window, operand 0']
    %11 = vsyncpa [#allocation3], 0
    %12 = vsyncpa [#allocation4], 0
    %s13 = scalar_lea.sflag [#allocation4], 1
    %14 = vsyncpa %s13, 0
    loop: start=0, step=1, limit=4
    $region2: #{tpu_custom_call.1} parent=1 // loop_pre_header
      _
    $region3: #{tpu_custom_call.1} parent=1 // loop_header
      %s16 = sphi 0, %s20
      %p17 = scmp.ge.s32.totalorder %s16, 4
      %s26 = sphi 0, %s28
      %s29 = sphi 0, %s26
      %s30 = sphi 0, %s29
      %s46 = sphi 0, %s30
      %s50 = sphi 0, %s50
      %s52 = sphi 0, %s50
      %s53 = sphi 0, %s52
      %s67 = sphi 0, %s53
      %s71 = sphi 0, %s71
      %s73 = sphi 0, %s71
      %s74 = sphi 0, %s73
      %s88 = sphi 0, %s74
      %s92 = sphi 0, %s92
      %s94 = sphi 0, %s92
      %s95 = sphi 0, %s94
      %s109 = sphi 0, %s95
      %s113 = sphi 0, %s113
      %s115 = sphi 0, %s113
      %s116 = sphi 0, %s115
      %s130 = sphi 0, %s116
      %s134 = sphi 0, %s134
      %s136 = sphi 0, %s134
      %s137 = sphi 0, %s136
      %s151 = sphi 0, %s137
      %s157 = sphi 0, %s159
      %s160 = sphi 0, %s157
      %s161 = sphi 0, %s160
      %s177 = sphi 0, %s161
    $region4: #{tpu_custom_call.1} parent=1 // loop_header_branch
      %19 = sbr.rel (%p17) target = $region8
    $region5: #{tpu_custom_call.1} parent=1 // loop_body
      %s21 = ssub.s32 %s16, 1
      %s22 = ssub.s32 %s16, 2
      %s23 = sadd.s32 %s16, 1
      %s24 = ssub.s32 %s16, %s23
      %p25 = scmp.eq.s32.totalorder %s24, 0
      %s27 = sadd.s32 %s26, 1
      %s28 = scalar_select %p25, %s26, %s27
      %p31 = pneg %p25
      %p32 = scmp.eq.s32.totalorder %s16, 1
      %p33 = por %p31, %p32
      %p34 = scmp.ne.s32.totalorder %s26, %s29
      %p35 = scmp.eq.s32.totalorder %s16, 0
      %p36 = por %p34, %p35
      %p37 = scmp.ne.s32.totalorder %s26, %s29
      %p38 = scmp.eq.s32.totalorder %s21, 1
      %p39 = por %p37, %p38
      %p40 = scmp.ne.s32.totalorder %s29, %s30
      %p41 = scmp.eq.s32.totalorder %s21, 0
      %p42 = por %p40, %p41
      %p43 = scmp.ne.s32.totalorder %s29, %s30
      %p44 = scmp.eq.s32.totalorder %s22, 1
      %p45 = por %p43, %p44
      %p47 = scmp.ne.s32.totalorder %s30, %s46
      %p48 = scmp.eq.s32.totalorder %s22, 0
      %p49 = por %p47, %p48
      %s51 = sadd.s32 %s50, 1
      %p54 = scmp.eq.s32.totalorder %s16, 1
      %p55 = scmp.ne.s32.totalorder %s50, %s52
      %p56 = scmp.eq.s32.totalorder %s16, 0
      %p57 = por %p55, %p56
      %p58 = scmp.ne.s32.totalorder %s50, %s52
      %p59 = scmp.eq.s32.totalorder %s21, 1
      %p60 = por %p58, %p59
      %p61 = scmp.ne.s32.totalorder %s52, %s53
      %p62 = scmp.eq.s32.totalorder %s21, 0
      %p63 = por %p61, %p62
      %p64 = scmp.ne.s32.totalorder %s52, %s53
      %p65 = scmp.eq.s32.totalorder %s22, 1
      %p66 = por %p64, %p65
      %p68 = scmp.ne.s32.totalorder %s53, %s67
      %p69 = scmp.eq.s32.totalorder %s22, 0
      %p70 = por %p68, %p69
      %s72 = sadd.s32 %s71, 1
      %p75 = scmp.eq.s32.totalorder %s16, 1
      %p76 = scmp.ne.s32.totalorder %s71, %s73
      %p77 = scmp.eq.s32.totalorder %s16, 0
      %p78 = por %p76, %p77
      %p79 = scmp.ne.s32.totalorder %s71, %s73
      %p80 = scmp.eq.s32.totalorder %s21, 1
      %p81 = por %p79, %p80
      %p82 = scmp.ne.s32.totalorder %s73, %s74
      %p83 = scmp.eq.s32.totalorder %s21, 0
      %p84 = por %p82, %p83
      %p85 = scmp.ne.s32.totalorder %s73, %s74
      %p86 = scmp.eq.s32.totalorder %s22, 1
      %p87 = por %p85, %p86
      %p89 = scmp.ne.s32.totalorder %s74, %s88
      %p90 = scmp.eq.s32.totalorder %s22, 0
      %p91 = por %p89, %p90
      %s93 = sadd.s32 %s92, 1
      %p96 = scmp.eq.s32.totalorder %s16, 1
      %p97 = scmp.ne.s32.totalorder %s92, %s94
      %p98 = scmp.eq.s32.totalorder %s16, 0
      %p99 = por %p97, %p98
      %p100 = scmp.ne.s32.totalorder %s92, %s94
      %p101 = scmp.eq.s32.totalorder %s21, 1
      %p102 = por %p100, %p101
      %p103 = scmp.ne.s32.totalorder %s94, %s95
      %p104 = scmp.eq.s32.totalorder %s21, 0
      %p105 = por %p103, %p104
      %p106 = scmp.ne.s32.totalorder %s94, %s95
      %p107 = scmp.eq.s32.totalorder %s22, 1
      %p108 = por %p106, %p107
      %p110 = scmp.ne.s32.totalorder %s95, %s109
      %p111 = scmp.eq.s32.totalorder %s22, 0
      %p112 = por %p110, %p111
      %s114 = sadd.s32 %s113, 1
      %p117 = scmp.eq.s32.totalorder %s16, 1
      %p118 = scmp.ne.s32.totalorder %s113, %s115
      %p119 = scmp.eq.s32.totalorder %s16, 0
      %p120 = por %p118, %p119
      %p121 = scmp.ne.s32.totalorder %s113, %s115
      %p122 = scmp.eq.s32.totalorder %s21, 1
      %p123 = por %p121, %p122
      %p124 = scmp.ne.s32.totalorder %s115, %s116
      %p125 = scmp.eq.s32.totalorder %s21, 0
      %p126 = por %p124, %p125
      %p127 = scmp.ne.s32.totalorder %s115, %s116
      %p128 = scmp.eq.s32.totalorder %s22, 1
      %p129 = por %p127, %p128
      %p131 = scmp.ne.s32.totalorder %s116, %s130
      %p132 = scmp.eq.s32.totalorder %s22, 0
      %p133 = por %p131, %p132
      %s135 = sadd.s32 %s134, 1
      %p138 = scmp.eq.s32.totalorder %s16, 1
      %p139 = scmp.ne.s32.totalorder %s134, %s136
      %p140 = scmp.eq.s32.totalorder %s16, 0
      %p141 = por %p139, %p140
      %p142 = scmp.ne.s32.totalorder %s134, %s136
      %p143 = scmp.eq.s32.totalorder %s21, 1
      %p144 = por %p142, %p143
      %p145 = scmp.ne.s32.totalorder %s136, %s137
      %p146 = scmp.eq.s32.totalorder %s21, 0
      %p147 = por %p145, %p146
      %p148 = scmp.ne.s32.totalorder %s136, %s137
      %p149 = scmp.eq.s32.totalorder %s22, 1
      %p150 = por %p148, %p149
      %p152 = scmp.ne.s32.totalorder %s137, %s151
      %p153 = scmp.eq.s32.totalorder %s22, 0
      %p154 = por %p152, %p153
      %s155 = ssub.s32 %s16, %s23
      %p156 = scmp.eq.s32.totalorder %s155, 0
      %s158 = sadd.s32 %s157, 1
      %s159 = scalar_select %p156, %s157, %s158
      %p162 = pneg %p156
      %p163 = scmp.eq.s32.totalorder %s16, 1
      %p164 = por %p162, %p163
      %p165 = scmp.ne.s32.totalorder %s157, %s160
      %p166 = scmp.eq.s32.totalorder %s16, 0
      %p167 = por %p165, %p166
      %p168 = scmp.ne.s32.totalorder %s157, %s160
      %p169 = scmp.eq.s32.totalorder %s21, 1
      %p170 = por %p168, %p169
      %p171 = scmp.ne.s32.totalorder %s160, %s161
      %p172 = scmp.eq.s32.totalorder %s21, 0
      %p173 = por %p171, %p172
      %p174 = scmp.ne.s32.totalorder %s160, %s161
      %p175 = scmp.eq.s32.totalorder %s22, 1
      %p176 = por %p174, %p175
      %p178 = scmp.ne.s32.totalorder %s161, %s177
      %p179 = scmp.eq.s32.totalorder %s22, 0
      %p180 = por %p178, %p179
      %p181 = scmp.le.s32.totalorder 1, %s16
      %p182 = scmp.lt.s32.totalorder %s16, 3
      %p183 = pnand %p181, %p182
      %p184 = pneg %p183
      // Predicated region
      $region9: #{tpu_custom_call.1} parent=5 // pred_check
        _
      $region10: #{tpu_custom_call.1} parent=5 // pred_check_branch
        %186 = sbr.rel (%p183) target = $region12
      $region11: #{tpu_custom_call.1} parent=5 // pred_region
        %s187 = ssub.s32 %s16, 1
        // Predicated region
        $region13: #{tpu_custom_call.1} parent=11 // pred_check
          %p188 = pneg %p63
        $region14: #{tpu_custom_call.1} parent=11 // pred_check_branch
          %190 = sbr.rel (%p188) target = $region16
        $region15: #{tpu_custom_call.1} parent=11 // pred_region
          _
        $region16: #{tpu_custom_call.1} parent=11 // pred_fallthru
          _
        // Predicated region
        $region17: #{tpu_custom_call.1} parent=11 // pred_check
          %p191 = pneg %p84
        $region18: #{tpu_custom_call.1} parent=11 // pred_check_branch
          %193 = sbr.rel (%p191) target = $region20
        $region19: #{tpu_custom_call.1} parent=11 // pred_region
          _
        $region20: #{tpu_custom_call.1} parent=11 // pred_fallthru
          _
        // Predicated region
        $region21: #{tpu_custom_call.1} parent=11 // pred_check
          %p194 = pneg %p105
        $region22: #{tpu_custom_call.1} parent=11 // pred_check_branch
          %196 = sbr.rel (%p194) target = $region24
        $region23: #{tpu_custom_call.1} parent=11 // pred_region
          _
        $region24: #{tpu_custom_call.1} parent=11 // pred_fallthru
          _
        // Predicated region
        $region25: #{tpu_custom_call.1} parent=11 // pred_check
          %p197 = pneg %p126
        $region26: #{tpu_custom_call.1} parent=11 // pred_check_branch
          %199 = sbr.rel (%p197) target = $region28
        $region27: #{tpu_custom_call.1} parent=11 // pred_region
          _
        $region28: #{tpu_custom_call.1} parent=11 // pred_fallthru
          _
        // Predicated region
        $region29: #{tpu_custom_call.1} parent=11 // pred_check
          %p200 = pneg %p147
        $region30: #{tpu_custom_call.1} parent=11 // pred_check_branch
          %202 = sbr.rel (%p200) target = $region32
        $region31: #{tpu_custom_call.1} parent=11 // pred_region
          %s204 = ssub.s32 6144, 6144
          %205 = vsyncadd [#allocation3], %s204
          %s206 = sshll.u32 [#allocation2], 4
          %s207 = int_to_ptr.vmem [resolvable:$true] %s206
          %212 = dma.hbm_to_vmem [thread:$0]  %s5, 6144, %s207, [#allocation3], 2048, 2048, 128
        $region32: #{tpu_custom_call.1} parent=11 // pred_fallthru
          _
      $region12: #{tpu_custom_call.1} parent=5 // pred_fallthru
        _
      %p213 = scmp.lt.s32.totalorder %s16, 2
      // Predicated region
      $region33: #{tpu_custom_call.1} parent=5 // pred_check
        %p214 = pneg %p213
      $region34: #{tpu_custom_call.1} parent=5 // pred_check_branch
        %216 = sbr.rel (%p214) target = $region36
      $region35: #{tpu_custom_call.1} parent=5 // pred_region
        // Predicated region
        $region37: #{tpu_custom_call.1} parent=35 // pred_check
          %p217 = pneg %p36
        $region38: #{tpu_custom_call.1} parent=35 // pred_check_branch
          %219 = sbr.rel (%p217) target = $region40
        $region39: #{tpu_custom_call.1} parent=35 // pred_region
          %s220 = smul.u32 16, %s16
          %p221 = scmp.lt.s32.totalorder %s220, 31
          %s222 = scalar_select %p221, %s220, 31
          %s223 = smul.addr %s222, 8
          %s224 = scalar_lea.vmem %s0, %s223
          %s225 = smul.u32 16, %s16
        $region40: #{tpu_custom_call.1} parent=35 // pred_fallthru
          _
      $region36: #{tpu_custom_call.1} parent=5 // pred_fallthru
        _
      %p226 = scmp.le.s32.totalorder 1, %s16
      %p227 = scmp.lt.s32.totalorder %s16, 3
      %p228 = pnand %p226, %p227
      %p229 = pneg %p228
      // Predicated region
      $region41: #{tpu_custom_call.1} parent=5 // pred_check
        _
      $region42: #{tpu_custom_call.1} parent=5 // pred_check_branch
        %231 = sbr.rel (%p228) target = $region44
      $region43: #{tpu_custom_call.1} parent=5 // pred_region
        %s232 = ssub.s32 %s16, 1
        // Predicated region
        $region45: #{tpu_custom_call.1} parent=43 // pred_check
          %p233 = pneg %p147
        $region46: #{tpu_custom_call.1} parent=43 // pred_check_branch
          %235 = sbr.rel (%p233) target = $region48
        $region47: #{tpu_custom_call.1} parent=43 // pred_region
          %236 = dma.done [#allocation3], 6144
        $region48: #{tpu_custom_call.1} parent=43 // pred_fallthru
          _
        %s237 = smul.u32 16, %s21
        %p238 = scmp.lt.s32.totalorder %s237, 31
        %s239 = scalar_select %p238, %s237, 31
        %s240 = smul.addr %s239, 8
        %s241 = scalar_lea.vmem %s0, %s240
        %p242 = pneg %p42
        %p243 = pneg %p39
        %p244 = pneg %p63
        %p245 = pneg %p60
        %p246 = pneg %p84
        %p247 = pneg %p81
        %p248 = pneg %p105
        %p249 = pneg %p102
        %p250 = pneg %p126
        %p251 = pneg %p123
        %p252 = pneg %p147
        %p253 = pneg %p144
        %p254 = pneg %p173
        %p255 = pneg %p170
        %s256 = sand.u32 %s160, 1
        %s257 = scalar_lea.sflag [#allocation4], %s256
        %s258 = sand.u32 %s160, 1
        %s259 = scalar_lea.vmem [#allocation5], %s258
        %s260 = smul.u32 16, %s21
        %p261 = scmp.lt.s32.totalorder %s260, 31
        %s262 = scalar_select %p261, %s260, 31
        %s263 = smul.addr %s262, 8
        %s264 = scalar_lea.vmem %s0, %s263
        %s265 = smul.u32 16, %s21
        %v266 = vld [vmem:[%s264] sm:$0xff]
        %v267 = vld [vmem:[%s264 + $0x8] sm:$0xff]
        %v268 = vld [vmem:[%s264 + $0x10] sm:$0xff]
        %v269 = vld [vmem:[%s264 + $0x18] sm:$0xff]
        %v270 = vld [vmem:[%s264 + $0x20] sm:$0xff]
        %v271 = vld [vmem:[%s264 + $0x28] sm:$0xff]
        %v272 = vld [vmem:[%s264 + $0x30] sm:$0xff]
        %v273 = vld [vmem:[%s264 + $0x38] sm:$0xff]
        %v274 = vld [vmem:[%s264 + $0x40] sm:$0xff]
        %v275 = vld [vmem:[%s264 + $0x48] sm:$0xff]
        %v276 = vld [vmem:[%s264 + $0x50] sm:$0xff]
        %v277 = vld [vmem:[%s264 + $0x58] sm:$0xff]
        %v278 = vld [vmem:[%s264 + $0x60] sm:$0xff]
        %v279 = vld [vmem:[%s264 + $0x68] sm:$0xff]
        %v280 = vld [vmem:[%s264 + $0x70] sm:$0xff]
        %v281 = vld [vmem:[%s264 + $0x78] sm:$0xff]
        %v282 = vld [vmem:[%s2] sm:$0xff]
        %v283 = vld [vmem:[%s2 + $0x8] sm:$0xf]
        %v284 = vld [vmem:[%s1] sm:$0xff]
        %v285 = vlaneseq
        %v286 = vshrl.u32 %v285, 7
        %v287 = vsub.s32 0, %v286
        %v288 = vrot.slane %v282, %v287
        %vm289 = vcmask 64512
        %v291 = vsel %vm289, %v266, 0
        %v294 = vsel %vm289, %v267, 0
        %v297 = vsel %vm289, %v268, 0
        %v300 = vsel %vm289, %v269, 0
        %v303 = vsel %vm289, %v270, 0
        %v306 = vsel %vm289, %v271, 0
        %v309 = vsel %vm289, %v272, 0
        %v312 = vsel %vm289, %v273, 0
        %v315 = vsel %vm289, %v274, 0
        %v318 = vsel %vm289, %v275, 0
        %v321 = vsel %vm289, %v276, 0
        %v324 = vsel %vm289, %v277, 0
        %v327 = vsel %vm289, %v278, 0
        %v330 = vsel %vm289, %v279, 0
        %v333 = vsel %vm289, %v280, 0
        %v336 = vsel %vm289, %v281, 0
        %338 = vmatprep.subr.mxu0 0.0
        %339 = vmatpush1.msra.mxu0 %v284
        %340 = vmatprep.subr.mxu0 0.0
        %341 = vmatpush1.msra.mxu0 0.0
        %342 = vmatprep.subr.mxu0 0.0
        %343 = vmatpush1.msra.mxu0 0.0
        %344 = vmatprep.subr.mxu0 0.0
        %345 = vmatpush1.msra.mxu0 0.0
        %346 = vmatprep.subr.mxu0 0.0
        %347 = vmatpush1.msra.mxu0 0.0
        %348 = vmatprep.subr.mxu0 0.0
        %349 = vmatpush1.msra.mxu0 0.0
        %350 = vmatprep.subr.mxu0 0.0
        %351 = vmatpush1.msra.mxu0 0.0
        %352 = vmatprep.subr.mxu0 0.0
        %353 = vmatpush1.msra.mxu0 0.0
        %354 = vmatprep.subr.mxu0 0.0
        %355 = vmatpush1.msra.mxu0 0.0
        %356 = vmatprep.subr.mxu0 0.0
        %357 = vmatpush1.msra.mxu0 0.0
        %358 = vmatprep.subr.mxu0 0.0
        %359 = vmatpush1.msra.mxu0 0.0
        %360 = vmatprep.subr.mxu0 0.0
        %361 = vmatpush1.msra.mxu0 0.0
        %362 = vmatprep.subr.mxu0 0.0
        %363 = vmatpush1.msra.mxu0 0.0
        %364 = vmatprep.subr.mxu0 0.0
        %365 = vmatpush1.msra.mxu0 0.0
        %366 = vmatprep.subr.mxu0 0.0
        %367 = vmatpush1.msra.mxu0 0.0
        %368 = vmatprep.subr.mxu0 0.0
        %369 = vmatpush1.msra.mxu0 0.0
        %370 = vmatprep.subr.mxu0 0.0
        %371 = vmatpush1.msra.mxu0 0.0
        %372 = vmatprep.subr.mxu0 0.0
        %373 = vmatpush1.msra.mxu0 0.0
        %374 = vmatprep.subr.mxu0 0.0
        %375 = vmatpush1.msra.mxu0 0.0
        %376 = vmatprep.subr.mxu0 0.0
        %377 = vmatpush1.msra.mxu0 0.0
        %378 = vmatprep.subr.mxu0 0.0
        %379 = vmatpush1.msra.mxu0 0.0
        %380 = vmatprep.subr.mxu0 0.0
        %381 = vmatpush1.msra.mxu0 0.0
        %382 = vmatprep.subr.mxu0 0.0
        %383 = vmatpush1.msra.mxu0 0.0
        %384 = vmatprep.subr.mxu0 0.0
        %385 = vmatpush1.msra.mxu0 0.0
        %386 = vmatprep.subr.mxu0 0.0
        %387 = vmatpush1.msra.mxu0 0.0
        %388 = vmatprep.subr.mxu0 0.0
        %389 = vmatpush1.msra.mxu0 0.0
        %390 = vmatprep.subr.mxu0 0.0
        %391 = vmatpush1.msra.mxu0 0.0
        %392 = vmatprep.subr.mxu0 0.0
        %393 = vmatpush1.msra.mxu0 0.0
        %394 = vmatprep.subr.mxu0 0.0
        %395 = vmatpush1.msra.mxu0 0.0
        %396 = vmatprep.subr.mxu0 0.0
        %397 = vmatpush1.msra.mxu0 0.0
        %398 = vmatprep.subr.mxu0 0.0
        %399 = vmatpush1.msra.mxu0 0.0
        %400 = vmatprep.subr.mxu0 0.0
        %401 = vmatpush1.msra.mxu0 0.0
        %402 = vmatprep.mubr.f32.mxu0 0.0
        %403 = vmatmul.mubr.f32.gmra.mrb[0].mxu0 %v291
        %v404 = vpop.f32.mrb[0].mxu0
        %v405 = vadd.f32 %v288, %v404
        %v406 = vpop.f32.mrb[0].mxu0
        %407 = vmatprep.mubr.f32.mxu0 0.0
        %408 = vmatmul.mubr.f32.gmra.mrb[0].mxu0 %v294
        %v409 = vpop.f32.mrb[0].mxu0
        %v410 = vadd.f32 %v288, %v409
        %v411 = vpop.f32.mrb[0].mxu0
        %412 = vmatprep.mubr.f32.mxu0 0.0
        %413 = vmatmul.mubr.f32.gmra.mrb[0].mxu0 %v297
        %v414 = vpop.f32.mrb[0].mxu0
        %v415 = vadd.f32 %v288, %v414
        %v416 = vpop.f32.mrb[0].mxu0
        %417 = vmatprep.mubr.f32.mxu0 0.0
        %418 = vmatmul.mubr.f32.gmra.mrb[0].mxu0 %v300
        %v419 = vpop.f32.mrb[0].mxu0
        %v420 = vadd.f32 %v288, %v419
        %v421 = vpop.f32.mrb[0].mxu0
        %422 = vmatprep.mubr.f32.mxu0 0.0
        %423 = vmatmul.mubr.f32.gmra.mrb[0].mxu0 %v303
        %v424 = vpop.f32.mrb[0].mxu0
        %v425 = vadd.f32 %v288, %v424
        %v426 = vpop.f32.mrb[0].mxu0
        %427 = vmatprep.mubr.f32.mxu0 0.0
        %428 = vmatmul.mubr.f32.gmra.mrb[0].mxu0 %v306
        %v429 = vpop.f32.mrb[0].mxu0
        %v430 = vadd.f32 %v288, %v429
        %v431 = vpop.f32.mrb[0].mxu0
        %432 = vmatprep.mubr.f32.mxu0 0.0
        %433 = vmatmul.mubr.f32.gmra.mrb[0].mxu0 %v309
        %v434 = vpop.f32.mrb[0].mxu0
        %v435 = vadd.f32 %v288, %v434
        %v436 = vpop.f32.mrb[0].mxu0
        %437 = vmatprep.mubr.f32.mxu0 0.0
        %438 = vmatmul.mubr.f32.gmra.mrb[0].mxu0 %v312
        %v439 = vpop.f32.mrb[0].mxu0
        %v440 = vadd.f32 %v288, %v439
        %v441 = vpop.f32.mrb[0].mxu0
        %442 = vmatprep.mubr.f32.mxu0 0.0
        %443 = vmatmul.mubr.f32.gmra.mrb[0].mxu0 %v315
        %v444 = vpop.f32.mrb[0].mxu0
        %v445 = vadd.f32 %v288, %v444
        %v446 = vpop.f32.mrb[0].mxu0
        %447 = vmatprep.mubr.f32.mxu0 0.0
        %448 = vmatmul.mubr.f32.gmra.mrb[0].mxu0 %v318
        %v449 = vpop.f32.mrb[0].mxu0
        %v450 = vadd.f32 %v288, %v449
        %v451 = vpop.f32.mrb[0].mxu0
        %452 = vmatprep.mubr.f32.mxu0 0.0
        %453 = vmatmul.mubr.f32.gmra.mrb[0].mxu0 %v321
        %v454 = vpop.f32.mrb[0].mxu0
        %v455 = vadd.f32 %v288, %v454
        %v456 = vpop.f32.mrb[0].mxu0
        %457 = vmatprep.mubr.f32.mxu0 0.0
        %458 = vmatmul.mubr.f32.gmra.mrb[0].mxu0 %v324
        %v459 = vpop.f32.mrb[0].mxu0
        %v460 = vadd.f32 %v288, %v459
        %v461 = vpop.f32.mrb[0].mxu0
        %462 = vmatprep.mubr.f32.mxu0 0.0
        %463 = vmatmul.mubr.f32.gmra.mrb[0].mxu0 %v327
        %v464 = vpop.f32.mrb[0].mxu0
        %v465 = vadd.f32 %v288, %v464
        %v466 = vpop.f32.mrb[0].mxu0
        %467 = vmatprep.mubr.f32.mxu0 0.0
        %468 = vmatmul.mubr.f32.gmra.mrb[0].mxu0 %v330
        %v469 = vpop.f32.mrb[0].mxu0
        %v470 = vadd.f32 %v288, %v469
        %v471 = vpop.f32.mrb[0].mxu0
        %472 = vmatprep.mubr.f32.mxu0 0.0
        %473 = vmatmul.mubr.f32.gmra.mrb[0].mxu0 %v333
        %v474 = vpop.f32.mrb[0].mxu0
        %v475 = vadd.f32 %v288, %v474
        %v476 = vpop.f32.mrb[0].mxu0
        %477 = vmatprep.mubr.f32.mxu0 0.0
        %478 = vmatmul.mubr.f32.gmra.mrb[0].mxu0 %v336
        %v479 = vpop.f32.mrb[0].mxu0
        %v480 = vadd.f32 %v288, %v479
        %v481 = vpop.f32.mrb[0].mxu0
        %482 = vdwg.mxu0
        %v483 = vtanh.pop %v405
        %v484 = vtanh.pop %v410
        %v485 = vtanh.pop %v415
        %v486 = vtanh.pop %v420
        %v487 = vtanh.pop %v425
        %v488 = vtanh.pop %v430
        %v489 = vtanh.pop %v435
        %v490 = vtanh.pop %v440
        %v491 = vtanh.pop %v445
        %v492 = vtanh.pop %v450
        %v493 = vtanh.pop %v455
        %v494 = vtanh.pop %v460
        %v495 = vtanh.pop %v465
        %v496 = vtanh.pop %v470
        %v497 = vtanh.pop %v475
        %v498 = vtanh.pop %v480
        %v499 = vld [vmem:[%s1 + $0x8] sm:$0xff]
        %v500 = vld [vmem:[%s1 + $0x10] sm:$0xff]
        %v501 = vld [vmem:[%s1 + $0x18] sm:$0xf]
        %v502 = vlaneseq
        %v503 = vshrl.u32 %v502, 7
        %v504 = vsub.s32 1, %v503
        %v505 = vrot.slane %v282, %v504
        %vm506 = vcmask 162816
        %v508 = vsel %vm506, %v483, 0
        %v511 = vsel %vm506, %v484, 0
        %v514 = vsel %vm506, %v485, 0
        %v517 = vsel %vm506, %v486, 0
        %v520 = vsel %vm506, %v487, 0
        %v523 = vsel %vm506, %v488, 0
        %v526 = vsel %vm506, %v489, 0
        %v529 = vsel %vm506, %v490, 0
        %v532 = vsel %vm506, %v491, 0
        %v535 = vsel %vm506, %v492, 0
        %v538 = vsel %vm506, %v493, 0
        %v541 = vsel %vm506, %v494, 0
        %v544 = vsel %vm506, %v495, 0
        %v547 = vsel %vm506, %v496, 0
        %v550 = vsel %vm506, %v497, 0
        %v553 = vsel %vm506, %v498, 0
        %vm555 = vcmask 1043456
        %v557 = vsel %vm555, %v501, 0
        %559 = vmatprep.subr.mxu0 0.0
        %560 = vmatpush1.msra.mxu0 %v499
        %561 = vmatprep.subr.mxu0 0.0
        %562 = vmatpush1.msra.mxu0 %v500
        %563 = vmatprep.subr.mxu0 0.0
        %564 = vmatpush1.msra.mxu0 %v557
        %565 = vmatprep.subr.mxu0 0.0
        %566 = vmatpush1.msra.mxu0 0.0
        %567 = vmatprep.subr.mxu0 0.0
        %568 = vmatpush1.msra.mxu0 0.0
        %569 = vmatprep.subr.mxu0 0.0
        %570 = vmatpush1.msra.mxu0 0.0
        %571 = vmatprep.subr.mxu0 0.0
        %572 = vmatpush1.msra.mxu0 0.0
        %573 = vmatprep.subr.mxu0 0.0
        %574 = vmatpush1.msra.mxu0 0.0
        %575 = vmatprep.subr.mxu0 0.0
        %576 = vmatpush1.msra.mxu0 0.0
        %577 = vmatprep.subr.mxu0 0.0
        %578 = vmatpush1.msra.mxu0 0.0
        %579 = vmatprep.subr.mxu0 0.0
        %580 = vmatpush1.msra.mxu0 0.0
        %581 = vmatprep.subr.mxu0 0.0
        %582 = vmatpush1.msra.mxu0 0.0
        %583 = vmatprep.subr.mxu0 0.0
        %584 = vmatpush1.msra.mxu0 0.0
        %585 = vmatprep.subr.mxu0 0.0
        %586 = vmatpush1.msra.mxu0 0.0
        %587 = vmatprep.subr.mxu0 0.0
        %588 = vmatpush1.msra.mxu0 0.0
        %589 = vmatprep.subr.mxu0 0.0
        %590 = vmatpush1.msra.mxu0 0.0
        %591 = vmatprep.subr.mxu0 0.0
        %592 = vmatpush1.msra.mxu0 0.0
        %593 = vmatprep.subr.mxu0 0.0
        %594 = vmatpush1.msra.mxu0 0.0
        %595 = vmatprep.subr.mxu0 0.0
        %596 = vmatpush1.msra.mxu0 0.0
        %597 = vmatprep.subr.mxu0 0.0
        %598 = vmatpush1.msra.mxu0 0.0
        %599 = vmatprep.subr.mxu0 0.0
        %600 = vmatpush1.msra.mxu0 0.0
        %601 = vmatprep.subr.mxu0 0.0
        %602 = vmatpush1.msra.mxu0 0.0
        %603 = vmatprep.subr.mxu0 0.0
        %604 = vmatpush1.msra.mxu0 0.0
        %605 = vmatprep.subr.mxu0 0.0
        %606 = vmatpush1.msra.mxu0 0.0
        %607 = vmatprep.subr.mxu0 0.0
        %608 = vmatpush1.msra.mxu0 0.0
        %609 = vmatprep.subr.mxu0 0.0
        %610 = vmatpush1.msra.mxu0 0.0
        %611 = vmatprep.subr.mxu0 0.0
        %612 = vmatpush1.msra.mxu0 0.0
        %613 = vmatprep.subr.mxu0 0.0
        %614 = vmatpush1.msra.mxu0 0.0
        %615 = vmatprep.subr.mxu0 0.0
        %616 = vmatpush1.msra.mxu0 0.0
        %617 = vmatprep.subr.mxu0 0.0
        %618 = vmatpush1.msra.mxu0 0.0
        %619 = vmatprep.subr.mxu0 0.0
        %620 = vmatpush1.msra.mxu0 0.0
        %621 = vmatprep.subr.mxu0 0.0
        %622 = vmatpush1.msra.mxu0 0.0
        %623 = vmatprep.mubr.f32.mxu0 0.0
        %624 = vmatmul.mubr.f32.gmra.mrb[0].mxu0 %v508
        %v625 = vpop.f32.mrb[0].mxu0
        %v626 = vadd.f32 %v505, %v625
        %v627 = vpop.f32.mrb[0].mxu0
        %628 = vmatprep.mubr.f32.mxu0 0.0
        %629 = vmatmul.mubr.f32.gmra.mrb[0].mxu0 %v511
        %v630 = vpop.f32.mrb[0].mxu0
        %v631 = vadd.f32 %v505, %v630
        %v632 = vpop.f32.mrb[0].mxu0
        %633 = vmatprep.mubr.f32.mxu0 0.0
        %634 = vmatmul.mubr.f32.gmra.mrb[0].mxu0 %v514
        %v635 = vpop.f32.mrb[0].mxu0
        %v636 = vadd.f32 %v505, %v635
        %v637 = vpop.f32.mrb[0].mxu0
        %638 = vmatprep.mubr.f32.mxu0 0.0
        %639 = vmatmul.mubr.f32.gmra.mrb[0].mxu0 %v517
        %v640 = vpop.f32.mrb[0].mxu0
        %v641 = vadd.f32 %v505, %v640
        %v642 = vpop.f32.mrb[0].mxu0
        %643 = vmatprep.mubr.f32.mxu0 0.0
        %644 = vmatmul.mubr.f32.gmra.mrb[0].mxu0 %v520
        %v645 = vpop.f32.mrb[0].mxu0
        %v646 = vadd.f32 %v505, %v645
        %v647 = vpop.f32.mrb[0].mxu0
        %648 = vmatprep.mubr.f32.mxu0 0.0
        %649 = vmatmul.mubr.f32.gmra.mrb[0].mxu0 %v523
        %v650 = vpop.f32.mrb[0].mxu0
        %v651 = vadd.f32 %v505, %v650
        %v652 = vpop.f32.mrb[0].mxu0
        %653 = vmatprep.mubr.f32.mxu0 0.0
        %654 = vmatmul.mubr.f32.gmra.mrb[0].mxu0 %v526
        %v655 = vpop.f32.mrb[0].mxu0
        %v656 = vadd.f32 %v505, %v655
        %v657 = vpop.f32.mrb[0].mxu0
        %658 = vmatprep.mubr.f32.mxu0 0.0
        %659 = vmatmul.mubr.f32.gmra.mrb[0].mxu0 %v529
        %v660 = vpop.f32.mrb[0].mxu0
        %v661 = vadd.f32 %v505, %v660
        %v662 = vpop.f32.mrb[0].mxu0
        %663 = vmatprep.mubr.f32.mxu0 0.0
        %664 = vmatmul.mubr.f32.gmra.mrb[0].mxu0 %v532
        %v665 = vpop.f32.mrb[0].mxu0
        %v666 = vadd.f32 %v505, %v665
        %v667 = vpop.f32.mrb[0].mxu0
        %668 = vmatprep.mubr.f32.mxu0 0.0
        %669 = vmatmul.mubr.f32.gmra.mrb[0].mxu0 %v535
        %v670 = vpop.f32.mrb[0].mxu0
        %v671 = vadd.f32 %v505, %v670
        %v672 = vpop.f32.mrb[0].mxu0
        %673 = vmatprep.mubr.f32.mxu0 0.0
        %674 = vmatmul.mubr.f32.gmra.mrb[0].mxu0 %v538
        %v675 = vpop.f32.mrb[0].mxu0
        %v676 = vadd.f32 %v505, %v675
        %v677 = vpop.f32.mrb[0].mxu0
        %678 = vmatprep.mubr.f32.mxu0 0.0
        %679 = vmatmul.mubr.f32.gmra.mrb[0].mxu0 %v541
        %v680 = vpop.f32.mrb[0].mxu0
        %v681 = vadd.f32 %v505, %v680
        %v682 = vpop.f32.mrb[0].mxu0
        %683 = vmatprep.mubr.f32.mxu0 0.0
        %684 = vmatmul.mubr.f32.gmra.mrb[0].mxu0 %v544
        %v685 = vpop.f32.mrb[0].mxu0
        %v686 = vadd.f32 %v505, %v685
        %v687 = vpop.f32.mrb[0].mxu0
        %688 = vmatprep.mubr.f32.mxu0 0.0
        %689 = vmatmul.mubr.f32.gmra.mrb[0].mxu0 %v547
        %v690 = vpop.f32.mrb[0].mxu0
        %v691 = vadd.f32 %v505, %v690
        %v692 = vpop.f32.mrb[0].mxu0
        %693 = vmatprep.mubr.f32.mxu0 0.0
        %694 = vmatmul.mubr.f32.gmra.mrb[0].mxu0 %v550
        %v695 = vpop.f32.mrb[0].mxu0
        %v696 = vadd.f32 %v505, %v695
        %v697 = vpop.f32.mrb[0].mxu0
        %698 = vmatprep.mubr.f32.mxu0 0.0
        %699 = vmatmul.mubr.f32.gmra.mrb[0].mxu0 %v553
        %v700 = vpop.f32.mrb[0].mxu0
        %v701 = vadd.f32 %v505, %v700
        %v702 = vpop.f32.mrb[0].mxu0
        %703 = vdwg.mxu0
        %v704 = vld [vmem:[%s1 + $0x20] sm:$0xff]
        %v705 = vld [vmem:[%s1 + $0x28] sm:$0xff]
        %v706 = vld [vmem:[%s1 + $0x30] sm:$0xf]
        %v707 = vlaneseq
        %v708 = vshrl.u32 %v707, 7
        %v709 = vsub.s32 2, %v708
        %v710 = vrot.slane %v282, %v709
        %v712 = vsel %vm555, %v706, 0
        %714 = vmatprep.subr.mxu0 0.0
        %715 = vmatpush1.msra.mxu0 %v704
        %716 = vmatprep.subr.mxu0 0.0
        %717 = vmatpush1.msra.mxu0 %v705
        %718 = vmatprep.subr.mxu0 0.0
        %719 = vmatpush1.msra.mxu0 %v712
        %720 = vmatprep.subr.mxu0 0.0
        %721 = vmatpush1.msra.mxu0 0.0
        %722 = vmatprep.subr.mxu0 0.0
        %723 = vmatpush1.msra.mxu0 0.0
        %724 = vmatprep.subr.mxu0 0.0
        %725 = vmatpush1.msra.mxu0 0.0
        %726 = vmatprep.subr.mxu0 0.0
        %727 = vmatpush1.msra.mxu0 0.0
        %728 = vmatprep.subr.mxu0 0.0
        %729 = vmatpush1.msra.mxu0 0.0
        %730 = vmatprep.subr.mxu0 0.0
        %731 = vmatpush1.msra.mxu0 0.0
        %732 = vmatprep.subr.mxu0 0.0
        %733 = vmatpush1.msra.mxu0 0.0
        %734 = vmatprep.subr.mxu0 0.0
        %735 = vmatpush1.msra.mxu0 0.0
        %736 = vmatprep.subr.mxu0 0.0
        %737 = vmatpush1.msra.mxu0 0.0
        %738 = vmatprep.subr.mxu0 0.0
        %739 = vmatpush1.msra.mxu0 0.0
        %740 = vmatprep.subr.mxu0 0.0
        %741 = vmatpush1.msra.mxu0 0.0
        %742 = vmatprep.subr.mxu0 0.0
        %743 = vmatpush1.msra.mxu0 0.0
        %744 = vmatprep.subr.mxu0 0.0
        %745 = vmatpush1.msra.mxu0 0.0
        %746 = vmatprep.subr.mxu0 0.0
        %747 = vmatpush1.msra.mxu0 0.0
        %748 = vmatprep.subr.mxu0 0.0
        %749 = vmatpush1.msra.mxu0 0.0
        %750 = vmatprep.subr.mxu0 0.0
        %751 = vmatpush1.msra.mxu0 0.0
        %752 = vmatprep.subr.mxu0 0.0
        %753 = vmatpush1.msra.mxu0 0.0
        %754 = vmatprep.subr.mxu0 0.0
        %755 = vmatpush1.msra.mxu0 0.0
        %756 = vmatprep.subr.mxu0 0.0
        %757 = vmatpush1.msra.mxu0 0.0
        %758 = vmatprep.subr.mxu0 0.0
        %759 = vmatpush1.msra.mxu0 0.0
        %760 = vmatprep.subr.mxu0 0.0
        %761 = vmatpush1.msra.mxu0 0.0
        %762 = vmatprep.subr.mxu0 0.0
        %763 = vmatpush1.msra.mxu0 0.0
        %764 = vmatprep.subr.mxu0 0.0
        %765 = vmatpush1.msra.mxu0 0.0
        %766 = vmatprep.subr.mxu0 0.0
        %767 = vmatpush1.msra.mxu0 0.0
        %768 = vmatprep.subr.mxu0 0.0
        %769 = vmatpush1.msra.mxu0 0.0
        %770 = vmatprep.subr.mxu0 0.0
        %771 = vmatpush1.msra.mxu0 0.0
        %772 = vmatprep.subr.mxu0 0.0
        %773 = vmatpush1.msra.mxu0 0.0
        %774 = vmatprep.subr.mxu0 0.0
        %775 = vmatpush1.msra.mxu0 0.0
        %776 = vmatprep.subr.mxu0 0.0
        %777 = vmatpush1.msra.mxu0 0.0
        %778 = vmatprep.mubr.f32.mxu0 0.0
        %779 = vmatmul.mubr.f32.gmra.mrb[0].mxu0 %v508
        %v780 = vpop.f32.mrb[0].mxu0
        %v781 = vadd.f32 %v710, %v780
        %v782 = vpop.f32.mrb[0].mxu0
        %783 = vmatprep.mubr.f32.mxu0 0.0
        %784 = vmatmul.mubr.f32.gmra.mrb[0].mxu0 %v511
        %v785 = vpop.f32.mrb[0].mxu0
        %v786 = vadd.f32 %v710, %v785
        %v787 = vpop.f32.mrb[0].mxu0
        %788 = vmatprep.mubr.f32.mxu0 0.0
        %789 = vmatmul.mubr.f32.gmra.mrb[0].mxu0 %v514
        %v790 = vpop.f32.mrb[0].mxu0
        %v791 = vadd.f32 %v710, %v790
        %v792 = vpop.f32.mrb[0].mxu0
        %793 = vmatprep.mubr.f32.mxu0 0.0
        %794 = vmatmul.mubr.f32.gmra.mrb[0].mxu0 %v517
        %v795 = vpop.f32.mrb[0].mxu0
        %v796 = vadd.f32 %v710, %v795
        %v797 = vpop.f32.mrb[0].mxu0
        %798 = vmatprep.mubr.f32.mxu0 0.0
        %799 = vmatmul.mubr.f32.gmra.mrb[0].mxu0 %v520
        %v800 = vpop.f32.mrb[0].mxu0
        %v801 = vadd.f32 %v710, %v800
        %v802 = vpop.f32.mrb[0].mxu0
        %803 = vmatprep.mubr.f32.mxu0 0.0
        %804 = vmatmul.mubr.f32.gmra.mrb[0].mxu0 %v523
        %v805 = vpop.f32.mrb[0].mxu0
        %v806 = vadd.f32 %v710, %v805
        %v807 = vpop.f32.mrb[0].mxu0
        %808 = vmatprep.mubr.f32.mxu0 0.0
        %809 = vmatmul.mubr.f32.gmra.mrb[0].mxu0 %v526
        %v810 = vpop.f32.mrb[0].mxu0
        %v811 = vadd.f32 %v710, %v810
        %v812 = vpop.f32.mrb[0].mxu0
        %813 = vmatprep.mubr.f32.mxu0 0.0
        %814 = vmatmul.mubr.f32.gmra.mrb[0].mxu0 %v529
        %v815 = vpop.f32.mrb[0].mxu0
        %v816 = vadd.f32 %v710, %v815
        %v817 = vpop.f32.mrb[0].mxu0
        %818 = vmatprep.mubr.f32.mxu0 0.0
        %819 = vmatmul.mubr.f32.gmra.mrb[0].mxu0 %v532
        %v820 = vpop.f32.mrb[0].mxu0
        %v821 = vadd.f32 %v710, %v820
        %v822 = vpop.f32.mrb[0].mxu0
        %823 = vmatprep.mubr.f32.mxu0 0.0
        %824 = vmatmul.mubr.f32.gmra.mrb[0].mxu0 %v535
        %v825 = vpop.f32.mrb[0].mxu0
        %v826 = vadd.f32 %v710, %v825
        %v827 = vpop.f32.mrb[0].mxu0
        %828 = vmatprep.mubr.f32.mxu0 0.0
        %829 = vmatmul.mubr.f32.gmra.mrb[0].mxu0 %v538
        %v830 = vpop.f32.mrb[0].mxu0
        %v831 = vadd.f32 %v710, %v830
        %v832 = vpop.f32.mrb[0].mxu0
        %833 = vmatprep.mubr.f32.mxu0 0.0
        %834 = vmatmul.mubr.f32.gmra.mrb[0].mxu0 %v541
        %v835 = vpop.f32.mrb[0].mxu0
        %v836 = vadd.f32 %v710, %v835
        %v837 = vpop.f32.mrb[0].mxu0
        %838 = vmatprep.mubr.f32.mxu0 0.0
        %839 = vmatmul.mubr.f32.gmra.mrb[0].mxu0 %v544
        %v840 = vpop.f32.mrb[0].mxu0
        %v841 = vadd.f32 %v710, %v840
        %v842 = vpop.f32.mrb[0].mxu0
        %843 = vmatprep.mubr.f32.mxu0 0.0
        %844 = vmatmul.mubr.f32.gmra.mrb[0].mxu0 %v547
        %v845 = vpop.f32.mrb[0].mxu0
        %v846 = vadd.f32 %v710, %v845
        %v847 = vpop.f32.mrb[0].mxu0
        %848 = vmatprep.mubr.f32.mxu0 0.0
        %849 = vmatmul.mubr.f32.gmra.mrb[0].mxu0 %v550
        %v850 = vpop.f32.mrb[0].mxu0
        %v851 = vadd.f32 %v710, %v850
        %v852 = vpop.f32.mrb[0].mxu0
        %853 = vmatprep.mubr.f32.mxu0 0.0
        %854 = vmatmul.mubr.f32.gmra.mrb[0].mxu0 %v553
        %v855 = vpop.f32.mrb[0].mxu0
        %v856 = vadd.f32 %v710, %v855
        %v857 = vpop.f32.mrb[0].mxu0
        %858 = vdwg.mxu0
        %v859 = vld [vmem:[%s1 + $0x38] sm:$0xff]
        %v860 = vld [vmem:[%s1 + $0x40] sm:$0xff]
        %v861 = vld [vmem:[%s1 + $0x48] sm:$0xf]
        %v862 = vlaneseq
        %v863 = vshrl.u32 %v862, 7
        %v864 = vsub.s32 3, %v863
        %v865 = vrot.slane %v282, %v864
        %v867 = vsel %vm555, %v861, 0
        %869 = vmatprep.subr.mxu0 0.0
        %870 = vmatpush1.msra.mxu0 %v859
        %871 = vmatprep.subr.mxu0 0.0
        %872 = vmatpush1.msra.mxu0 %v860
        %873 = vmatprep.subr.mxu0 0.0
        %874 = vmatpush1.msra.mxu0 %v867
        %875 = vmatprep.subr.mxu0 0.0
        %876 = vmatpush1.msra.mxu0 0.0
        %877 = vmatprep.subr.mxu0 0.0
        %878 = vmatpush1.msra.mxu0 0.0
        %879 = vmatprep.subr.mxu0 0.0
        %880 = vmatpush1.msra.mxu0 0.0
        %881 = vmatprep.subr.mxu0 0.0
        %882 = vmatpush1.msra.mxu0 0.0
        %883 = vmatprep.subr.mxu0 0.0
        %884 = vmatpush1.msra.mxu0 0.0
        %885 = vmatprep.subr.mxu0 0.0
        %886 = vmatpush1.msra.mxu0 0.0
        %887 = vmatprep.subr.mxu0 0.0
        %888 = vmatpush1.msra.mxu0 0.0
        %889 = vmatprep.subr.mxu0 0.0
        %890 = vmatpush1.msra.mxu0 0.0
        %891 = vmatprep.subr.mxu0 0.0
        %892 = vmatpush1.msra.mxu0 0.0
        %893 = vmatprep.subr.mxu0 0.0
        %894 = vmatpush1.msra.mxu0 0.0
        %895 = vmatprep.subr.mxu0 0.0
        %896 = vmatpush1.msra.mxu0 0.0
        %897 = vmatprep.subr.mxu0 0.0
        %898 = vmatpush1.msra.mxu0 0.0
        %899 = vmatprep.subr.mxu0 0.0
        %900 = vmatpush1.msra.mxu0 0.0
        %901 = vmatprep.subr.mxu0 0.0
        %902 = vmatpush1.msra.mxu0 0.0
        %903 = vmatprep.subr.mxu0 0.0
        %904 = vmatpush1.msra.mxu0 0.0
        %905 = vmatprep.subr.mxu0 0.0
        %906 = vmatpush1.msra.mxu0 0.0
        %907 = vmatprep.subr.mxu0 0.0
        %908 = vmatpush1.msra.mxu0 0.0
        %909 = vmatprep.subr.mxu0 0.0
        %910 = vmatpush1.msra.mxu0 0.0
        %911 = vmatprep.subr.mxu0 0.0
        %912 = vmatpush1.msra.mxu0 0.0
        %913 = vmatprep.subr.mxu0 0.0
        %914 = vmatpush1.msra.mxu0 0.0
        %915 = vmatprep.subr.mxu0 0.0
        %916 = vmatpush1.msra.mxu0 0.0
        %917 = vmatprep.subr.mxu0 0.0
        %918 = vmatpush1.msra.mxu0 0.0
        %919 = vmatprep.subr.mxu0 0.0
        %920 = vmatpush1.msra.mxu0 0.0
        %921 = vmatprep.subr.mxu0 0.0
        %922 = vmatpush1.msra.mxu0 0.0
        %923 = vmatprep.subr.mxu0 0.0
        %924 = vmatpush1.msra.mxu0 0.0
        %925 = vmatprep.subr.mxu0 0.0
        %926 = vmatpush1.msra.mxu0 0.0
        %927 = vmatprep.subr.mxu0 0.0
        %928 = vmatpush1.msra.mxu0 0.0
        %929 = vmatprep.subr.mxu0 0.0
        %930 = vmatpush1.msra.mxu0 0.0
        %931 = vmatprep.subr.mxu0 0.0
        %932 = vmatpush1.msra.mxu0 0.0
        %933 = vmatprep.mubr.f32.mxu0 0.0
        %934 = vmatmul.mubr.f32.gmra.mrb[0].mxu0 %v508
        %v935 = vpop.f32.mrb[0].mxu0
        %v936 = vadd.f32 %v865, %v935
        %v937 = vpop.f32.mrb[0].mxu0
        %938 = vmatprep.mubr.f32.mxu0 0.0
        %939 = vmatmul.mubr.f32.gmra.mrb[0].mxu0 %v511
        %v940 = vpop.f32.mrb[0].mxu0
        %v941 = vadd.f32 %v865, %v940
        %v942 = vpop.f32.mrb[0].mxu0
        %943 = vmatprep.mubr.f32.mxu0 0.0
        %944 = vmatmul.mubr.f32.gmra.mrb[0].mxu0 %v514
        %v945 = vpop.f32.mrb[0].mxu0
        %v946 = vadd.f32 %v865, %v945
        %v947 = vpop.f32.mrb[0].mxu0
        %948 = vmatprep.mubr.f32.mxu0 0.0
        %949 = vmatmul.mubr.f32.gmra.mrb[0].mxu0 %v517
        %v950 = vpop.f32.mrb[0].mxu0
        %v951 = vadd.f32 %v865, %v950
        %v952 = vpop.f32.mrb[0].mxu0
        %953 = vmatprep.mubr.f32.mxu0 0.0
        %954 = vmatmul.mubr.f32.gmra.mrb[0].mxu0 %v520
        %v955 = vpop.f32.mrb[0].mxu0
        %v956 = vadd.f32 %v865, %v955
        %v957 = vpop.f32.mrb[0].mxu0
        %958 = vmatprep.mubr.f32.mxu0 0.0
        %959 = vmatmul.mubr.f32.gmra.mrb[0].mxu0 %v523
        %v960 = vpop.f32.mrb[0].mxu0
        %v961 = vadd.f32 %v865, %v960
        %v962 = vpop.f32.mrb[0].mxu0
        %963 = vmatprep.mubr.f32.mxu0 0.0
        %964 = vmatmul.mubr.f32.gmra.mrb[0].mxu0 %v526
        %v965 = vpop.f32.mrb[0].mxu0
        %v966 = vadd.f32 %v865, %v965
        %v967 = vpop.f32.mrb[0].mxu0
        %968 = vmatprep.mubr.f32.mxu0 0.0
        %969 = vmatmul.mubr.f32.gmra.mrb[0].mxu0 %v529
        %v970 = vpop.f32.mrb[0].mxu0
        %v971 = vadd.f32 %v865, %v970
        %v972 = vpop.f32.mrb[0].mxu0
        %973 = vmatprep.mubr.f32.mxu0 0.0
        %974 = vmatmul.mubr.f32.gmra.mrb[0].mxu0 %v532
        %v975 = vpop.f32.mrb[0].mxu0
        %v976 = vadd.f32 %v865, %v975
        %v977 = vpop.f32.mrb[0].mxu0
        %978 = vmatprep.mubr.f32.mxu0 0.0
        %979 = vmatmul.mubr.f32.gmra.mrb[0].mxu0 %v535
        %v980 = vpop.f32.mrb[0].mxu0
        %v981 = vadd.f32 %v865, %v980
        %v982 = vpop.f32.mrb[0].mxu0
        %983 = vmatprep.mubr.f32.mxu0 0.0
        %984 = vmatmul.mubr.f32.gmra.mrb[0].mxu0 %v538
        %v985 = vpop.f32.mrb[0].mxu0
        %v986 = vadd.f32 %v865, %v985
        %v987 = vpop.f32.mrb[0].mxu0
        %988 = vmatprep.mubr.f32.mxu0 0.0
        %989 = vmatmul.mubr.f32.gmra.mrb[0].mxu0 %v541
        %v990 = vpop.f32.mrb[0].mxu0
        %v991 = vadd.f32 %v865, %v990
        %v992 = vpop.f32.mrb[0].mxu0
        %993 = vmatprep.mubr.f32.mxu0 0.0
        %994 = vmatmul.mubr.f32.gmra.mrb[0].mxu0 %v544
        %v995 = vpop.f32.mrb[0].mxu0
        %v996 = vadd.f32 %v865, %v995
        %v997 = vpop.f32.mrb[0].mxu0
        %998 = vmatprep.mubr.f32.mxu0 0.0
        %999 = vmatmul.mubr.f32.gmra.mrb[0].mxu0 %v547
        %v1000 = vpop.f32.mrb[0].mxu0
        %v1001 = vadd.f32 %v865, %v1000
        %v1002 = vpop.f32.mrb[0].mxu0
        %1003 = vmatprep.mubr.f32.mxu0 0.0
        %1004 = vmatmul.mubr.f32.gmra.mrb[0].mxu0 %v550
        %v1005 = vpop.f32.mrb[0].mxu0
        %v1006 = vadd.f32 %v865, %v1005
        %v1007 = vpop.f32.mrb[0].mxu0
        %1008 = vmatprep.mubr.f32.mxu0 0.0
        %1009 = vmatmul.mubr.f32.gmra.mrb[0].mxu0 %v553
        %v1010 = vpop.f32.mrb[0].mxu0
        %v1011 = vadd.f32 %v865, %v1010
        %v1012 = vpop.f32.mrb[0].mxu0
        %1013 = vdwg.mxu0
        %v1015 = vsel %vm506, %v626, 0
        %v1018 = vsel %vm506, %v781, 0
        %1020 = vmatprep.subr.mxu0 0.0
        %1021 = vmatpush1.xpose.msra.mxu0 %v1018
        %1022 = vmatprep.subr.mxu0 0.0
        %1023 = vmatpush1.xpose.msra.mxu0 0.0
        %1024 = vmatprep.subr.mxu0 0.0
        %1025 = vmatpush1.xpose.msra.mxu0 0.0
        %1026 = vmatprep.subr.mxu0 0.0
        %1027 = vmatpush1.xpose.msra.mxu0 0.0
        %1028 = vmatprep.subr.mxu0 0.0
        %1029 = vmatpush1.xpose.msra.mxu0 0.0
        %1030 = vmatprep.subr.mxu0 0.0
        %1031 = vmatpush1.xpose.msra.mxu0 0.0
        %1032 = vmatprep.subr.mxu0 0.0
        %1033 = vmatpush1.xpose.msra.mxu0 0.0
        %1034 = vmatprep.subr.mxu0 0.0
        %1035 = vmatpush1.xpose.msra.mxu0 0.0
        %1036 = vmatprep.subr.mxu0 0.0
        %1037 = vmatpush1.xpose.msra.mxu0 0.0
        %1038 = vmatprep.subr.mxu0 0.0
        %1039 = vmatpush1.xpose.msra.mxu0 0.0
        %1040 = vmatprep.subr.mxu0 0.0
        %1041 = vmatpush1.xpose.msra.mxu0 0.0
        %1042 = vmatprep.subr.mxu0 0.0
        %1043 = vmatpush1.xpose.msra.mxu0 0.0
        %1044 = vmatprep.subr.mxu0 0.0
        %1045 = vmatpush1.xpose.msra.mxu0 0.0
        %1046 = vmatprep.subr.mxu0 0.0
        %1047 = vmatpush1.xpose.msra.mxu0 0.0
        %1048 = vmatprep.subr.mxu0 0.0
        %1049 = vmatpush1.xpose.msra.mxu0 0.0
        %1050 = vmatprep.subr.mxu0 0.0
        %1051 = vmatpush1.xpose.msra.mxu0 0.0
        %1052 = vmatprep.subr.mxu0 0.0
        %1053 = vmatpush1.xpose.msra.mxu0 0.0
        %1054 = vmatprep.subr.mxu0 0.0
        %1055 = vmatpush1.xpose.msra.mxu0 0.0
        %1056 = vmatprep.subr.mxu0 0.0
        %1057 = vmatpush1.xpose.msra.mxu0 0.0
        %1058 = vmatprep.subr.mxu0 0.0
        %1059 = vmatpush1.xpose.msra.mxu0 0.0
        %1060 = vmatprep.subr.mxu0 0.0
        %1061 = vmatpush1.xpose.msra.mxu0 0.0
        %1062 = vmatprep.subr.mxu0 0.0
        %1063 = vmatpush1.xpose.msra.mxu0 0.0
        %1064 = vmatprep.subr.mxu0 0.0
        %1065 = vmatpush1.xpose.msra.mxu0 0.0
        %1066 = vmatprep.subr.mxu0 0.0
        %1067 = vmatpush1.xpose.msra.mxu0 0.0
        %1068 = vmatprep.subr.mxu0 0.0
        %1069 = vmatpush1.xpose.msra.mxu0 0.0
        %1070 = vmatprep.subr.mxu0 0.0
        %1071 = vmatpush1.xpose.msra.mxu0 0.0
        %1072 = vmatprep.subr.mxu0 0.0
        %1073 = vmatpush1.xpose.msra.mxu0 0.0
        %1074 = vmatprep.subr.mxu0 0.0
        %1075 = vmatpush1.xpose.msra.mxu0 0.0
        %1076 = vmatprep.subr.mxu0 0.0
        %1077 = vmatpush1.xpose.msra.mxu0 0.0
        %1078 = vmatprep.subr.mxu0 0.0
        %1079 = vmatpush1.xpose.msra.mxu0 0.0
        %1080 = vmatprep.subr.mxu0 0.0
        %1081 = vmatpush1.xpose.msra.mxu0 0.0
        %1082 = vmatprep.subr.mxu0 0.0
        %1083 = vmatpush1.xpose.msra.mxu0 0.0
        %1084 = vmatprep.mubr.f32.mxu0 0.0
        %1085 = vmatmul.mubr.f32.gmra.mrb[0].mxu0 %v1015
        %v1086 = vpop.f32.mrb[0].mxu0
        %v1087 = vadd.f32 0.0, %v1086
        %v1088 = vpop.f32.mrb[0].mxu0
        %1089 = vdwg.mxu0
        %v1091 = vsel %vm506, %v631, 0
        %v1094 = vsel %vm506, %v786, 0
        %1096 = vmatprep.subr.mxu0 0.0
        %1097 = vmatpush1.xpose.msra.mxu0 %v1094
        %1098 = vmatprep.subr.mxu0 0.0
        %1099 = vmatpush1.xpose.msra.mxu0 0.0
        %1100 = vmatprep.subr.mxu0 0.0
        %1101 = vmatpush1.xpose.msra.mxu0 0.0
        %1102 = vmatprep.subr.mxu0 0.0
        %1103 = vmatpush1.xpose.msra.mxu0 0.0
        %1104 = vmatprep.subr.mxu0 0.0
        %1105 = vmatpush1.xpose.msra.mxu0 0.0
        %1106 = vmatprep.subr.mxu0 0.0
        %1107 = vmatpush1.xpose.msra.mxu0 0.0
        %1108 = vmatprep.subr.mxu0 0.0
        %1109 = vmatpush1.xpose.msra.mxu0 0.0
        %1110 = vmatprep.subr.mxu0 0.0
        %1111 = vmatpush1.xpose.msra.mxu0 0.0
        %1112 = vmatprep.subr.mxu0 0.0
        %1113 = vmatpush1.xpose.msra.mxu0 0.0
        %1114 = vmatprep.subr.mxu0 0.0
        %1115 = vmatpush1.xpose.msra.mxu0 0.0
        %1116 = vmatprep.subr.mxu0 0.0
        %1117 = vmatpush1.xpose.msra.mxu0 0.0
        %1118 = vmatprep.subr.mxu0 0.0
        %1119 = vmatpush1.xpose.msra.mxu0 0.0
        %1120 = vmatprep.subr.mxu0 0.0
        %1121 = vmatpush1.xpose.msra.mxu0 0.0
        %1122 = vmatprep.subr.mxu0 0.0
        %1123 = vmatpush1.xpose.msra.mxu0 0.0
        %1124 = vmatprep.subr.mxu0 0.0
        %1125 = vmatpush1.xpose.msra.mxu0 0.0
        %1126 = vmatprep.subr.mxu0 0.0
        %1127 = vmatpush1.xpose.msra.mxu0 0.0
        %1128 = vmatprep.subr.mxu0 0.0
        %1129 = vmatpush1.xpose.msra.mxu0 0.0
        %1130 = vmatprep.subr.mxu0 0.0
        %1131 = vmatpush1.xpose.msra.mxu0 0.0
        %1132 = vmatprep.subr.mxu0 0.0
        %1133 = vmatpush1.xpose.msra.mxu0 0.0
        %1134 = vmatprep.subr.mxu0 0.0
        %1135 = vmatpush1.xpose.msra.mxu0 0.0
        %1136 = vmatprep.subr.mxu0 0.0
        %1137 = vmatpush1.xpose.msra.mxu0 0.0
        %1138 = vmatprep.subr.mxu0 0.0
        %1139 = vmatpush1.xpose.msra.mxu0 0.0
        %1140 = vmatprep.subr.mxu0 0.0
        %1141 = vmatpush1.xpose.msra.mxu0 0.0
        %1142 = vmatprep.subr.mxu0 0.0
        %1143 = vmatpush1.xpose.msra.mxu0 0.0
        %1144 = vmatprep.subr.mxu0 0.0
        %1145 = vmatpush1.xpose.msra.mxu0 0.0
        %1146 = vmatprep.subr.mxu0 0.0
        %1147 = vmatpush1.xpose.msra.mxu0 0.0
        %1148 = vmatprep.subr.mxu0 0.0
        %1149 = vmatpush1.xpose.msra.mxu0 0.0
        %1150 = vmatprep.subr.mxu0 0.0
        %1151 = vmatpush1.xpose.msra.mxu0 0.0
        %1152 = vmatprep.subr.mxu0 0.0
        %1153 = vmatpush1.xpose.msra.mxu0 0.0
        %1154 = vmatprep.subr.mxu0 0.0
        %1155 = vmatpush1.xpose.msra.mxu0 0.0
        %1156 = vmatprep.subr.mxu0 0.0
        %1157 = vmatpush1.xpose.msra.mxu0 0.0
        %1158 = vmatprep.subr.mxu0 0.0
        %1159 = vmatpush1.xpose.msra.mxu0 0.0
        %1160 = vmatprep.mubr.f32.mxu0 0.0
        %1161 = vmatmul.mubr.f32.gmra.mrb[0].mxu0 %v1091
        %v1162 = vpop.f32.mrb[0].mxu0
        %v1163 = vadd.f32 0.0, %v1162
        %v1164 = vpop.f32.mrb[0].mxu0
        %1165 = vdwg.mxu0
        %v1167 = vsel %vm506, %v636, 0
        %v1170 = vsel %vm506, %v791, 0
        %1172 = vmatprep.subr.mxu0 0.0
        %1173 = vmatpush1.xpose.msra.mxu0 %v1170
        %1174 = vmatprep.subr.mxu0 0.0
        %1175 = vmatpush1.xpose.msra.mxu0 0.0
        %1176 = vmatprep.subr.mxu0 0.0
        %1177 = vmatpush1.xpose.msra.mxu0 0.0
        %1178 = vmatprep.subr.mxu0 0.0
        %1179 = vmatpush1.xpose.msra.mxu0 0.0
        %1180 = vmatprep.subr.mxu0 0.0
        %1181 = vmatpush1.xpose.msra.mxu0 0.0
        %1182 = vmatprep.subr.mxu0 0.0
        %1183 = vmatpush1.xpose.msra.mxu0 0.0
        %1184 = vmatprep.subr.mxu0 0.0
        %1185 = vmatpush1.xpose.msra.mxu0 0.0
        %1186 = vmatprep.subr.mxu0 0.0
        %1187 = vmatpush1.xpose.msra.mxu0 0.0
        %1188 = vmatprep.subr.mxu0 0.0
        %1189 = vmatpush1.xpose.msra.mxu0 0.0
        %1190 = vmatprep.subr.mxu0 0.0
        %1191 = vmatpush1.xpose.msra.mxu0 0.0
        %1192 = vmatprep.subr.mxu0 0.0
        %1193 = vmatpush1.xpose.msra.mxu0 0.0
        %1194 = vmatprep.subr.mxu0 0.0
        %1195 = vmatpush1.xpose.msra.mxu0 0.0
        %1196 = vmatprep.subr.mxu0 0.0
        %1197 = vmatpush1.xpose.msra.mxu0 0.0
        %1198 = vmatprep.subr.mxu0 0.0
        %1199 = vmatpush1.xpose.msra.mxu0 0.0
        %1200 = vmatprep.subr.mxu0 0.0
        %1201 = vmatpush1.xpose.msra.mxu0 0.0
        %1202 = vmatprep.subr.mxu0 0.0
        %1203 = vmatpush1.xpose.msra.mxu0 0.0
        %1204 = vmatprep.subr.mxu0 0.0
        %1205 = vmatpush1.xpose.msra.mxu0 0.0
        %1206 = vmatprep.subr.mxu0 0.0
        %1207 = vmatpush1.xpose.msra.mxu0 0.0
        %1208 = vmatprep.subr.mxu0 0.0
        %1209 = vmatpush1.xpose.msra.mxu0 0.0
        %1210 = vmatprep.subr.mxu0 0.0
        %1211 = vmatpush1.xpose.msra.mxu0 0.0
        %1212 = vmatprep.subr.mxu0 0.0
        %1213 = vmatpush1.xpose.msra.mxu0 0.0
        %1214 = vmatprep.subr.mxu0 0.0
        %1215 = vmatpush1.xpose.msra.mxu0 0.0
        %1216 = vmatprep.subr.mxu0 0.0
        %1217 = vmatpush1.xpose.msra.mxu0 0.0
        %1218 = vmatprep.subr.mxu0 0.0
        %1219 = vmatpush1.xpose.msra.mxu0 0.0
        %1220 = vmatprep.subr.mxu0 0.0
        %1221 = vmatpush1.xpose.msra.mxu0 0.0
        %1222 = vmatprep.subr.mxu0 0.0
        %1223 = vmatpush1.xpose.msra.mxu0 0.0
        %1224 = vmatprep.subr.mxu0 0.0
        %1225 = vmatpush1.xpose.msra.mxu0 0.0
        %1226 = vmatprep.subr.mxu0 0.0
        %1227 = vmatpush1.xpose.msra.mxu0 0.0
        %1228 = vmatprep.subr.mxu0 0.0
        %1229 = vmatpush1.xpose.msra.mxu0 0.0
        %1230 = vmatprep.subr.mxu0 0.0
        %1231 = vmatpush1.xpose.msra.mxu0 0.0
        %1232 = vmatprep.subr.mxu0 0.0
        %1233 = vmatpush1.xpose.msra.mxu0 0.0
        %1234 = vmatprep.subr.mxu0 0.0
        %1235 = vmatpush1.xpose.msra.mxu0 0.0
        %1236 = vmatprep.mubr.f32.mxu0 0.0
        %1237 = vmatmul.mubr.f32.gmra.mrb[0].mxu0 %v1167
        %v1238 = vpop.f32.mrb[0].mxu0
        %v1239 = vadd.f32 0.0, %v1238
        %v1240 = vpop.f32.mrb[0].mxu0
        %1241 = vdwg.mxu0
        %v1243 = vsel %vm506, %v641, 0
        %v1246 = vsel %vm506, %v796, 0
        %1248 = vmatprep.subr.mxu0 0.0
        %1249 = vmatpush1.xpose.msra.mxu0 %v1246
        %1250 = vmatprep.subr.mxu0 0.0
        %1251 = vmatpush1.xpose.msra.mxu0 0.0
        %1252 = vmatprep.subr.mxu0 0.0
        %1253 = vmatpush1.xpose.msra.mxu0 0.0
        %1254 = vmatprep.subr.mxu0 0.0
        %1255 = vmatpush1.xpose.msra.mxu0 0.0
        %1256 = vmatprep.subr.mxu0 0.0
        %1257 = vmatpush1.xpose.msra.mxu0 0.0
        %1258 = vmatprep.subr.mxu0 0.0
        %1259 = vmatpush1.xpose.msra.mxu0 0.0
        %1260 = vmatprep.subr.mxu0 0.0
        %1261 = vmatpush1.xpose.msra.mxu0 0.0
        %1262 = vmatprep.subr.mxu0 0.0
        %1263 = vmatpush1.xpose.msra.mxu0 0.0
        %1264 = vmatprep.subr.mxu0 0.0
        %1265 = vmatpush1.xpose.msra.mxu0 0.0
        %1266 = vmatprep.subr.mxu0 0.0
        %1267 = vmatpush1.xpose.msra.mxu0 0.0
        %1268 = vmatprep.subr.mxu0 0.0
        %1269 = vmatpush1.xpose.msra.mxu0 0.0
        %1270 = vmatprep.subr.mxu0 0.0
        %1271 = vmatpush1.xpose.msra.mxu0 0.0
        %1272 = vmatprep.subr.mxu0 0.0
        %1273 = vmatpush1.xpose.msra.mxu0 0.0
        %1274 = vmatprep.subr.mxu0 0.0
        %1275 = vmatpush1.xpose.msra.mxu0 0.0
        %1276 = vmatprep.subr.mxu0 0.0
        %1277 = vmatpush1.xpose.msra.mxu0 0.0
        %1278 = vmatprep.subr.mxu0 0.0
        %1279 = vmatpush1.xpose.msra.mxu0 0.0
        %1280 = vmatprep.subr.mxu0 0.0
        %1281 = vmatpush1.xpose.msra.mxu0 0.0
        %1282 = vmatprep.subr.mxu0 0.0
        %1283 = vmatpush1.xpose.msra.mxu0 0.0
        %1284 = vmatprep.subr.mxu0 0.0
        %1285 = vmatpush1.xpose.msra.mxu0 0.0
        %1286 = vmatprep.subr.mxu0 0.0
        %1287 = vmatpush1.xpose.msra.mxu0 0.0
        %1288 = vmatprep.subr.mxu0 0.0
        %1289 = vmatpush1.xpose.msra.mxu0 0.0
        %1290 = vmatprep.subr.mxu0 0.0
        %1291 = vmatpush1.xpose.msra.mxu0 0.0
        %1292 = vmatprep.subr.mxu0 0.0
        %1293 = vmatpush1.xpose.msra.mxu0 0.0
        %1294 = vmatprep.subr.mxu0 0.0
        %1295 = vmatpush1.xpose.msra.mxu0 0.0
        %1296 = vmatprep.subr.mxu0 0.0
        %1297 = vmatpush1.xpose.msra.mxu0 0.0
        %1298 = vmatprep.subr.mxu0 0.0
        %1299 = vmatpush1.xpose.msra.mxu0 0.0
        %1300 = vmatprep.subr.mxu0 0.0
        %1301 = vmatpush1.xpose.msra.mxu0 0.0
        %1302 = vmatprep.subr.mxu0 0.0
        %1303 = vmatpush1.xpose.msra.mxu0 0.0
        %1304 = vmatprep.subr.mxu0 0.0
        %1305 = vmatpush1.xpose.msra.mxu0 0.0
        %1306 = vmatprep.subr.mxu0 0.0
        %1307 = vmatpush1.xpose.msra.mxu0 0.0
        %1308 = vmatprep.subr.mxu0 0.0
        %1309 = vmatpush1.xpose.msra.mxu0 0.0
        %1310 = vmatprep.subr.mxu0 0.0
        %1311 = vmatpush1.xpose.msra.mxu0 0.0
        %1312 = vmatprep.mubr.f32.mxu0 0.0
        %1313 = vmatmul.mubr.f32.gmra.mrb[0].mxu0 %v1243
        %v1314 = vpop.f32.mrb[0].mxu0
        %v1315 = vadd.f32 0.0, %v1314
        %v1316 = vpop.f32.mrb[0].mxu0
        %1317 = vdwg.mxu0
        %v1319 = vsel %vm506, %v646, 0
        %v1322 = vsel %vm506, %v801, 0
        %1324 = vmatprep.subr.mxu0 0.0
        %1325 = vmatpush1.xpose.msra.mxu0 %v1322
        %1326 = vmatprep.subr.mxu0 0.0
        %1327 = vmatpush1.xpose.msra.mxu0 0.0
        %1328 = vmatprep.subr.mxu0 0.0
        %1329 = vmatpush1.xpose.msra.mxu0 0.0
        %1330 = vmatprep.subr.mxu0 0.0
        %1331 = vmatpush1.xpose.msra.mxu0 0.0
        %1332 = vmatprep.subr.mxu0 0.0
        %1333 = vmatpush1.xpose.msra.mxu0 0.0
        %1334 = vmatprep.subr.mxu0 0.0
        %1335 = vmatpush1.xpose.msra.mxu0 0.0
        %1336 = vmatprep.subr.mxu0 0.0
        %1337 = vmatpush1.xpose.msra.mxu0 0.0
        %1338 = vmatprep.subr.mxu0 0.0
        %1339 = vmatpush1.xpose.msra.mxu0 0.0
        %1340 = vmatprep.subr.mxu0 0.0
        %1341 = vmatpush1.xpose.msra.mxu0 0.0
        %1342 = vmatprep.subr.mxu0 0.0
        %1343 = vmatpush1.xpose.msra.mxu0 0.0
        %1344 = vmatprep.subr.mxu0 0.0
        %1345 = vmatpush1.xpose.msra.mxu0 0.0
        %1346 = vmatprep.subr.mxu0 0.0
        %1347 = vmatpush1.xpose.msra.mxu0 0.0
        %1348 = vmatprep.subr.mxu0 0.0
        %1349 = vmatpush1.xpose.msra.mxu0 0.0
        %1350 = vmatprep.subr.mxu0 0.0
        %1351 = vmatpush1.xpose.msra.mxu0 0.0
        %1352 = vmatprep.subr.mxu0 0.0
        %1353 = vmatpush1.xpose.msra.mxu0 0.0
        %1354 = vmatprep.subr.mxu0 0.0
        %1355 = vmatpush1.xpose.msra.mxu0 0.0
        %1356 = vmatprep.subr.mxu0 0.0
        %1357 = vmatpush1.xpose.msra.mxu0 0.0
        %1358 = vmatprep.subr.mxu0 0.0
        %1359 = vmatpush1.xpose.msra.mxu0 0.0
        %1360 = vmatprep.subr.mxu0 0.0
        %1361 = vmatpush1.xpose.msra.mxu0 0.0
        %1362 = vmatprep.subr.mxu0 0.0
        %1363 = vmatpush1.xpose.msra.mxu0 0.0
        %1364 = vmatprep.subr.mxu0 0.0
        %1365 = vmatpush1.xpose.msra.mxu0 0.0
        %1366 = vmatprep.subr.mxu0 0.0
        %1367 = vmatpush1.xpose.msra.mxu0 0.0
        %1368 = vmatprep.subr.mxu0 0.0
        %1369 = vmatpush1.xpose.msra.mxu0 0.0
        %1370 = vmatprep.subr.mxu0 0.0
        %1371 = vmatpush1.xpose.msra.mxu0 0.0
        %1372 = vmatprep.subr.mxu0 0.0
        %1373 = vmatpush1.xpose.msra.mxu0 0.0
        %1374 = vmatprep.subr.mxu0 0.0
        %1375 = vmatpush1.xpose.msra.mxu0 0.0
        %1376 = vmatprep.subr.mxu0 0.0
        %1377 = vmatpush1.xpose.msra.mxu0 0.0
        %1378 = vmatprep.subr.mxu0 0.0
        %1379 = vmatpush1.xpose.msra.mxu0 0.0
        %1380 = vmatprep.subr.mxu0 0.0
        %1381 = vmatpush1.xpose.msra.mxu0 0.0
        %1382 = vmatprep.subr.mxu0 0.0
        %1383 = vmatpush1.xpose.msra.mxu0 0.0
        %1384 = vmatprep.subr.mxu0 0.0
        %1385 = vmatpush1.xpose.msra.mxu0 0.0
        %1386 = vmatprep.subr.mxu0 0.0
        %1387 = vmatpush1.xpose.msra.mxu0 0.0
        %1388 = vmatprep.mubr.f32.mxu0 0.0
        %1389 = vmatmul.mubr.f32.gmra.mrb[0].mxu0 %v1319
        %v1390 = vpop.f32.mrb[0].mxu0
        %v1391 = vadd.f32 0.0, %v1390
        %v1392 = vpop.f32.mrb[0].mxu0
        %1393 = vdwg.mxu0
        %v1395 = vsel %vm506, %v651, 0
        %v1398 = vsel %vm506, %v806, 0
        %1400 = vmatprep.subr.mxu0 0.0
        %1401 = vmatpush1.xpose.msra.mxu0 %v1398
        %1402 = vmatprep.subr.mxu0 0.0
        %1403 = vmatpush1.xpose.msra.mxu0 0.0
        %1404 = vmatprep.subr.mxu0 0.0
        %1405 = vmatpush1.xpose.msra.mxu0 0.0
        %1406 = vmatprep.subr.mxu0 0.0
        %1407 = vmatpush1.xpose.msra.mxu0 0.0
        %1408 = vmatprep.subr.mxu0 0.0
        %1409 = vmatpush1.xpose.msra.mxu0 0.0
        %1410 = vmatprep.subr.mxu0 0.0
        %1411 = vmatpush1.xpose.msra.mxu0 0.0
        %1412 = vmatprep.subr.mxu0 0.0
        %1413 = vmatpush1.xpose.msra.mxu0 0.0
        %1414 = vmatprep.subr.mxu0 0.0
        %1415 = vmatpush1.xpose.msra.mxu0 0.0
        %1416 = vmatprep.subr.mxu0 0.0
        %1417 = vmatpush1.xpose.msra.mxu0 0.0
        %1418 = vmatprep.subr.mxu0 0.0
        %1419 = vmatpush1.xpose.msra.mxu0 0.0
        %1420 = vmatprep.subr.mxu0 0.0
        %1421 = vmatpush1.xpose.msra.mxu0 0.0
        %1422 = vmatprep.subr.mxu0 0.0
        %1423 = vmatpush1.xpose.msra.mxu0 0.0
        %1424 = vmatprep.subr.mxu0 0.0
        %1425 = vmatpush1.xpose.msra.mxu0 0.0
        %1426 = vmatprep.subr.mxu0 0.0
        %1427 = vmatpush1.xpose.msra.mxu0 0.0
        %1428 = vmatprep.subr.mxu0 0.0
        %1429 = vmatpush1.xpose.msra.mxu0 0.0
        %1430 = vmatprep.subr.mxu0 0.0
        %1431 = vmatpush1.xpose.msra.mxu0 0.0
        %1432 = vmatprep.subr.mxu0 0.0
        %1433 = vmatpush1.xpose.msra.mxu0 0.0
        %1434 = vmatprep.subr.mxu0 0.0
        %1435 = vmatpush1.xpose.msra.mxu0 0.0
        %1436 = vmatprep.subr.mxu0 0.0
        %1437 = vmatpush1.xpose.msra.mxu0 0.0
        %1438 = vmatprep.subr.mxu0 0.0
        %1439 = vmatpush1.xpose.msra.mxu0 0.0
        %1440 = vmatprep.subr.mxu0 0.0
        %1441 = vmatpush1.xpose.msra.mxu0 0.0
        %1442 = vmatprep.subr.mxu0 0.0
        %1443 = vmatpush1.xpose.msra.mxu0 0.0
        %1444 = vmatprep.subr.mxu0 0.0
        %1445 = vmatpush1.xpose.msra.mxu0 0.0
        %1446 = vmatprep.subr.mxu0 0.0
        %1447 = vmatpush1.xpose.msra.mxu0 0.0
        %1448 = vmatprep.subr.mxu0 0.0
        %1449 = vmatpush1.xpose.msra.mxu0 0.0
        %1450 = vmatprep.subr.mxu0 0.0
        %1451 = vmatpush1.xpose.msra.mxu0 0.0
        %1452 = vmatprep.subr.mxu0 0.0
        %1453 = vmatpush1.xpose.msra.mxu0 0.0
        %1454 = vmatprep.subr.mxu0 0.0
        %1455 = vmatpush1.xpose.msra.mxu0 0.0
        %1456 = vmatprep.subr.mxu0 0.0
        %1457 = vmatpush1.xpose.msra.mxu0 0.0
        %1458 = vmatprep.subr.mxu0 0.0
        %1459 = vmatpush1.xpose.msra.mxu0 0.0
        %1460 = vmatprep.subr.mxu0 0.0
        %1461 = vmatpush1.xpose.msra.mxu0 0.0
        %1462 = vmatprep.subr.mxu0 0.0
        %1463 = vmatpush1.xpose.msra.mxu0 0.0
        %1464 = vmatprep.mubr.f32.mxu0 0.0
        %1465 = vmatmul.mubr.f32.gmra.mrb[0].mxu0 %v1395
        %v1466 = vpop.f32.mrb[0].mxu0
        %v1467 = vadd.f32 0.0, %v1466
        %v1468 = vpop.f32.mrb[0].mxu0
        %1469 = vdwg.mxu0
        %v1471 = vsel %vm506, %v656, 0
        %v1474 = vsel %vm506, %v811, 0
        %1476 = vmatprep.subr.mxu0 0.0
        %1477 = vmatpush1.xpose.msra.mxu0 %v1474
        %1478 = vmatprep.subr.mxu0 0.0
        %1479 = vmatpush1.xpose.msra.mxu0 0.0
        %1480 = vmatprep.subr.mxu0 0.0
        %1481 = vmatpush1.xpose.msra.mxu0 0.0
        %1482 = vmatprep.subr.mxu0 0.0
        %1483 = vmatpush1.xpose.msra.mxu0 0.0
        %1484 = vmatprep.subr.mxu0 0.0
        %1485 = vmatpush1.xpose.msra.mxu0 0.0
        %1486 = vmatprep.subr.mxu0 0.0
        %1487 = vmatpush1.xpose.msra.mxu0 0.0
        %1488 = vmatprep.subr.mxu0 0.0
        %1489 = vmatpush1.xpose.msra.mxu0 0.0
        %1490 = vmatprep.subr.mxu0 0.0
        %1491 = vmatpush1.xpose.msra.mxu0 0.0
        %1492 = vmatprep.subr.mxu0 0.0
        %1493 = vmatpush1.xpose.msra.mxu0 0.0
        %1494 = vmatprep.subr.mxu0 0.0
        %1495 = vmatpush1.xpose.msra.mxu0 0.0
        %1496 = vmatprep.subr.mxu0 0.0
        %1497 = vmatpush1.xpose.msra.mxu0 0.0
        %1498 = vmatprep.subr.mxu0 0.0
        %1499 = vmatpush1.xpose.msra.mxu0 0.0
        %1500 = vmatprep.subr.mxu0 0.0
        %1501 = vmatpush1.xpose.msra.mxu0 0.0
        %1502 = vmatprep.subr.mxu0 0.0
        %1503 = vmatpush1.xpose.msra.mxu0 0.0
        %1504 = vmatprep.subr.mxu0 0.0
        %1505 = vmatpush1.xpose.msra.mxu0 0.0
        %1506 = vmatprep.subr.mxu0 0.0
        %1507 = vmatpush1.xpose.msra.mxu0 0.0
        %1508 = vmatprep.subr.mxu0 0.0
        %1509 = vmatpush1.xpose.msra.mxu0 0.0
        %1510 = vmatprep.subr.mxu0 0.0
        %1511 = vmatpush1.xpose.msra.mxu0 0.0
        %1512 = vmatprep.subr.mxu0 0.0
        %1513 = vmatpush1.xpose.msra.mxu0 0.0
        %1514 = vmatprep.subr.mxu0 0.0
        %1515 = vmatpush1.xpose.msra.mxu0 0.0
        %1516 = vmatprep.subr.mxu0 0.0
        %1517 = vmatpush1.xpose.msra.mxu0 0.0
        %1518 = vmatprep.subr.mxu0 0.0
        %1519 = vmatpush1.xpose.msra.mxu0 0.0
        %1520 = vmatprep.subr.mxu0 0.0
        %1521 = vmatpush1.xpose.msra.mxu0 0.0
        %1522 = vmatprep.subr.mxu0 0.0
        %1523 = vmatpush1.xpose.msra.mxu0 0.0
        %1524 = vmatprep.subr.mxu0 0.0
        %1525 = vmatpush1.xpose.msra.mxu0 0.0
        %1526 = vmatprep.subr.mxu0 0.0
        %1527 = vmatpush1.xpose.msra.mxu0 0.0
        %1528 = vmatprep.subr.mxu0 0.0
        %1529 = vmatpush1.xpose.msra.mxu0 0.0
        %1530 = vmatprep.subr.mxu0 0.0
        %1531 = vmatpush1.xpose.msra.mxu0 0.0
        %1532 = vmatprep.subr.mxu0 0.0
        %1533 = vmatpush1.xpose.msra.mxu0 0.0
        %1534 = vmatprep.subr.mxu0 0.0
        %1535 = vmatpush1.xpose.msra.mxu0 0.0
        %1536 = vmatprep.subr.mxu0 0.0
        %1537 = vmatpush1.xpose.msra.mxu0 0.0
        %1538 = vmatprep.subr.mxu0 0.0
        %1539 = vmatpush1.xpose.msra.mxu0 0.0
        %1540 = vmatprep.mubr.f32.mxu0 0.0
        %1541 = vmatmul.mubr.f32.gmra.mrb[0].mxu0 %v1471
        %v1542 = vpop.f32.mrb[0].mxu0
        %v1543 = vadd.f32 0.0, %v1542
        %v1544 = vpop.f32.mrb[0].mxu0
        %1545 = vdwg.mxu0
        %v1547 = vsel %vm506, %v661, 0
        %v1550 = vsel %vm506, %v816, 0
        %1552 = vmatprep.subr.mxu0 0.0
        %1553 = vmatpush1.xpose.msra.mxu0 %v1550
        %1554 = vmatprep.subr.mxu0 0.0
        %1555 = vmatpush1.xpose.msra.mxu0 0.0
        %1556 = vmatprep.subr.mxu0 0.0
        %1557 = vmatpush1.xpose.msra.mxu0 0.0
        %1558 = vmatprep.subr.mxu0 0.0
        %1559 = vmatpush1.xpose.msra.mxu0 0.0
        %1560 = vmatprep.subr.mxu0 0.0
        %1561 = vmatpush1.xpose.msra.mxu0 0.0
        %1562 = vmatprep.subr.mxu0 0.0
        %1563 = vmatpush1.xpose.msra.mxu0 0.0
        %1564 = vmatprep.subr.mxu0 0.0
        %1565 = vmatpush1.xpose.msra.mxu0 0.0
        %1566 = vmatprep.subr.mxu0 0.0
        %1567 = vmatpush1.xpose.msra.mxu0 0.0
        %1568 = vmatprep.subr.mxu0 0.0
        %1569 = vmatpush1.xpose.msra.mxu0 0.0
        %1570 = vmatprep.subr.mxu0 0.0
        %1571 = vmatpush1.xpose.msra.mxu0 0.0
        %1572 = vmatprep.subr.mxu0 0.0
        %1573 = vmatpush1.xpose.msra.mxu0 0.0
        %1574 = vmatprep.subr.mxu0 0.0
        %1575 = vmatpush1.xpose.msra.mxu0 0.0
        %1576 = vmatprep.subr.mxu0 0.0
        %1577 = vmatpush1.xpose.msra.mxu0 0.0
        %1578 = vmatprep.subr.mxu0 0.0
        %1579 = vmatpush1.xpose.msra.mxu0 0.0
        %1580 = vmatprep.subr.mxu0 0.0
        %1581 = vmatpush1.xpose.msra.mxu0 0.0
        %1582 = vmatprep.subr.mxu0 0.0
        %1583 = vmatpush1.xpose.msra.mxu0 0.0
        %1584 = vmatprep.subr.mxu0 0.0
        %1585 = vmatpush1.xpose.msra.mxu0 0.0
        %1586 = vmatprep.subr.mxu0 0.0
        %1587 = vmatpush1.xpose.msra.mxu0 0.0
        %1588 = vmatprep.subr.mxu0 0.0
        %1589 = vmatpush1.xpose.msra.mxu0 0.0
        %1590 = vmatprep.subr.mxu0 0.0
        %1591 = vmatpush1.xpose.msra.mxu0 0.0
        %1592 = vmatprep.subr.mxu0 0.0
        %1593 = vmatpush1.xpose.msra.mxu0 0.0
        %1594 = vmatprep.subr.mxu0 0.0
        %1595 = vmatpush1.xpose.msra.mxu0 0.0
        %1596 = vmatprep.subr.mxu0 0.0
        %1597 = vmatpush1.xpose.msra.mxu0 0.0
        %1598 = vmatprep.subr.mxu0 0.0
        %1599 = vmatpush1.xpose.msra.mxu0 0.0
        %1600 = vmatprep.subr.mxu0 0.0
        %1601 = vmatpush1.xpose.msra.mxu0 0.0
        %1602 = vmatprep.subr.mxu0 0.0
        %1603 = vmatpush1.xpose.msra.mxu0 0.0
        %1604 = vmatprep.subr.mxu0 0.0
        %1605 = vmatpush1.xpose.msra.mxu0 0.0
        %1606 = vmatprep.subr.mxu0 0.0
        %1607 = vmatpush1.xpose.msra.mxu0 0.0
        %1608 = vmatprep.subr.mxu0 0.0
        %1609 = vmatpush1.xpose.msra.mxu0 0.0
        %1610 = vmatprep.subr.mxu0 0.0
        %1611 = vmatpush1.xpose.msra.mxu0 0.0
        %1612 = vmatprep.subr.mxu0 0.0
        %1613 = vmatpush1.xpose.msra.mxu0 0.0
        %1614 = vmatprep.subr.mxu0 0.0
        %1615 = vmatpush1.xpose.msra.mxu0 0.0
        %1616 = vmatprep.mubr.f32.mxu0 0.0
        %1617 = vmatmul.mubr.f32.gmra.mrb[0].mxu0 %v1547
        %v1618 = vpop.f32.mrb[0].mxu0
        %v1619 = vadd.f32 0.0, %v1618
        %v1620 = vpop.f32.mrb[0].mxu0
        %1621 = vdwg.mxu0
        %v1623 = vsel %vm506, %v666, 0
        %v1626 = vsel %vm506, %v821, 0
        %1628 = vmatprep.subr.mxu0 0.0
        %1629 = vmatpush1.xpose.msra.mxu0 %v1626
        %1630 = vmatprep.subr.mxu0 0.0
        %1631 = vmatpush1.xpose.msra.mxu0 0.0
        %1632 = vmatprep.subr.mxu0 0.0
        %1633 = vmatpush1.xpose.msra.mxu0 0.0
        %1634 = vmatprep.subr.mxu0 0.0
        %1635 = vmatpush1.xpose.msra.mxu0 0.0
        %1636 = vmatprep.subr.mxu0 0.0
        %1637 = vmatpush1.xpose.msra.mxu0 0.0
        %1638 = vmatprep.subr.mxu0 0.0
        %1639 = vmatpush1.xpose.msra.mxu0 0.0
        %1640 = vmatprep.subr.mxu0 0.0
        %1641 = vmatpush1.xpose.msra.mxu0 0.0
        %1642 = vmatprep.subr.mxu0 0.0
        %1643 = vmatpush1.xpose.msra.mxu0 0.0
        %1644 = vmatprep.subr.mxu0 0.0
        %1645 = vmatpush1.xpose.msra.mxu0 0.0
        %1646 = vmatprep.subr.mxu0 0.0
        %1647 = vmatpush1.xpose.msra.mxu0 0.0
        %1648 = vmatprep.subr.mxu0 0.0
        %1649 = vmatpush1.xpose.msra.mxu0 0.0
        %1650 = vmatprep.subr.mxu0 0.0
        %1651 = vmatpush1.xpose.msra.mxu0 0.0
        %1652 = vmatprep.subr.mxu0 0.0
        %1653 = vmatpush1.xpose.msra.mxu0 0.0
        %1654 = vmatprep.subr.mxu0 0.0
        %1655 = vmatpush1.xpose.msra.mxu0 0.0
        %1656 = vmatprep.subr.mxu0 0.0
        %1657 = vmatpush1.xpose.msra.mxu0 0.0
        %1658 = vmatprep.subr.mxu0 0.0
        %1659 = vmatpush1.xpose.msra.mxu0 0.0
        %1660 = vmatprep.subr.mxu0 0.0
        %1661 = vmatpush1.xpose.msra.mxu0 0.0
        %1662 = vmatprep.subr.mxu0 0.0
        %1663 = vmatpush1.xpose.msra.mxu0 0.0
        %1664 = vmatprep.subr.mxu0 0.0
        %1665 = vmatpush1.xpose.msra.mxu0 0.0
        %1666 = vmatprep.subr.mxu0 0.0
        %1667 = vmatpush1.xpose.msra.mxu0 0.0
        %1668 = vmatprep.subr.mxu0 0.0
        %1669 = vmatpush1.xpose.msra.mxu0 0.0
        %1670 = vmatprep.subr.mxu0 0.0
        %1671 = vmatpush1.xpose.msra.mxu0 0.0
        %1672 = vmatprep.subr.mxu0 0.0
        %1673 = vmatpush1.xpose.msra.mxu0 0.0
        %1674 = vmatprep.subr.mxu0 0.0
        %1675 = vmatpush1.xpose.msra.mxu0 0.0
        %1676 = vmatprep.subr.mxu0 0.0
        %1677 = vmatpush1.xpose.msra.mxu0 0.0
        %1678 = vmatprep.subr.mxu0 0.0
        %1679 = vmatpush1.xpose.msra.mxu0 0.0
        %1680 = vmatprep.subr.mxu0 0.0
        %1681 = vmatpush1.xpose.msra.mxu0 0.0
        %1682 = vmatprep.subr.mxu0 0.0
        %1683 = vmatpush1.xpose.msra.mxu0 0.0
        %1684 = vmatprep.subr.mxu0 0.0
        %1685 = vmatpush1.xpose.msra.mxu0 0.0
        %1686 = vmatprep.subr.mxu0 0.0
        %1687 = vmatpush1.xpose.msra.mxu0 0.0
        %1688 = vmatprep.subr.mxu0 0.0
        %1689 = vmatpush1.xpose.msra.mxu0 0.0
        %1690 = vmatprep.subr.mxu0 0.0
        %1691 = vmatpush1.xpose.msra.mxu0 0.0
        %1692 = vmatprep.mubr.f32.mxu0 0.0
        %1693 = vmatmul.mubr.f32.gmra.mrb[0].mxu0 %v1623
        %v1694 = vpop.f32.mrb[0].mxu0
        %v1695 = vadd.f32 0.0, %v1694
        %v1696 = vpop.f32.mrb[0].mxu0
        %1697 = vdwg.mxu0
        %v1699 = vsel %vm506, %v671, 0
        %v1702 = vsel %vm506, %v826, 0
        %1704 = vmatprep.subr.mxu0 0.0
        %1705 = vmatpush1.xpose.msra.mxu0 %v1702
        %1706 = vmatprep.subr.mxu0 0.0
        %1707 = vmatpush1.xpose.msra.mxu0 0.0
        %1708 = vmatprep.subr.mxu0 0.0
        %1709 = vmatpush1.xpose.msra.mxu0 0.0
        %1710 = vmatprep.subr.mxu0 0.0
        %1711 = vmatpush1.xpose.msra.mxu0 0.0
        %1712 = vmatprep.subr.mxu0 0.0
        %1713 = vmatpush1.xpose.msra.mxu0 0.0
        %1714 = vmatprep.subr.mxu0 0.0
        %1715 = vmatpush1.xpose.msra.mxu0 0.0
        %1716 = vmatprep.subr.mxu0 0.0
        %1717 = vmatpush1.xpose.msra.mxu0 0.0
        %1718 = vmatprep.subr.mxu0 0.0
        %1719 = vmatpush1.xpose.msra.mxu0 0.0
        %1720 = vmatprep.subr.mxu0 0.0
        %1721 = vmatpush1.xpose.msra.mxu0 0.0
        %1722 = vmatprep.subr.mxu0 0.0
        %1723 = vmatpush1.xpose.msra.mxu0 0.0
        %1724 = vmatprep.subr.mxu0 0.0
        %1725 = vmatpush1.xpose.msra.mxu0 0.0
        %1726 = vmatprep.subr.mxu0 0.0
        %1727 = vmatpush1.xpose.msra.mxu0 0.0
        %1728 = vmatprep.subr.mxu0 0.0
        %1729 = vmatpush1.xpose.msra.mxu0 0.0
        %1730 = vmatprep.subr.mxu0 0.0
        %1731 = vmatpush1.xpose.msra.mxu0 0.0
        %1732 = vmatprep.subr.mxu0 0.0
        %1733 = vmatpush1.xpose.msra.mxu0 0.0
        %1734 = vmatprep.subr.mxu0 0.0
        %1735 = vmatpush1.xpose.msra.mxu0 0.0
        %1736 = vmatprep.subr.mxu0 0.0
        %1737 = vmatpush1.xpose.msra.mxu0 0.0
        %1738 = vmatprep.subr.mxu0 0.0
        %1739 = vmatpush1.xpose.msra.mxu0 0.0
        %1740 = vmatprep.subr.mxu0 0.0
        %1741 = vmatpush1.xpose.msra.mxu0 0.0
        %1742 = vmatprep.subr.mxu0 0.0
        %1743 = vmatpush1.xpose.msra.mxu0 0.0
        %1744 = vmatprep.subr.mxu0 0.0
        %1745 = vmatpush1.xpose.msra.mxu0 0.0
        %1746 = vmatprep.subr.mxu0 0.0
        %1747 = vmatpush1.xpose.msra.mxu0 0.0
        %1748 = vmatprep.subr.mxu0 0.0
        %1749 = vmatpush1.xpose.msra.mxu0 0.0
        %1750 = vmatprep.subr.mxu0 0.0
        %1751 = vmatpush1.xpose.msra.mxu0 0.0
        %1752 = vmatprep.subr.mxu0 0.0
        %1753 = vmatpush1.xpose.msra.mxu0 0.0
        %1754 = vmatprep.subr.mxu0 0.0
        %1755 = vmatpush1.xpose.msra.mxu0 0.0
        %1756 = vmatprep.subr.mxu0 0.0
        %1757 = vmatpush1.xpose.msra.mxu0 0.0
        %1758 = vmatprep.subr.mxu0 0.0
        %1759 = vmatpush1.xpose.msra.mxu0 0.0
        %1760 = vmatprep.subr.mxu0 0.0
        %1761 = vmatpush1.xpose.msra.mxu0 0.0
        %1762 = vmatprep.subr.mxu0 0.0
        %1763 = vmatpush1.xpose.msra.mxu0 0.0
        %1764 = vmatprep.subr.mxu0 0.0
        %1765 = vmatpush1.xpose.msra.mxu0 0.0
        %1766 = vmatprep.subr.mxu0 0.0
        %1767 = vmatpush1.xpose.msra.mxu0 0.0
        %1768 = vmatprep.mubr.f32.mxu0 0.0
        %1769 = vmatmul.mubr.f32.gmra.mrb[0].mxu0 %v1699
        %v1770 = vpop.f32.mrb[0].mxu0
        %v1771 = vadd.f32 0.0, %v1770
        %v1772 = vpop.f32.mrb[0].mxu0
        %1773 = vdwg.mxu0
        %v1775 = vsel %vm506, %v676, 0
        %v1778 = vsel %vm506, %v831, 0
        %1780 = vmatprep.subr.mxu0 0.0
        %1781 = vmatpush1.xpose.msra.mxu0 %v1778
        %1782 = vmatprep.subr.mxu0 0.0
        %1783 = vmatpush1.xpose.msra.mxu0 0.0
        %1784 = vmatprep.subr.mxu0 0.0
        %1785 = vmatpush1.xpose.msra.mxu0 0.0
        %1786 = vmatprep.subr.mxu0 0.0
        %1787 = vmatpush1.xpose.msra.mxu0 0.0
        %1788 = vmatprep.subr.mxu0 0.0
        %1789 = vmatpush1.xpose.msra.mxu0 0.0
        %1790 = vmatprep.subr.mxu0 0.0
        %1791 = vmatpush1.xpose.msra.mxu0 0.0
        %1792 = vmatprep.subr.mxu0 0.0
        %1793 = vmatpush1.xpose.msra.mxu0 0.0
        %1794 = vmatprep.subr.mxu0 0.0
        %1795 = vmatpush1.xpose.msra.mxu0 0.0
        %1796 = vmatprep.subr.mxu0 0.0
        %1797 = vmatpush1.xpose.msra.mxu0 0.0
        %1798 = vmatprep.subr.mxu0 0.0
        %1799 = vmatpush1.xpose.msra.mxu0 0.0
        %1800 = vmatprep.subr.mxu0 0.0
        %1801 = vmatpush1.xpose.msra.mxu0 0.0
        %1802 = vmatprep.subr.mxu0 0.0
        %1803 = vmatpush1.xpose.msra.mxu0 0.0
        %1804 = vmatprep.subr.mxu0 0.0
        %1805 = vmatpush1.xpose.msra.mxu0 0.0
        %1806 = vmatprep.subr.mxu0 0.0
        %1807 = vmatpush1.xpose.msra.mxu0 0.0
        %1808 = vmatprep.subr.mxu0 0.0
        %1809 = vmatpush1.xpose.msra.mxu0 0.0
        %1810 = vmatprep.subr.mxu0 0.0
        %1811 = vmatpush1.xpose.msra.mxu0 0.0
        %1812 = vmatprep.subr.mxu0 0.0
        %1813 = vmatpush1.xpose.msra.mxu0 0.0
        %1814 = vmatprep.subr.mxu0 0.0
        %1815 = vmatpush1.xpose.msra.mxu0 0.0
        %1816 = vmatprep.subr.mxu0 0.0
        %1817 = vmatpush1.xpose.msra.mxu0 0.0
        %1818 = vmatprep.subr.mxu0 0.0
        %1819 = vmatpush1.xpose.msra.mxu0 0.0
        %1820 = vmatprep.subr.mxu0 0.0
        %1821 = vmatpush1.xpose.msra.mxu0 0.0
        %1822 = vmatprep.subr.mxu0 0.0
        %1823 = vmatpush1.xpose.msra.mxu0 0.0
        %1824 = vmatprep.subr.mxu0 0.0
        %1825 = vmatpush1.xpose.msra.mxu0 0.0
        %1826 = vmatprep.subr.mxu0 0.0
        %1827 = vmatpush1.xpose.msra.mxu0 0.0
        %1828 = vmatprep.subr.mxu0 0.0
        %1829 = vmatpush1.xpose.msra.mxu0 0.0
        %1830 = vmatprep.subr.mxu0 0.0
        %1831 = vmatpush1.xpose.msra.mxu0 0.0
        %1832 = vmatprep.subr.mxu0 0.0
        %1833 = vmatpush1.xpose.msra.mxu0 0.0
        %1834 = vmatprep.subr.mxu0 0.0
        %1835 = vmatpush1.xpose.msra.mxu0 0.0
        %1836 = vmatprep.subr.mxu0 0.0
        %1837 = vmatpush1.xpose.msra.mxu0 0.0
        %1838 = vmatprep.subr.mxu0 0.0
        %1839 = vmatpush1.xpose.msra.mxu0 0.0
        %1840 = vmatprep.subr.mxu0 0.0
        %1841 = vmatpush1.xpose.msra.mxu0 0.0
        %1842 = vmatprep.subr.mxu0 0.0
        %1843 = vmatpush1.xpose.msra.mxu0 0.0
        %1844 = vmatprep.mubr.f32.mxu0 0.0
        %1845 = vmatmul.mubr.f32.gmra.mrb[0].mxu0 %v1775
        %v1846 = vpop.f32.mrb[0].mxu0
        %v1847 = vadd.f32 0.0, %v1846
        %v1848 = vpop.f32.mrb[0].mxu0
        %1849 = vdwg.mxu0
        %v1851 = vsel %vm506, %v681, 0
        %v1854 = vsel %vm506, %v836, 0
        %1856 = vmatprep.subr.mxu0 0.0
        %1857 = vmatpush1.xpose.msra.mxu0 %v1854
        %1858 = vmatprep.subr.mxu0 0.0
        %1859 = vmatpush1.xpose.msra.mxu0 0.0
        %1860 = vmatprep.subr.mxu0 0.0
        %1861 = vmatpush1.xpose.msra.mxu0 0.0
        %1862 = vmatprep.subr.mxu0 0.0
        %1863 = vmatpush1.xpose.msra.mxu0 0.0
        %1864 = vmatprep.subr.mxu0 0.0
        %1865 = vmatpush1.xpose.msra.mxu0 0.0
        %1866 = vmatprep.subr.mxu0 0.0
        %1867 = vmatpush1.xpose.msra.mxu0 0.0
        %1868 = vmatprep.subr.mxu0 0.0
        %1869 = vmatpush1.xpose.msra.mxu0 0.0
        %1870 = vmatprep.subr.mxu0 0.0
        %1871 = vmatpush1.xpose.msra.mxu0 0.0
        %1872 = vmatprep.subr.mxu0 0.0
        %1873 = vmatpush1.xpose.msra.mxu0 0.0
        %1874 = vmatprep.subr.mxu0 0.0
        %1875 = vmatpush1.xpose.msra.mxu0 0.0
        %1876 = vmatprep.subr.mxu0 0.0
        %1877 = vmatpush1.xpose.msra.mxu0 0.0
        %1878 = vmatprep.subr.mxu0 0.0
        %1879 = vmatpush1.xpose.msra.mxu0 0.0
        %1880 = vmatprep.subr.mxu0 0.0
        %1881 = vmatpush1.xpose.msra.mxu0 0.0
        %1882 = vmatprep.subr.mxu0 0.0
        %1883 = vmatpush1.xpose.msra.mxu0 0.0
        %1884 = vmatprep.subr.mxu0 0.0
        %1885 = vmatpush1.xpose.msra.mxu0 0.0
        %1886 = vmatprep.subr.mxu0 0.0
        %1887 = vmatpush1.xpose.msra.mxu0 0.0
        %1888 = vmatprep.subr.mxu0 0.0
        %1889 = vmatpush1.xpose.msra.mxu0 0.0
        %1890 = vmatprep.subr.mxu0 0.0
        %1891 = vmatpush1.xpose.msra.mxu0 0.0
        %1892 = vmatprep.subr.mxu0 0.0
        %1893 = vmatpush1.xpose.msra.mxu0 0.0
        %1894 = vmatprep.subr.mxu0 0.0
        %1895 = vmatpush1.xpose.msra.mxu0 0.0
        %1896 = vmatprep.subr.mxu0 0.0
        %1897 = vmatpush1.xpose.msra.mxu0 0.0
        %1898 = vmatprep.subr.mxu0 0.0
        %1899 = vmatpush1.xpose.msra.mxu0 0.0
        %1900 = vmatprep.subr.mxu0 0.0
        %1901 = vmatpush1.xpose.msra.mxu0 0.0
        %1902 = vmatprep.subr.mxu0 0.0
        %1903 = vmatpush1.xpose.msra.mxu0 0.0
        %1904 = vmatprep.subr.mxu0 0.0
        %1905 = vmatpush1.xpose.msra.mxu0 0.0
        %1906 = vmatprep.subr.mxu0 0.0
        %1907 = vmatpush1.xpose.msra.mxu0 0.0
        %1908 = vmatprep.subr.mxu0 0.0
        %1909 = vmatpush1.xpose.msra.mxu0 0.0
        %1910 = vmatprep.subr.mxu0 0.0
        %1911 = vmatpush1.xpose.msra.mxu0 0.0
        %1912 = vmatprep.subr.mxu0 0.0
        %1913 = vmatpush1.xpose.msra.mxu0 0.0
        %1914 = vmatprep.subr.mxu0 0.0
        %1915 = vmatpush1.xpose.msra.mxu0 0.0
        %1916 = vmatprep.subr.mxu0 0.0
        %1917 = vmatpush1.xpose.msra.mxu0 0.0
        %1918 = vmatprep.subr.mxu0 0.0
        %1919 = vmatpush1.xpose.msra.mxu0 0.0
        %1920 = vmatprep.mubr.f32.mxu0 0.0
        %1921 = vmatmul.mubr.f32.gmra.mrb[0].mxu0 %v1851
        %v1922 = vpop.f32.mrb[0].mxu0
        %v1923 = vadd.f32 0.0, %v1922
        %v1924 = vpop.f32.mrb[0].mxu0
        %1925 = vdwg.mxu0
        %v1927 = vsel %vm506, %v686, 0
        %v1930 = vsel %vm506, %v841, 0
        %1932 = vmatprep.subr.mxu0 0.0
        %1933 = vmatpush1.xpose.msra.mxu0 %v1930
        %1934 = vmatprep.subr.mxu0 0.0
        %1935 = vmatpush1.xpose.msra.mxu0 0.0
        %1936 = vmatprep.subr.mxu0 0.0
        %1937 = vmatpush1.xpose.msra.mxu0 0.0
        %1938 = vmatprep.subr.mxu0 0.0
        %1939 = vmatpush1.xpose.msra.mxu0 0.0
        %1940 = vmatprep.subr.mxu0 0.0
        %1941 = vmatpush1.xpose.msra.mxu0 0.0
        %1942 = vmatprep.subr.mxu0 0.0
        %1943 = vmatpush1.xpose.msra.mxu0 0.0
        %1944 = vmatprep.subr.mxu0 0.0
        %1945 = vmatpush1.xpose.msra.mxu0 0.0
        %1946 = vmatprep.subr.mxu0 0.0
        %1947 = vmatpush1.xpose.msra.mxu0 0.0
        %1948 = vmatprep.subr.mxu0 0.0
        %1949 = vmatpush1.xpose.msra.mxu0 0.0
        %1950 = vmatprep.subr.mxu0 0.0
        %1951 = vmatpush1.xpose.msra.mxu0 0.0
        %1952 = vmatprep.subr.mxu0 0.0
        %1953 = vmatpush1.xpose.msra.mxu0 0.0
        %1954 = vmatprep.subr.mxu0 0.0
        %1955 = vmatpush1.xpose.msra.mxu0 0.0
        %1956 = vmatprep.subr.mxu0 0.0
        %1957 = vmatpush1.xpose.msra.mxu0 0.0
        %1958 = vmatprep.subr.mxu0 0.0
        %1959 = vmatpush1.xpose.msra.mxu0 0.0
        %1960 = vmatprep.subr.mxu0 0.0
        %1961 = vmatpush1.xpose.msra.mxu0 0.0
        %1962 = vmatprep.subr.mxu0 0.0
        %1963 = vmatpush1.xpose.msra.mxu0 0.0
        %1964 = vmatprep.subr.mxu0 0.0
        %1965 = vmatpush1.xpose.msra.mxu0 0.0
        %1966 = vmatprep.subr.mxu0 0.0
        %1967 = vmatpush1.xpose.msra.mxu0 0.0
        %1968 = vmatprep.subr.mxu0 0.0
        %1969 = vmatpush1.xpose.msra.mxu0 0.0
        %1970 = vmatprep.subr.mxu0 0.0
        %1971 = vmatpush1.xpose.msra.mxu0 0.0
        %1972 = vmatprep.subr.mxu0 0.0
        %1973 = vmatpush1.xpose.msra.mxu0 0.0
        %1974 = vmatprep.subr.mxu0 0.0
        %1975 = vmatpush1.xpose.msra.mxu0 0.0
        %1976 = vmatprep.subr.mxu0 0.0
        %1977 = vmatpush1.xpose.msra.mxu0 0.0
        %1978 = vmatprep.subr.mxu0 0.0
        %1979 = vmatpush1.xpose.msra.mxu0 0.0
        %1980 = vmatprep.subr.mxu0 0.0
        %1981 = vmatpush1.xpose.msra.mxu0 0.0
        %1982 = vmatprep.subr.mxu0 0.0
        %1983 = vmatpush1.xpose.msra.mxu0 0.0
        %1984 = vmatprep.subr.mxu0 0.0
        %1985 = vmatpush1.xpose.msra.mxu0 0.0
        %1986 = vmatprep.subr.mxu0 0.0
        %1987 = vmatpush1.xpose.msra.mxu0 0.0
        %1988 = vmatprep.subr.mxu0 0.0
        %1989 = vmatpush1.xpose.msra.mxu0 0.0
        %1990 = vmatprep.subr.mxu0 0.0
        %1991 = vmatpush1.xpose.msra.mxu0 0.0
        %1992 = vmatprep.subr.mxu0 0.0
        %1993 = vmatpush1.xpose.msra.mxu0 0.0
        %1994 = vmatprep.subr.mxu0 0.0
        %1995 = vmatpush1.xpose.msra.mxu0 0.0
        %1996 = vmatprep.mubr.f32.mxu0 0.0
        %1997 = vmatmul.mubr.f32.gmra.mrb[0].mxu0 %v1927
        %v1998 = vpop.f32.mrb[0].mxu0
        %v1999 = vadd.f32 0.0, %v1998
        %v2000 = vpop.f32.mrb[0].mxu0
        %2001 = vdwg.mxu0
        %v2003 = vsel %vm506, %v691, 0
        %v2006 = vsel %vm506, %v846, 0
        %2008 = vmatprep.subr.mxu0 0.0
        %2009 = vmatpush1.xpose.msra.mxu0 %v2006
        %2010 = vmatprep.subr.mxu0 0.0
        %2011 = vmatpush1.xpose.msra.mxu0 0.0
        %2012 = vmatprep.subr.mxu0 0.0
        %2013 = vmatpush1.xpose.msra.mxu0 0.0
        %2014 = vmatprep.subr.mxu0 0.0
        %2015 = vmatpush1.xpose.msra.mxu0 0.0
        %2016 = vmatprep.subr.mxu0 0.0
        %2017 = vmatpush1.xpose.msra.mxu0 0.0
        %2018 = vmatprep.subr.mxu0 0.0
        %2019 = vmatpush1.xpose.msra.mxu0 0.0
        %2020 = vmatprep.subr.mxu0 0.0
        %2021 = vmatpush1.xpose.msra.mxu0 0.0
        %2022 = vmatprep.subr.mxu0 0.0
        %2023 = vmatpush1.xpose.msra.mxu0 0.0
        %2024 = vmatprep.subr.mxu0 0.0
        %2025 = vmatpush1.xpose.msra.mxu0 0.0
        %2026 = vmatprep.subr.mxu0 0.0
        %2027 = vmatpush1.xpose.msra.mxu0 0.0
        %2028 = vmatprep.subr.mxu0 0.0
        %2029 = vmatpush1.xpose.msra.mxu0 0.0
        %2030 = vmatprep.subr.mxu0 0.0
        %2031 = vmatpush1.xpose.msra.mxu0 0.0
        %2032 = vmatprep.subr.mxu0 0.0
        %2033 = vmatpush1.xpose.msra.mxu0 0.0
        %2034 = vmatprep.subr.mxu0 0.0
        %2035 = vmatpush1.xpose.msra.mxu0 0.0
        %2036 = vmatprep.subr.mxu0 0.0
        %2037 = vmatpush1.xpose.msra.mxu0 0.0
        %2038 = vmatprep.subr.mxu0 0.0
        %2039 = vmatpush1.xpose.msra.mxu0 0.0
        %2040 = vmatprep.subr.mxu0 0.0
        %2041 = vmatpush1.xpose.msra.mxu0 0.0
        %2042 = vmatprep.subr.mxu0 0.0
        %2043 = vmatpush1.xpose.msra.mxu0 0.0
        %2044 = vmatprep.subr.mxu0 0.0
        %2045 = vmatpush1.xpose.msra.mxu0 0.0
        %2046 = vmatprep.subr.mxu0 0.0
        %2047 = vmatpush1.xpose.msra.mxu0 0.0
        %2048 = vmatprep.subr.mxu0 0.0
        %2049 = vmatpush1.xpose.msra.mxu0 0.0
        %2050 = vmatprep.subr.mxu0 0.0
        %2051 = vmatpush1.xpose.msra.mxu0 0.0
        %2052 = vmatprep.subr.mxu0 0.0
        %2053 = vmatpush1.xpose.msra.mxu0 0.0
        %2054 = vmatprep.subr.mxu0 0.0
        %2055 = vmatpush1.xpose.msra.mxu0 0.0
        %2056 = vmatprep.subr.mxu0 0.0
        %2057 = vmatpush1.xpose.msra.mxu0 0.0
        %2058 = vmatprep.subr.mxu0 0.0
        %2059 = vmatpush1.xpose.msra.mxu0 0.0
        %2060 = vmatprep.subr.mxu0 0.0
        %2061 = vmatpush1.xpose.msra.mxu0 0.0
        %2062 = vmatprep.subr.mxu0 0.0
        %2063 = vmatpush1.xpose.msra.mxu0 0.0
        %2064 = vmatprep.subr.mxu0 0.0
        %2065 = vmatpush1.xpose.msra.mxu0 0.0
        %2066 = vmatprep.subr.mxu0 0.0
        %2067 = vmatpush1.xpose.msra.mxu0 0.0
        %2068 = vmatprep.subr.mxu0 0.0
        %2069 = vmatpush1.xpose.msra.mxu0 0.0
        %2070 = vmatprep.subr.mxu0 0.0
        %2071 = vmatpush1.xpose.msra.mxu0 0.0
        %2072 = vmatprep.mubr.f32.mxu0 0.0
        %2073 = vmatmul.mubr.f32.gmra.mrb[0].mxu0 %v2003
        %v2074 = vpop.f32.mrb[0].mxu0
        %v2075 = vadd.f32 0.0, %v2074
        %v2076 = vpop.f32.mrb[0].mxu0
        %2077 = vdwg.mxu0
        %v2079 = vsel %vm506, %v696, 0
        %v2082 = vsel %vm506, %v851, 0
        %2084 = vmatprep.subr.mxu0 0.0
        %2085 = vmatpush1.xpose.msra.mxu0 %v2082
        %2086 = vmatprep.subr.mxu0 0.0
        %2087 = vmatpush1.xpose.msra.mxu0 0.0
        %2088 = vmatprep.subr.mxu0 0.0
        %2089 = vmatpush1.xpose.msra.mxu0 0.0
        %2090 = vmatprep.subr.mxu0 0.0
        %2091 = vmatpush1.xpose.msra.mxu0 0.0
        %2092 = vmatprep.subr.mxu0 0.0
        %2093 = vmatpush1.xpose.msra.mxu0 0.0
        %2094 = vmatprep.subr.mxu0 0.0
        %2095 = vmatpush1.xpose.msra.mxu0 0.0
        %2096 = vmatprep.subr.mxu0 0.0
        %2097 = vmatpush1.xpose.msra.mxu0 0.0
        %2098 = vmatprep.subr.mxu0 0.0
        %2099 = vmatpush1.xpose.msra.mxu0 0.0
        %2100 = vmatprep.subr.mxu0 0.0
        %2101 = vmatpush1.xpose.msra.mxu0 0.0
        %2102 = vmatprep.subr.mxu0 0.0
        %2103 = vmatpush1.xpose.msra.mxu0 0.0
        %2104 = vmatprep.subr.mxu0 0.0
        %2105 = vmatpush1.xpose.msra.mxu0 0.0
        %2106 = vmatprep.subr.mxu0 0.0
        %2107 = vmatpush1.xpose.msra.mxu0 0.0
        %2108 = vmatprep.subr.mxu0 0.0
        %2109 = vmatpush1.xpose.msra.mxu0 0.0
        %2110 = vmatprep.subr.mxu0 0.0
        %2111 = vmatpush1.xpose.msra.mxu0 0.0
        %2112 = vmatprep.subr.mxu0 0.0
        %2113 = vmatpush1.xpose.msra.mxu0 0.0
        %2114 = vmatprep.subr.mxu0 0.0
        %2115 = vmatpush1.xpose.msra.mxu0 0.0
        %2116 = vmatprep.subr.mxu0 0.0
        %2117 = vmatpush1.xpose.msra.mxu0 0.0
        %2118 = vmatprep.subr.mxu0 0.0
        %2119 = vmatpush1.xpose.msra.mxu0 0.0
        %2120 = vmatprep.subr.mxu0 0.0
        %2121 = vmatpush1.xpose.msra.mxu0 0.0
        %2122 = vmatprep.subr.mxu0 0.0
        %2123 = vmatpush1.xpose.msra.mxu0 0.0
        %2124 = vmatprep.subr.mxu0 0.0
        %2125 = vmatpush1.xpose.msra.mxu0 0.0
        %2126 = vmatprep.subr.mxu0 0.0
        %2127 = vmatpush1.xpose.msra.mxu0 0.0
        %2128 = vmatprep.subr.mxu0 0.0
        %2129 = vmatpush1.xpose.msra.mxu0 0.0
        %2130 = vmatprep.subr.mxu0 0.0
        %2131 = vmatpush1.xpose.msra.mxu0 0.0
        %2132 = vmatprep.subr.mxu0 0.0
        %2133 = vmatpush1.xpose.msra.mxu0 0.0
        %2134 = vmatprep.subr.mxu0 0.0
        %2135 = vmatpush1.xpose.msra.mxu0 0.0
        %2136 = vmatprep.subr.mxu0 0.0
        %2137 = vmatpush1.xpose.msra.mxu0 0.0
        %2138 = vmatprep.subr.mxu0 0.0
        %2139 = vmatpush1.xpose.msra.mxu0 0.0
        %2140 = vmatprep.subr.mxu0 0.0
        %2141 = vmatpush1.xpose.msra.mxu0 0.0
        %2142 = vmatprep.subr.mxu0 0.0
        %2143 = vmatpush1.xpose.msra.mxu0 0.0
        %2144 = vmatprep.subr.mxu0 0.0
        %2145 = vmatpush1.xpose.msra.mxu0 0.0
        %2146 = vmatprep.subr.mxu0 0.0
        %2147 = vmatpush1.xpose.msra.mxu0 0.0
        %2148 = vmatprep.mubr.f32.mxu0 0.0
        %2149 = vmatmul.mubr.f32.gmra.mrb[0].mxu0 %v2079
        %v2150 = vpop.f32.mrb[0].mxu0
        %v2151 = vadd.f32 0.0, %v2150
        %v2152 = vpop.f32.mrb[0].mxu0
        %2153 = vdwg.mxu0
        %v2155 = vsel %vm506, %v701, 0
        %v2158 = vsel %vm506, %v856, 0
        %2160 = vmatprep.subr.mxu0 0.0
        %2161 = vmatpush1.xpose.msra.mxu0 %v2158
        %2162 = vmatprep.subr.mxu0 0.0
        %2163 = vmatpush1.xpose.msra.mxu0 0.0
        %2164 = vmatprep.subr.mxu0 0.0
        %2165 = vmatpush1.xpose.msra.mxu0 0.0
        %2166 = vmatprep.subr.mxu0 0.0
        %2167 = vmatpush1.xpose.msra.mxu0 0.0
        %2168 = vmatprep.subr.mxu0 0.0
        %2169 = vmatpush1.xpose.msra.mxu0 0.0
        %2170 = vmatprep.subr.mxu0 0.0
        %2171 = vmatpush1.xpose.msra.mxu0 0.0
        %2172 = vmatprep.subr.mxu0 0.0
        %2173 = vmatpush1.xpose.msra.mxu0 0.0
        %2174 = vmatprep.subr.mxu0 0.0
        %2175 = vmatpush1.xpose.msra.mxu0 0.0
        %2176 = vmatprep.subr.mxu0 0.0
        %2177 = vmatpush1.xpose.msra.mxu0 0.0
        %2178 = vmatprep.subr.mxu0 0.0
        %2179 = vmatpush1.xpose.msra.mxu0 0.0
        %2180 = vmatprep.subr.mxu0 0.0
        %2181 = vmatpush1.xpose.msra.mxu0 0.0
        %2182 = vmatprep.subr.mxu0 0.0
        %2183 = vmatpush1.xpose.msra.mxu0 0.0
        %2184 = vmatprep.subr.mxu0 0.0
        %2185 = vmatpush1.xpose.msra.mxu0 0.0
        %2186 = vmatprep.subr.mxu0 0.0
        %2187 = vmatpush1.xpose.msra.mxu0 0.0
        %2188 = vmatprep.subr.mxu0 0.0
        %2189 = vmatpush1.xpose.msra.mxu0 0.0
        %2190 = vmatprep.subr.mxu0 0.0
        %2191 = vmatpush1.xpose.msra.mxu0 0.0
        %2192 = vmatprep.subr.mxu0 0.0
        %2193 = vmatpush1.xpose.msra.mxu0 0.0
        %2194 = vmatprep.subr.mxu0 0.0
        %2195 = vmatpush1.xpose.msra.mxu0 0.0
        %2196 = vmatprep.subr.mxu0 0.0
        %2197 = vmatpush1.xpose.msra.mxu0 0.0
        %2198 = vmatprep.subr.mxu0 0.0
        %2199 = vmatpush1.xpose.msra.mxu0 0.0
        %2200 = vmatprep.subr.mxu0 0.0
        %2201 = vmatpush1.xpose.msra.mxu0 0.0
        %2202 = vmatprep.subr.mxu0 0.0
        %2203 = vmatpush1.xpose.msra.mxu0 0.0
        %2204 = vmatprep.subr.mxu0 0.0
        %2205 = vmatpush1.xpose.msra.mxu0 0.0
        %2206 = vmatprep.subr.mxu0 0.0
        %2207 = vmatpush1.xpose.msra.mxu0 0.0
        %2208 = vmatprep.subr.mxu0 0.0
        %2209 = vmatpush1.xpose.msra.mxu0 0.0
        %2210 = vmatprep.subr.mxu0 0.0
        %2211 = vmatpush1.xpose.msra.mxu0 0.0
        %2212 = vmatprep.subr.mxu0 0.0
        %2213 = vmatpush1.xpose.msra.mxu0 0.0
        %2214 = vmatprep.subr.mxu0 0.0
        %2215 = vmatpush1.xpose.msra.mxu0 0.0
        %2216 = vmatprep.subr.mxu0 0.0
        %2217 = vmatpush1.xpose.msra.mxu0 0.0
        %2218 = vmatprep.subr.mxu0 0.0
        %2219 = vmatpush1.xpose.msra.mxu0 0.0
        %2220 = vmatprep.subr.mxu0 0.0
        %2221 = vmatpush1.xpose.msra.mxu0 0.0
        %2222 = vmatprep.subr.mxu0 0.0
        %2223 = vmatpush1.xpose.msra.mxu0 0.0
        %2224 = vmatprep.mubr.f32.mxu0 0.0
        %2225 = vmatmul.mubr.f32.gmra.mrb[0].mxu0 %v2155
        %v2226 = vpop.f32.mrb[0].mxu0
        %v2227 = vadd.f32 0.0, %v2226
        %v2228 = vpop.f32.mrb[0].mxu0
        %2229 = vdwg.mxu0
        %v2230 = vsel %vm289, %v1087, -inf
        %2231 = vmax.xlane.f32.xlu0 %v2230
        %v2232 = vpop.xlane.xlu0 %2231
        %v2233 = vsel %vm289, %v1163, -inf
        %2234 = vmax.xlane.f32.xlu0 %v2233
        %v2235 = vpop.xlane.xlu0 %2234
        %v2236 = vsel %vm289, %v1239, -inf
        %2237 = vmax.xlane.f32.xlu0 %v2236
        %v2238 = vpop.xlane.xlu0 %2237
        %v2239 = vsel %vm289, %v1315, -inf
        %2240 = vmax.xlane.f32.xlu0 %v2239
        %v2241 = vpop.xlane.xlu0 %2240
        %v2242 = vsel %vm289, %v1391, -inf
        %2243 = vmax.xlane.f32.xlu0 %v2242
        %v2244 = vpop.xlane.xlu0 %2243
        %v2245 = vsel %vm289, %v1467, -inf
        %2246 = vmax.xlane.f32.xlu0 %v2245
        %v2247 = vpop.xlane.xlu0 %2246
        %v2248 = vsel %vm289, %v1543, -inf
        %2249 = vmax.xlane.f32.xlu0 %v2248
        %v2250 = vpop.xlane.xlu0 %2249
        %v2251 = vsel %vm289, %v1619, -inf
        %2252 = vmax.xlane.f32.xlu0 %v2251
        %v2253 = vpop.xlane.xlu0 %2252
        %v2254 = vsel %vm289, %v1695, -inf
        %2255 = vmax.xlane.f32.xlu0 %v2254
        %v2256 = vpop.xlane.xlu0 %2255
        %v2257 = vsel %vm289, %v1771, -inf
        %2258 = vmax.xlane.f32.xlu0 %v2257
        %v2259 = vpop.xlane.xlu0 %2258
        %v2260 = vsel %vm289, %v1847, -inf
        %2261 = vmax.xlane.f32.xlu0 %v2260
        %v2262 = vpop.xlane.xlu0 %2261
        %v2263 = vsel %vm289, %v1923, -inf
        %2264 = vmax.xlane.f32.xlu0 %v2263
        %v2265 = vpop.xlane.xlu0 %2264
        %v2266 = vsel %vm289, %v1999, -inf
        %2267 = vmax.xlane.f32.xlu0 %v2266
        %v2268 = vpop.xlane.xlu0 %2267
        %v2269 = vsel %vm289, %v2075, -inf
        %2270 = vmax.xlane.f32.xlu0 %v2269
        %v2271 = vpop.xlane.xlu0 %2270
        %v2272 = vsel %vm289, %v2151, -inf
        %2273 = vmax.xlane.f32.xlu0 %v2272
        %v2274 = vpop.xlane.xlu0 %2273
        %v2275 = vsel %vm289, %v2227, -inf
        %2276 = vmax.xlane.f32.xlu0 %v2275
        %v2277 = vpop.xlane.xlu0 %2276
        %v2278 = vsub.f32 %v1087, %v2232
        %v2279 = vsub.f32 %v1163, %v2235
        %v2280 = vsub.f32 %v1239, %v2238
        %v2281 = vsub.f32 %v1315, %v2241
        %v2282 = vsub.f32 %v1391, %v2244
        %v2283 = vsub.f32 %v1467, %v2247
        %v2284 = vsub.f32 %v1543, %v2250
        %v2285 = vsub.f32 %v1619, %v2253
        %v2286 = vsub.f32 %v1695, %v2256
        %v2287 = vsub.f32 %v1771, %v2259
        %v2288 = vsub.f32 %v1847, %v2262
        %v2289 = vsub.f32 %v1923, %v2265
        %v2290 = vsub.f32 %v1999, %v2268
        %v2291 = vsub.f32 %v2075, %v2271
        %v2292 = vsub.f32 %v2151, %v2274
        %v2293 = vsub.f32 %v2227, %v2277
        %v2294 = vmul.f32 %v2278, 1.442695
        %v2295 = vpow.pop %v2294
        %v2296 = vmul.f32 %v2279, 1.442695
        %v2297 = vpow.pop %v2296
        %v2298 = vmul.f32 %v2280, 1.442695
        %v2299 = vpow.pop %v2298
        %v2300 = vmul.f32 %v2281, 1.442695
        %v2301 = vpow.pop %v2300
        %v2302 = vmul.f32 %v2282, 1.442695
        %v2303 = vpow.pop %v2302
        %v2304 = vmul.f32 %v2283, 1.442695
        %v2305 = vpow.pop %v2304
        %v2306 = vmul.f32 %v2284, 1.442695
        %v2307 = vpow.pop %v2306
        %v2308 = vmul.f32 %v2285, 1.442695
        %v2309 = vpow.pop %v2308
        %v2310 = vmul.f32 %v2286, 1.442695
        %v2311 = vpow.pop %v2310
        %v2312 = vmul.f32 %v2287, 1.442695
        %v2313 = vpow.pop %v2312
        %v2314 = vmul.f32 %v2288, 1.442695
        %v2315 = vpow.pop %v2314
        %v2316 = vmul.f32 %v2289, 1.442695
        %v2317 = vpow.pop %v2316
        %v2318 = vmul.f32 %v2290, 1.442695
        %v2319 = vpow.pop %v2318
        %v2320 = vmul.f32 %v2291, 1.442695
        %v2321 = vpow.pop %v2320
        %v2322 = vmul.f32 %v2292, 1.442695
        %v2323 = vpow.pop %v2322
        %v2324 = vmul.f32 %v2293, 1.442695
        %v2325 = vpow.pop %v2324
        %v2326 = vsel %vm289, %v2295, 0.0
        %2327 = vadd.xlane.f32.xlu0 %v2326
        %v2328 = vpop.xlane.xlu0 %2327
        %v2329 = vsel %vm289, %v2297, 0.0
        %2330 = vadd.xlane.f32.xlu0 %v2329
        %v2331 = vpop.xlane.xlu0 %2330
        %v2332 = vsel %vm289, %v2299, 0.0
        %2333 = vadd.xlane.f32.xlu0 %v2332
        %v2334 = vpop.xlane.xlu0 %2333
        %v2335 = vsel %vm289, %v2301, 0.0
        %2336 = vadd.xlane.f32.xlu0 %v2335
        %v2337 = vpop.xlane.xlu0 %2336
        %v2338 = vsel %vm289, %v2303, 0.0
        %2339 = vadd.xlane.f32.xlu0 %v2338
        %v2340 = vpop.xlane.xlu0 %2339
        %v2341 = vsel %vm289, %v2305, 0.0
        %2342 = vadd.xlane.f32.xlu0 %v2341
        %v2343 = vpop.xlane.xlu0 %2342
        %v2344 = vsel %vm289, %v2307, 0.0
        %2345 = vadd.xlane.f32.xlu0 %v2344
        %v2346 = vpop.xlane.xlu0 %2345
        %v2347 = vsel %vm289, %v2309, 0.0
        %2348 = vadd.xlane.f32.xlu0 %v2347
        %v2349 = vpop.xlane.xlu0 %2348
        %v2350 = vsel %vm289, %v2311, 0.0
        %2351 = vadd.xlane.f32.xlu0 %v2350
        %v2352 = vpop.xlane.xlu0 %2351
        %v2353 = vsel %vm289, %v2313, 0.0
        %2354 = vadd.xlane.f32.xlu0 %v2353
        %v2355 = vpop.xlane.xlu0 %2354
        %v2356 = vsel %vm289, %v2315, 0.0
        %2357 = vadd.xlane.f32.xlu0 %v2356
        %v2358 = vpop.xlane.xlu0 %2357
        %v2359 = vsel %vm289, %v2317, 0.0
        %2360 = vadd.xlane.f32.xlu0 %v2359
        %v2361 = vpop.xlane.xlu0 %2360
        %v2362 = vsel %vm289, %v2319, 0.0
        %2363 = vadd.xlane.f32.xlu0 %v2362
        %v2364 = vpop.xlane.xlu0 %2363
        %v2365 = vsel %vm289, %v2321, 0.0
        %2366 = vadd.xlane.f32.xlu0 %v2365
        %v2367 = vpop.xlane.xlu0 %2366
        %v2368 = vsel %vm289, %v2323, 0.0
        %2369 = vadd.xlane.f32.xlu0 %v2368
        %v2370 = vpop.xlane.xlu0 %2369
        %v2371 = vsel %vm289, %v2325, 0.0
        %2372 = vadd.xlane.f32.xlu0 %v2371
        %v2373 = vpop.xlane.xlu0 %2372
        %v2374 = vrcp.pop %v2328
        %v2375 = vmul.f32 %v2295, %v2374
        %v2376 = vrcp.pop %v2331
        %v2377 = vmul.f32 %v2297, %v2376
        %v2378 = vrcp.pop %v2334
        %v2379 = vmul.f32 %v2299, %v2378
        %v2380 = vrcp.pop %v2337
        %v2381 = vmul.f32 %v2301, %v2380
        %v2382 = vrcp.pop %v2340
        %v2383 = vmul.f32 %v2303, %v2382
        %v2384 = vrcp.pop %v2343
        %v2385 = vmul.f32 %v2305, %v2384
        %v2386 = vrcp.pop %v2346
        %v2387 = vmul.f32 %v2307, %v2386
        %v2388 = vrcp.pop %v2349
        %v2389 = vmul.f32 %v2309, %v2388
        %v2390 = vrcp.pop %v2352
        %v2391 = vmul.f32 %v2311, %v2390
        %v2392 = vrcp.pop %v2355
        %v2393 = vmul.f32 %v2313, %v2392
        %v2394 = vrcp.pop %v2358
        %v2395 = vmul.f32 %v2315, %v2394
        %v2396 = vrcp.pop %v2361
        %v2397 = vmul.f32 %v2317, %v2396
        %v2398 = vrcp.pop %v2364
        %v2399 = vmul.f32 %v2319, %v2398
        %v2400 = vrcp.pop %v2367
        %v2401 = vmul.f32 %v2321, %v2400
        %v2402 = vrcp.pop %v2370
        %v2403 = vmul.f32 %v2323, %v2402
        %v2404 = vrcp.pop %v2373
        %v2405 = vmul.f32 %v2325, %v2404
        %v2407 = vsel %vm289, %v2375, 0
        %2409 = vmatprep.subr.mxu0 0.0
        %2410 = vmatpush1.msra.mxu0 %v936
        %2411 = vmatprep.subr.mxu0 0.0
        %2412 = vmatpush1.msra.mxu0 0.0
        %2413 = vmatprep.subr.mxu0 0.0
        %2414 = vmatpush1.msra.mxu0 0.0
        %2415 = vmatprep.subr.mxu0 0.0
        %2416 = vmatpush1.msra.mxu0 0.0
        %2417 = vmatprep.subr.mxu0 0.0
        %2418 = vmatpush1.msra.mxu0 0.0
        %2419 = vmatprep.subr.mxu0 0.0
        %2420 = vmatpush1.msra.mxu0 0.0
        %2421 = vmatprep.subr.mxu0 0.0
        %2422 = vmatpush1.msra.mxu0 0.0
        %2423 = vmatprep.subr.mxu0 0.0
        %2424 = vmatpush1.msra.mxu0 0.0
        %2425 = vmatprep.subr.mxu0 0.0
        %2426 = vmatpush1.msra.mxu0 0.0
        %2427 = vmatprep.subr.mxu0 0.0
        %2428 = vmatpush1.msra.mxu0 0.0
        %2429 = vmatprep.subr.mxu0 0.0
        %2430 = vmatpush1.msra.mxu0 0.0
        %2431 = vmatprep.subr.mxu0 0.0
        %2432 = vmatpush1.msra.mxu0 0.0
        %2433 = vmatprep.subr.mxu0 0.0
        %2434 = vmatpush1.msra.mxu0 0.0
        %2435 = vmatprep.subr.mxu0 0.0
        %2436 = vmatpush1.msra.mxu0 0.0
        %2437 = vmatprep.subr.mxu0 0.0
        %2438 = vmatpush1.msra.mxu0 0.0
        %2439 = vmatprep.subr.mxu0 0.0
        %2440 = vmatpush1.msra.mxu0 0.0
        %2441 = vmatprep.subr.mxu0 0.0
        %2442 = vmatpush1.msra.mxu0 0.0
        %2443 = vmatprep.subr.mxu0 0.0
        %2444 = vmatpush1.msra.mxu0 0.0
        %2445 = vmatprep.subr.mxu0 0.0
        %2446 = vmatpush1.msra.mxu0 0.0
        %2447 = vmatprep.subr.mxu0 0.0
        %2448 = vmatpush1.msra.mxu0 0.0
        %2449 = vmatprep.subr.mxu0 0.0
        %2450 = vmatpush1.msra.mxu0 0.0
        %2451 = vmatprep.subr.mxu0 0.0
        %2452 = vmatpush1.msra.mxu0 0.0
        %2453 = vmatprep.subr.mxu0 0.0
        %2454 = vmatpush1.msra.mxu0 0.0
        %2455 = vmatprep.subr.mxu0 0.0
        %2456 = vmatpush1.msra.mxu0 0.0
        %2457 = vmatprep.subr.mxu0 0.0
        %2458 = vmatpush1.msra.mxu0 0.0
        %2459 = vmatprep.subr.mxu0 0.0
        %2460 = vmatpush1.msra.mxu0 0.0
        %2461 = vmatprep.subr.mxu0 0.0
        %2462 = vmatpush1.msra.mxu0 0.0
        %2463 = vmatprep.subr.mxu0 0.0
        %2464 = vmatpush1.msra.mxu0 0.0
        %2465 = vmatprep.subr.mxu0 0.0
        %2466 = vmatpush1.msra.mxu0 0.0
        %2467 = vmatprep.subr.mxu0 0.0
        %2468 = vmatpush1.msra.mxu0 0.0
        %2469 = vmatprep.subr.mxu0 0.0
        %2470 = vmatpush1.msra.mxu0 0.0
        %2471 = vmatprep.subr.mxu0 0.0
        %2472 = vmatpush1.msra.mxu0 0.0
        %2473 = vmatprep.mubr.f32.mxu0 0.0
        %2474 = vmatmul.mubr.f32.gmra.mrb[0].mxu0 %v2407
        %v2475 = vpop.f32.mrb[0].mxu0
        %v2476 = vadd.f32 0.0, %v2475
        %v2477 = vpop.f32.mrb[0].mxu0
        %2478 = vdwg.mxu0
        %v2480 = vsel %vm289, %v2377, 0
        %2482 = vmatprep.subr.mxu0 0.0
        %2483 = vmatpush1.msra.mxu0 %v941
        %2484 = vmatprep.subr.mxu0 0.0
        %2485 = vmatpush1.msra.mxu0 0.0
        %2486 = vmatprep.subr.mxu0 0.0
        %2487 = vmatpush1.msra.mxu0 0.0
        %2488 = vmatprep.subr.mxu0 0.0
        %2489 = vmatpush1.msra.mxu0 0.0
        %2490 = vmatprep.subr.mxu0 0.0
        %2491 = vmatpush1.msra.mxu0 0.0
        %2492 = vmatprep.subr.mxu0 0.0
        %2493 = vmatpush1.msra.mxu0 0.0
        %2494 = vmatprep.subr.mxu0 0.0
        %2495 = vmatpush1.msra.mxu0 0.0
        %2496 = vmatprep.subr.mxu0 0.0
        %2497 = vmatpush1.msra.mxu0 0.0
        %2498 = vmatprep.subr.mxu0 0.0
        %2499 = vmatpush1.msra.mxu0 0.0
        %2500 = vmatprep.subr.mxu0 0.0
        %2501 = vmatpush1.msra.mxu0 0.0
        %2502 = vmatprep.subr.mxu0 0.0
        %2503 = vmatpush1.msra.mxu0 0.0
        %2504 = vmatprep.subr.mxu0 0.0
        %2505 = vmatpush1.msra.mxu0 0.0
        %2506 = vmatprep.subr.mxu0 0.0
        %2507 = vmatpush1.msra.mxu0 0.0
        %2508 = vmatprep.subr.mxu0 0.0
        %2509 = vmatpush1.msra.mxu0 0.0
        %2510 = vmatprep.subr.mxu0 0.0
        %2511 = vmatpush1.msra.mxu0 0.0
        %2512 = vmatprep.subr.mxu0 0.0
        %2513 = vmatpush1.msra.mxu0 0.0
        %2514 = vmatprep.subr.mxu0 0.0
        %2515 = vmatpush1.msra.mxu0 0.0
        %2516 = vmatprep.subr.mxu0 0.0
        %2517 = vmatpush1.msra.mxu0 0.0
        %2518 = vmatprep.subr.mxu0 0.0
        %2519 = vmatpush1.msra.mxu0 0.0
        %2520 = vmatprep.subr.mxu0 0.0
        %2521 = vmatpush1.msra.mxu0 0.0
        %2522 = vmatprep.subr.mxu0 0.0
        %2523 = vmatpush1.msra.mxu0 0.0
        %2524 = vmatprep.subr.mxu0 0.0
        %2525 = vmatpush1.msra.mxu0 0.0
        %2526 = vmatprep.subr.mxu0 0.0
        %2527 = vmatpush1.msra.mxu0 0.0
        %2528 = vmatprep.subr.mxu0 0.0
        %2529 = vmatpush1.msra.mxu0 0.0
        %2530 = vmatprep.subr.mxu0 0.0
        %2531 = vmatpush1.msra.mxu0 0.0
        %2532 = vmatprep.subr.mxu0 0.0
        %2533 = vmatpush1.msra.mxu0 0.0
        %2534 = vmatprep.subr.mxu0 0.0
        %2535 = vmatpush1.msra.mxu0 0.0
        %2536 = vmatprep.subr.mxu0 0.0
        %2537 = vmatpush1.msra.mxu0 0.0
        %2538 = vmatprep.subr.mxu0 0.0
        %2539 = vmatpush1.msra.mxu0 0.0
        %2540 = vmatprep.subr.mxu0 0.0
        %2541 = vmatpush1.msra.mxu0 0.0
        %2542 = vmatprep.subr.mxu0 0.0
        %2543 = vmatpush1.msra.mxu0 0.0
        %2544 = vmatprep.subr.mxu0 0.0
        %2545 = vmatpush1.msra.mxu0 0.0
        %2546 = vmatprep.mubr.f32.mxu0 0.0
        %2547 = vmatmul.mubr.f32.gmra.mrb[0].mxu0 %v2480
        %v2548 = vpop.f32.mrb[0].mxu0
        %v2549 = vadd.f32 0.0, %v2548
        %v2550 = vpop.f32.mrb[0].mxu0
        %2551 = vdwg.mxu0
        %v2553 = vsel %vm289, %v2379, 0
        %2555 = vmatprep.subr.mxu0 0.0
        %2556 = vmatpush1.msra.mxu0 %v946
        %2557 = vmatprep.subr.mxu0 0.0
        %2558 = vmatpush1.msra.mxu0 0.0
        %2559 = vmatprep.subr.mxu0 0.0
        %2560 = vmatpush1.msra.mxu0 0.0
        %2561 = vmatprep.subr.mxu0 0.0
        %2562 = vmatpush1.msra.mxu0 0.0
        %2563 = vmatprep.subr.mxu0 0.0
        %2564 = vmatpush1.msra.mxu0 0.0
        %2565 = vmatprep.subr.mxu0 0.0
        %2566 = vmatpush1.msra.mxu0 0.0
        %2567 = vmatprep.subr.mxu0 0.0
        %2568 = vmatpush1.msra.mxu0 0.0
        %2569 = vmatprep.subr.mxu0 0.0
        %2570 = vmatpush1.msra.mxu0 0.0
        %2571 = vmatprep.subr.mxu0 0.0
        %2572 = vmatpush1.msra.mxu0 0.0
        %2573 = vmatprep.subr.mxu0 0.0
        %2574 = vmatpush1.msra.mxu0 0.0
        %2575 = vmatprep.subr.mxu0 0.0
        %2576 = vmatpush1.msra.mxu0 0.0
        %2577 = vmatprep.subr.mxu0 0.0
        %2578 = vmatpush1.msra.mxu0 0.0
        %2579 = vmatprep.subr.mxu0 0.0
        %2580 = vmatpush1.msra.mxu0 0.0
        %2581 = vmatprep.subr.mxu0 0.0
        %2582 = vmatpush1.msra.mxu0 0.0
        %2583 = vmatprep.subr.mxu0 0.0
        %2584 = vmatpush1.msra.mxu0 0.0
        %2585 = vmatprep.subr.mxu0 0.0
        %2586 = vmatpush1.msra.mxu0 0.0
        %2587 = vmatprep.subr.mxu0 0.0
        %2588 = vmatpush1.msra.mxu0 0.0
        %2589 = vmatprep.subr.mxu0 0.0
        %2590 = vmatpush1.msra.mxu0 0.0
        %2591 = vmatprep.subr.mxu0 0.0
        %2592 = vmatpush1.msra.mxu0 0.0
        %2593 = vmatprep.subr.mxu0 0.0
        %2594 = vmatpush1.msra.mxu0 0.0
        %2595 = vmatprep.subr.mxu0 0.0
        %2596 = vmatpush1.msra.mxu0 0.0
        %2597 = vmatprep.subr.mxu0 0.0
        %2598 = vmatpush1.msra.mxu0 0.0
        %2599 = vmatprep.subr.mxu0 0.0
        %2600 = vmatpush1.msra.mxu0 0.0
        %2601 = vmatprep.subr.mxu0 0.0
        %2602 = vmatpush1.msra.mxu0 0.0
        %2603 = vmatprep.subr.mxu0 0.0
        %2604 = vmatpush1.msra.mxu0 0.0
        %2605 = vmatprep.subr.mxu0 0.0
        %2606 = vmatpush1.msra.mxu0 0.0
        %2607 = vmatprep.subr.mxu0 0.0
        %2608 = vmatpush1.msra.mxu0 0.0
        %2609 = vmatprep.subr.mxu0 0.0
        %2610 = vmatpush1.msra.mxu0 0.0
        %2611 = vmatprep.subr.mxu0 0.0
        %2612 = vmatpush1.msra.mxu0 0.0
        %2613 = vmatprep.subr.mxu0 0.0
        %2614 = vmatpush1.msra.mxu0 0.0
        %2615 = vmatprep.subr.mxu0 0.0
        %2616 = vmatpush1.msra.mxu0 0.0
        %2617 = vmatprep.subr.mxu0 0.0
        %2618 = vmatpush1.msra.mxu0 0.0
        %2619 = vmatprep.mubr.f32.mxu0 0.0
        %2620 = vmatmul.mubr.f32.gmra.mrb[0].mxu0 %v2553
        %v2621 = vpop.f32.mrb[0].mxu0
        %v2622 = vadd.f32 0.0, %v2621
        %v2623 = vpop.f32.mrb[0].mxu0
        %2624 = vdwg.mxu0
        %v2626 = vsel %vm289, %v2381, 0
        %2628 = vmatprep.subr.mxu0 0.0
        %2629 = vmatpush1.msra.mxu0 %v951
        %2630 = vmatprep.subr.mxu0 0.0
        %2631 = vmatpush1.msra.mxu0 0.0
        %2632 = vmatprep.subr.mxu0 0.0
        %2633 = vmatpush1.msra.mxu0 0.0
        %2634 = vmatprep.subr.mxu0 0.0
        %2635 = vmatpush1.msra.mxu0 0.0
        %2636 = vmatprep.subr.mxu0 0.0
        %2637 = vmatpush1.msra.mxu0 0.0
        %2638 = vmatprep.subr.mxu0 0.0
        %2639 = vmatpush1.msra.mxu0 0.0
        %2640 = vmatprep.subr.mxu0 0.0
        %2641 = vmatpush1.msra.mxu0 0.0
        %2642 = vmatprep.subr.mxu0 0.0
        %2643 = vmatpush1.msra.mxu0 0.0
        %2644 = vmatprep.subr.mxu0 0.0
        %2645 = vmatpush1.msra.mxu0 0.0
        %2646 = vmatprep.subr.mxu0 0.0
        %2647 = vmatpush1.msra.mxu0 0.0
        %2648 = vmatprep.subr.mxu0 0.0
        %2649 = vmatpush1.msra.mxu0 0.0
        %2650 = vmatprep.subr.mxu0 0.0
        %2651 = vmatpush1.msra.mxu0 0.0
        %2652 = vmatprep.subr.mxu0 0.0
        %2653 = vmatpush1.msra.mxu0 0.0
        %2654 = vmatprep.subr.mxu0 0.0
        %2655 = vmatpush1.msra.mxu0 0.0
        %2656 = vmatprep.subr.mxu0 0.0
        %2657 = vmatpush1.msra.mxu0 0.0
        %2658 = vmatprep.subr.mxu0 0.0
        %2659 = vmatpush1.msra.mxu0 0.0
        %2660 = vmatprep.subr.mxu0 0.0
        %2661 = vmatpush1.msra.mxu0 0.0
        %2662 = vmatprep.subr.mxu0 0.0
        %2663 = vmatpush1.msra.mxu0 0.0
        %2664 = vmatprep.subr.mxu0 0.0
        %2665 = vmatpush1.msra.mxu0 0.0
        %2666 = vmatprep.subr.mxu0 0.0
        %2667 = vmatpush1.msra.mxu0 0.0
        %2668 = vmatprep.subr.mxu0 0.0
        %2669 = vmatpush1.msra.mxu0 0.0
        %2670 = vmatprep.subr.mxu0 0.0
        %2671 = vmatpush1.msra.mxu0 0.0
        %2672 = vmatprep.subr.mxu0 0.0
        %2673 = vmatpush1.msra.mxu0 0.0
        %2674 = vmatprep.subr.mxu0 0.0
        %2675 = vmatpush1.msra.mxu0 0.0
        %2676 = vmatprep.subr.mxu0 0.0
        %2677 = vmatpush1.msra.mxu0 0.0
        %2678 = vmatprep.subr.mxu0 0.0
        %2679 = vmatpush1.msra.mxu0 0.0
        %2680 = vmatprep.subr.mxu0 0.0
        %2681 = vmatpush1.msra.mxu0 0.0
        %2682 = vmatprep.subr.mxu0 0.0
        %2683 = vmatpush1.msra.mxu0 0.0
        %2684 = vmatprep.subr.mxu0 0.0
        %2685 = vmatpush1.msra.mxu0 0.0
        %2686 = vmatprep.subr.mxu0 0.0
        %2687 = vmatpush1.msra.mxu0 0.0
        %2688 = vmatprep.subr.mxu0 0.0
        %2689 = vmatpush1.msra.mxu0 0.0
        %2690 = vmatprep.subr.mxu0 0.0
        %2691 = vmatpush1.msra.mxu0 0.0
        %2692 = vmatprep.mubr.f32.mxu0 0.0
        %2693 = vmatmul.mubr.f32.gmra.mrb[0].mxu0 %v2626
        %v2694 = vpop.f32.mrb[0].mxu0
        %v2695 = vadd.f32 0.0, %v2694
        %v2696 = vpop.f32.mrb[0].mxu0
        %2697 = vdwg.mxu0
        %v2699 = vsel %vm289, %v2383, 0
        %2701 = vmatprep.subr.mxu0 0.0
        %2702 = vmatpush1.msra.mxu0 %v956
        %2703 = vmatprep.subr.mxu0 0.0
        %2704 = vmatpush1.msra.mxu0 0.0
        %2705 = vmatprep.subr.mxu0 0.0
        %2706 = vmatpush1.msra.mxu0 0.0
        %2707 = vmatprep.subr.mxu0 0.0
        %2708 = vmatpush1.msra.mxu0 0.0
        %2709 = vmatprep.subr.mxu0 0.0
        %2710 = vmatpush1.msra.mxu0 0.0
        %2711 = vmatprep.subr.mxu0 0.0
        %2712 = vmatpush1.msra.mxu0 0.0
        %2713 = vmatprep.subr.mxu0 0.0
        %2714 = vmatpush1.msra.mxu0 0.0
        %2715 = vmatprep.subr.mxu0 0.0
        %2716 = vmatpush1.msra.mxu0 0.0
        %2717 = vmatprep.subr.mxu0 0.0
        %2718 = vmatpush1.msra.mxu0 0.0
        %2719 = vmatprep.subr.mxu0 0.0
        %2720 = vmatpush1.msra.mxu0 0.0
        %2721 = vmatprep.subr.mxu0 0.0
        %2722 = vmatpush1.msra.mxu0 0.0
        %2723 = vmatprep.subr.mxu0 0.0
        %2724 = vmatpush1.msra.mxu0 0.0
        %2725 = vmatprep.subr.mxu0 0.0
        %2726 = vmatpush1.msra.mxu0 0.0
        %2727 = vmatprep.subr.mxu0 0.0
        %2728 = vmatpush1.msra.mxu0 0.0
        %2729 = vmatprep.subr.mxu0 0.0
        %2730 = vmatpush1.msra.mxu0 0.0
        %2731 = vmatprep.subr.mxu0 0.0
        %2732 = vmatpush1.msra.mxu0 0.0
        %2733 = vmatprep.subr.mxu0 0.0
        %2734 = vmatpush1.msra.mxu0 0.0
        %2735 = vmatprep.subr.mxu0 0.0
        %2736 = vmatpush1.msra.mxu0 0.0
        %2737 = vmatprep.subr.mxu0 0.0
        %2738 = vmatpush1.msra.mxu0 0.0
        %2739 = vmatprep.subr.mxu0 0.0
        %2740 = vmatpush1.msra.mxu0 0.0
        %2741 = vmatprep.subr.mxu0 0.0
        %2742 = vmatpush1.msra.mxu0 0.0
        %2743 = vmatprep.subr.mxu0 0.0
        %2744 = vmatpush1.msra.mxu0 0.0
        %2745 = vmatprep.subr.mxu0 0.0
        %2746 = vmatpush1.msra.mxu0 0.0
        %2747 = vmatprep.subr.mxu0 0.0
        %2748 = vmatpush1.msra.mxu0 0.0
        %2749 = vmatprep.subr.mxu0 0.0
        %2750 = vmatpush1.msra.mxu0 0.0
        %2751 = vmatprep.subr.mxu0 0.0
        %2752 = vmatpush1.msra.mxu0 0.0
        %2753 = vmatprep.subr.mxu0 0.0
        %2754 = vmatpush1.msra.mxu0 0.0
        %2755 = vmatprep.subr.mxu0 0.0
        %2756 = vmatpush1.msra.mxu0 0.0
        %2757 = vmatprep.subr.mxu0 0.0
        %2758 = vmatpush1.msra.mxu0 0.0
        %2759 = vmatprep.subr.mxu0 0.0
        %2760 = vmatpush1.msra.mxu0 0.0
        %2761 = vmatprep.subr.mxu0 0.0
        %2762 = vmatpush1.msra.mxu0 0.0
        %2763 = vmatprep.subr.mxu0 0.0
        %2764 = vmatpush1.msra.mxu0 0.0
        %2765 = vmatprep.mubr.f32.mxu0 0.0
        %2766 = vmatmul.mubr.f32.gmra.mrb[0].mxu0 %v2699
        %v2767 = vpop.f32.mrb[0].mxu0
        %v2768 = vadd.f32 0.0, %v2767
        %v2769 = vpop.f32.mrb[0].mxu0
        %2770 = vdwg.mxu0
        %v2772 = vsel %vm289, %v2385, 0
        %2774 = vmatprep.subr.mxu0 0.0
        %2775 = vmatpush1.msra.mxu0 %v961
        %2776 = vmatprep.subr.mxu0 0.0
        %2777 = vmatpush1.msra.mxu0 0.0
        %2778 = vmatprep.subr.mxu0 0.0
        %2779 = vmatpush1.msra.mxu0 0.0
        %2780 = vmatprep.subr.mxu0 0.0
        %2781 = vmatpush1.msra.mxu0 0.0
        %2782 = vmatprep.subr.mxu0 0.0
        %2783 = vmatpush1.msra.mxu0 0.0
        %2784 = vmatprep.subr.mxu0 0.0
        %2785 = vmatpush1.msra.mxu0 0.0
        %2786 = vmatprep.subr.mxu0 0.0
        %2787 = vmatpush1.msra.mxu0 0.0
        %2788 = vmatprep.subr.mxu0 0.0
        %2789 = vmatpush1.msra.mxu0 0.0
        %2790 = vmatprep.subr.mxu0 0.0
        %2791 = vmatpush1.msra.mxu0 0.0
        %2792 = vmatprep.subr.mxu0 0.0
        %2793 = vmatpush1.msra.mxu0 0.0
        %2794 = vmatprep.subr.mxu0 0.0
        %2795 = vmatpush1.msra.mxu0 0.0
        %2796 = vmatprep.subr.mxu0 0.0
        %2797 = vmatpush1.msra.mxu0 0.0
        %2798 = vmatprep.subr.mxu0 0.0
        %2799 = vmatpush1.msra.mxu0 0.0
        %2800 = vmatprep.subr.mxu0 0.0
        %2801 = vmatpush1.msra.mxu0 0.0
        %2802 = vmatprep.subr.mxu0 0.0
        %2803 = vmatpush1.msra.mxu0 0.0
        %2804 = vmatprep.subr.mxu0 0.0
        %2805 = vmatpush1.msra.mxu0 0.0
        %2806 = vmatprep.subr.mxu0 0.0
        %2807 = vmatpush1.msra.mxu0 0.0
        %2808 = vmatprep.subr.mxu0 0.0
        %2809 = vmatpush1.msra.mxu0 0.0
        %2810 = vmatprep.subr.mxu0 0.0
        %2811 = vmatpush1.msra.mxu0 0.0
        %2812 = vmatprep.subr.mxu0 0.0
        %2813 = vmatpush1.msra.mxu0 0.0
        %2814 = vmatprep.subr.mxu0 0.0
        %2815 = vmatpush1.msra.mxu0 0.0
        %2816 = vmatprep.subr.mxu0 0.0
        %2817 = vmatpush1.msra.mxu0 0.0
        %2818 = vmatprep.subr.mxu0 0.0
        %2819 = vmatpush1.msra.mxu0 0.0
        %2820 = vmatprep.subr.mxu0 0.0
        %2821 = vmatpush1.msra.mxu0 0.0
        %2822 = vmatprep.subr.mxu0 0.0
        %2823 = vmatpush1.msra.mxu0 0.0
        %2824 = vmatprep.subr.mxu0 0.0
        %2825 = vmatpush1.msra.mxu0 0.0
        %2826 = vmatprep.subr.mxu0 0.0
        %2827 = vmatpush1.msra.mxu0 0.0
        %2828 = vmatprep.subr.mxu0 0.0
        %2829 = vmatpush1.msra.mxu0 0.0
        %2830 = vmatprep.subr.mxu0 0.0
        %2831 = vmatpush1.msra.mxu0 0.0
        %2832 = vmatprep.subr.mxu0 0.0
        %2833 = vmatpush1.msra.mxu0 0.0
        %2834 = vmatprep.subr.mxu0 0.0
        %2835 = vmatpush1.msra.mxu0 0.0
        %2836 = vmatprep.subr.mxu0 0.0
        %2837 = vmatpush1.msra.mxu0 0.0
        %2838 = vmatprep.mubr.f32.mxu0 0.0
        %2839 = vmatmul.mubr.f32.gmra.mrb[0].mxu0 %v2772
        %v2840 = vpop.f32.mrb[0].mxu0
        %v2841 = vadd.f32 0.0, %v2840
        %v2842 = vpop.f32.mrb[0].mxu0
        %2843 = vdwg.mxu0
        %v2845 = vsel %vm289, %v2387, 0
        %2847 = vmatprep.subr.mxu0 0.0
        %2848 = vmatpush1.msra.mxu0 %v966
        %2849 = vmatprep.subr.mxu0 0.0
        %2850 = vmatpush1.msra.mxu0 0.0
        %2851 = vmatprep.subr.mxu0 0.0
        %2852 = vmatpush1.msra.mxu0 0.0
        %2853 = vmatprep.subr.mxu0 0.0
        %2854 = vmatpush1.msra.mxu0 0.0
        %2855 = vmatprep.subr.mxu0 0.0
        %2856 = vmatpush1.msra.mxu0 0.0
        %2857 = vmatprep.subr.mxu0 0.0
        %2858 = vmatpush1.msra.mxu0 0.0
        %2859 = vmatprep.subr.mxu0 0.0
        %2860 = vmatpush1.msra.mxu0 0.0
        %2861 = vmatprep.subr.mxu0 0.0
        %2862 = vmatpush1.msra.mxu0 0.0
        %2863 = vmatprep.subr.mxu0 0.0
        %2864 = vmatpush1.msra.mxu0 0.0
        %2865 = vmatprep.subr.mxu0 0.0
        %2866 = vmatpush1.msra.mxu0 0.0
        %2867 = vmatprep.subr.mxu0 0.0
        %2868 = vmatpush1.msra.mxu0 0.0
        %2869 = vmatprep.subr.mxu0 0.0
        %2870 = vmatpush1.msra.mxu0 0.0
        %2871 = vmatprep.subr.mxu0 0.0
        %2872 = vmatpush1.msra.mxu0 0.0
        %2873 = vmatprep.subr.mxu0 0.0
        %2874 = vmatpush1.msra.mxu0 0.0
        %2875 = vmatprep.subr.mxu0 0.0
        %2876 = vmatpush1.msra.mxu0 0.0
        %2877 = vmatprep.subr.mxu0 0.0
        %2878 = vmatpush1.msra.mxu0 0.0
        %2879 = vmatprep.subr.mxu0 0.0
        %2880 = vmatpush1.msra.mxu0 0.0
        %2881 = vmatprep.subr.mxu0 0.0
        %2882 = vmatpush1.msra.mxu0 0.0
        %2883 = vmatprep.subr.mxu0 0.0
        %2884 = vmatpush1.msra.mxu0 0.0
        %2885 = vmatprep.subr.mxu0 0.0
        %2886 = vmatpush1.msra.mxu0 0.0
        %2887 = vmatprep.subr.mxu0 0.0
        %2888 = vmatpush1.msra.mxu0 0.0
        %2889 = vmatprep.subr.mxu0 0.0
        %2890 = vmatpush1.msra.mxu0 0.0
        %2891 = vmatprep.subr.mxu0 0.0
        %2892 = vmatpush1.msra.mxu0 0.0
        %2893 = vmatprep.subr.mxu0 0.0
        %2894 = vmatpush1.msra.mxu0 0.0
        %2895 = vmatprep.subr.mxu0 0.0
        %2896 = vmatpush1.msra.mxu0 0.0
        %2897 = vmatprep.subr.mxu0 0.0
        %2898 = vmatpush1.msra.mxu0 0.0
        %2899 = vmatprep.subr.mxu0 0.0
        %2900 = vmatpush1.msra.mxu0 0.0
        %2901 = vmatprep.subr.mxu0 0.0
        %2902 = vmatpush1.msra.mxu0 0.0
        %2903 = vmatprep.subr.mxu0 0.0
        %2904 = vmatpush1.msra.mxu0 0.0
        %2905 = vmatprep.subr.mxu0 0.0
        %2906 = vmatpush1.msra.mxu0 0.0
        %2907 = vmatprep.subr.mxu0 0.0
        %2908 = vmatpush1.msra.mxu0 0.0
        %2909 = vmatprep.subr.mxu0 0.0
        %2910 = vmatpush1.msra.mxu0 0.0
        %2911 = vmatprep.mubr.f32.mxu0 0.0
        %2912 = vmatmul.mubr.f32.gmra.mrb[0].mxu0 %v2845
        %v2913 = vpop.f32.mrb[0].mxu0
        %v2914 = vadd.f32 0.0, %v2913
        %v2915 = vpop.f32.mrb[0].mxu0
        %2916 = vdwg.mxu0
        %v2918 = vsel %vm289, %v2389, 0
        %2920 = vmatprep.subr.mxu0 0.0
        %2921 = vmatpush1.msra.mxu0 %v971
        %2922 = vmatprep.subr.mxu0 0.0
        %2923 = vmatpush1.msra.mxu0 0.0
        %2924 = vmatprep.subr.mxu0 0.0
        %2925 = vmatpush1.msra.mxu0 0.0
        %2926 = vmatprep.subr.mxu0 0.0
        %2927 = vmatpush1.msra.mxu0 0.0
        %2928 = vmatprep.subr.mxu0 0.0
        %2929 = vmatpush1.msra.mxu0 0.0
        %2930 = vmatprep.subr.mxu0 0.0
        %2931 = vmatpush1.msra.mxu0 0.0
        %2932 = vmatprep.subr.mxu0 0.0
        %2933 = vmatpush1.msra.mxu0 0.0
        %2934 = vmatprep.subr.mxu0 0.0
        %2935 = vmatpush1.msra.mxu0 0.0
        %2936 = vmatprep.subr.mxu0 0.0
        %2937 = vmatpush1.msra.mxu0 0.0
        %2938 = vmatprep.subr.mxu0 0.0
        %2939 = vmatpush1.msra.mxu0 0.0
        %2940 = vmatprep.subr.mxu0 0.0
        %2941 = vmatpush1.msra.mxu0 0.0
        %2942 = vmatprep.subr.mxu0 0.0
        %2943 = vmatpush1.msra.mxu0 0.0
        %2944 = vmatprep.subr.mxu0 0.0
        %2945 = vmatpush1.msra.mxu0 0.0
        %2946 = vmatprep.subr.mxu0 0.0
        %2947 = vmatpush1.msra.mxu0 0.0
        %2948 = vmatprep.subr.mxu0 0.0
        %2949 = vmatpush1.msra.mxu0 0.0
        %2950 = vmatprep.subr.mxu0 0.0
        %2951 = vmatpush1.msra.mxu0 0.0
        %2952 = vmatprep.subr.mxu0 0.0
        %2953 = vmatpush1.msra.mxu0 0.0
        %2954 = vmatprep.subr.mxu0 0.0
        %2955 = vmatpush1.msra.mxu0 0.0
        %2956 = vmatprep.subr.mxu0 0.0
        %2957 = vmatpush1.msra.mxu0 0.0
        %2958 = vmatprep.subr.mxu0 0.0
        %2959 = vmatpush1.msra.mxu0 0.0
        %2960 = vmatprep.subr.mxu0 0.0
        %2961 = vmatpush1.msra.mxu0 0.0
        %2962 = vmatprep.subr.mxu0 0.0
        %2963 = vmatpush1.msra.mxu0 0.0
        %2964 = vmatprep.subr.mxu0 0.0
        %2965 = vmatpush1.msra.mxu0 0.0
        %2966 = vmatprep.subr.mxu0 0.0
        %2967 = vmatpush1.msra.mxu0 0.0
        %2968 = vmatprep.subr.mxu0 0.0
        %2969 = vmatpush1.msra.mxu0 0.0
        %2970 = vmatprep.subr.mxu0 0.0
        %2971 = vmatpush1.msra.mxu0 0.0
        %2972 = vmatprep.subr.mxu0 0.0
        %2973 = vmatpush1.msra.mxu0 0.0
        %2974 = vmatprep.subr.mxu0 0.0
        %2975 = vmatpush1.msra.mxu0 0.0
        %2976 = vmatprep.subr.mxu0 0.0
        %2977 = vmatpush1.msra.mxu0 0.0
        %2978 = vmatprep.subr.mxu0 0.0
        %2979 = vmatpush1.msra.mxu0 0.0
        %2980 = vmatprep.subr.mxu0 0.0
        %2981 = vmatpush1.msra.mxu0 0.0
        %2982 = vmatprep.subr.mxu0 0.0
        %2983 = vmatpush1.msra.mxu0 0.0
        %2984 = vmatprep.mubr.f32.mxu0 0.0
        %2985 = vmatmul.mubr.f32.gmra.mrb[0].mxu0 %v2918
        %v2986 = vpop.f32.mrb[0].mxu0
        %v2987 = vadd.f32 0.0, %v2986
        %v2988 = vpop.f32.mrb[0].mxu0
        %2989 = vdwg.mxu0
        %v2991 = vsel %vm289, %v2391, 0
        %2993 = vmatprep.subr.mxu0 0.0
        %2994 = vmatpush1.msra.mxu0 %v976
        %2995 = vmatprep.subr.mxu0 0.0
        %2996 = vmatpush1.msra.mxu0 0.0
        %2997 = vmatprep.subr.mxu0 0.0
        %2998 = vmatpush1.msra.mxu0 0.0
        %2999 = vmatprep.subr.mxu0 0.0
        %3000 = vmatpush1.msra.mxu0 0.0
        %3001 = vmatprep.subr.mxu0 0.0
        %3002 = vmatpush1.msra.mxu0 0.0
        %3003 = vmatprep.subr.mxu0 0.0
        %3004 = vmatpush1.msra.mxu0 0.0
        %3005 = vmatprep.subr.mxu0 0.0
        %3006 = vmatpush1.msra.mxu0 0.0
        %3007 = vmatprep.subr.mxu0 0.0
        %3008 = vmatpush1.msra.mxu0 0.0
        %3009 = vmatprep.subr.mxu0 0.0
        %3010 = vmatpush1.msra.mxu0 0.0
        %3011 = vmatprep.subr.mxu0 0.0
        %3012 = vmatpush1.msra.mxu0 0.0
        %3013 = vmatprep.subr.mxu0 0.0
        %3014 = vmatpush1.msra.mxu0 0.0
        %3015 = vmatprep.subr.mxu0 0.0
        %3016 = vmatpush1.msra.mxu0 0.0
        %3017 = vmatprep.subr.mxu0 0.0
        %3018 = vmatpush1.msra.mxu0 0.0
        %3019 = vmatprep.subr.mxu0 0.0
        %3020 = vmatpush1.msra.mxu0 0.0
        %3021 = vmatprep.subr.mxu0 0.0
        %3022 = vmatpush1.msra.mxu0 0.0
        %3023 = vmatprep.subr.mxu0 0.0
        %3024 = vmatpush1.msra.mxu0 0.0
        %3025 = vmatprep.subr.mxu0 0.0
        %3026 = vmatpush1.msra.mxu0 0.0
        %3027 = vmatprep.subr.mxu0 0.0
        %3028 = vmatpush1.msra.mxu0 0.0
        %3029 = vmatprep.subr.mxu0 0.0
        %3030 = vmatpush1.msra.mxu0 0.0
        %3031 = vmatprep.subr.mxu0 0.0
        %3032 = vmatpush1.msra.mxu0 0.0
        %3033 = vmatprep.subr.mxu0 0.0
        %3034 = vmatpush1.msra.mxu0 0.0
        %3035 = vmatprep.subr.mxu0 0.0
        %3036 = vmatpush1.msra.mxu0 0.0
        %3037 = vmatprep.subr.mxu0 0.0
        %3038 = vmatpush1.msra.mxu0 0.0
        %3039 = vmatprep.subr.mxu0 0.0
        %3040 = vmatpush1.msra.mxu0 0.0
        %3041 = vmatprep.subr.mxu0 0.0
        %3042 = vmatpush1.msra.mxu0 0.0
        %3043 = vmatprep.subr.mxu0 0.0
        %3044 = vmatpush1.msra.mxu0 0.0
        %3045 = vmatprep.subr.mxu0 0.0
        %3046 = vmatpush1.msra.mxu0 0.0
        %3047 = vmatprep.subr.mxu0 0.0
        %3048 = vmatpush1.msra.mxu0 0.0
        %3049 = vmatprep.subr.mxu0 0.0
        %3050 = vmatpush1.msra.mxu0 0.0
        %3051 = vmatprep.subr.mxu0 0.0
        %3052 = vmatpush1.msra.mxu0 0.0
        %3053 = vmatprep.subr.mxu0 0.0
        %3054 = vmatpush1.msra.mxu0 0.0
        %3055 = vmatprep.subr.mxu0 0.0
        %3056 = vmatpush1.msra.mxu0 0.0
        %3057 = vmatprep.mubr.f32.mxu0 0.0
        %3058 = vmatmul.mubr.f32.gmra.mrb[0].mxu0 %v2991
        %v3059 = vpop.f32.mrb[0].mxu0
        %v3060 = vadd.f32 0.0, %v3059
        %v3061 = vpop.f32.mrb[0].mxu0
        %3062 = vdwg.mxu0
        %v3064 = vsel %vm289, %v2393, 0
        %3066 = vmatprep.subr.mxu0 0.0
        %3067 = vmatpush1.msra.mxu0 %v981
        %3068 = vmatprep.subr.mxu0 0.0
        %3069 = vmatpush1.msra.mxu0 0.0
        %3070 = vmatprep.subr.mxu0 0.0
        %3071 = vmatpush1.msra.mxu0 0.0
        %3072 = vmatprep.subr.mxu0 0.0
        %3073 = vmatpush1.msra.mxu0 0.0
        %3074 = vmatprep.subr.mxu0 0.0
        %3075 = vmatpush1.msra.mxu0 0.0
        %3076 = vmatprep.subr.mxu0 0.0
        %3077 = vmatpush1.msra.mxu0 0.0
        %3078 = vmatprep.subr.mxu0 0.0
        %3079 = vmatpush1.msra.mxu0 0.0
        %3080 = vmatprep.subr.mxu0 0.0
        %3081 = vmatpush1.msra.mxu0 0.0
        %3082 = vmatprep.subr.mxu0 0.0
        %3083 = vmatpush1.msra.mxu0 0.0
        %3084 = vmatprep.subr.mxu0 0.0
        %3085 = vmatpush1.msra.mxu0 0.0
        %3086 = vmatprep.subr.mxu0 0.0
        %3087 = vmatpush1.msra.mxu0 0.0
        %3088 = vmatprep.subr.mxu0 0.0
        %3089 = vmatpush1.msra.mxu0 0.0
        %3090 = vmatprep.subr.mxu0 0.0
        %3091 = vmatpush1.msra.mxu0 0.0
        %3092 = vmatprep.subr.mxu0 0.0
        %3093 = vmatpush1.msra.mxu0 0.0
        %3094 = vmatprep.subr.mxu0 0.0
        %3095 = vmatpush1.msra.mxu0 0.0
        %3096 = vmatprep.subr.mxu0 0.0
        %3097 = vmatpush1.msra.mxu0 0.0
        %3098 = vmatprep.subr.mxu0 0.0
        %3099 = vmatpush1.msra.mxu0 0.0
        %3100 = vmatprep.subr.mxu0 0.0
        %3101 = vmatpush1.msra.mxu0 0.0
        %3102 = vmatprep.subr.mxu0 0.0
        %3103 = vmatpush1.msra.mxu0 0.0
        %3104 = vmatprep.subr.mxu0 0.0
        %3105 = vmatpush1.msra.mxu0 0.0
        %3106 = vmatprep.subr.mxu0 0.0
        %3107 = vmatpush1.msra.mxu0 0.0
        %3108 = vmatprep.subr.mxu0 0.0
        %3109 = vmatpush1.msra.mxu0 0.0
        %3110 = vmatprep.subr.mxu0 0.0
        %3111 = vmatpush1.msra.mxu0 0.0
        %3112 = vmatprep.subr.mxu0 0.0
        %3113 = vmatpush1.msra.mxu0 0.0
        %3114 = vmatprep.subr.mxu0 0.0
        %3115 = vmatpush1.msra.mxu0 0.0
        %3116 = vmatprep.subr.mxu0 0.0
        %3117 = vmatpush1.msra.mxu0 0.0
        %3118 = vmatprep.subr.mxu0 0.0
        %3119 = vmatpush1.msra.mxu0 0.0
        %3120 = vmatprep.subr.mxu0 0.0
        %3121 = vmatpush1.msra.mxu0 0.0
        %3122 = vmatprep.subr.mxu0 0.0
        %3123 = vmatpush1.msra.mxu0 0.0
        %3124 = vmatprep.subr.mxu0 0.0
        %3125 = vmatpush1.msra.mxu0 0.0
        %3126 = vmatprep.subr.mxu0 0.0
        %3127 = vmatpush1.msra.mxu0 0.0
        %3128 = vmatprep.subr.mxu0 0.0
        %3129 = vmatpush1.msra.mxu0 0.0
        %3130 = vmatprep.mubr.f32.mxu0 0.0
        %3131 = vmatmul.mubr.f32.gmra.mrb[0].mxu0 %v3064
        %v3132 = vpop.f32.mrb[0].mxu0
        %v3133 = vadd.f32 0.0, %v3132
        %v3134 = vpop.f32.mrb[0].mxu0
        %3135 = vdwg.mxu0
        %v3137 = vsel %vm289, %v2395, 0
        %3139 = vmatprep.subr.mxu0 0.0
        %3140 = vmatpush1.msra.mxu0 %v986
        %3141 = vmatprep.subr.mxu0 0.0
        %3142 = vmatpush1.msra.mxu0 0.0
        %3143 = vmatprep.subr.mxu0 0.0
        %3144 = vmatpush1.msra.mxu0 0.0
        %3145 = vmatprep.subr.mxu0 0.0
        %3146 = vmatpush1.msra.mxu0 0.0
        %3147 = vmatprep.subr.mxu0 0.0
        %3148 = vmatpush1.msra.mxu0 0.0
        %3149 = vmatprep.subr.mxu0 0.0
        %3150 = vmatpush1.msra.mxu0 0.0
        %3151 = vmatprep.subr.mxu0 0.0
        %3152 = vmatpush1.msra.mxu0 0.0
        %3153 = vmatprep.subr.mxu0 0.0
        %3154 = vmatpush1.msra.mxu0 0.0
        %3155 = vmatprep.subr.mxu0 0.0
        %3156 = vmatpush1.msra.mxu0 0.0
        %3157 = vmatprep.subr.mxu0 0.0
        %3158 = vmatpush1.msra.mxu0 0.0
        %3159 = vmatprep.subr.mxu0 0.0
        %3160 = vmatpush1.msra.mxu0 0.0
        %3161 = vmatprep.subr.mxu0 0.0
        %3162 = vmatpush1.msra.mxu0 0.0
        %3163 = vmatprep.subr.mxu0 0.0
        %3164 = vmatpush1.msra.mxu0 0.0
        %3165 = vmatprep.subr.mxu0 0.0
        %3166 = vmatpush1.msra.mxu0 0.0
        %3167 = vmatprep.subr.mxu0 0.0
        %3168 = vmatpush1.msra.mxu0 0.0
        %3169 = vmatprep.subr.mxu0 0.0
        %3170 = vmatpush1.msra.mxu0 0.0
        %3171 = vmatprep.subr.mxu0 0.0
        %3172 = vmatpush1.msra.mxu0 0.0
        %3173 = vmatprep.subr.mxu0 0.0
        %3174 = vmatpush1.msra.mxu0 0.0
        %3175 = vmatprep.subr.mxu0 0.0
        %3176 = vmatpush1.msra.mxu0 0.0
        %3177 = vmatprep.subr.mxu0 0.0
        %3178 = vmatpush1.msra.mxu0 0.0
        %3179 = vmatprep.subr.mxu0 0.0
        %3180 = vmatpush1.msra.mxu0 0.0
        %3181 = vmatprep.subr.mxu0 0.0
        %3182 = vmatpush1.msra.mxu0 0.0
        %3183 = vmatprep.subr.mxu0 0.0
        %3184 = vmatpush1.msra.mxu0 0.0
        %3185 = vmatprep.subr.mxu0 0.0
        %3186 = vmatpush1.msra.mxu0 0.0
        %3187 = vmatprep.subr.mxu0 0.0
        %3188 = vmatpush1.msra.mxu0 0.0
        %3189 = vmatprep.subr.mxu0 0.0
        %3190 = vmatpush1.msra.mxu0 0.0
        %3191 = vmatprep.subr.mxu0 0.0
        %3192 = vmatpush1.msra.mxu0 0.0
        %3193 = vmatprep.subr.mxu0 0.0
        %3194 = vmatpush1.msra.mxu0 0.0
        %3195 = vmatprep.subr.mxu0 0.0
        %3196 = vmatpush1.msra.mxu0 0.0
        %3197 = vmatprep.subr.mxu0 0.0
        %3198 = vmatpush1.msra.mxu0 0.0
        %3199 = vmatprep.subr.mxu0 0.0
        %3200 = vmatpush1.msra.mxu0 0.0
        %3201 = vmatprep.subr.mxu0 0.0
        %3202 = vmatpush1.msra.mxu0 0.0
        %3203 = vmatprep.mubr.f32.mxu0 0.0
        %3204 = vmatmul.mubr.f32.gmra.mrb[0].mxu0 %v3137
        %v3205 = vpop.f32.mrb[0].mxu0
        %v3206 = vadd.f32 0.0, %v3205
        %v3207 = vpop.f32.mrb[0].mxu0
        %3208 = vdwg.mxu0
        %v3210 = vsel %vm289, %v2397, 0
        %3212 = vmatprep.subr.mxu0 0.0
        %3213 = vmatpush1.msra.mxu0 %v991
        %3214 = vmatprep.subr.mxu0 0.0
        %3215 = vmatpush1.msra.mxu0 0.0
        %3216 = vmatprep.subr.mxu0 0.0
        %3217 = vmatpush1.msra.mxu0 0.0
        %3218 = vmatprep.subr.mxu0 0.0
        %3219 = vmatpush1.msra.mxu0 0.0
        %3220 = vmatprep.subr.mxu0 0.0
        %3221 = vmatpush1.msra.mxu0 0.0
        %3222 = vmatprep.subr.mxu0 0.0
        %3223 = vmatpush1.msra.mxu0 0.0
        %3224 = vmatprep.subr.mxu0 0.0
        %3225 = vmatpush1.msra.mxu0 0.0
        %3226 = vmatprep.subr.mxu0 0.0
        %3227 = vmatpush1.msra.mxu0 0.0
        %3228 = vmatprep.subr.mxu0 0.0
        %3229 = vmatpush1.msra.mxu0 0.0
        %3230 = vmatprep.subr.mxu0 0.0
        %3231 = vmatpush1.msra.mxu0 0.0
        %3232 = vmatprep.subr.mxu0 0.0
        %3233 = vmatpush1.msra.mxu0 0.0
        %3234 = vmatprep.subr.mxu0 0.0
        %3235 = vmatpush1.msra.mxu0 0.0
        %3236 = vmatprep.subr.mxu0 0.0
        %3237 = vmatpush1.msra.mxu0 0.0
        %3238 = vmatprep.subr.mxu0 0.0
        %3239 = vmatpush1.msra.mxu0 0.0
        %3240 = vmatprep.subr.mxu0 0.0
        %3241 = vmatpush1.msra.mxu0 0.0
        %3242 = vmatprep.subr.mxu0 0.0
        %3243 = vmatpush1.msra.mxu0 0.0
        %3244 = vmatprep.subr.mxu0 0.0
        %3245 = vmatpush1.msra.mxu0 0.0
        %3246 = vmatprep.subr.mxu0 0.0
        %3247 = vmatpush1.msra.mxu0 0.0
        %3248 = vmatprep.subr.mxu0 0.0
        %3249 = vmatpush1.msra.mxu0 0.0
        %3250 = vmatprep.subr.mxu0 0.0
        %3251 = vmatpush1.msra.mxu0 0.0
        %3252 = vmatprep.subr.mxu0 0.0
        %3253 = vmatpush1.msra.mxu0 0.0
        %3254 = vmatprep.subr.mxu0 0.0
        %3255 = vmatpush1.msra.mxu0 0.0
        %3256 = vmatprep.subr.mxu0 0.0
        %3257 = vmatpush1.msra.mxu0 0.0
        %3258 = vmatprep.subr.mxu0 0.0
        %3259 = vmatpush1.msra.mxu0 0.0
        %3260 = vmatprep.subr.mxu0 0.0
        %3261 = vmatpush1.msra.mxu0 0.0
        %3262 = vmatprep.subr.mxu0 0.0
        %3263 = vmatpush1.msra.mxu0 0.0
        %3264 = vmatprep.subr.mxu0 0.0
        %3265 = vmatpush1.msra.mxu0 0.0
        %3266 = vmatprep.subr.mxu0 0.0
        %3267 = vmatpush1.msra.mxu0 0.0
        %3268 = vmatprep.subr.mxu0 0.0
        %3269 = vmatpush1.msra.mxu0 0.0
        %3270 = vmatprep.subr.mxu0 0.0
        %3271 = vmatpush1.msra.mxu0 0.0
        %3272 = vmatprep.subr.mxu0 0.0
        %3273 = vmatpush1.msra.mxu0 0.0
        %3274 = vmatprep.subr.mxu0 0.0
        %3275 = vmatpush1.msra.mxu0 0.0
        %3276 = vmatprep.mubr.f32.mxu0 0.0
        %3277 = vmatmul.mubr.f32.gmra.mrb[0].mxu0 %v3210
        %v3278 = vpop.f32.mrb[0].mxu0
        %v3279 = vadd.f32 0.0, %v3278
        %v3280 = vpop.f32.mrb[0].mxu0
        %3281 = vdwg.mxu0
        %v3283 = vsel %vm289, %v2399, 0
        %3285 = vmatprep.subr.mxu0 0.0
        %3286 = vmatpush1.msra.mxu0 %v996
        %3287 = vmatprep.subr.mxu0 0.0
        %3288 = vmatpush1.msra.mxu0 0.0
        %3289 = vmatprep.subr.mxu0 0.0
        %3290 = vmatpush1.msra.mxu0 0.0
        %3291 = vmatprep.subr.mxu0 0.0
        %3292 = vmatpush1.msra.mxu0 0.0
        %3293 = vmatprep.subr.mxu0 0.0
        %3294 = vmatpush1.msra.mxu0 0.0
        %3295 = vmatprep.subr.mxu0 0.0
        %3296 = vmatpush1.msra.mxu0 0.0
        %3297 = vmatprep.subr.mxu0 0.0
        %3298 = vmatpush1.msra.mxu0 0.0
        %3299 = vmatprep.subr.mxu0 0.0
        %3300 = vmatpush1.msra.mxu0 0.0
        %3301 = vmatprep.subr.mxu0 0.0
        %3302 = vmatpush1.msra.mxu0 0.0
        %3303 = vmatprep.subr.mxu0 0.0
        %3304 = vmatpush1.msra.mxu0 0.0
        %3305 = vmatprep.subr.mxu0 0.0
        %3306 = vmatpush1.msra.mxu0 0.0
        %3307 = vmatprep.subr.mxu0 0.0
        %3308 = vmatpush1.msra.mxu0 0.0
        %3309 = vmatprep.subr.mxu0 0.0
        %3310 = vmatpush1.msra.mxu0 0.0
        %3311 = vmatprep.subr.mxu0 0.0
        %3312 = vmatpush1.msra.mxu0 0.0
        %3313 = vmatprep.subr.mxu0 0.0
        %3314 = vmatpush1.msra.mxu0 0.0
        %3315 = vmatprep.subr.mxu0 0.0
        %3316 = vmatpush1.msra.mxu0 0.0
        %3317 = vmatprep.subr.mxu0 0.0
        %3318 = vmatpush1.msra.mxu0 0.0
        %3319 = vmatprep.subr.mxu0 0.0
        %3320 = vmatpush1.msra.mxu0 0.0
        %3321 = vmatprep.subr.mxu0 0.0
        %3322 = vmatpush1.msra.mxu0 0.0
        %3323 = vmatprep.subr.mxu0 0.0
        %3324 = vmatpush1.msra.mxu0 0.0
        %3325 = vmatprep.subr.mxu0 0.0
        %3326 = vmatpush1.msra.mxu0 0.0
        %3327 = vmatprep.subr.mxu0 0.0
        %3328 = vmatpush1.msra.mxu0 0.0
        %3329 = vmatprep.subr.mxu0 0.0
        %3330 = vmatpush1.msra.mxu0 0.0
        %3331 = vmatprep.subr.mxu0 0.0
        %3332 = vmatpush1.msra.mxu0 0.0
        %3333 = vmatprep.subr.mxu0 0.0
        %3334 = vmatpush1.msra.mxu0 0.0
        %3335 = vmatprep.subr.mxu0 0.0
        %3336 = vmatpush1.msra.mxu0 0.0
        %3337 = vmatprep.subr.mxu0 0.0
        %3338 = vmatpush1.msra.mxu0 0.0
        %3339 = vmatprep.subr.mxu0 0.0
        %3340 = vmatpush1.msra.mxu0 0.0
        %3341 = vmatprep.subr.mxu0 0.0
        %3342 = vmatpush1.msra.mxu0 0.0
        %3343 = vmatprep.subr.mxu0 0.0
        %3344 = vmatpush1.msra.mxu0 0.0
        %3345 = vmatprep.subr.mxu0 0.0
        %3346 = vmatpush1.msra.mxu0 0.0
        %3347 = vmatprep.subr.mxu0 0.0
        %3348 = vmatpush1.msra.mxu0 0.0
        %3349 = vmatprep.mubr.f32.mxu0 0.0
        %3350 = vmatmul.mubr.f32.gmra.mrb[0].mxu0 %v3283
        %v3351 = vpop.f32.mrb[0].mxu0
        %v3352 = vadd.f32 0.0, %v3351
        %v3353 = vpop.f32.mrb[0].mxu0
        %3354 = vdwg.mxu0
        %v3356 = vsel %vm289, %v2401, 0
        %3358 = vmatprep.subr.mxu0 0.0
        %3359 = vmatpush1.msra.mxu0 %v1001
        %3360 = vmatprep.subr.mxu0 0.0
        %3361 = vmatpush1.msra.mxu0 0.0
        %3362 = vmatprep.subr.mxu0 0.0
        %3363 = vmatpush1.msra.mxu0 0.0
        %3364 = vmatprep.subr.mxu0 0.0
        %3365 = vmatpush1.msra.mxu0 0.0
        %3366 = vmatprep.subr.mxu0 0.0
        %3367 = vmatpush1.msra.mxu0 0.0
        %3368 = vmatprep.subr.mxu0 0.0
        %3369 = vmatpush1.msra.mxu0 0.0
        %3370 = vmatprep.subr.mxu0 0.0
        %3371 = vmatpush1.msra.mxu0 0.0
        %3372 = vmatprep.subr.mxu0 0.0
        %3373 = vmatpush1.msra.mxu0 0.0
        %3374 = vmatprep.subr.mxu0 0.0
        %3375 = vmatpush1.msra.mxu0 0.0
        %3376 = vmatprep.subr.mxu0 0.0
        %3377 = vmatpush1.msra.mxu0 0.0
        %3378 = vmatprep.subr.mxu0 0.0
        %3379 = vmatpush1.msra.mxu0 0.0
        %3380 = vmatprep.subr.mxu0 0.0
        %3381 = vmatpush1.msra.mxu0 0.0
        %3382 = vmatprep.subr.mxu0 0.0
        %3383 = vmatpush1.msra.mxu0 0.0
        %3384 = vmatprep.subr.mxu0 0.0
        %3385 = vmatpush1.msra.mxu0 0.0
        %3386 = vmatprep.subr.mxu0 0.0
        %3387 = vmatpush1.msra.mxu0 0.0
        %3388 = vmatprep.subr.mxu0 0.0
        %3389 = vmatpush1.msra.mxu0 0.0
        %3390 = vmatprep.subr.mxu0 0.0
        %3391 = vmatpush1.msra.mxu0 0.0
        %3392 = vmatprep.subr.mxu0 0.0
        %3393 = vmatpush1.msra.mxu0 0.0
        %3394 = vmatprep.subr.mxu0 0.0
        %3395 = vmatpush1.msra.mxu0 0.0
        %3396 = vmatprep.subr.mxu0 0.0
        %3397 = vmatpush1.msra.mxu0 0.0
        %3398 = vmatprep.subr.mxu0 0.0
        %3399 = vmatpush1.msra.mxu0 0.0
        %3400 = vmatprep.subr.mxu0 0.0
        %3401 = vmatpush1.msra.mxu0 0.0
        %3402 = vmatprep.subr.mxu0 0.0
        %3403 = vmatpush1.msra.mxu0 0.0
        %3404 = vmatprep.subr.mxu0 0.0
        %3405 = vmatpush1.msra.mxu0 0.0
        %3406 = vmatprep.subr.mxu0 0.0
        %3407 = vmatpush1.msra.mxu0 0.0
        %3408 = vmatprep.subr.mxu0 0.0
        %3409 = vmatpush1.msra.mxu0 0.0
        %3410 = vmatprep.subr.mxu0 0.0
        %3411 = vmatpush1.msra.mxu0 0.0
        %3412 = vmatprep.subr.mxu0 0.0
        %3413 = vmatpush1.msra.mxu0 0.0
        %3414 = vmatprep.subr.mxu0 0.0
        %3415 = vmatpush1.msra.mxu0 0.0
        %3416 = vmatprep.subr.mxu0 0.0
        %3417 = vmatpush1.msra.mxu0 0.0
        %3418 = vmatprep.subr.mxu0 0.0
        %3419 = vmatpush1.msra.mxu0 0.0
        %3420 = vmatprep.subr.mxu0 0.0
        %3421 = vmatpush1.msra.mxu0 0.0
        %3422 = vmatprep.mubr.f32.mxu0 0.0
        %3423 = vmatmul.mubr.f32.gmra.mrb[0].mxu0 %v3356
        %v3424 = vpop.f32.mrb[0].mxu0
        %v3425 = vadd.f32 0.0, %v3424
        %v3426 = vpop.f32.mrb[0].mxu0
        %3427 = vdwg.mxu0
        %v3429 = vsel %vm289, %v2403, 0
        %3431 = vmatprep.subr.mxu0 0.0
        %3432 = vmatpush1.msra.mxu0 %v1006
        %3433 = vmatprep.subr.mxu0 0.0
        %3434 = vmatpush1.msra.mxu0 0.0
        %3435 = vmatprep.subr.mxu0 0.0
        %3436 = vmatpush1.msra.mxu0 0.0
        %3437 = vmatprep.subr.mxu0 0.0
        %3438 = vmatpush1.msra.mxu0 0.0
        %3439 = vmatprep.subr.mxu0 0.0
        %3440 = vmatpush1.msra.mxu0 0.0
        %3441 = vmatprep.subr.mxu0 0.0
        %3442 = vmatpush1.msra.mxu0 0.0
        %3443 = vmatprep.subr.mxu0 0.0
        %3444 = vmatpush1.msra.mxu0 0.0
        %3445 = vmatprep.subr.mxu0 0.0
        %3446 = vmatpush1.msra.mxu0 0.0
        %3447 = vmatprep.subr.mxu0 0.0
        %3448 = vmatpush1.msra.mxu0 0.0
        %3449 = vmatprep.subr.mxu0 0.0
        %3450 = vmatpush1.msra.mxu0 0.0
        %3451 = vmatprep.subr.mxu0 0.0
        %3452 = vmatpush1.msra.mxu0 0.0
        %3453 = vmatprep.subr.mxu0 0.0
        %3454 = vmatpush1.msra.mxu0 0.0
        %3455 = vmatprep.subr.mxu0 0.0
        %3456 = vmatpush1.msra.mxu0 0.0
        %3457 = vmatprep.subr.mxu0 0.0
        %3458 = vmatpush1.msra.mxu0 0.0
        %3459 = vmatprep.subr.mxu0 0.0
        %3460 = vmatpush1.msra.mxu0 0.0
        %3461 = vmatprep.subr.mxu0 0.0
        %3462 = vmatpush1.msra.mxu0 0.0
        %3463 = vmatprep.subr.mxu0 0.0
        %3464 = vmatpush1.msra.mxu0 0.0
        %3465 = vmatprep.subr.mxu0 0.0
        %3466 = vmatpush1.msra.mxu0 0.0
        %3467 = vmatprep.subr.mxu0 0.0
        %3468 = vmatpush1.msra.mxu0 0.0
        %3469 = vmatprep.subr.mxu0 0.0
        %3470 = vmatpush1.msra.mxu0 0.0
        %3471 = vmatprep.subr.mxu0 0.0
        %3472 = vmatpush1.msra.mxu0 0.0
        %3473 = vmatprep.subr.mxu0 0.0
        %3474 = vmatpush1.msra.mxu0 0.0
        %3475 = vmatprep.subr.mxu0 0.0
        %3476 = vmatpush1.msra.mxu0 0.0
        %3477 = vmatprep.subr.mxu0 0.0
        %3478 = vmatpush1.msra.mxu0 0.0
        %3479 = vmatprep.subr.mxu0 0.0
        %3480 = vmatpush1.msra.mxu0 0.0
        %3481 = vmatprep.subr.mxu0 0.0
        %3482 = vmatpush1.msra.mxu0 0.0
        %3483 = vmatprep.subr.mxu0 0.0
        %3484 = vmatpush1.msra.mxu0 0.0
        %3485 = vmatprep.subr.mxu0 0.0
        %3486 = vmatpush1.msra.mxu0 0.0
        %3487 = vmatprep.subr.mxu0 0.0
        %3488 = vmatpush1.msra.mxu0 0.0
        %3489 = vmatprep.subr.mxu0 0.0
        %3490 = vmatpush1.msra.mxu0 0.0
        %3491 = vmatprep.subr.mxu0 0.0
        %3492 = vmatpush1.msra.mxu0 0.0
        %3493 = vmatprep.subr.mxu0 0.0
        %3494 = vmatpush1.msra.mxu0 0.0
        %3495 = vmatprep.mubr.f32.mxu0 0.0
        %3496 = vmatmul.mubr.f32.gmra.mrb[0].mxu0 %v3429
        %v3497 = vpop.f32.mrb[0].mxu0
        %v3498 = vadd.f32 0.0, %v3497
        %v3499 = vpop.f32.mrb[0].mxu0
        %3500 = vdwg.mxu0
        %v3502 = vsel %vm289, %v2405, 0
        %3504 = vmatprep.subr.mxu0 0.0
        %3505 = vmatpush1.msra.mxu0 %v1011
        %3506 = vmatprep.subr.mxu0 0.0
        %3507 = vmatpush1.msra.mxu0 0.0
        %3508 = vmatprep.subr.mxu0 0.0
        %3509 = vmatpush1.msra.mxu0 0.0
        %3510 = vmatprep.subr.mxu0 0.0
        %3511 = vmatpush1.msra.mxu0 0.0
        %3512 = vmatprep.subr.mxu0 0.0
        %3513 = vmatpush1.msra.mxu0 0.0
        %3514 = vmatprep.subr.mxu0 0.0
        %3515 = vmatpush1.msra.mxu0 0.0
        %3516 = vmatprep.subr.mxu0 0.0
        %3517 = vmatpush1.msra.mxu0 0.0
        %3518 = vmatprep.subr.mxu0 0.0
        %3519 = vmatpush1.msra.mxu0 0.0
        %3520 = vmatprep.subr.mxu0 0.0
        %3521 = vmatpush1.msra.mxu0 0.0
        %3522 = vmatprep.subr.mxu0 0.0
        %3523 = vmatpush1.msra.mxu0 0.0
        %3524 = vmatprep.subr.mxu0 0.0
        %3525 = vmatpush1.msra.mxu0 0.0
        %3526 = vmatprep.subr.mxu0 0.0
        %3527 = vmatpush1.msra.mxu0 0.0
        %3528 = vmatprep.subr.mxu0 0.0
        %3529 = vmatpush1.msra.mxu0 0.0
        %3530 = vmatprep.subr.mxu0 0.0
        %3531 = vmatpush1.msra.mxu0 0.0
        %3532 = vmatprep.subr.mxu0 0.0
        %3533 = vmatpush1.msra.mxu0 0.0
        %3534 = vmatprep.subr.mxu0 0.0
        %3535 = vmatpush1.msra.mxu0 0.0
        %3536 = vmatprep.subr.mxu0 0.0
        %3537 = vmatpush1.msra.mxu0 0.0
        %3538 = vmatprep.subr.mxu0 0.0
        %3539 = vmatpush1.msra.mxu0 0.0
        %3540 = vmatprep.subr.mxu0 0.0
        %3541 = vmatpush1.msra.mxu0 0.0
        %3542 = vmatprep.subr.mxu0 0.0
        %3543 = vmatpush1.msra.mxu0 0.0
        %3544 = vmatprep.subr.mxu0 0.0
        %3545 = vmatpush1.msra.mxu0 0.0
        %3546 = vmatprep.subr.mxu0 0.0
        %3547 = vmatpush1.msra.mxu0 0.0
        %3548 = vmatprep.subr.mxu0 0.0
        %3549 = vmatpush1.msra.mxu0 0.0
        %3550 = vmatprep.subr.mxu0 0.0
        %3551 = vmatpush1.msra.mxu0 0.0
        %3552 = vmatprep.subr.mxu0 0.0
        %3553 = vmatpush1.msra.mxu0 0.0
        %3554 = vmatprep.subr.mxu0 0.0
        %3555 = vmatpush1.msra.mxu0 0.0
        %3556 = vmatprep.subr.mxu0 0.0
        %3557 = vmatpush1.msra.mxu0 0.0
        %3558 = vmatprep.subr.mxu0 0.0
        %3559 = vmatpush1.msra.mxu0 0.0
        %3560 = vmatprep.subr.mxu0 0.0
        %3561 = vmatpush1.msra.mxu0 0.0
        %3562 = vmatprep.subr.mxu0 0.0
        %3563 = vmatpush1.msra.mxu0 0.0
        %3564 = vmatprep.subr.mxu0 0.0
        %3565 = vmatpush1.msra.mxu0 0.0
        %3566 = vmatprep.subr.mxu0 0.0
        %3567 = vmatpush1.msra.mxu0 0.0
        %3568 = vmatprep.mubr.f32.mxu0 0.0
        %3569 = vmatmul.mubr.f32.gmra.mrb[0].mxu0 %v3502
        %v3570 = vpop.f32.mrb[0].mxu0
        %v3571 = vadd.f32 0.0, %v3570
        %v3572 = vpop.f32.mrb[0].mxu0
        %3573 = vdwg.mxu0
        %v3574 = vld [vmem:[%s1 + $0x50] sm:$0xff]
        %v3575 = vld [vmem:[%s1 + $0x58] sm:$0xff]
        %v3576 = vld [vmem:[%s1 + $0x60] sm:$0xf]
        %v3577 = vlaneseq
        %v3578 = vshrl.u32 %v3577, 7
        %v3579 = vsub.s32 4, %v3578
        %v3580 = vrot.slane %v282, %v3579
        %v3582 = vsel %vm506, %v2476, 0
        %v3585 = vsel %vm506, %v2549, 0
        %v3588 = vsel %vm506, %v2622, 0
        %v3591 = vsel %vm506, %v2695, 0
        %v3594 = vsel %vm506, %v2768, 0
        %v3597 = vsel %vm506, %v2841, 0
        %v3600 = vsel %vm506, %v2914, 0
        %v3603 = vsel %vm506, %v2987, 0
        %v3606 = vsel %vm506, %v3060, 0
        %v3609 = vsel %vm506, %v3133, 0
        %v3612 = vsel %vm506, %v3206, 0
        %v3615 = vsel %vm506, %v3279, 0
        %v3618 = vsel %vm506, %v3352, 0
        %v3621 = vsel %vm506, %v3425, 0
        %v3624 = vsel %vm506, %v3498, 0
        %v3627 = vsel %vm506, %v3571, 0
        %v3630 = vsel %vm555, %v3576, 0
        %3632 = vmatprep.subr.mxu0 0.0
        %3633 = vmatpush1.msra.mxu0 %v3574
        %3634 = vmatprep.subr.mxu0 0.0
        %3635 = vmatpush1.msra.mxu0 %v3575
        %3636 = vmatprep.subr.mxu0 0.0
        %3637 = vmatpush1.msra.mxu0 %v3630
        %3638 = vmatprep.subr.mxu0 0.0
        %3639 = vmatpush1.msra.mxu0 0.0
        %3640 = vmatprep.subr.mxu0 0.0
        %3641 = vmatpush1.msra.mxu0 0.0
        %3642 = vmatprep.subr.mxu0 0.0
        %3643 = vmatpush1.msra.mxu0 0.0
        %3644 = vmatprep.subr.mxu0 0.0
        %3645 = vmatpush1.msra.mxu0 0.0
        %3646 = vmatprep.subr.mxu0 0.0
        %3647 = vmatpush1.msra.mxu0 0.0
        %3648 = vmatprep.subr.mxu0 0.0
        %3649 = vmatpush1.msra.mxu0 0.0
        %3650 = vmatprep.subr.mxu0 0.0
        %3651 = vmatpush1.msra.mxu0 0.0
        %3652 = vmatprep.subr.mxu0 0.0
        %3653 = vmatpush1.msra.mxu0 0.0
        %3654 = vmatprep.subr.mxu0 0.0
        %3655 = vmatpush1.msra.mxu0 0.0
        %3656 = vmatprep.subr.mxu0 0.0
        %3657 = vmatpush1.msra.mxu0 0.0
        %3658 = vmatprep.subr.mxu0 0.0
        %3659 = vmatpush1.msra.mxu0 0.0
        %3660 = vmatprep.subr.mxu0 0.0
        %3661 = vmatpush1.msra.mxu0 0.0
        %3662 = vmatprep.subr.mxu0 0.0
        %3663 = vmatpush1.msra.mxu0 0.0
        %3664 = vmatprep.subr.mxu0 0.0
        %3665 = vmatpush1.msra.mxu0 0.0
        %3666 = vmatprep.subr.mxu0 0.0
        %3667 = vmatpush1.msra.mxu0 0.0
        %3668 = vmatprep.subr.mxu0 0.0
        %3669 = vmatpush1.msra.mxu0 0.0
        %3670 = vmatprep.subr.mxu0 0.0
        %3671 = vmatpush1.msra.mxu0 0.0
        %3672 = vmatprep.subr.mxu0 0.0
        %3673 = vmatpush1.msra.mxu0 0.0
        %3674 = vmatprep.subr.mxu0 0.0
        %3675 = vmatpush1.msra.mxu0 0.0
        %3676 = vmatprep.subr.mxu0 0.0
        %3677 = vmatpush1.msra.mxu0 0.0
        %3678 = vmatprep.subr.mxu0 0.0
        %3679 = vmatpush1.msra.mxu0 0.0
        %3680 = vmatprep.subr.mxu0 0.0
        %3681 = vmatpush1.msra.mxu0 0.0
        %3682 = vmatprep.subr.mxu0 0.0
        %3683 = vmatpush1.msra.mxu0 0.0
        %3684 = vmatprep.subr.mxu0 0.0
        %3685 = vmatpush1.msra.mxu0 0.0
        %3686 = vmatprep.subr.mxu0 0.0
        %3687 = vmatpush1.msra.mxu0 0.0
        %3688 = vmatprep.subr.mxu0 0.0
        %3689 = vmatpush1.msra.mxu0 0.0
        %3690 = vmatprep.subr.mxu0 0.0
        %3691 = vmatpush1.msra.mxu0 0.0
        %3692 = vmatprep.subr.mxu0 0.0
        %3693 = vmatpush1.msra.mxu0 0.0
        %3694 = vmatprep.subr.mxu0 0.0
        %3695 = vmatpush1.msra.mxu0 0.0
        %3696 = vmatprep.mubr.f32.mxu0 0.0
        %3697 = vmatmul.mubr.f32.gmra.mrb[0].mxu0 %v3582
        %v3698 = vpop.f32.mrb[0].mxu0
        %v3699 = vadd.f32 %v3580, %v3698
        %v3700 = vpop.f32.mrb[0].mxu0
        %3701 = vmatprep.mubr.f32.mxu0 0.0
        %3702 = vmatmul.mubr.f32.gmra.mrb[0].mxu0 %v3585
        %v3703 = vpop.f32.mrb[0].mxu0
        %v3704 = vadd.f32 %v3580, %v3703
        %v3705 = vpop.f32.mrb[0].mxu0
        %3706 = vmatprep.mubr.f32.mxu0 0.0
        %3707 = vmatmul.mubr.f32.gmra.mrb[0].mxu0 %v3588
        %v3708 = vpop.f32.mrb[0].mxu0
        %v3709 = vadd.f32 %v3580, %v3708
        %v3710 = vpop.f32.mrb[0].mxu0
        %3711 = vmatprep.mubr.f32.mxu0 0.0
        %3712 = vmatmul.mubr.f32.gmra.mrb[0].mxu0 %v3591
        %v3713 = vpop.f32.mrb[0].mxu0
        %v3714 = vadd.f32 %v3580, %v3713
        %v3715 = vpop.f32.mrb[0].mxu0
        %3716 = vmatprep.mubr.f32.mxu0 0.0
        %3717 = vmatmul.mubr.f32.gmra.mrb[0].mxu0 %v3594
        %v3718 = vpop.f32.mrb[0].mxu0
        %v3719 = vadd.f32 %v3580, %v3718
        %v3720 = vpop.f32.mrb[0].mxu0
        %3721 = vmatprep.mubr.f32.mxu0 0.0
        %3722 = vmatmul.mubr.f32.gmra.mrb[0].mxu0 %v3597
        %v3723 = vpop.f32.mrb[0].mxu0
        %v3724 = vadd.f32 %v3580, %v3723
        %v3725 = vpop.f32.mrb[0].mxu0
        %3726 = vmatprep.mubr.f32.mxu0 0.0
        %3727 = vmatmul.mubr.f32.gmra.mrb[0].mxu0 %v3600
        %v3728 = vpop.f32.mrb[0].mxu0
        %v3729 = vadd.f32 %v3580, %v3728
        %v3730 = vpop.f32.mrb[0].mxu0
        %3731 = vmatprep.mubr.f32.mxu0 0.0
        %3732 = vmatmul.mubr.f32.gmra.mrb[0].mxu0 %v3603
        %v3733 = vpop.f32.mrb[0].mxu0
        %v3734 = vadd.f32 %v3580, %v3733
        %v3735 = vpop.f32.mrb[0].mxu0
        %3736 = vmatprep.mubr.f32.mxu0 0.0
        %3737 = vmatmul.mubr.f32.gmra.mrb[0].mxu0 %v3606
        %v3738 = vpop.f32.mrb[0].mxu0
        %v3739 = vadd.f32 %v3580, %v3738
        %v3740 = vpop.f32.mrb[0].mxu0
        %3741 = vmatprep.mubr.f32.mxu0 0.0
        %3742 = vmatmul.mubr.f32.gmra.mrb[0].mxu0 %v3609
        %v3743 = vpop.f32.mrb[0].mxu0
        %v3744 = vadd.f32 %v3580, %v3743
        %v3745 = vpop.f32.mrb[0].mxu0
        %3746 = vmatprep.mubr.f32.mxu0 0.0
        %3747 = vmatmul.mubr.f32.gmra.mrb[0].mxu0 %v3612
        %v3748 = vpop.f32.mrb[0].mxu0
        %v3749 = vadd.f32 %v3580, %v3748
        %v3750 = vpop.f32.mrb[0].mxu0
        %3751 = vmatprep.mubr.f32.mxu0 0.0
        %3752 = vmatmul.mubr.f32.gmra.mrb[0].mxu0 %v3615
        %v3753 = vpop.f32.mrb[0].mxu0
        %v3754 = vadd.f32 %v3580, %v3753
        %v3755 = vpop.f32.mrb[0].mxu0
        %3756 = vmatprep.mubr.f32.mxu0 0.0
        %3757 = vmatmul.mubr.f32.gmra.mrb[0].mxu0 %v3618
        %v3758 = vpop.f32.mrb[0].mxu0
        %v3759 = vadd.f32 %v3580, %v3758
        %v3760 = vpop.f32.mrb[0].mxu0
        %3761 = vmatprep.mubr.f32.mxu0 0.0
        %3762 = vmatmul.mubr.f32.gmra.mrb[0].mxu0 %v3621
        %v3763 = vpop.f32.mrb[0].mxu0
        %v3764 = vadd.f32 %v3580, %v3763
        %v3765 = vpop.f32.mrb[0].mxu0
        %3766 = vmatprep.mubr.f32.mxu0 0.0
        %3767 = vmatmul.mubr.f32.gmra.mrb[0].mxu0 %v3624
        %v3768 = vpop.f32.mrb[0].mxu0
        %v3769 = vadd.f32 %v3580, %v3768
        %v3770 = vpop.f32.mrb[0].mxu0
        %3771 = vmatprep.mubr.f32.mxu0 0.0
        %3772 = vmatmul.mubr.f32.gmra.mrb[0].mxu0 %v3627
        %v3773 = vpop.f32.mrb[0].mxu0
        %v3774 = vadd.f32 %v3580, %v3773
        %v3775 = vpop.f32.mrb[0].mxu0
        %3776 = vdwg.mxu0
        %v3777 = vadd.f32 %v483, %v3699
        %v3778 = vadd.f32 %v484, %v3704
        %v3779 = vadd.f32 %v485, %v3709
        %v3780 = vadd.f32 %v486, %v3714
        %v3781 = vadd.f32 %v487, %v3719
        %v3782 = vadd.f32 %v488, %v3724
        %v3783 = vadd.f32 %v489, %v3729
        %v3784 = vadd.f32 %v490, %v3734
        %v3785 = vadd.f32 %v491, %v3739
        %v3786 = vadd.f32 %v492, %v3744
        %v3787 = vadd.f32 %v493, %v3749
        %v3788 = vadd.f32 %v494, %v3754
        %v3789 = vadd.f32 %v495, %v3759
        %v3790 = vadd.f32 %v496, %v3764
        %v3791 = vadd.f32 %v497, %v3769
        %v3792 = vadd.f32 %v498, %v3774
        %v3793 = vsel %vm506, %v3777, 0.0
        %3794 = vadd.xlane.f32.xlu0 %v3793
        %v3795 = vpop.xlane.xlu0 %3794
        %v3796 = vsel %vm506, %v3778, 0.0
        %3797 = vadd.xlane.f32.xlu0 %v3796
        %v3798 = vpop.xlane.xlu0 %3797
        %v3799 = vsel %vm506, %v3779, 0.0
        %3800 = vadd.xlane.f32.xlu0 %v3799
        %v3801 = vpop.xlane.xlu0 %3800
        %v3802 = vsel %vm506, %v3780, 0.0
        %3803 = vadd.xlane.f32.xlu0 %v3802
        %v3804 = vpop.xlane.xlu0 %3803
        %v3805 = vsel %vm506, %v3781, 0.0
        %3806 = vadd.xlane.f32.xlu0 %v3805
        %v3807 = vpop.xlane.xlu0 %3806
        %v3808 = vsel %vm506, %v3782, 0.0
        %3809 = vadd.xlane.f32.xlu0 %v3808
        %v3810 = vpop.xlane.xlu0 %3809
        %v3811 = vsel %vm506, %v3783, 0.0
        %3812 = vadd.xlane.f32.xlu0 %v3811
        %v3813 = vpop.xlane.xlu0 %3812
        %v3814 = vsel %vm506, %v3784, 0.0
        %3815 = vadd.xlane.f32.xlu0 %v3814
        %v3816 = vpop.xlane.xlu0 %3815
        %v3817 = vsel %vm506, %v3785, 0.0
        %3818 = vadd.xlane.f32.xlu0 %v3817
        %v3819 = vpop.xlane.xlu0 %3818
        %v3820 = vsel %vm506, %v3786, 0.0
        %3821 = vadd.xlane.f32.xlu0 %v3820
        %v3822 = vpop.xlane.xlu0 %3821
        %v3823 = vsel %vm506, %v3787, 0.0
        %3824 = vadd.xlane.f32.xlu0 %v3823
        %v3825 = vpop.xlane.xlu0 %3824
        %v3826 = vsel %vm506, %v3788, 0.0
        %3827 = vadd.xlane.f32.xlu0 %v3826
        %v3828 = vpop.xlane.xlu0 %3827
        %v3829 = vsel %vm506, %v3789, 0.0
        %3830 = vadd.xlane.f32.xlu0 %v3829
        %v3831 = vpop.xlane.xlu0 %3830
        %v3832 = vsel %vm506, %v3790, 0.0
        %3833 = vadd.xlane.f32.xlu0 %v3832
        %v3834 = vpop.xlane.xlu0 %3833
        %v3835 = vsel %vm506, %v3791, 0.0
        %3836 = vadd.xlane.f32.xlu0 %v3835
        %v3837 = vpop.xlane.xlu0 %3836
        %v3838 = vsel %vm506, %v3792, 0.0
        %3839 = vadd.xlane.f32.xlu0 %v3838
        %v3840 = vpop.xlane.xlu0 %3839
        %v3841 = vrcp.pop 20.0
        %v3842 = vmul.f32 %v3795, %v3841
        %v3843 = vmul.f32 %v3798, %v3841
        %v3844 = vmul.f32 %v3801, %v3841
        %v3845 = vmul.f32 %v3804, %v3841
        %v3846 = vmul.f32 %v3807, %v3841
        %v3847 = vmul.f32 %v3810, %v3841
        %v3848 = vmul.f32 %v3813, %v3841
        %v3849 = vmul.f32 %v3816, %v3841
        %v3850 = vmul.f32 %v3819, %v3841
        %v3851 = vmul.f32 %v3822, %v3841
        %v3852 = vmul.f32 %v3825, %v3841
        %v3853 = vmul.f32 %v3828, %v3841
        %v3854 = vmul.f32 %v3831, %v3841
        %v3855 = vmul.f32 %v3834, %v3841
        %v3856 = vmul.f32 %v3837, %v3841
        %v3857 = vmul.f32 %v3840, %v3841
        %v3858 = vsub.f32 %v3777, %v3842
        %v3859 = vsub.f32 %v3778, %v3843
        %v3860 = vsub.f32 %v3779, %v3844
        %v3861 = vsub.f32 %v3780, %v3845
        %v3862 = vsub.f32 %v3781, %v3846
        %v3863 = vsub.f32 %v3782, %v3847
        %v3864 = vsub.f32 %v3783, %v3848
        %v3865 = vsub.f32 %v3784, %v3849
        %v3866 = vsub.f32 %v3785, %v3850
        %v3867 = vsub.f32 %v3786, %v3851
        %v3868 = vsub.f32 %v3787, %v3852
        %v3869 = vsub.f32 %v3788, %v3853
        %v3870 = vsub.f32 %v3789, %v3854
        %v3871 = vsub.f32 %v3790, %v3855
        %v3872 = vsub.f32 %v3791, %v3856
        %v3873 = vsub.f32 %v3792, %v3857
        %v3874 = vmul.f32 %v3858, %v3858
        %v3875 = vmul.f32 %v3859, %v3859
        %v3876 = vmul.f32 %v3860, %v3860
        %v3877 = vmul.f32 %v3861, %v3861
        %v3878 = vmul.f32 %v3862, %v3862
        %v3879 = vmul.f32 %v3863, %v3863
        %v3880 = vmul.f32 %v3864, %v3864
        %v3881 = vmul.f32 %v3865, %v3865
        %v3882 = vmul.f32 %v3866, %v3866
        %v3883 = vmul.f32 %v3867, %v3867
        %v3884 = vmul.f32 %v3868, %v3868
        %v3885 = vmul.f32 %v3869, %v3869
        %v3886 = vmul.f32 %v3870, %v3870
        %v3887 = vmul.f32 %v3871, %v3871
        %v3888 = vmul.f32 %v3872, %v3872
        %v3889 = vmul.f32 %v3873, %v3873
        %v3890 = vsel %vm506, %v3874, 0.0
        %3891 = vadd.xlane.f32.xlu0 %v3890
        %v3892 = vpop.xlane.xlu0 %3891
        %v3893 = vsel %vm506, %v3875, 0.0
        %3894 = vadd.xlane.f32.xlu0 %v3893
        %v3895 = vpop.xlane.xlu0 %3894
        %v3896 = vsel %vm506, %v3876, 0.0
        %3897 = vadd.xlane.f32.xlu0 %v3896
        %v3898 = vpop.xlane.xlu0 %3897
        %v3899 = vsel %vm506, %v3877, 0.0
        %3900 = vadd.xlane.f32.xlu0 %v3899
        %v3901 = vpop.xlane.xlu0 %3900
        %v3902 = vsel %vm506, %v3878, 0.0
        %3903 = vadd.xlane.f32.xlu0 %v3902
        %v3904 = vpop.xlane.xlu0 %3903
        %v3905 = vsel %vm506, %v3879, 0.0
        %3906 = vadd.xlane.f32.xlu0 %v3905
        %v3907 = vpop.xlane.xlu0 %3906
        %v3908 = vsel %vm506, %v3880, 0.0
        %3909 = vadd.xlane.f32.xlu0 %v3908
        %v3910 = vpop.xlane.xlu0 %3909
        %v3911 = vsel %vm506, %v3881, 0.0
        %3912 = vadd.xlane.f32.xlu0 %v3911
        %v3913 = vpop.xlane.xlu0 %3912
        %v3914 = vsel %vm506, %v3882, 0.0
        %3915 = vadd.xlane.f32.xlu0 %v3914
        %v3916 = vpop.xlane.xlu0 %3915
        %v3917 = vsel %vm506, %v3883, 0.0
        %3918 = vadd.xlane.f32.xlu0 %v3917
        %v3919 = vpop.xlane.xlu0 %3918
        %v3920 = vsel %vm506, %v3884, 0.0
        %3921 = vadd.xlane.f32.xlu0 %v3920
        %v3922 = vpop.xlane.xlu0 %3921
        %v3923 = vsel %vm506, %v3885, 0.0
        %3924 = vadd.xlane.f32.xlu0 %v3923
        %v3925 = vpop.xlane.xlu0 %3924
        %v3926 = vsel %vm506, %v3886, 0.0
        %3927 = vadd.xlane.f32.xlu0 %v3926
        %v3928 = vpop.xlane.xlu0 %3927
        %v3929 = vsel %vm506, %v3887, 0.0
        %3930 = vadd.xlane.f32.xlu0 %v3929
        %v3931 = vpop.xlane.xlu0 %3930
        %v3932 = vsel %vm506, %v3888, 0.0
        %3933 = vadd.xlane.f32.xlu0 %v3932
        %v3934 = vpop.xlane.xlu0 %3933
        %v3935 = vsel %vm506, %v3889, 0.0
        %3936 = vadd.xlane.f32.xlu0 %v3935
        %v3937 = vpop.xlane.xlu0 %3936
        %v3938 = vmul.f32 %v3892, %v3841
        %v3939 = vmul.f32 %v3895, %v3841
        %v3940 = vmul.f32 %v3898, %v3841
        %v3941 = vmul.f32 %v3901, %v3841
        %v3942 = vmul.f32 %v3904, %v3841
        %v3943 = vmul.f32 %v3907, %v3841
        %v3944 = vmul.f32 %v3910, %v3841
        %v3945 = vmul.f32 %v3913, %v3841
        %v3946 = vmul.f32 %v3916, %v3841
        %v3947 = vmul.f32 %v3919, %v3841
        %v3948 = vmul.f32 %v3922, %v3841
        %v3949 = vmul.f32 %v3925, %v3841
        %v3950 = vmul.f32 %v3928, %v3841
        %v3951 = vmul.f32 %v3931, %v3841
        %v3952 = vmul.f32 %v3934, %v3841
        %v3953 = vmul.f32 %v3937, %v3841
        %v3954 = vadd.f32 %v3938, 1e-05
        %v3955 = vadd.f32 %v3939, 1e-05
        %v3956 = vadd.f32 %v3940, 1e-05
        %v3957 = vadd.f32 %v3941, 1e-05
        %v3958 = vadd.f32 %v3942, 1e-05
        %v3959 = vadd.f32 %v3943, 1e-05
        %v3960 = vadd.f32 %v3944, 1e-05
        %v3961 = vadd.f32 %v3945, 1e-05
        %v3962 = vadd.f32 %v3946, 1e-05
        %v3963 = vadd.f32 %v3947, 1e-05
        %v3964 = vadd.f32 %v3948, 1e-05
        %v3965 = vadd.f32 %v3949, 1e-05
        %v3966 = vadd.f32 %v3950, 1e-05
        %v3967 = vadd.f32 %v3951, 1e-05
        %v3968 = vadd.f32 %v3952, 1e-05
        %v3969 = vadd.f32 %v3953, 1e-05
        %v3970 = vrsqrt.pop %v3954
        %v3971 = vrsqrt.pop %v3955
        %v3972 = vrsqrt.pop %v3956
        %v3973 = vrsqrt.pop %v3957
        %v3974 = vrsqrt.pop %v3958
        %v3975 = vrsqrt.pop %v3959
        %v3976 = vrsqrt.pop %v3960
        %v3977 = vrsqrt.pop %v3961
        %v3978 = vrsqrt.pop %v3962
        %v3979 = vrsqrt.pop %v3963
        %v3980 = vrsqrt.pop %v3964
        %v3981 = vrsqrt.pop %v3965
        %v3982 = vrsqrt.pop %v3966
        %v3983 = vrsqrt.pop %v3967
        %v3984 = vrsqrt.pop %v3968
        %v3985 = vrsqrt.pop %v3969
        %v3986 = vmul.f32 %v3858, %v3970
        %v3987 = vmul.f32 %v3859, %v3971
        %v3988 = vmul.f32 %v3860, %v3972
        %v3989 = vmul.f32 %v3861, %v3973
        %v3990 = vmul.f32 %v3862, %v3974
        %v3991 = vmul.f32 %v3863, %v3975
        %v3992 = vmul.f32 %v3864, %v3976
        %v3993 = vmul.f32 %v3865, %v3977
        %v3994 = vmul.f32 %v3866, %v3978
        %v3995 = vmul.f32 %v3867, %v3979
        %v3996 = vmul.f32 %v3868, %v3980
        %v3997 = vmul.f32 %v3869, %v3981
        %v3998 = vmul.f32 %v3870, %v3982
        %v3999 = vmul.f32 %v3871, %v3983
        %v4000 = vmul.f32 %v3872, %v3984
        %v4001 = vmul.f32 %v3873, %v3985
        %v4002 = vlaneseq
        %v4003 = vshrl.u32 %v4002, 7
        %v4004 = vsub.s32 5, %v4003
        %v4005 = vrot.slane %v282, %v4004
        %v4006 = vmul.f32 %v3986, %v4005
        %v4007 = vmul.f32 %v3987, %v4005
        %v4008 = vmul.f32 %v3988, %v4005
        %v4009 = vmul.f32 %v3989, %v4005
        %v4010 = vmul.f32 %v3990, %v4005
        %v4011 = vmul.f32 %v3991, %v4005
        %v4012 = vmul.f32 %v3992, %v4005
        %v4013 = vmul.f32 %v3993, %v4005
        %v4014 = vmul.f32 %v3994, %v4005
        %v4015 = vmul.f32 %v3995, %v4005
        %v4016 = vmul.f32 %v3996, %v4005
        %v4017 = vmul.f32 %v3997, %v4005
        %v4018 = vmul.f32 %v3998, %v4005
        %v4019 = vmul.f32 %v3999, %v4005
        %v4020 = vmul.f32 %v4000, %v4005
        %v4021 = vmul.f32 %v4001, %v4005
        %v4022 = vlaneseq
        %v4023 = vshrl.u32 %v4022, 7
        %v4024 = vsub.s32 6, %v4023
        %v4025 = vrot.slane %v282, %v4024
        %v4026 = vadd.f32 %v4006, %v4025
        %v4027 = vadd.f32 %v4007, %v4025
        %v4028 = vadd.f32 %v4008, %v4025
        %v4029 = vadd.f32 %v4009, %v4025
        %v4030 = vadd.f32 %v4010, %v4025
        %v4031 = vadd.f32 %v4011, %v4025
        %v4032 = vadd.f32 %v4012, %v4025
        %v4033 = vadd.f32 %v4013, %v4025
        %v4034 = vadd.f32 %v4014, %v4025
        %v4035 = vadd.f32 %v4015, %v4025
        %v4036 = vadd.f32 %v4016, %v4025
        %v4037 = vadd.f32 %v4017, %v4025
        %v4038 = vadd.f32 %v4018, %v4025
        %v4039 = vadd.f32 %v4019, %v4025
        %v4040 = vadd.f32 %v4020, %v4025
        %v4041 = vadd.f32 %v4021, %v4025
        %v4042 = vld [vmem:[%s3] sm:$0xff]
        %v4043 = vld [vmem:[%s3 + $0x8] sm:$0xff]
        %v4044 = vld [vmem:[%s3 + $0x10] sm:$0xff]
        %v4045 = vld [vmem:[%s3 + $0x18] sm:$0xff]
        %v4046 = vld [vmem:[%s3 + $0x20] sm:$0xff]
        %v4047 = vld [vmem:[%s3 + $0x28] sm:$0xff]
        %v4048 = vld [vmem:[%s3 + $0x30] sm:$0xff]
        %v4049 = vld [vmem:[%s3 + $0x38] sm:$0xff]
        %v4050 = vld [vmem:[%s3 + $0x40] sm:$0xff]
        %v4051 = vld [vmem:[%s3 + $0x48] sm:$0xff]
        %v4052 = vld [vmem:[%s3 + $0x50] sm:$0xff]
        %v4053 = vld [vmem:[%s3 + $0x58] sm:$0xff]
        %v4054 = vld [vmem:[%s3 + $0x60] sm:$0xff]
        %v4055 = vld [vmem:[%s3 + $0x68] sm:$0xff]
        %v4056 = vld [vmem:[%s3 + $0x70] sm:$0xff]
        %v4057 = vld [vmem:[%s3 + $0x78] sm:$0xff]
        %v4058 = vld [vmem:[%s3 + $0x80] sm:$0xff]
        %v4059 = vld [vmem:[%s3 + $0x88] sm:$0xff]
        %v4060 = vld [vmem:[%s3 + $0x90] sm:$0xff]
        %v4061 = vld [vmem:[%s3 + $0x98] sm:$0xff]
        %v4062 = vld [vmem:[%s3 + $0xa0] sm:$0xff]
        %v4063 = vld [vmem:[%s3 + $0xa8] sm:$0xff]
        %v4064 = vld [vmem:[%s3 + $0xb0] sm:$0xff]
        %v4065 = vld [vmem:[%s3 + $0xb8] sm:$0xff]
        %v4066 = vld [vmem:[%s3 + $0xc0] sm:$0xff]
        %v4067 = vld [vmem:[%s3 + $0xc8] sm:$0xff]
        %v4068 = vld [vmem:[%s3 + $0xd0] sm:$0xff]
        %v4069 = vld [vmem:[%s3 + $0xd8] sm:$0xff]
        %v4070 = vld [vmem:[%s3 + $0xe0] sm:$0xff]
        %v4071 = vld [vmem:[%s3 + $0xe8] sm:$0xff]
        %v4072 = vld [vmem:[%s3 + $0xf0] sm:$0xff]
        %v4073 = vld [vmem:[%s3 + $0xf8] sm:$0xff]
        %v4074 = vld [vmem:[%s3 + $0x100] sm:$0xf]
        %v4075 = vld [vmem:[%s3 + $0x108] sm:$0xf]
        %v4076 = vld [vmem:[%s3 + $0x110] sm:$0xf]
        %v4077 = vld [vmem:[%s3 + $0x118] sm:$0xf]
        %v4078 = vld [vmem:[%s3 + $0x120] sm:$0xf]
        %v4079 = vld [vmem:[%s3 + $0x128] sm:$0xf]
        %v4080 = vld [vmem:[%s3 + $0x130] sm:$0xf]
        %v4081 = vld [vmem:[%s3 + $0x138] sm:$0xf]
        %v4082 = vld [vmem:[%s3 + $0x140] sm:$0xf]
        %v4083 = vld [vmem:[%s3 + $0x148] sm:$0xf]
        %v4084 = vld [vmem:[%s3 + $0x150] sm:$0xf]
        %v4085 = vld [vmem:[%s3 + $0x158] sm:$0xf]
        %v4086 = vld [vmem:[%s3 + $0x160] sm:$0xf]
        %v4087 = vld [vmem:[%s3 + $0x168] sm:$0xf]
        %v4088 = vld [vmem:[%s3 + $0x170] sm:$0xf]
        %v4089 = vld [vmem:[%s3 + $0x178] sm:$0xf]
        %v4090 = vld [vmem:[%s4] sm:$0xff]
        %v4091 = vld [vmem:[%s4 + $0x8] sm:$0xff]
        %v4094 = vlaneseq
        %v4095 = vshrl.u32 %v4094, 7
        %v4096 = vsub.s32 0, %v4095
        %v4097 = vrot.slane %v4090, %v4096
        %v4098 = vlaneseq
        %v4099 = vshrl.u32 %v4098, 7
        %v4100 = vsub.s32 1, %v4099
        %v4101 = vrot.slane %v4090, %v4100
        %v4102 = vlaneseq
        %v4103 = vshrl.u32 %v4102, 7
        %v4104 = vsub.s32 2, %v4103
        %v4105 = vrot.slane %v4090, %v4104
        %v4106 = vlaneseq
        %v4107 = vshrl.u32 %v4106, 7
        %v4108 = vsub.s32 3, %v4107
        %v4109 = vrot.slane %v4090, %v4108
        %v4110 = vlaneseq
        %v4111 = vshrl.u32 %v4110, 7
        %v4112 = vsub.s32 4, %v4111
        %v4113 = vrot.slane %v4090, %v4112
        %v4114 = vlaneseq
        %v4115 = vshrl.u32 %v4114, 7
        %v4116 = vsub.s32 5, %v4115
        %v4117 = vrot.slane %v4090, %v4116
        %v4118 = vlaneseq
        %v4119 = vshrl.u32 %v4118, 7
        %v4120 = vsub.s32 6, %v4119
        %v4121 = vrot.slane %v4090, %v4120
        %v4122 = vlaneseq
        %v4123 = vshrl.u32 %v4122, 7
        %v4124 = vsub.s32 7, %v4123
        %v4125 = vrot.slane %v4090, %v4124
        %v4126 = vlaneseq
        %v4127 = vshrl.u32 %v4126, 7
        %v4128 = vsub.s32 0, %v4127
        %v4129 = vrot.slane %v4091, %v4128
        %v4130 = vlaneseq
        %v4131 = vshrl.u32 %v4130, 7
        %v4132 = vsub.s32 1, %v4131
        %v4133 = vrot.slane %v4091, %v4132
        %v4134 = vlaneseq
        %v4135 = vshrl.u32 %v4134, 7
        %v4136 = vsub.s32 2, %v4135
        %v4137 = vrot.slane %v4091, %v4136
        %v4138 = vlaneseq
        %v4139 = vshrl.u32 %v4138, 7
        %v4140 = vsub.s32 3, %v4139
        %v4141 = vrot.slane %v4091, %v4140
        %v4142 = vlaneseq
        %v4143 = vshrl.u32 %v4142, 7
        %v4144 = vsub.s32 4, %v4143
        %v4145 = vrot.slane %v4091, %v4144
        %v4146 = vlaneseq
        %v4147 = vshrl.u32 %v4146, 7
        %v4148 = vsub.s32 5, %v4147
        %v4149 = vrot.slane %v4091, %v4148
        %v4150 = vlaneseq
        %v4151 = vshrl.u32 %v4150, 7
        %v4152 = vsub.s32 6, %v4151
        %v4153 = vrot.slane %v4091, %v4152
        %v4154 = vlaneseq
        %v4155 = vshrl.u32 %v4154, 7
        %v4156 = vsub.s32 7, %v4155
        %v4157 = vrot.slane %v4091, %v4156
        %v4175 = vsel %vm506, %v4026, 0
        %v4178 = vsel %vm506, %v4027, 0
        %v4181 = vsel %vm506, %v4028, 0
        %v4184 = vsel %vm506, %v4029, 0
        %v4187 = vsel %vm506, %v4030, 0
        %v4190 = vsel %vm506, %v4031, 0
        %v4193 = vsel %vm506, %v4032, 0
        %v4196 = vsel %vm506, %v4033, 0
        %v4199 = vsel %vm506, %v4034, 0
        %v4202 = vsel %vm506, %v4035, 0
        %v4205 = vsel %vm506, %v4036, 0
        %v4208 = vsel %vm506, %v4037, 0
        %v4211 = vsel %vm506, %v4038, 0
        %v4214 = vsel %vm506, %v4039, 0
        %v4217 = vsel %vm506, %v4040, 0
        %v4220 = vsel %vm506, %v4041, 0
        %v4223 = vsel %vm555, %v4074, 0
        %v4226 = vsel %vm555, %v4075, 0
        %v4229 = vsel %vm555, %v4076, 0
        %v4232 = vsel %vm555, %v4077, 0
        %v4235 = vsel %vm555, %v4078, 0
        %v4238 = vsel %vm555, %v4079, 0
        %v4241 = vsel %vm555, %v4080, 0
        %v4244 = vsel %vm555, %v4081, 0
        %v4247 = vsel %vm555, %v4082, 0
        %v4250 = vsel %vm555, %v4083, 0
        %v4253 = vsel %vm555, %v4084, 0
        %v4256 = vsel %vm555, %v4085, 0
        %v4259 = vsel %vm555, %v4086, 0
        %v4262 = vsel %vm555, %v4087, 0
        %v4265 = vsel %vm555, %v4088, 0
        %v4268 = vsel %vm555, %v4089, 0
        %4270 = vmatprep.subr.mxu0 %v4043
        %4271 = vmatpush1.msra.mxu0 %v4042
        %4272 = vmatprep.subr.mxu0 %v4059
        %4273 = vmatpush1.msra.mxu0 %v4058
        %4274 = vmatprep.subr.mxu0 %v4226
        %4275 = vmatpush1.msra.mxu0 %v4223
        %4276 = vmatprep.subr.mxu0 0.0
        %4277 = vmatpush1.msra.mxu0 0.0
        %4278 = vmatprep.subr.mxu0 0.0
        %4279 = vmatpush1.msra.mxu0 0.0
        %4280 = vmatprep.subr.mxu0 0.0
        %4281 = vmatpush1.msra.mxu0 0.0
        %4282 = vmatprep.subr.mxu0 0.0
        %4283 = vmatpush1.msra.mxu0 0.0
        %4284 = vmatprep.subr.mxu0 0.0
        %4285 = vmatpush1.msra.mxu0 0.0
        %4286 = vmatprep.subr.mxu0 0.0
        %4287 = vmatpush1.msra.mxu0 0.0
        %4288 = vmatprep.subr.mxu0 0.0
        %4289 = vmatpush1.msra.mxu0 0.0
        %4290 = vmatprep.subr.mxu0 0.0
        %4291 = vmatpush1.msra.mxu0 0.0
        %4292 = vmatprep.subr.mxu0 0.0
        %4293 = vmatpush1.msra.mxu0 0.0
        %4294 = vmatprep.subr.mxu0 0.0
        %4295 = vmatpush1.msra.mxu0 0.0
        %4296 = vmatprep.subr.mxu0 0.0
        %4297 = vmatpush1.msra.mxu0 0.0
        %4298 = vmatprep.subr.mxu0 0.0
        %4299 = vmatpush1.msra.mxu0 0.0
        %4300 = vmatprep.subr.mxu0 0.0
        %4301 = vmatpush1.msra.mxu0 0.0
        %4302 = vmatprep.subr.mxu0 0.0
        %4303 = vmatpush1.msra.mxu0 0.0
        %4304 = vmatprep.subr.mxu0 0.0
        %4305 = vmatpush1.msra.mxu0 0.0
        %4306 = vmatprep.subr.mxu0 0.0
        %4307 = vmatpush1.msra.mxu0 0.0
        %4308 = vmatprep.subr.mxu0 0.0
        %4309 = vmatpush1.msra.mxu0 0.0
        %4310 = vmatprep.subr.mxu0 0.0
        %4311 = vmatpush1.msra.mxu0 0.0
        %4312 = vmatprep.subr.mxu0 0.0
        %4313 = vmatpush1.msra.mxu0 0.0
        %4314 = vmatprep.subr.mxu0 0.0
        %4315 = vmatpush1.msra.mxu0 0.0
        %4316 = vmatprep.subr.mxu0 0.0
        %4317 = vmatpush1.msra.mxu0 0.0
        %4318 = vmatprep.subr.mxu0 0.0
        %4319 = vmatpush1.msra.mxu0 0.0
        %4320 = vmatprep.subr.mxu0 0.0
        %4321 = vmatpush1.msra.mxu0 0.0
        %4322 = vmatprep.subr.mxu0 0.0
        %4323 = vmatpush1.msra.mxu0 0.0
        %4324 = vmatprep.subr.mxu0 0.0
        %4325 = vmatpush1.msra.mxu0 0.0
        %4326 = vmatprep.subr.mxu0 0.0
        %4327 = vmatpush1.msra.mxu0 0.0
        %4328 = vmatprep.subr.mxu0 0.0
        %4329 = vmatpush1.msra.mxu0 0.0
        %4330 = vmatprep.subr.mxu0 0.0
        %4331 = vmatpush1.msra.mxu0 0.0
        %4332 = vmatprep.subr.mxu0 0.0
        %4333 = vmatpush1.msra.mxu0 0.0
        %4334 = vmatprep.mubr.f32.mxu0 0.0
        %4335 = vmatmul.mubr.f32.gmra.mrb[0].mxu0 %v4175
        %v4336 = vpop.f32.mrb[0].mxu0
        %v4337 = vadd.f32 %v4097, %v4336
        %v4338 = vpop.f32.mrb[0].mxu0
        %v4339 = vadd.f32 %v4101, %v4338
        %4340 = vmatprep.mubr.f32.mxu0 0.0
        %4341 = vmatmul.mubr.f32.gmra.mrb[0].mxu0 %v4178
        %v4342 = vpop.f32.mrb[0].mxu0
        %v4343 = vadd.f32 %v4097, %v4342
        %v4344 = vpop.f32.mrb[0].mxu0
        %v4345 = vadd.f32 %v4101, %v4344
        %4346 = vmatprep.mubr.f32.mxu0 0.0
        %4347 = vmatmul.mubr.f32.gmra.mrb[0].mxu0 %v4181
        %v4348 = vpop.f32.mrb[0].mxu0
        %v4349 = vadd.f32 %v4097, %v4348
        %v4350 = vpop.f32.mrb[0].mxu0
        %v4351 = vadd.f32 %v4101, %v4350
        %4352 = vmatprep.mubr.f32.mxu0 0.0
        %4353 = vmatmul.mubr.f32.gmra.mrb[0].mxu0 %v4184
        %v4354 = vpop.f32.mrb[0].mxu0
        %v4355 = vadd.f32 %v4097, %v4354
        %v4356 = vpop.f32.mrb[0].mxu0
        %v4357 = vadd.f32 %v4101, %v4356
        %4358 = vmatprep.mubr.f32.mxu0 0.0
        %4359 = vmatmul.mubr.f32.gmra.mrb[0].mxu0 %v4187
        %v4360 = vpop.f32.mrb[0].mxu0
        %v4361 = vadd.f32 %v4097, %v4360
        %v4362 = vpop.f32.mrb[0].mxu0
        %v4363 = vadd.f32 %v4101, %v4362
        %4364 = vmatprep.mubr.f32.mxu0 0.0
        %4365 = vmatmul.mubr.f32.gmra.mrb[0].mxu0 %v4190
        %v4366 = vpop.f32.mrb[0].mxu0
        %v4367 = vadd.f32 %v4097, %v4366
        %v4368 = vpop.f32.mrb[0].mxu0
        %v4369 = vadd.f32 %v4101, %v4368
        %4370 = vmatprep.mubr.f32.mxu0 0.0
        %4371 = vmatmul.mubr.f32.gmra.mrb[0].mxu0 %v4193
        %v4372 = vpop.f32.mrb[0].mxu0
        %v4373 = vadd.f32 %v4097, %v4372
        %v4374 = vpop.f32.mrb[0].mxu0
        %v4375 = vadd.f32 %v4101, %v4374
        %4376 = vmatprep.mubr.f32.mxu0 0.0
        %4377 = vmatmul.mubr.f32.gmra.mrb[0].mxu0 %v4196
        %v4378 = vpop.f32.mrb[0].mxu0
        %v4379 = vadd.f32 %v4097, %v4378
        %v4380 = vpop.f32.mrb[0].mxu0
        %v4381 = vadd.f32 %v4101, %v4380
        %4382 = vmatprep.mubr.f32.mxu0 0.0
        %4383 = vmatmul.mubr.f32.gmra.mrb[0].mxu0 %v4199
        %v4384 = vpop.f32.mrb[0].mxu0
        %v4385 = vadd.f32 %v4097, %v4384
        %v4386 = vpop.f32.mrb[0].mxu0
        %v4387 = vadd.f32 %v4101, %v4386
        %4388 = vmatprep.mubr.f32.mxu0 0.0
        %4389 = vmatmul.mubr.f32.gmra.mrb[0].mxu0 %v4202
        %v4390 = vpop.f32.mrb[0].mxu0
        %v4391 = vadd.f32 %v4097, %v4390
        %v4392 = vpop.f32.mrb[0].mxu0
        %v4393 = vadd.f32 %v4101, %v4392
        %4394 = vmatprep.mubr.f32.mxu0 0.0
        %4395 = vmatmul.mubr.f32.gmra.mrb[0].mxu0 %v4205
        %v4396 = vpop.f32.mrb[0].mxu0
        %v4397 = vadd.f32 %v4097, %v4396
        %v4398 = vpop.f32.mrb[0].mxu0
        %v4399 = vadd.f32 %v4101, %v4398
        %4400 = vmatprep.mubr.f32.mxu0 0.0
        %4401 = vmatmul.mubr.f32.gmra.mrb[0].mxu0 %v4208
        %v4402 = vpop.f32.mrb[0].mxu0
        %v4403 = vadd.f32 %v4097, %v4402
        %v4404 = vpop.f32.mrb[0].mxu0
        %v4405 = vadd.f32 %v4101, %v4404
        %4406 = vmatprep.mubr.f32.mxu0 0.0
        %4407 = vmatmul.mubr.f32.gmra.mrb[0].mxu0 %v4211
        %v4408 = vpop.f32.mrb[0].mxu0
        %v4409 = vadd.f32 %v4097, %v4408
        %v4410 = vpop.f32.mrb[0].mxu0
        %v4411 = vadd.f32 %v4101, %v4410
        %4412 = vmatprep.mubr.f32.mxu0 0.0
        %4413 = vmatmul.mubr.f32.gmra.mrb[0].mxu0 %v4214
        %v4414 = vpop.f32.mrb[0].mxu0
        %v4415 = vadd.f32 %v4097, %v4414
        %v4416 = vpop.f32.mrb[0].mxu0
        %v4417 = vadd.f32 %v4101, %v4416
        %4418 = vmatprep.mubr.f32.mxu0 0.0
        %4419 = vmatmul.mubr.f32.gmra.mrb[0].mxu0 %v4217
        %v4420 = vpop.f32.mrb[0].mxu0
        %v4421 = vadd.f32 %v4097, %v4420
        %v4422 = vpop.f32.mrb[0].mxu0
        %v4423 = vadd.f32 %v4101, %v4422
        %4424 = vmatprep.mubr.f32.mxu0 0.0
        %4425 = vmatmul.mubr.f32.gmra.mrb[0].mxu0 %v4220
        %v4426 = vpop.f32.mrb[0].mxu0
        %v4427 = vadd.f32 %v4097, %v4426
        %v4428 = vpop.f32.mrb[0].mxu0
        %v4429 = vadd.f32 %v4101, %v4428
        %4430 = vdwg.mxu0
        %4431 = vmatprep.subr.mxu0 %v4045
        %4432 = vmatpush1.msra.mxu0 %v4044
        %4433 = vmatprep.subr.mxu0 %v4061
        %4434 = vmatpush1.msra.mxu0 %v4060
        %4435 = vmatprep.subr.mxu0 %v4232
        %4436 = vmatpush1.msra.mxu0 %v4229
        %4437 = vmatprep.subr.mxu0 0.0
        %4438 = vmatpush1.msra.mxu0 0.0
        %4439 = vmatprep.subr.mxu0 0.0
        %4440 = vmatpush1.msra.mxu0 0.0
        %4441 = vmatprep.subr.mxu0 0.0
        %4442 = vmatpush1.msra.mxu0 0.0
        %4443 = vmatprep.subr.mxu0 0.0
        %4444 = vmatpush1.msra.mxu0 0.0
        %4445 = vmatprep.subr.mxu0 0.0
        %4446 = vmatpush1.msra.mxu0 0.0
        %4447 = vmatprep.subr.mxu0 0.0
        %4448 = vmatpush1.msra.mxu0 0.0
        %4449 = vmatprep.subr.mxu0 0.0
        %4450 = vmatpush1.msra.mxu0 0.0
        %4451 = vmatprep.subr.mxu0 0.0
        %4452 = vmatpush1.msra.mxu0 0.0
        %4453 = vmatprep.subr.mxu0 0.0
        %4454 = vmatpush1.msra.mxu0 0.0
        %4455 = vmatprep.subr.mxu0 0.0
        %4456 = vmatpush1.msra.mxu0 0.0
        %4457 = vmatprep.subr.mxu0 0.0
        %4458 = vmatpush1.msra.mxu0 0.0
        %4459 = vmatprep.subr.mxu0 0.0
        %4460 = vmatpush1.msra.mxu0 0.0
        %4461 = vmatprep.subr.mxu0 0.0
        %4462 = vmatpush1.msra.mxu0 0.0
        %4463 = vmatprep.subr.mxu0 0.0
        %4464 = vmatpush1.msra.mxu0 0.0
        %4465 = vmatprep.subr.mxu0 0.0
        %4466 = vmatpush1.msra.mxu0 0.0
        %4467 = vmatprep.subr.mxu0 0.0
        %4468 = vmatpush1.msra.mxu0 0.0
        %4469 = vmatprep.subr.mxu0 0.0
        %4470 = vmatpush1.msra.mxu0 0.0
        %4471 = vmatprep.subr.mxu0 0.0
        %4472 = vmatpush1.msra.mxu0 0.0
        %4473 = vmatprep.subr.mxu0 0.0
        %4474 = vmatpush1.msra.mxu0 0.0
        %4475 = vmatprep.subr.mxu0 0.0
        %4476 = vmatpush1.msra.mxu0 0.0
        %4477 = vmatprep.subr.mxu0 0.0
        %4478 = vmatpush1.msra.mxu0 0.0
        %4479 = vmatprep.subr.mxu0 0.0
        %4480 = vmatpush1.msra.mxu0 0.0
        %4481 = vmatprep.subr.mxu0 0.0
        %4482 = vmatpush1.msra.mxu0 0.0
        %4483 = vmatprep.subr.mxu0 0.0
        %4484 = vmatpush1.msra.mxu0 0.0
        %4485 = vmatprep.subr.mxu0 0.0
        %4486 = vmatpush1.msra.mxu0 0.0
        %4487 = vmatprep.subr.mxu0 0.0
        %4488 = vmatpush1.msra.mxu0 0.0
        %4489 = vmatprep.subr.mxu0 0.0
        %4490 = vmatpush1.msra.mxu0 0.0
        %4491 = vmatprep.subr.mxu0 0.0
        %4492 = vmatpush1.msra.mxu0 0.0
        %4493 = vmatprep.subr.mxu0 0.0
        %4494 = vmatpush1.msra.mxu0 0.0
        %4495 = vmatprep.mubr.f32.mxu0 0.0
        %4496 = vmatmul.mubr.f32.gmra.mrb[0].mxu0 %v4175
        %v4497 = vpop.f32.mrb[0].mxu0
        %v4498 = vadd.f32 %v4105, %v4497
        %v4499 = vpop.f32.mrb[0].mxu0
        %v4500 = vadd.f32 %v4109, %v4499
        %4501 = vmatprep.mubr.f32.mxu0 0.0
        %4502 = vmatmul.mubr.f32.gmra.mrb[0].mxu0 %v4178
        %v4503 = vpop.f32.mrb[0].mxu0
        %v4504 = vadd.f32 %v4105, %v4503
        %v4505 = vpop.f32.mrb[0].mxu0
        %v4506 = vadd.f32 %v4109, %v4505
        %4507 = vmatprep.mubr.f32.mxu0 0.0
        %4508 = vmatmul.mubr.f32.gmra.mrb[0].mxu0 %v4181
        %v4509 = vpop.f32.mrb[0].mxu0
        %v4510 = vadd.f32 %v4105, %v4509
        %v4511 = vpop.f32.mrb[0].mxu0
        %v4512 = vadd.f32 %v4109, %v4511
        %4513 = vmatprep.mubr.f32.mxu0 0.0
        %4514 = vmatmul.mubr.f32.gmra.mrb[0].mxu0 %v4184
        %v4515 = vpop.f32.mrb[0].mxu0
        %v4516 = vadd.f32 %v4105, %v4515
        %v4517 = vpop.f32.mrb[0].mxu0
        %v4518 = vadd.f32 %v4109, %v4517
        %4519 = vmatprep.mubr.f32.mxu0 0.0
        %4520 = vmatmul.mubr.f32.gmra.mrb[0].mxu0 %v4187
        %v4521 = vpop.f32.mrb[0].mxu0
        %v4522 = vadd.f32 %v4105, %v4521
        %v4523 = vpop.f32.mrb[0].mxu0
        %v4524 = vadd.f32 %v4109, %v4523
        %4525 = vmatprep.mubr.f32.mxu0 0.0
        %4526 = vmatmul.mubr.f32.gmra.mrb[0].mxu0 %v4190
        %v4527 = vpop.f32.mrb[0].mxu0
        %v4528 = vadd.f32 %v4105, %v4527
        %v4529 = vpop.f32.mrb[0].mxu0
        %v4530 = vadd.f32 %v4109, %v4529
        %4531 = vmatprep.mubr.f32.mxu0 0.0
        %4532 = vmatmul.mubr.f32.gmra.mrb[0].mxu0 %v4193
        %v4533 = vpop.f32.mrb[0].mxu0
        %v4534 = vadd.f32 %v4105, %v4533
        %v4535 = vpop.f32.mrb[0].mxu0
        %v4536 = vadd.f32 %v4109, %v4535
        %4537 = vmatprep.mubr.f32.mxu0 0.0
        %4538 = vmatmul.mubr.f32.gmra.mrb[0].mxu0 %v4196
        %v4539 = vpop.f32.mrb[0].mxu0
        %v4540 = vadd.f32 %v4105, %v4539
        %v4541 = vpop.f32.mrb[0].mxu0
        %v4542 = vadd.f32 %v4109, %v4541
        %4543 = vmatprep.mubr.f32.mxu0 0.0
        %4544 = vmatmul.mubr.f32.gmra.mrb[0].mxu0 %v4199
        %v4545 = vpop.f32.mrb[0].mxu0
        %v4546 = vadd.f32 %v4105, %v4545
        %v4547 = vpop.f32.mrb[0].mxu0
        %v4548 = vadd.f32 %v4109, %v4547
        %4549 = vmatprep.mubr.f32.mxu0 0.0
        %4550 = vmatmul.mubr.f32.gmra.mrb[0].mxu0 %v4202
        %v4551 = vpop.f32.mrb[0].mxu0
        %v4552 = vadd.f32 %v4105, %v4551
        %v4553 = vpop.f32.mrb[0].mxu0
        %v4554 = vadd.f32 %v4109, %v4553
        %4555 = vmatprep.mubr.f32.mxu0 0.0
        %4556 = vmatmul.mubr.f32.gmra.mrb[0].mxu0 %v4205
        %v4557 = vpop.f32.mrb[0].mxu0
        %v4558 = vadd.f32 %v4105, %v4557
        %v4559 = vpop.f32.mrb[0].mxu0
        %v4560 = vadd.f32 %v4109, %v4559
        %4561 = vmatprep.mubr.f32.mxu0 0.0
        %4562 = vmatmul.mubr.f32.gmra.mrb[0].mxu0 %v4208
        %v4563 = vpop.f32.mrb[0].mxu0
        %v4564 = vadd.f32 %v4105, %v4563
        %v4565 = vpop.f32.mrb[0].mxu0
        %v4566 = vadd.f32 %v4109, %v4565
        %4567 = vmatprep.mubr.f32.mxu0 0.0
        %4568 = vmatmul.mubr.f32.gmra.mrb[0].mxu0 %v4211
        %v4569 = vpop.f32.mrb[0].mxu0
        %v4570 = vadd.f32 %v4105, %v4569
        %v4571 = vpop.f32.mrb[0].mxu0
        %v4572 = vadd.f32 %v4109, %v4571
        %4573 = vmatprep.mubr.f32.mxu0 0.0
        %4574 = vmatmul.mubr.f32.gmra.mrb[0].mxu0 %v4214
        %v4575 = vpop.f32.mrb[0].mxu0
        %v4576 = vadd.f32 %v4105, %v4575
        %v4577 = vpop.f32.mrb[0].mxu0
        %v4578 = vadd.f32 %v4109, %v4577
        %4579 = vmatprep.mubr.f32.mxu0 0.0
        %4580 = vmatmul.mubr.f32.gmra.mrb[0].mxu0 %v4217
        %v4581 = vpop.f32.mrb[0].mxu0
        %v4582 = vadd.f32 %v4105, %v4581
        %v4583 = vpop.f32.mrb[0].mxu0
        %v4584 = vadd.f32 %v4109, %v4583
        %4585 = vmatprep.mubr.f32.mxu0 0.0
        %4586 = vmatmul.mubr.f32.gmra.mrb[0].mxu0 %v4220
        %v4587 = vpop.f32.mrb[0].mxu0
        %v4588 = vadd.f32 %v4105, %v4587
        %v4589 = vpop.f32.mrb[0].mxu0
        %v4590 = vadd.f32 %v4109, %v4589
        %4591 = vdwg.mxu0
        %4592 = vmatprep.subr.mxu0 %v4047
        %4593 = vmatpush1.msra.mxu0 %v4046
        %4594 = vmatprep.subr.mxu0 %v4063
        %4595 = vmatpush1.msra.mxu0 %v4062
        %4596 = vmatprep.subr.mxu0 %v4238
        %4597 = vmatpush1.msra.mxu0 %v4235
        %4598 = vmatprep.subr.mxu0 0.0
        %4599 = vmatpush1.msra.mxu0 0.0
        %4600 = vmatprep.subr.mxu0 0.0
        %4601 = vmatpush1.msra.mxu0 0.0
        %4602 = vmatprep.subr.mxu0 0.0
        %4603 = vmatpush1.msra.mxu0 0.0
        %4604 = vmatprep.subr.mxu0 0.0
        %4605 = vmatpush1.msra.mxu0 0.0
        %4606 = vmatprep.subr.mxu0 0.0
        %4607 = vmatpush1.msra.mxu0 0.0
        %4608 = vmatprep.subr.mxu0 0.0
        %4609 = vmatpush1.msra.mxu0 0.0
        %4610 = vmatprep.subr.mxu0 0.0
        %4611 = vmatpush1.msra.mxu0 0.0
        %4612 = vmatprep.subr.mxu0 0.0
        %4613 = vmatpush1.msra.mxu0 0.0
        %4614 = vmatprep.subr.mxu0 0.0
        %4615 = vmatpush1.msra.mxu0 0.0
        %4616 = vmatprep.subr.mxu0 0.0
        %4617 = vmatpush1.msra.mxu0 0.0
        %4618 = vmatprep.subr.mxu0 0.0
        %4619 = vmatpush1.msra.mxu0 0.0
        %4620 = vmatprep.subr.mxu0 0.0
        %4621 = vmatpush1.msra.mxu0 0.0
        %4622 = vmatprep.subr.mxu0 0.0
        %4623 = vmatpush1.msra.mxu0 0.0
        %4624 = vmatprep.subr.mxu0 0.0
        %4625 = vmatpush1.msra.mxu0 0.0
        %4626 = vmatprep.subr.mxu0 0.0
        %4627 = vmatpush1.msra.mxu0 0.0
        %4628 = vmatprep.subr.mxu0 0.0
        %4629 = vmatpush1.msra.mxu0 0.0
        %4630 = vmatprep.subr.mxu0 0.0
        %4631 = vmatpush1.msra.mxu0 0.0
        %4632 = vmatprep.subr.mxu0 0.0
        %4633 = vmatpush1.msra.mxu0 0.0
        %4634 = vmatprep.subr.mxu0 0.0
        %4635 = vmatpush1.msra.mxu0 0.0
        %4636 = vmatprep.subr.mxu0 0.0
        %4637 = vmatpush1.msra.mxu0 0.0
        %4638 = vmatprep.subr.mxu0 0.0
        %4639 = vmatpush1.msra.mxu0 0.0
        %4640 = vmatprep.subr.mxu0 0.0
        %4641 = vmatpush1.msra.mxu0 0.0
        %4642 = vmatprep.subr.mxu0 0.0
        %4643 = vmatpush1.msra.mxu0 0.0
        %4644 = vmatprep.subr.mxu0 0.0
        %4645 = vmatpush1.msra.mxu0 0.0
        %4646 = vmatprep.subr.mxu0 0.0
        %4647 = vmatpush1.msra.mxu0 0.0
        %4648 = vmatprep.subr.mxu0 0.0
        %4649 = vmatpush1.msra.mxu0 0.0
        %4650 = vmatprep.subr.mxu0 0.0
        %4651 = vmatpush1.msra.mxu0 0.0
        %4652 = vmatprep.subr.mxu0 0.0
        %4653 = vmatpush1.msra.mxu0 0.0
        %4654 = vmatprep.subr.mxu0 0.0
        %4655 = vmatpush1.msra.mxu0 0.0
        %4656 = vmatprep.mubr.f32.mxu0 0.0
        %4657 = vmatmul.mubr.f32.gmra.mrb[0].mxu0 %v4175
        %v4658 = vpop.f32.mrb[0].mxu0
        %v4659 = vadd.f32 %v4113, %v4658
        %v4660 = vpop.f32.mrb[0].mxu0
        %v4661 = vadd.f32 %v4117, %v4660
        %4662 = vmatprep.mubr.f32.mxu0 0.0
        %4663 = vmatmul.mubr.f32.gmra.mrb[0].mxu0 %v4178
        %v4664 = vpop.f32.mrb[0].mxu0
        %v4665 = vadd.f32 %v4113, %v4664
        %v4666 = vpop.f32.mrb[0].mxu0
        %v4667 = vadd.f32 %v4117, %v4666
        %4668 = vmatprep.mubr.f32.mxu0 0.0
        %4669 = vmatmul.mubr.f32.gmra.mrb[0].mxu0 %v4181
        %v4670 = vpop.f32.mrb[0].mxu0
        %v4671 = vadd.f32 %v4113, %v4670
        %v4672 = vpop.f32.mrb[0].mxu0
        %v4673 = vadd.f32 %v4117, %v4672
        %4674 = vmatprep.mubr.f32.mxu0 0.0
        %4675 = vmatmul.mubr.f32.gmra.mrb[0].mxu0 %v4184
        %v4676 = vpop.f32.mrb[0].mxu0
        %v4677 = vadd.f32 %v4113, %v4676
        %v4678 = vpop.f32.mrb[0].mxu0
        %v4679 = vadd.f32 %v4117, %v4678
        %4680 = vmatprep.mubr.f32.mxu0 0.0
        %4681 = vmatmul.mubr.f32.gmra.mrb[0].mxu0 %v4187
        %v4682 = vpop.f32.mrb[0].mxu0
        %v4683 = vadd.f32 %v4113, %v4682
        %v4684 = vpop.f32.mrb[0].mxu0
        %v4685 = vadd.f32 %v4117, %v4684
        %4686 = vmatprep.mubr.f32.mxu0 0.0
        %4687 = vmatmul.mubr.f32.gmra.mrb[0].mxu0 %v4190
        %v4688 = vpop.f32.mrb[0].mxu0
        %v4689 = vadd.f32 %v4113, %v4688
        %v4690 = vpop.f32.mrb[0].mxu0
        %v4691 = vadd.f32 %v4117, %v4690
        %4692 = vmatprep.mubr.f32.mxu0 0.0
        %4693 = vmatmul.mubr.f32.gmra.mrb[0].mxu0 %v4193
        %v4694 = vpop.f32.mrb[0].mxu0
        %v4695 = vadd.f32 %v4113, %v4694
        %v4696 = vpop.f32.mrb[0].mxu0
        %v4697 = vadd.f32 %v4117, %v4696
        %4698 = vmatprep.mubr.f32.mxu0 0.0
        %4699 = vmatmul.mubr.f32.gmra.mrb[0].mxu0 %v4196
        %v4700 = vpop.f32.mrb[0].mxu0
        %v4701 = vadd.f32 %v4113, %v4700
        %v4702 = vpop.f32.mrb[0].mxu0
        %v4703 = vadd.f32 %v4117, %v4702
        %4704 = vmatprep.mubr.f32.mxu0 0.0
        %4705 = vmatmul.mubr.f32.gmra.mrb[0].mxu0 %v4199
        %v4706 = vpop.f32.mrb[0].mxu0
        %v4707 = vadd.f32 %v4113, %v4706
        %v4708 = vpop.f32.mrb[0].mxu0
        %v4709 = vadd.f32 %v4117, %v4708
        %4710 = vmatprep.mubr.f32.mxu0 0.0
        %4711 = vmatmul.mubr.f32.gmra.mrb[0].mxu0 %v4202
        %v4712 = vpop.f32.mrb[0].mxu0
        %v4713 = vadd.f32 %v4113, %v4712
        %v4714 = vpop.f32.mrb[0].mxu0
        %v4715 = vadd.f32 %v4117, %v4714
        %4716 = vmatprep.mubr.f32.mxu0 0.0
        %4717 = vmatmul.mubr.f32.gmra.mrb[0].mxu0 %v4205
        %v4718 = vpop.f32.mrb[0].mxu0
        %v4719 = vadd.f32 %v4113, %v4718
        %v4720 = vpop.f32.mrb[0].mxu0
        %v4721 = vadd.f32 %v4117, %v4720
        %4722 = vmatprep.mubr.f32.mxu0 0.0
        %4723 = vmatmul.mubr.f32.gmra.mrb[0].mxu0 %v4208
        %v4724 = vpop.f32.mrb[0].mxu0
        %v4725 = vadd.f32 %v4113, %v4724
        %v4726 = vpop.f32.mrb[0].mxu0
        %v4727 = vadd.f32 %v4117, %v4726
        %4728 = vmatprep.mubr.f32.mxu0 0.0
        %4729 = vmatmul.mubr.f32.gmra.mrb[0].mxu0 %v4211
        %v4730 = vpop.f32.mrb[0].mxu0
        %v4731 = vadd.f32 %v4113, %v4730
        %v4732 = vpop.f32.mrb[0].mxu0
        %v4733 = vadd.f32 %v4117, %v4732
        %4734 = vmatprep.mubr.f32.mxu0 0.0
        %4735 = vmatmul.mubr.f32.gmra.mrb[0].mxu0 %v4214
        %v4736 = vpop.f32.mrb[0].mxu0
        %v4737 = vadd.f32 %v4113, %v4736
        %v4738 = vpop.f32.mrb[0].mxu0
        %v4739 = vadd.f32 %v4117, %v4738
        %4740 = vmatprep.mubr.f32.mxu0 0.0
        %4741 = vmatmul.mubr.f32.gmra.mrb[0].mxu0 %v4217
        %v4742 = vpop.f32.mrb[0].mxu0
        %v4743 = vadd.f32 %v4113, %v4742
        %v4744 = vpop.f32.mrb[0].mxu0
        %v4745 = vadd.f32 %v4117, %v4744
        %4746 = vmatprep.mubr.f32.mxu0 0.0
        %4747 = vmatmul.mubr.f32.gmra.mrb[0].mxu0 %v4220
        %v4748 = vpop.f32.mrb[0].mxu0
        %v4749 = vadd.f32 %v4113, %v4748
        %v4750 = vpop.f32.mrb[0].mxu0
        %v4751 = vadd.f32 %v4117, %v4750
        %4752 = vdwg.mxu0
        %4753 = vmatprep.subr.mxu0 %v4049
        %4754 = vmatpush1.msra.mxu0 %v4048
        %4755 = vmatprep.subr.mxu0 %v4065
        %4756 = vmatpush1.msra.mxu0 %v4064
        %4757 = vmatprep.subr.mxu0 %v4244
        %4758 = vmatpush1.msra.mxu0 %v4241
        %4759 = vmatprep.subr.mxu0 0.0
        %4760 = vmatpush1.msra.mxu0 0.0
        %4761 = vmatprep.subr.mxu0 0.0
        %4762 = vmatpush1.msra.mxu0 0.0
        %4763 = vmatprep.subr.mxu0 0.0
        %4764 = vmatpush1.msra.mxu0 0.0
        %4765 = vmatprep.subr.mxu0 0.0
        %4766 = vmatpush1.msra.mxu0 0.0
        %4767 = vmatprep.subr.mxu0 0.0
        %4768 = vmatpush1.msra.mxu0 0.0
        %4769 = vmatprep.subr.mxu0 0.0
        %4770 = vmatpush1.msra.mxu0 0.0
        %4771 = vmatprep.subr.mxu0 0.0
        %4772 = vmatpush1.msra.mxu0 0.0
        %4773 = vmatprep.subr.mxu0 0.0
        %4774 = vmatpush1.msra.mxu0 0.0
        %4775 = vmatprep.subr.mxu0 0.0
        %4776 = vmatpush1.msra.mxu0 0.0
        %4777 = vmatprep.subr.mxu0 0.0
        %4778 = vmatpush1.msra.mxu0 0.0
        %4779 = vmatprep.subr.mxu0 0.0
        %4780 = vmatpush1.msra.mxu0 0.0
        %4781 = vmatprep.subr.mxu0 0.0
        %4782 = vmatpush1.msra.mxu0 0.0
        %4783 = vmatprep.subr.mxu0 0.0
        %4784 = vmatpush1.msra.mxu0 0.0
        %4785 = vmatprep.subr.mxu0 0.0
        %4786 = vmatpush1.msra.mxu0 0.0
        %4787 = vmatprep.subr.mxu0 0.0
        %4788 = vmatpush1.msra.mxu0 0.0
        %4789 = vmatprep.subr.mxu0 0.0
        %4790 = vmatpush1.msra.mxu0 0.0
        %4791 = vmatprep.subr.mxu0 0.0
        %4792 = vmatpush1.msra.mxu0 0.0
        %4793 = vmatprep.subr.mxu0 0.0
        %4794 = vmatpush1.msra.mxu0 0.0
        %4795 = vmatprep.subr.mxu0 0.0
        %4796 = vmatpush1.msra.mxu0 0.0
        %4797 = vmatprep.subr.mxu0 0.0
        %4798 = vmatpush1.msra.mxu0 0.0
        %4799 = vmatprep.subr.mxu0 0.0
        %4800 = vmatpush1.msra.mxu0 0.0
        %4801 = vmatprep.subr.mxu0 0.0
        %4802 = vmatpush1.msra.mxu0 0.0
        %4803 = vmatprep.subr.mxu0 0.0
        %4804 = vmatpush1.msra.mxu0 0.0
        %4805 = vmatprep.subr.mxu0 0.0
        %4806 = vmatpush1.msra.mxu0 0.0
        %4807 = vmatprep.subr.mxu0 0.0
        %4808 = vmatpush1.msra.mxu0 0.0
        %4809 = vmatprep.subr.mxu0 0.0
        %4810 = vmatpush1.msra.mxu0 0.0
        %4811 = vmatprep.subr.mxu0 0.0
        %4812 = vmatpush1.msra.mxu0 0.0
        %4813 = vmatprep.subr.mxu0 0.0
        %4814 = vmatpush1.msra.mxu0 0.0
        %4815 = vmatprep.subr.mxu0 0.0
        %4816 = vmatpush1.msra.mxu0 0.0
        %4817 = vmatprep.mubr.f32.mxu0 0.0
        %4818 = vmatmul.mubr.f32.gmra.mrb[0].mxu0 %v4175
        %v4819 = vpop.f32.mrb[0].mxu0
        %v4820 = vadd.f32 %v4121, %v4819
        %v4821 = vpop.f32.mrb[0].mxu0
        %v4822 = vadd.f32 %v4125, %v4821
        %4823 = vmatprep.mubr.f32.mxu0 0.0
        %4824 = vmatmul.mubr.f32.gmra.mrb[0].mxu0 %v4178
        %v4825 = vpop.f32.mrb[0].mxu0
        %v4826 = vadd.f32 %v4121, %v4825
        %v4827 = vpop.f32.mrb[0].mxu0
        %v4828 = vadd.f32 %v4125, %v4827
        %4829 = vmatprep.mubr.f32.mxu0 0.0
        %4830 = vmatmul.mubr.f32.gmra.mrb[0].mxu0 %v4181
        %v4831 = vpop.f32.mrb[0].mxu0
        %v4832 = vadd.f32 %v4121, %v4831
        %v4833 = vpop.f32.mrb[0].mxu0
        %v4834 = vadd.f32 %v4125, %v4833
        %4835 = vmatprep.mubr.f32.mxu0 0.0
        %4836 = vmatmul.mubr.f32.gmra.mrb[0].mxu0 %v4184
        %v4837 = vpop.f32.mrb[0].mxu0
        %v4838 = vadd.f32 %v4121, %v4837
        %v4839 = vpop.f32.mrb[0].mxu0
        %v4840 = vadd.f32 %v4125, %v4839
        %4841 = vmatprep.mubr.f32.mxu0 0.0
        %4842 = vmatmul.mubr.f32.gmra.mrb[0].mxu0 %v4187
        %v4843 = vpop.f32.mrb[0].mxu0
        %v4844 = vadd.f32 %v4121, %v4843
        %v4845 = vpop.f32.mrb[0].mxu0
        %v4846 = vadd.f32 %v4125, %v4845
        %4847 = vmatprep.mubr.f32.mxu0 0.0
        %4848 = vmatmul.mubr.f32.gmra.mrb[0].mxu0 %v4190
        %v4849 = vpop.f32.mrb[0].mxu0
        %v4850 = vadd.f32 %v4121, %v4849
        %v4851 = vpop.f32.mrb[0].mxu0
        %v4852 = vadd.f32 %v4125, %v4851
        %4853 = vmatprep.mubr.f32.mxu0 0.0
        %4854 = vmatmul.mubr.f32.gmra.mrb[0].mxu0 %v4193
        %v4855 = vpop.f32.mrb[0].mxu0
        %v4856 = vadd.f32 %v4121, %v4855
        %v4857 = vpop.f32.mrb[0].mxu0
        %v4858 = vadd.f32 %v4125, %v4857
        %4859 = vmatprep.mubr.f32.mxu0 0.0
        %4860 = vmatmul.mubr.f32.gmra.mrb[0].mxu0 %v4196
        %v4861 = vpop.f32.mrb[0].mxu0
        %v4862 = vadd.f32 %v4121, %v4861
        %v4863 = vpop.f32.mrb[0].mxu0
        %v4864 = vadd.f32 %v4125, %v4863
        %4865 = vmatprep.mubr.f32.mxu0 0.0
        %4866 = vmatmul.mubr.f32.gmra.mrb[0].mxu0 %v4199
        %v4867 = vpop.f32.mrb[0].mxu0
        %v4868 = vadd.f32 %v4121, %v4867
        %v4869 = vpop.f32.mrb[0].mxu0
        %v4870 = vadd.f32 %v4125, %v4869
        %4871 = vmatprep.mubr.f32.mxu0 0.0
        %4872 = vmatmul.mubr.f32.gmra.mrb[0].mxu0 %v4202
        %v4873 = vpop.f32.mrb[0].mxu0
        %v4874 = vadd.f32 %v4121, %v4873
        %v4875 = vpop.f32.mrb[0].mxu0
        %v4876 = vadd.f32 %v4125, %v4875
        %4877 = vmatprep.mubr.f32.mxu0 0.0
        %4878 = vmatmul.mubr.f32.gmra.mrb[0].mxu0 %v4205
        %v4879 = vpop.f32.mrb[0].mxu0
        %v4880 = vadd.f32 %v4121, %v4879
        %v4881 = vpop.f32.mrb[0].mxu0
        %v4882 = vadd.f32 %v4125, %v4881
        %4883 = vmatprep.mubr.f32.mxu0 0.0
        %4884 = vmatmul.mubr.f32.gmra.mrb[0].mxu0 %v4208
        %v4885 = vpop.f32.mrb[0].mxu0
        %v4886 = vadd.f32 %v4121, %v4885
        %v4887 = vpop.f32.mrb[0].mxu0
        %v4888 = vadd.f32 %v4125, %v4887
        %4889 = vmatprep.mubr.f32.mxu0 0.0
        %4890 = vmatmul.mubr.f32.gmra.mrb[0].mxu0 %v4211
        %v4891 = vpop.f32.mrb[0].mxu0
        %v4892 = vadd.f32 %v4121, %v4891
        %v4893 = vpop.f32.mrb[0].mxu0
        %v4894 = vadd.f32 %v4125, %v4893
        %4895 = vmatprep.mubr.f32.mxu0 0.0
        %4896 = vmatmul.mubr.f32.gmra.mrb[0].mxu0 %v4214
        %v4897 = vpop.f32.mrb[0].mxu0
        %v4898 = vadd.f32 %v4121, %v4897
        %v4899 = vpop.f32.mrb[0].mxu0
        %v4900 = vadd.f32 %v4125, %v4899
        %4901 = vmatprep.mubr.f32.mxu0 0.0
        %4902 = vmatmul.mubr.f32.gmra.mrb[0].mxu0 %v4217
        %v4903 = vpop.f32.mrb[0].mxu0
        %v4904 = vadd.f32 %v4121, %v4903
        %v4905 = vpop.f32.mrb[0].mxu0
        %v4906 = vadd.f32 %v4125, %v4905
        %4907 = vmatprep.mubr.f32.mxu0 0.0
        %4908 = vmatmul.mubr.f32.gmra.mrb[0].mxu0 %v4220
        %v4909 = vpop.f32.mrb[0].mxu0
        %v4910 = vadd.f32 %v4121, %v4909
        %v4911 = vpop.f32.mrb[0].mxu0
        %v4912 = vadd.f32 %v4125, %v4911
        %4913 = vdwg.mxu0
        %4914 = vmatprep.subr.mxu0 %v4051
        %4915 = vmatpush1.msra.mxu0 %v4050
        %4916 = vmatprep.subr.mxu0 %v4067
        %4917 = vmatpush1.msra.mxu0 %v4066
        %4918 = vmatprep.subr.mxu0 %v4250
        %4919 = vmatpush1.msra.mxu0 %v4247
        %4920 = vmatprep.subr.mxu0 0.0
        %4921 = vmatpush1.msra.mxu0 0.0
        %4922 = vmatprep.subr.mxu0 0.0
        %4923 = vmatpush1.msra.mxu0 0.0
        %4924 = vmatprep.subr.mxu0 0.0
        %4925 = vmatpush1.msra.mxu0 0.0
        %4926 = vmatprep.subr.mxu0 0.0
        %4927 = vmatpush1.msra.mxu0 0.0
        %4928 = vmatprep.subr.mxu0 0.0
        %4929 = vmatpush1.msra.mxu0 0.0
        %4930 = vmatprep.subr.mxu0 0.0
        %4931 = vmatpush1.msra.mxu0 0.0
        %4932 = vmatprep.subr.mxu0 0.0
        %4933 = vmatpush1.msra.mxu0 0.0
        %4934 = vmatprep.subr.mxu0 0.0
        %4935 = vmatpush1.msra.mxu0 0.0
        %4936 = vmatprep.subr.mxu0 0.0
        %4937 = vmatpush1.msra.mxu0 0.0
        %4938 = vmatprep.subr.mxu0 0.0
        %4939 = vmatpush1.msra.mxu0 0.0
        %4940 = vmatprep.subr.mxu0 0.0
        %4941 = vmatpush1.msra.mxu0 0.0
        %4942 = vmatprep.subr.mxu0 0.0
        %4943 = vmatpush1.msra.mxu0 0.0
        %4944 = vmatprep.subr.mxu0 0.0
        %4945 = vmatpush1.msra.mxu0 0.0
        %4946 = vmatprep.subr.mxu0 0.0
        %4947 = vmatpush1.msra.mxu0 0.0
        %4948 = vmatprep.subr.mxu0 0.0
        %4949 = vmatpush1.msra.mxu0 0.0
        %4950 = vmatprep.subr.mxu0 0.0
        %4951 = vmatpush1.msra.mxu0 0.0
        %4952 = vmatprep.subr.mxu0 0.0
        %4953 = vmatpush1.msra.mxu0 0.0
        %4954 = vmatprep.subr.mxu0 0.0
        %4955 = vmatpush1.msra.mxu0 0.0
        %4956 = vmatprep.subr.mxu0 0.0
        %4957 = vmatpush1.msra.mxu0 0.0
        %4958 = vmatprep.subr.mxu0 0.0
        %4959 = vmatpush1.msra.mxu0 0.0
        %4960 = vmatprep.subr.mxu0 0.0
        %4961 = vmatpush1.msra.mxu0 0.0
        %4962 = vmatprep.subr.mxu0 0.0
        %4963 = vmatpush1.msra.mxu0 0.0
        %4964 = vmatprep.subr.mxu0 0.0
        %4965 = vmatpush1.msra.mxu0 0.0
        %4966 = vmatprep.subr.mxu0 0.0
        %4967 = vmatpush1.msra.mxu0 0.0
        %4968 = vmatprep.subr.mxu0 0.0
        %4969 = vmatpush1.msra.mxu0 0.0
        %4970 = vmatprep.subr.mxu0 0.0
        %4971 = vmatpush1.msra.mxu0 0.0
        %4972 = vmatprep.subr.mxu0 0.0
        %4973 = vmatpush1.msra.mxu0 0.0
        %4974 = vmatprep.subr.mxu0 0.0
        %4975 = vmatpush1.msra.mxu0 0.0
        %4976 = vmatprep.subr.mxu0 0.0
        %4977 = vmatpush1.msra.mxu0 0.0
        %4978 = vmatprep.mubr.f32.mxu0 0.0
        %4979 = vmatmul.mubr.f32.gmra.mrb[0].mxu0 %v4175
        %v4980 = vpop.f32.mrb[0].mxu0
        %v4981 = vadd.f32 %v4129, %v4980
        %v4982 = vpop.f32.mrb[0].mxu0
        %v4983 = vadd.f32 %v4133, %v4982
        %4984 = vmatprep.mubr.f32.mxu0 0.0
        %4985 = vmatmul.mubr.f32.gmra.mrb[0].mxu0 %v4178
        %v4986 = vpop.f32.mrb[0].mxu0
        %v4987 = vadd.f32 %v4129, %v4986
        %v4988 = vpop.f32.mrb[0].mxu0
        %v4989 = vadd.f32 %v4133, %v4988
        %4990 = vmatprep.mubr.f32.mxu0 0.0
        %4991 = vmatmul.mubr.f32.gmra.mrb[0].mxu0 %v4181
        %v4992 = vpop.f32.mrb[0].mxu0
        %v4993 = vadd.f32 %v4129, %v4992
        %v4994 = vpop.f32.mrb[0].mxu0
        %v4995 = vadd.f32 %v4133, %v4994
        %4996 = vmatprep.mubr.f32.mxu0 0.0
        %4997 = vmatmul.mubr.f32.gmra.mrb[0].mxu0 %v4184
        %v4998 = vpop.f32.mrb[0].mxu0
        %v4999 = vadd.f32 %v4129, %v4998
        %v5000 = vpop.f32.mrb[0].mxu0
        %v5001 = vadd.f32 %v4133, %v5000
        %5002 = vmatprep.mubr.f32.mxu0 0.0
        %5003 = vmatmul.mubr.f32.gmra.mrb[0].mxu0 %v4187
        %v5004 = vpop.f32.mrb[0].mxu0
        %v5005 = vadd.f32 %v4129, %v5004
        %v5006 = vpop.f32.mrb[0].mxu0
        %v5007 = vadd.f32 %v4133, %v5006
        %5008 = vmatprep.mubr.f32.mxu0 0.0
        %5009 = vmatmul.mubr.f32.gmra.mrb[0].mxu0 %v4190
        %v5010 = vpop.f32.mrb[0].mxu0
        %v5011 = vadd.f32 %v4129, %v5010
        %v5012 = vpop.f32.mrb[0].mxu0
        %v5013 = vadd.f32 %v4133, %v5012
        %5014 = vmatprep.mubr.f32.mxu0 0.0
        %5015 = vmatmul.mubr.f32.gmra.mrb[0].mxu0 %v4193
        %v5016 = vpop.f32.mrb[0].mxu0
        %v5017 = vadd.f32 %v4129, %v5016
        %v5018 = vpop.f32.mrb[0].mxu0
        %v5019 = vadd.f32 %v4133, %v5018
        %5020 = vmatprep.mubr.f32.mxu0 0.0
        %5021 = vmatmul.mubr.f32.gmra.mrb[0].mxu0 %v4196
        %v5022 = vpop.f32.mrb[0].mxu0
        %v5023 = vadd.f32 %v4129, %v5022
        %v5024 = vpop.f32.mrb[0].mxu0
        %v5025 = vadd.f32 %v4133, %v5024
        %5026 = vmatprep.mubr.f32.mxu0 0.0
        %5027 = vmatmul.mubr.f32.gmra.mrb[0].mxu0 %v4199
        %v5028 = vpop.f32.mrb[0].mxu0
        %v5029 = vadd.f32 %v4129, %v5028
        %v5030 = vpop.f32.mrb[0].mxu0
        %v5031 = vadd.f32 %v4133, %v5030
        %5032 = vmatprep.mubr.f32.mxu0 0.0
        %5033 = vmatmul.mubr.f32.gmra.mrb[0].mxu0 %v4202
        %v5034 = vpop.f32.mrb[0].mxu0
        %v5035 = vadd.f32 %v4129, %v5034
        %v5036 = vpop.f32.mrb[0].mxu0
        %v5037 = vadd.f32 %v4133, %v5036
        %5038 = vmatprep.mubr.f32.mxu0 0.0
        %5039 = vmatmul.mubr.f32.gmra.mrb[0].mxu0 %v4205
        %v5040 = vpop.f32.mrb[0].mxu0
        %v5041 = vadd.f32 %v4129, %v5040
        %v5042 = vpop.f32.mrb[0].mxu0
        %v5043 = vadd.f32 %v4133, %v5042
        %5044 = vmatprep.mubr.f32.mxu0 0.0
        %5045 = vmatmul.mubr.f32.gmra.mrb[0].mxu0 %v4208
        %v5046 = vpop.f32.mrb[0].mxu0
        %v5047 = vadd.f32 %v4129, %v5046
        %v5048 = vpop.f32.mrb[0].mxu0
        %v5049 = vadd.f32 %v4133, %v5048
        %5050 = vmatprep.mubr.f32.mxu0 0.0
        %5051 = vmatmul.mubr.f32.gmra.mrb[0].mxu0 %v4211
        %v5052 = vpop.f32.mrb[0].mxu0
        %v5053 = vadd.f32 %v4129, %v5052
        %v5054 = vpop.f32.mrb[0].mxu0
        %v5055 = vadd.f32 %v4133, %v5054
        %5056 = vmatprep.mubr.f32.mxu0 0.0
        %5057 = vmatmul.mubr.f32.gmra.mrb[0].mxu0 %v4214
        %v5058 = vpop.f32.mrb[0].mxu0
        %v5059 = vadd.f32 %v4129, %v5058
        %v5060 = vpop.f32.mrb[0].mxu0
        %v5061 = vadd.f32 %v4133, %v5060
        %5062 = vmatprep.mubr.f32.mxu0 0.0
        %5063 = vmatmul.mubr.f32.gmra.mrb[0].mxu0 %v4217
        %v5064 = vpop.f32.mrb[0].mxu0
        %v5065 = vadd.f32 %v4129, %v5064
        %v5066 = vpop.f32.mrb[0].mxu0
        %v5067 = vadd.f32 %v4133, %v5066
        %5068 = vmatprep.mubr.f32.mxu0 0.0
        %5069 = vmatmul.mubr.f32.gmra.mrb[0].mxu0 %v4220
        %v5070 = vpop.f32.mrb[0].mxu0
        %v5071 = vadd.f32 %v4129, %v5070
        %v5072 = vpop.f32.mrb[0].mxu0
        %v5073 = vadd.f32 %v4133, %v5072
        %5074 = vdwg.mxu0
        %5075 = vmatprep.subr.mxu0 %v4053
        %5076 = vmatpush1.msra.mxu0 %v4052
        %5077 = vmatprep.subr.mxu0 %v4069
        %5078 = vmatpush1.msra.mxu0 %v4068
        %5079 = vmatprep.subr.mxu0 %v4256
        %5080 = vmatpush1.msra.mxu0 %v4253
        %5081 = vmatprep.subr.mxu0 0.0
        %5082 = vmatpush1.msra.mxu0 0.0
        %5083 = vmatprep.subr.mxu0 0.0
        %5084 = vmatpush1.msra.mxu0 0.0
        %5085 = vmatprep.subr.mxu0 0.0
        %5086 = vmatpush1.msra.mxu0 0.0
        %5087 = vmatprep.subr.mxu0 0.0
        %5088 = vmatpush1.msra.mxu0 0.0
        %5089 = vmatprep.subr.mxu0 0.0
        %5090 = vmatpush1.msra.mxu0 0.0
        %5091 = vmatprep.subr.mxu0 0.0
        %5092 = vmatpush1.msra.mxu0 0.0
        %5093 = vmatprep.subr.mxu0 0.0
        %5094 = vmatpush1.msra.mxu0 0.0
        %5095 = vmatprep.subr.mxu0 0.0
        %5096 = vmatpush1.msra.mxu0 0.0
        %5097 = vmatprep.subr.mxu0 0.0
        %5098 = vmatpush1.msra.mxu0 0.0
        %5099 = vmatprep.subr.mxu0 0.0
        %5100 = vmatpush1.msra.mxu0 0.0
        %5101 = vmatprep.subr.mxu0 0.0
        %5102 = vmatpush1.msra.mxu0 0.0
        %5103 = vmatprep.subr.mxu0 0.0
        %5104 = vmatpush1.msra.mxu0 0.0
        %5105 = vmatprep.subr.mxu0 0.0
        %5106 = vmatpush1.msra.mxu0 0.0
        %5107 = vmatprep.subr.mxu0 0.0
        %5108 = vmatpush1.msra.mxu0 0.0
        %5109 = vmatprep.subr.mxu0 0.0
        %5110 = vmatpush1.msra.mxu0 0.0
        %5111 = vmatprep.subr.mxu0 0.0
        %5112 = vmatpush1.msra.mxu0 0.0
        %5113 = vmatprep.subr.mxu0 0.0
        %5114 = vmatpush1.msra.mxu0 0.0
        %5115 = vmatprep.subr.mxu0 0.0
        %5116 = vmatpush1.msra.mxu0 0.0
        %5117 = vmatprep.subr.mxu0 0.0
        %5118 = vmatpush1.msra.mxu0 0.0
        %5119 = vmatprep.subr.mxu0 0.0
        %5120 = vmatpush1.msra.mxu0 0.0
        %5121 = vmatprep.subr.mxu0 0.0
        %5122 = vmatpush1.msra.mxu0 0.0
        %5123 = vmatprep.subr.mxu0 0.0
        %5124 = vmatpush1.msra.mxu0 0.0
        %5125 = vmatprep.subr.mxu0 0.0
        %5126 = vmatpush1.msra.mxu0 0.0
        %5127 = vmatprep.subr.mxu0 0.0
        %5128 = vmatpush1.msra.mxu0 0.0
        %5129 = vmatprep.subr.mxu0 0.0
        %5130 = vmatpush1.msra.mxu0 0.0
        %5131 = vmatprep.subr.mxu0 0.0
        %5132 = vmatpush1.msra.mxu0 0.0
        %5133 = vmatprep.subr.mxu0 0.0
        %5134 = vmatpush1.msra.mxu0 0.0
        %5135 = vmatprep.subr.mxu0 0.0
        %5136 = vmatpush1.msra.mxu0 0.0
        %5137 = vmatprep.subr.mxu0 0.0
        %5138 = vmatpush1.msra.mxu0 0.0
        %5139 = vmatprep.mubr.f32.mxu0 0.0
        %5140 = vmatmul.mubr.f32.gmra.mrb[0].mxu0 %v4175
        %v5141 = vpop.f32.mrb[0].mxu0
        %v5142 = vadd.f32 %v4137, %v5141
        %v5143 = vpop.f32.mrb[0].mxu0
        %v5144 = vadd.f32 %v4141, %v5143
        %5145 = vmatprep.mubr.f32.mxu0 0.0
        %5146 = vmatmul.mubr.f32.gmra.mrb[0].mxu0 %v4178
        %v5147 = vpop.f32.mrb[0].mxu0
        %v5148 = vadd.f32 %v4137, %v5147
        %v5149 = vpop.f32.mrb[0].mxu0
        %v5150 = vadd.f32 %v4141, %v5149
        %5151 = vmatprep.mubr.f32.mxu0 0.0
        %5152 = vmatmul.mubr.f32.gmra.mrb[0].mxu0 %v4181
        %v5153 = vpop.f32.mrb[0].mxu0
        %v5154 = vadd.f32 %v4137, %v5153
        %v5155 = vpop.f32.mrb[0].mxu0
        %v5156 = vadd.f32 %v4141, %v5155
        %5157 = vmatprep.mubr.f32.mxu0 0.0
        %5158 = vmatmul.mubr.f32.gmra.mrb[0].mxu0 %v4184
        %v5159 = vpop.f32.mrb[0].mxu0
        %v5160 = vadd.f32 %v4137, %v5159
        %v5161 = vpop.f32.mrb[0].mxu0
        %v5162 = vadd.f32 %v4141, %v5161
        %5163 = vmatprep.mubr.f32.mxu0 0.0
        %5164 = vmatmul.mubr.f32.gmra.mrb[0].mxu0 %v4187
        %v5165 = vpop.f32.mrb[0].mxu0
        %v5166 = vadd.f32 %v4137, %v5165
        %v5167 = vpop.f32.mrb[0].mxu0
        %v5168 = vadd.f32 %v4141, %v5167
        %5169 = vmatprep.mubr.f32.mxu0 0.0
        %5170 = vmatmul.mubr.f32.gmra.mrb[0].mxu0 %v4190
        %v5171 = vpop.f32.mrb[0].mxu0
        %v5172 = vadd.f32 %v4137, %v5171
        %v5173 = vpop.f32.mrb[0].mxu0
        %v5174 = vadd.f32 %v4141, %v5173
        %5175 = vmatprep.mubr.f32.mxu0 0.0
        %5176 = vmatmul.mubr.f32.gmra.mrb[0].mxu0 %v4193
        %v5177 = vpop.f32.mrb[0].mxu0
        %v5178 = vadd.f32 %v4137, %v5177
        %v5179 = vpop.f32.mrb[0].mxu0
        %v5180 = vadd.f32 %v4141, %v5179
        %5181 = vmatprep.mubr.f32.mxu0 0.0
        %5182 = vmatmul.mubr.f32.gmra.mrb[0].mxu0 %v4196
        %v5183 = vpop.f32.mrb[0].mxu0
        %v5184 = vadd.f32 %v4137, %v5183
        %v5185 = vpop.f32.mrb[0].mxu0
        %v5186 = vadd.f32 %v4141, %v5185
        %5187 = vmatprep.mubr.f32.mxu0 0.0
        %5188 = vmatmul.mubr.f32.gmra.mrb[0].mxu0 %v4199
        %v5189 = vpop.f32.mrb[0].mxu0
        %v5190 = vadd.f32 %v4137, %v5189
        %v5191 = vpop.f32.mrb[0].mxu0
        %v5192 = vadd.f32 %v4141, %v5191
        %5193 = vmatprep.mubr.f32.mxu0 0.0
        %5194 = vmatmul.mubr.f32.gmra.mrb[0].mxu0 %v4202
        %v5195 = vpop.f32.mrb[0].mxu0
        %v5196 = vadd.f32 %v4137, %v5195
        %v5197 = vpop.f32.mrb[0].mxu0
        %v5198 = vadd.f32 %v4141, %v5197
        %5199 = vmatprep.mubr.f32.mxu0 0.0
        %5200 = vmatmul.mubr.f32.gmra.mrb[0].mxu0 %v4205
        %v5201 = vpop.f32.mrb[0].mxu0
        %v5202 = vadd.f32 %v4137, %v5201
        %v5203 = vpop.f32.mrb[0].mxu0
        %v5204 = vadd.f32 %v4141, %v5203
        %5205 = vmatprep.mubr.f32.mxu0 0.0
        %5206 = vmatmul.mubr.f32.gmra.mrb[0].mxu0 %v4208
        %v5207 = vpop.f32.mrb[0].mxu0
        %v5208 = vadd.f32 %v4137, %v5207
        %v5209 = vpop.f32.mrb[0].mxu0
        %v5210 = vadd.f32 %v4141, %v5209
        %5211 = vmatprep.mubr.f32.mxu0 0.0
        %5212 = vmatmul.mubr.f32.gmra.mrb[0].mxu0 %v4211
        %v5213 = vpop.f32.mrb[0].mxu0
        %v5214 = vadd.f32 %v4137, %v5213
        %v5215 = vpop.f32.mrb[0].mxu0
        %v5216 = vadd.f32 %v4141, %v5215
        %5217 = vmatprep.mubr.f32.mxu0 0.0
        %5218 = vmatmul.mubr.f32.gmra.mrb[0].mxu0 %v4214
        %v5219 = vpop.f32.mrb[0].mxu0
        %v5220 = vadd.f32 %v4137, %v5219
        %v5221 = vpop.f32.mrb[0].mxu0
        %v5222 = vadd.f32 %v4141, %v5221
        %5223 = vmatprep.mubr.f32.mxu0 0.0
        %5224 = vmatmul.mubr.f32.gmra.mrb[0].mxu0 %v4217
        %v5225 = vpop.f32.mrb[0].mxu0
        %v5226 = vadd.f32 %v4137, %v5225
        %v5227 = vpop.f32.mrb[0].mxu0
        %v5228 = vadd.f32 %v4141, %v5227
        %5229 = vmatprep.mubr.f32.mxu0 0.0
        %5230 = vmatmul.mubr.f32.gmra.mrb[0].mxu0 %v4220
        %v5231 = vpop.f32.mrb[0].mxu0
        %v5232 = vadd.f32 %v4137, %v5231
        %v5233 = vpop.f32.mrb[0].mxu0
        %v5234 = vadd.f32 %v4141, %v5233
        %5235 = vdwg.mxu0
        %5236 = vmatprep.subr.mxu0 %v4055
        %5237 = vmatpush1.msra.mxu0 %v4054
        %5238 = vmatprep.subr.mxu0 %v4071
        %5239 = vmatpush1.msra.mxu0 %v4070
        %5240 = vmatprep.subr.mxu0 %v4262
        %5241 = vmatpush1.msra.mxu0 %v4259
        %5242 = vmatprep.subr.mxu0 0.0
        %5243 = vmatpush1.msra.mxu0 0.0
        %5244 = vmatprep.subr.mxu0 0.0
        %5245 = vmatpush1.msra.mxu0 0.0
        %5246 = vmatprep.subr.mxu0 0.0
        %5247 = vmatpush1.msra.mxu0 0.0
        %5248 = vmatprep.subr.mxu0 0.0
        %5249 = vmatpush1.msra.mxu0 0.0
        %5250 = vmatprep.subr.mxu0 0.0
        %5251 = vmatpush1.msra.mxu0 0.0
        %5252 = vmatprep.subr.mxu0 0.0
        %5253 = vmatpush1.msra.mxu0 0.0
        %5254 = vmatprep.subr.mxu0 0.0
        %5255 = vmatpush1.msra.mxu0 0.0
        %5256 = vmatprep.subr.mxu0 0.0
        %5257 = vmatpush1.msra.mxu0 0.0
        %5258 = vmatprep.subr.mxu0 0.0
        %5259 = vmatpush1.msra.mxu0 0.0
        %5260 = vmatprep.subr.mxu0 0.0
        %5261 = vmatpush1.msra.mxu0 0.0
        %5262 = vmatprep.subr.mxu0 0.0
        %5263 = vmatpush1.msra.mxu0 0.0
        %5264 = vmatprep.subr.mxu0 0.0
        %5265 = vmatpush1.msra.mxu0 0.0
        %5266 = vmatprep.subr.mxu0 0.0
        %5267 = vmatpush1.msra.mxu0 0.0
        %5268 = vmatprep.subr.mxu0 0.0
        %5269 = vmatpush1.msra.mxu0 0.0
        %5270 = vmatprep.subr.mxu0 0.0
        %5271 = vmatpush1.msra.mxu0 0.0
        %5272 = vmatprep.subr.mxu0 0.0
        %5273 = vmatpush1.msra.mxu0 0.0
        %5274 = vmatprep.subr.mxu0 0.0
        %5275 = vmatpush1.msra.mxu0 0.0
        %5276 = vmatprep.subr.mxu0 0.0
        %5277 = vmatpush1.msra.mxu0 0.0
        %5278 = vmatprep.subr.mxu0 0.0
        %5279 = vmatpush1.msra.mxu0 0.0
        %5280 = vmatprep.subr.mxu0 0.0
        %5281 = vmatpush1.msra.mxu0 0.0
        %5282 = vmatprep.subr.mxu0 0.0
        %5283 = vmatpush1.msra.mxu0 0.0
        %5284 = vmatprep.subr.mxu0 0.0
        %5285 = vmatpush1.msra.mxu0 0.0
        %5286 = vmatprep.subr.mxu0 0.0
        %5287 = vmatpush1.msra.mxu0 0.0
        %5288 = vmatprep.subr.mxu0 0.0
        %5289 = vmatpush1.msra.mxu0 0.0
        %5290 = vmatprep.subr.mxu0 0.0
        %5291 = vmatpush1.msra.mxu0 0.0
        %5292 = vmatprep.subr.mxu0 0.0
        %5293 = vmatpush1.msra.mxu0 0.0
        %5294 = vmatprep.subr.mxu0 0.0
        %5295 = vmatpush1.msra.mxu0 0.0
        %5296 = vmatprep.subr.mxu0 0.0
        %5297 = vmatpush1.msra.mxu0 0.0
        %5298 = vmatprep.subr.mxu0 0.0
        %5299 = vmatpush1.msra.mxu0 0.0
        %5300 = vmatprep.mubr.f32.mxu0 0.0
        %5301 = vmatmul.mubr.f32.gmra.mrb[0].mxu0 %v4175
        %v5302 = vpop.f32.mrb[0].mxu0
        %v5303 = vadd.f32 %v4145, %v5302
        %v5304 = vpop.f32.mrb[0].mxu0
        %v5305 = vadd.f32 %v4149, %v5304
        %5306 = vmatprep.mubr.f32.mxu0 0.0
        %5307 = vmatmul.mubr.f32.gmra.mrb[0].mxu0 %v4178
        %v5308 = vpop.f32.mrb[0].mxu0
        %v5309 = vadd.f32 %v4145, %v5308
        %v5310 = vpop.f32.mrb[0].mxu0
        %v5311 = vadd.f32 %v4149, %v5310
        %5312 = vmatprep.mubr.f32.mxu0 0.0
        %5313 = vmatmul.mubr.f32.gmra.mrb[0].mxu0 %v4181
        %v5314 = vpop.f32.mrb[0].mxu0
        %v5315 = vadd.f32 %v4145, %v5314
        %v5316 = vpop.f32.mrb[0].mxu0
        %v5317 = vadd.f32 %v4149, %v5316
        %5318 = vmatprep.mubr.f32.mxu0 0.0
        %5319 = vmatmul.mubr.f32.gmra.mrb[0].mxu0 %v4184
        %v5320 = vpop.f32.mrb[0].mxu0
        %v5321 = vadd.f32 %v4145, %v5320
        %v5322 = vpop.f32.mrb[0].mxu0
        %v5323 = vadd.f32 %v4149, %v5322
        %5324 = vmatprep.mubr.f32.mxu0 0.0
        %5325 = vmatmul.mubr.f32.gmra.mrb[0].mxu0 %v4187
        %v5326 = vpop.f32.mrb[0].mxu0
        %v5327 = vadd.f32 %v4145, %v5326
        %v5328 = vpop.f32.mrb[0].mxu0
        %v5329 = vadd.f32 %v4149, %v5328
        %5330 = vmatprep.mubr.f32.mxu0 0.0
        %5331 = vmatmul.mubr.f32.gmra.mrb[0].mxu0 %v4190
        %v5332 = vpop.f32.mrb[0].mxu0
        %v5333 = vadd.f32 %v4145, %v5332
        %v5334 = vpop.f32.mrb[0].mxu0
        %v5335 = vadd.f32 %v4149, %v5334
        %5336 = vmatprep.mubr.f32.mxu0 0.0
        %5337 = vmatmul.mubr.f32.gmra.mrb[0].mxu0 %v4193
        %v5338 = vpop.f32.mrb[0].mxu0
        %v5339 = vadd.f32 %v4145, %v5338
        %v5340 = vpop.f32.mrb[0].mxu0
        %v5341 = vadd.f32 %v4149, %v5340
        %5342 = vmatprep.mubr.f32.mxu0 0.0
        %5343 = vmatmul.mubr.f32.gmra.mrb[0].mxu0 %v4196
        %v5344 = vpop.f32.mrb[0].mxu0
        %v5345 = vadd.f32 %v4145, %v5344
        %v5346 = vpop.f32.mrb[0].mxu0
        %v5347 = vadd.f32 %v4149, %v5346
        %5348 = vmatprep.mubr.f32.mxu0 0.0
        %5349 = vmatmul.mubr.f32.gmra.mrb[0].mxu0 %v4199
        %v5350 = vpop.f32.mrb[0].mxu0
        %v5351 = vadd.f32 %v4145, %v5350
        %v5352 = vpop.f32.mrb[0].mxu0
        %v5353 = vadd.f32 %v4149, %v5352
        %5354 = vmatprep.mubr.f32.mxu0 0.0
        %5355 = vmatmul.mubr.f32.gmra.mrb[0].mxu0 %v4202
        %v5356 = vpop.f32.mrb[0].mxu0
        %v5357 = vadd.f32 %v4145, %v5356
        %v5358 = vpop.f32.mrb[0].mxu0
        %v5359 = vadd.f32 %v4149, %v5358
        %5360 = vmatprep.mubr.f32.mxu0 0.0
        %5361 = vmatmul.mubr.f32.gmra.mrb[0].mxu0 %v4205
        %v5362 = vpop.f32.mrb[0].mxu0
        %v5363 = vadd.f32 %v4145, %v5362
        %v5364 = vpop.f32.mrb[0].mxu0
        %v5365 = vadd.f32 %v4149, %v5364
        %5366 = vmatprep.mubr.f32.mxu0 0.0
        %5367 = vmatmul.mubr.f32.gmra.mrb[0].mxu0 %v4208
        %v5368 = vpop.f32.mrb[0].mxu0
        %v5369 = vadd.f32 %v4145, %v5368
        %v5370 = vpop.f32.mrb[0].mxu0
        %v5371 = vadd.f32 %v4149, %v5370
        %5372 = vmatprep.mubr.f32.mxu0 0.0
        %5373 = vmatmul.mubr.f32.gmra.mrb[0].mxu0 %v4211
        %v5374 = vpop.f32.mrb[0].mxu0
        %v5375 = vadd.f32 %v4145, %v5374
        %v5376 = vpop.f32.mrb[0].mxu0
        %v5377 = vadd.f32 %v4149, %v5376
        %5378 = vmatprep.mubr.f32.mxu0 0.0
        %5379 = vmatmul.mubr.f32.gmra.mrb[0].mxu0 %v4214
        %v5380 = vpop.f32.mrb[0].mxu0
        %v5381 = vadd.f32 %v4145, %v5380
        %v5382 = vpop.f32.mrb[0].mxu0
        %v5383 = vadd.f32 %v4149, %v5382
        %5384 = vmatprep.mubr.f32.mxu0 0.0
        %5385 = vmatmul.mubr.f32.gmra.mrb[0].mxu0 %v4217
        %v5386 = vpop.f32.mrb[0].mxu0
        %v5387 = vadd.f32 %v4145, %v5386
        %v5388 = vpop.f32.mrb[0].mxu0
        %v5389 = vadd.f32 %v4149, %v5388
        %5390 = vmatprep.mubr.f32.mxu0 0.0
        %5391 = vmatmul.mubr.f32.gmra.mrb[0].mxu0 %v4220
        %v5392 = vpop.f32.mrb[0].mxu0
        %v5393 = vadd.f32 %v4145, %v5392
        %v5394 = vpop.f32.mrb[0].mxu0
        %v5395 = vadd.f32 %v4149, %v5394
        %5396 = vdwg.mxu0
        %5397 = vmatprep.subr.mxu0 %v4057
        %5398 = vmatpush1.msra.mxu0 %v4056
        %5399 = vmatprep.subr.mxu0 %v4073
        %5400 = vmatpush1.msra.mxu0 %v4072
        %5401 = vmatprep.subr.mxu0 %v4268
        %5402 = vmatpush1.msra.mxu0 %v4265
        %5403 = vmatprep.subr.mxu0 0.0
        %5404 = vmatpush1.msra.mxu0 0.0
        %5405 = vmatprep.subr.mxu0 0.0
        %5406 = vmatpush1.msra.mxu0 0.0
        %5407 = vmatprep.subr.mxu0 0.0
        %5408 = vmatpush1.msra.mxu0 0.0
        %5409 = vmatprep.subr.mxu0 0.0
        %5410 = vmatpush1.msra.mxu0 0.0
        %5411 = vmatprep.subr.mxu0 0.0
        %5412 = vmatpush1.msra.mxu0 0.0
        %5413 = vmatprep.subr.mxu0 0.0
        %5414 = vmatpush1.msra.mxu0 0.0
        %5415 = vmatprep.subr.mxu0 0.0
        %5416 = vmatpush1.msra.mxu0 0.0
        %5417 = vmatprep.subr.mxu0 0.0
        %5418 = vmatpush1.msra.mxu0 0.0
        %5419 = vmatprep.subr.mxu0 0.0
        %5420 = vmatpush1.msra.mxu0 0.0
        %5421 = vmatprep.subr.mxu0 0.0
        %5422 = vmatpush1.msra.mxu0 0.0
        %5423 = vmatprep.subr.mxu0 0.0
        %5424 = vmatpush1.msra.mxu0 0.0
        %5425 = vmatprep.subr.mxu0 0.0
        %5426 = vmatpush1.msra.mxu0 0.0
        %5427 = vmatprep.subr.mxu0 0.0
        %5428 = vmatpush1.msra.mxu0 0.0
        %5429 = vmatprep.subr.mxu0 0.0
        %5430 = vmatpush1.msra.mxu0 0.0
        %5431 = vmatprep.subr.mxu0 0.0
        %5432 = vmatpush1.msra.mxu0 0.0
        %5433 = vmatprep.subr.mxu0 0.0
        %5434 = vmatpush1.msra.mxu0 0.0
        %5435 = vmatprep.subr.mxu0 0.0
        %5436 = vmatpush1.msra.mxu0 0.0
        %5437 = vmatprep.subr.mxu0 0.0
        %5438 = vmatpush1.msra.mxu0 0.0
        %5439 = vmatprep.subr.mxu0 0.0
        %5440 = vmatpush1.msra.mxu0 0.0
        %5441 = vmatprep.subr.mxu0 0.0
        %5442 = vmatpush1.msra.mxu0 0.0
        %5443 = vmatprep.subr.mxu0 0.0
        %5444 = vmatpush1.msra.mxu0 0.0
        %5445 = vmatprep.subr.mxu0 0.0
        %5446 = vmatpush1.msra.mxu0 0.0
        %5447 = vmatprep.subr.mxu0 0.0
        %5448 = vmatpush1.msra.mxu0 0.0
        %5449 = vmatprep.subr.mxu0 0.0
        %5450 = vmatpush1.msra.mxu0 0.0
        %5451 = vmatprep.subr.mxu0 0.0
        %5452 = vmatpush1.msra.mxu0 0.0
        %5453 = vmatprep.subr.mxu0 0.0
        %5454 = vmatpush1.msra.mxu0 0.0
        %5455 = vmatprep.subr.mxu0 0.0
        %5456 = vmatpush1.msra.mxu0 0.0
        %5457 = vmatprep.subr.mxu0 0.0
        %5458 = vmatpush1.msra.mxu0 0.0
        %5459 = vmatprep.subr.mxu0 0.0
        %5460 = vmatpush1.msra.mxu0 0.0
        %5461 = vmatprep.mubr.f32.mxu0 0.0
        %5462 = vmatmul.mubr.f32.gmra.mrb[0].mxu0 %v4175
        %v5463 = vpop.f32.mrb[0].mxu0
        %v5464 = vadd.f32 %v4153, %v5463
        %v5465 = vpop.f32.mrb[0].mxu0
        %v5466 = vadd.f32 %v4157, %v5465
        %5467 = vmatprep.mubr.f32.mxu0 0.0
        %5468 = vmatmul.mubr.f32.gmra.mrb[0].mxu0 %v4178
        %v5469 = vpop.f32.mrb[0].mxu0
        %v5470 = vadd.f32 %v4153, %v5469
        %v5471 = vpop.f32.mrb[0].mxu0
        %v5472 = vadd.f32 %v4157, %v5471
        %5473 = vmatprep.mubr.f32.mxu0 0.0
        %5474 = vmatmul.mubr.f32.gmra.mrb[0].mxu0 %v4181
        %v5475 = vpop.f32.mrb[0].mxu0
        %v5476 = vadd.f32 %v4153, %v5475
        %v5477 = vpop.f32.mrb[0].mxu0
        %v5478 = vadd.f32 %v4157, %v5477
        %5479 = vmatprep.mubr.f32.mxu0 0.0
        %5480 = vmatmul.mubr.f32.gmra.mrb[0].mxu0 %v4184
        %v5481 = vpop.f32.mrb[0].mxu0
        %v5482 = vadd.f32 %v4153, %v5481
        %v5483 = vpop.f32.mrb[0].mxu0
        %v5484 = vadd.f32 %v4157, %v5483
        %5485 = vmatprep.mubr.f32.mxu0 0.0
        %5486 = vmatmul.mubr.f32.gmra.mrb[0].mxu0 %v4187
        %v5487 = vpop.f32.mrb[0].mxu0
        %v5488 = vadd.f32 %v4153, %v5487
        %v5489 = vpop.f32.mrb[0].mxu0
        %v5490 = vadd.f32 %v4157, %v5489
        %5491 = vmatprep.mubr.f32.mxu0 0.0
        %5492 = vmatmul.mubr.f32.gmra.mrb[0].mxu0 %v4190
        %v5493 = vpop.f32.mrb[0].mxu0
        %v5494 = vadd.f32 %v4153, %v5493
        %v5495 = vpop.f32.mrb[0].mxu0
        %v5496 = vadd.f32 %v4157, %v5495
        %5497 = vmatprep.mubr.f32.mxu0 0.0
        %5498 = vmatmul.mubr.f32.gmra.mrb[0].mxu0 %v4193
        %v5499 = vpop.f32.mrb[0].mxu0
        %v5500 = vadd.f32 %v4153, %v5499
        %v5501 = vpop.f32.mrb[0].mxu0
        %v5502 = vadd.f32 %v4157, %v5501
        %5503 = vmatprep.mubr.f32.mxu0 0.0
        %5504 = vmatmul.mubr.f32.gmra.mrb[0].mxu0 %v4196
        %v5505 = vpop.f32.mrb[0].mxu0
        %v5506 = vadd.f32 %v4153, %v5505
        %v5507 = vpop.f32.mrb[0].mxu0
        %v5508 = vadd.f32 %v4157, %v5507
        %5509 = vmatprep.mubr.f32.mxu0 0.0
        %5510 = vmatmul.mubr.f32.gmra.mrb[0].mxu0 %v4199
        %v5511 = vpop.f32.mrb[0].mxu0
        %v5512 = vadd.f32 %v4153, %v5511
        %v5513 = vpop.f32.mrb[0].mxu0
        %v5514 = vadd.f32 %v4157, %v5513
        %5515 = vmatprep.mubr.f32.mxu0 0.0
        %5516 = vmatmul.mubr.f32.gmra.mrb[0].mxu0 %v4202
        %v5517 = vpop.f32.mrb[0].mxu0
        %v5518 = vadd.f32 %v4153, %v5517
        %v5519 = vpop.f32.mrb[0].mxu0
        %v5520 = vadd.f32 %v4157, %v5519
        %5521 = vmatprep.mubr.f32.mxu0 0.0
        %5522 = vmatmul.mubr.f32.gmra.mrb[0].mxu0 %v4205
        %v5523 = vpop.f32.mrb[0].mxu0
        %v5524 = vadd.f32 %v4153, %v5523
        %v5525 = vpop.f32.mrb[0].mxu0
        %v5526 = vadd.f32 %v4157, %v5525
        %5527 = vmatprep.mubr.f32.mxu0 0.0
        %5528 = vmatmul.mubr.f32.gmra.mrb[0].mxu0 %v4208
        %v5529 = vpop.f32.mrb[0].mxu0
        %v5530 = vadd.f32 %v4153, %v5529
        %v5531 = vpop.f32.mrb[0].mxu0
        %v5532 = vadd.f32 %v4157, %v5531
        %5533 = vmatprep.mubr.f32.mxu0 0.0
        %5534 = vmatmul.mubr.f32.gmra.mrb[0].mxu0 %v4211
        %v5535 = vpop.f32.mrb[0].mxu0
        %v5536 = vadd.f32 %v4153, %v5535
        %v5537 = vpop.f32.mrb[0].mxu0
        %v5538 = vadd.f32 %v4157, %v5537
        %5539 = vmatprep.mubr.f32.mxu0 0.0
        %5540 = vmatmul.mubr.f32.gmra.mrb[0].mxu0 %v4214
        %v5541 = vpop.f32.mrb[0].mxu0
        %v5542 = vadd.f32 %v4153, %v5541
        %v5543 = vpop.f32.mrb[0].mxu0
        %v5544 = vadd.f32 %v4157, %v5543
        %5545 = vmatprep.mubr.f32.mxu0 0.0
        %5546 = vmatmul.mubr.f32.gmra.mrb[0].mxu0 %v4217
        %v5547 = vpop.f32.mrb[0].mxu0
        %v5548 = vadd.f32 %v4153, %v5547
        %v5549 = vpop.f32.mrb[0].mxu0
        %v5550 = vadd.f32 %v4157, %v5549
        %5551 = vmatprep.mubr.f32.mxu0 0.0
        %5552 = vmatmul.mubr.f32.gmra.mrb[0].mxu0 %v4220
        %v5553 = vpop.f32.mrb[0].mxu0
        %v5554 = vadd.f32 %v4153, %v5553
        %v5555 = vpop.f32.mrb[0].mxu0
        %v5556 = vadd.f32 %v4157, %v5555
        %5557 = vdwg.mxu0
        %v5558 = vmax.f32 %v4337, 0.0
        %v5559 = vmax.f32 %v4339, 0.0
        %v5560 = vmax.f32 %v4498, 0.0
        %v5561 = vmax.f32 %v4500, 0.0
        %v5562 = vmax.f32 %v4659, 0.0
        %v5563 = vmax.f32 %v4661, 0.0
        %v5564 = vmax.f32 %v4820, 0.0
        %v5565 = vmax.f32 %v4822, 0.0
        %v5566 = vmax.f32 %v4981, 0.0
        %v5567 = vmax.f32 %v4983, 0.0
        %v5568 = vmax.f32 %v5142, 0.0
        %v5569 = vmax.f32 %v5144, 0.0
        %v5570 = vmax.f32 %v5303, 0.0
        %v5571 = vmax.f32 %v5305, 0.0
        %v5572 = vmax.f32 %v5464, 0.0
        %v5573 = vmax.f32 %v5466, 0.0
        %v5574 = vmax.f32 %v4343, 0.0
        %v5575 = vmax.f32 %v4345, 0.0
        %v5576 = vmax.f32 %v4504, 0.0
        %v5577 = vmax.f32 %v4506, 0.0
        %v5578 = vmax.f32 %v4665, 0.0
        %v5579 = vmax.f32 %v4667, 0.0
        %v5580 = vmax.f32 %v4826, 0.0
        %v5581 = vmax.f32 %v4828, 0.0
        %v5582 = vmax.f32 %v4987, 0.0
        %v5583 = vmax.f32 %v4989, 0.0
        %v5584 = vmax.f32 %v5148, 0.0
        %v5585 = vmax.f32 %v5150, 0.0
        %v5586 = vmax.f32 %v5309, 0.0
        %v5587 = vmax.f32 %v5311, 0.0
        %v5588 = vmax.f32 %v5470, 0.0
        %v5589 = vmax.f32 %v5472, 0.0
        %v5590 = vmax.f32 %v4349, 0.0
        %v5591 = vmax.f32 %v4351, 0.0
        %v5592 = vmax.f32 %v4510, 0.0
        %v5593 = vmax.f32 %v4512, 0.0
        %v5594 = vmax.f32 %v4671, 0.0
        %v5595 = vmax.f32 %v4673, 0.0
        %v5596 = vmax.f32 %v4832, 0.0
        %v5597 = vmax.f32 %v4834, 0.0
        %v5598 = vmax.f32 %v4993, 0.0
        %v5599 = vmax.f32 %v4995, 0.0
        %v5600 = vmax.f32 %v5154, 0.0
        %v5601 = vmax.f32 %v5156, 0.0
        %v5602 = vmax.f32 %v5315, 0.0
        %v5603 = vmax.f32 %v5317, 0.0
        %v5604 = vmax.f32 %v5476, 0.0
        %v5605 = vmax.f32 %v5478, 0.0
        %v5606 = vmax.f32 %v4355, 0.0
        %v5607 = vmax.f32 %v4357, 0.0
        %v5608 = vmax.f32 %v4516, 0.0
        %v5609 = vmax.f32 %v4518, 0.0
        %v5610 = vmax.f32 %v4677, 0.0
        %v5611 = vmax.f32 %v4679, 0.0
        %v5612 = vmax.f32 %v4838, 0.0
        %v5613 = vmax.f32 %v4840, 0.0
        %v5614 = vmax.f32 %v4999, 0.0
        %v5615 = vmax.f32 %v5001, 0.0
        %v5616 = vmax.f32 %v5160, 0.0
        %v5617 = vmax.f32 %v5162, 0.0
        %v5618 = vmax.f32 %v5321, 0.0
        %v5619 = vmax.f32 %v5323, 0.0
        %v5620 = vmax.f32 %v5482, 0.0
        %v5621 = vmax.f32 %v5484, 0.0
        %v5622 = vmax.f32 %v4361, 0.0
        %v5623 = vmax.f32 %v4363, 0.0
        %v5624 = vmax.f32 %v4522, 0.0
        %v5625 = vmax.f32 %v4524, 0.0
        %v5626 = vmax.f32 %v4683, 0.0
        %v5627 = vmax.f32 %v4685, 0.0
        %v5628 = vmax.f32 %v4844, 0.0
        %v5629 = vmax.f32 %v4846, 0.0
        %v5630 = vmax.f32 %v5005, 0.0
        %v5631 = vmax.f32 %v5007, 0.0
        %v5632 = vmax.f32 %v5166, 0.0
        %v5633 = vmax.f32 %v5168, 0.0
        %v5634 = vmax.f32 %v5327, 0.0
        %v5635 = vmax.f32 %v5329, 0.0
        %v5636 = vmax.f32 %v5488, 0.0
        %v5637 = vmax.f32 %v5490, 0.0
        %v5638 = vmax.f32 %v4367, 0.0
        %v5639 = vmax.f32 %v4369, 0.0
        %v5640 = vmax.f32 %v4528, 0.0
        %v5641 = vmax.f32 %v4530, 0.0
        %v5642 = vmax.f32 %v4689, 0.0
        %v5643 = vmax.f32 %v4691, 0.0
        %v5644 = vmax.f32 %v4850, 0.0
        %v5645 = vmax.f32 %v4852, 0.0
        %v5646 = vmax.f32 %v5011, 0.0
        %v5647 = vmax.f32 %v5013, 0.0
        %v5648 = vmax.f32 %v5172, 0.0
        %v5649 = vmax.f32 %v5174, 0.0
        %v5650 = vmax.f32 %v5333, 0.0
        %v5651 = vmax.f32 %v5335, 0.0
        %v5652 = vmax.f32 %v5494, 0.0
        %v5653 = vmax.f32 %v5496, 0.0
        %v5654 = vmax.f32 %v4373, 0.0
        %v5655 = vmax.f32 %v4375, 0.0
        %v5656 = vmax.f32 %v4534, 0.0
        %v5657 = vmax.f32 %v4536, 0.0
        %v5658 = vmax.f32 %v4695, 0.0
        %v5659 = vmax.f32 %v4697, 0.0
        %v5660 = vmax.f32 %v4856, 0.0
        %v5661 = vmax.f32 %v4858, 0.0
        %v5662 = vmax.f32 %v5017, 0.0
        %v5663 = vmax.f32 %v5019, 0.0
        %v5664 = vmax.f32 %v5178, 0.0
        %v5665 = vmax.f32 %v5180, 0.0
        %v5666 = vmax.f32 %v5339, 0.0
        %v5667 = vmax.f32 %v5341, 0.0
        %v5668 = vmax.f32 %v5500, 0.0
        %v5669 = vmax.f32 %v5502, 0.0
        %v5670 = vmax.f32 %v4379, 0.0
        %v5671 = vmax.f32 %v4381, 0.0
        %v5672 = vmax.f32 %v4540, 0.0
        %v5673 = vmax.f32 %v4542, 0.0
        %v5674 = vmax.f32 %v4701, 0.0
        %v5675 = vmax.f32 %v4703, 0.0
        %v5676 = vmax.f32 %v4862, 0.0
        %v5677 = vmax.f32 %v4864, 0.0
        %v5678 = vmax.f32 %v5023, 0.0
        %v5679 = vmax.f32 %v5025, 0.0
        %v5680 = vmax.f32 %v5184, 0.0
        %v5681 = vmax.f32 %v5186, 0.0
        %v5682 = vmax.f32 %v5345, 0.0
        %v5683 = vmax.f32 %v5347, 0.0
        %v5684 = vmax.f32 %v5506, 0.0
        %v5685 = vmax.f32 %v5508, 0.0
        %v5686 = vmax.f32 %v4385, 0.0
        %v5687 = vmax.f32 %v4387, 0.0
        %v5688 = vmax.f32 %v4546, 0.0
        %v5689 = vmax.f32 %v4548, 0.0
        %v5690 = vmax.f32 %v4707, 0.0
        %v5691 = vmax.f32 %v4709, 0.0
        %v5692 = vmax.f32 %v4868, 0.0
        %v5693 = vmax.f32 %v4870, 0.0
        %v5694 = vmax.f32 %v5029, 0.0
        %v5695 = vmax.f32 %v5031, 0.0
        %v5696 = vmax.f32 %v5190, 0.0
        %v5697 = vmax.f32 %v5192, 0.0
        %v5698 = vmax.f32 %v5351, 0.0
        %v5699 = vmax.f32 %v5353, 0.0
        %v5700 = vmax.f32 %v5512, 0.0
        %v5701 = vmax.f32 %v5514, 0.0
        %v5702 = vmax.f32 %v4391, 0.0
        %v5703 = vmax.f32 %v4393, 0.0
        %v5704 = vmax.f32 %v4552, 0.0
        %v5705 = vmax.f32 %v4554, 0.0
        %v5706 = vmax.f32 %v4713, 0.0
        %v5707 = vmax.f32 %v4715, 0.0
        %v5708 = vmax.f32 %v4874, 0.0
        %v5709 = vmax.f32 %v4876, 0.0
        %v5710 = vmax.f32 %v5035, 0.0
        %v5711 = vmax.f32 %v5037, 0.0
        %v5712 = vmax.f32 %v5196, 0.0
        %v5713 = vmax.f32 %v5198, 0.0
        %v5714 = vmax.f32 %v5357, 0.0
        %v5715 = vmax.f32 %v5359, 0.0
        %v5716 = vmax.f32 %v5518, 0.0
        %v5717 = vmax.f32 %v5520, 0.0
        %v5718 = vmax.f32 %v4397, 0.0
        %v5719 = vmax.f32 %v4399, 0.0
        %v5720 = vmax.f32 %v4558, 0.0
        %v5721 = vmax.f32 %v4560, 0.0
        %v5722 = vmax.f32 %v4719, 0.0
        %v5723 = vmax.f32 %v4721, 0.0
        %v5724 = vmax.f32 %v4880, 0.0
        %v5725 = vmax.f32 %v4882, 0.0
        %v5726 = vmax.f32 %v5041, 0.0
        %v5727 = vmax.f32 %v5043, 0.0
        %v5728 = vmax.f32 %v5202, 0.0
        %v5729 = vmax.f32 %v5204, 0.0
        %v5730 = vmax.f32 %v5363, 0.0
        %v5731 = vmax.f32 %v5365, 0.0
        %v5732 = vmax.f32 %v5524, 0.0
        %v5733 = vmax.f32 %v5526, 0.0
        %v5734 = vmax.f32 %v4403, 0.0
        %v5735 = vmax.f32 %v4405, 0.0
        %v5736 = vmax.f32 %v4564, 0.0
        %v5737 = vmax.f32 %v4566, 0.0
        %v5738 = vmax.f32 %v4725, 0.0
        %v5739 = vmax.f32 %v4727, 0.0
        %v5740 = vmax.f32 %v4886, 0.0
        %v5741 = vmax.f32 %v4888, 0.0
        %v5742 = vmax.f32 %v5047, 0.0
        %v5743 = vmax.f32 %v5049, 0.0
        %v5744 = vmax.f32 %v5208, 0.0
        %v5745 = vmax.f32 %v5210, 0.0
        %v5746 = vmax.f32 %v5369, 0.0
        %v5747 = vmax.f32 %v5371, 0.0
        %v5748 = vmax.f32 %v5530, 0.0
        %v5749 = vmax.f32 %v5532, 0.0
        %v5750 = vmax.f32 %v4409, 0.0
        %v5751 = vmax.f32 %v4411, 0.0
        %v5752 = vmax.f32 %v4570, 0.0
        %v5753 = vmax.f32 %v4572, 0.0
        %v5754 = vmax.f32 %v4731, 0.0
        %v5755 = vmax.f32 %v4733, 0.0
        %v5756 = vmax.f32 %v4892, 0.0
        %v5757 = vmax.f32 %v4894, 0.0
        %v5758 = vmax.f32 %v5053, 0.0
        %v5759 = vmax.f32 %v5055, 0.0
        %v5760 = vmax.f32 %v5214, 0.0
        %v5761 = vmax.f32 %v5216, 0.0
        %v5762 = vmax.f32 %v5375, 0.0
        %v5763 = vmax.f32 %v5377, 0.0
        %v5764 = vmax.f32 %v5536, 0.0
        %v5765 = vmax.f32 %v5538, 0.0
        %v5766 = vmax.f32 %v4415, 0.0
        %v5767 = vmax.f32 %v4417, 0.0
        %v5768 = vmax.f32 %v4576, 0.0
        %v5769 = vmax.f32 %v4578, 0.0
        %v5770 = vmax.f32 %v4737, 0.0
        %v5771 = vmax.f32 %v4739, 0.0
        %v5772 = vmax.f32 %v4898, 0.0
        %v5773 = vmax.f32 %v4900, 0.0
        %v5774 = vmax.f32 %v5059, 0.0
        %v5775 = vmax.f32 %v5061, 0.0
        %v5776 = vmax.f32 %v5220, 0.0
        %v5777 = vmax.f32 %v5222, 0.0
        %v5778 = vmax.f32 %v5381, 0.0
        %v5779 = vmax.f32 %v5383, 0.0
        %v5780 = vmax.f32 %v5542, 0.0
        %v5781 = vmax.f32 %v5544, 0.0
        %v5782 = vmax.f32 %v4421, 0.0
        %v5783 = vmax.f32 %v4423, 0.0
        %v5784 = vmax.f32 %v4582, 0.0
        %v5785 = vmax.f32 %v4584, 0.0
        %v5786 = vmax.f32 %v4743, 0.0
        %v5787 = vmax.f32 %v4745, 0.0
        %v5788 = vmax.f32 %v4904, 0.0
        %v5789 = vmax.f32 %v4906, 0.0
        %v5790 = vmax.f32 %v5065, 0.0
        %v5791 = vmax.f32 %v5067, 0.0
        %v5792 = vmax.f32 %v5226, 0.0
        %v5793 = vmax.f32 %v5228, 0.0
        %v5794 = vmax.f32 %v5387, 0.0
        %v5795 = vmax.f32 %v5389, 0.0
        %v5796 = vmax.f32 %v5548, 0.0
        %v5797 = vmax.f32 %v5550, 0.0
        %v5798 = vmax.f32 %v4427, 0.0
        %v5799 = vmax.f32 %v4429, 0.0
        %v5800 = vmax.f32 %v4588, 0.0
        %v5801 = vmax.f32 %v4590, 0.0
        %v5802 = vmax.f32 %v4749, 0.0
        %v5803 = vmax.f32 %v4751, 0.0
        %v5804 = vmax.f32 %v4910, 0.0
        %v5805 = vmax.f32 %v4912, 0.0
        %v5806 = vmax.f32 %v5071, 0.0
        %v5807 = vmax.f32 %v5073, 0.0
        %v5808 = vmax.f32 %v5232, 0.0
        %v5809 = vmax.f32 %v5234, 0.0
        %v5810 = vmax.f32 %v5393, 0.0
        %v5811 = vmax.f32 %v5395, 0.0
        %v5812 = vmax.f32 %v5554, 0.0
        %v5813 = vmax.f32 %v5556, 0.0
        %v5814 = vld [vmem:[#allocation2] sm:$0xff]
        %v5815 = vld [vmem:[#allocation2 + $0x8] sm:$0xff]
        %v5816 = vld [vmem:[#allocation2 + $0x10] sm:$0xff]
        %v5817 = vld [vmem:[#allocation2 + $0x18] sm:$0xff]
        %v5818 = vld [vmem:[#allocation2 + $0x20] sm:$0xff]
        %v5819 = vld [vmem:[#allocation2 + $0x28] sm:$0xff]
        %v5820 = vld [vmem:[#allocation2 + $0x30] sm:$0xff]
        %v5821 = vld [vmem:[#allocation2 + $0x38] sm:$0xff]
        %v5822 = vld [vmem:[#allocation2 + $0x40] sm:$0xff]
        %v5823 = vld [vmem:[#allocation2 + $0x48] sm:$0xff]
        %v5824 = vld [vmem:[#allocation2 + $0x50] sm:$0xff]
        %v5825 = vld [vmem:[#allocation2 + $0x58] sm:$0xff]
        %v5826 = vld [vmem:[#allocation2 + $0x60] sm:$0xff]
        %v5827 = vld [vmem:[#allocation2 + $0x68] sm:$0xff]
        %v5828 = vld [vmem:[#allocation2 + $0x70] sm:$0xff]
        %v5829 = vld [vmem:[#allocation2 + $0x78] sm:$0xff]
        %v5830 = vld [vmem:[#allocation2 + $0x80] sm:$0xff]
        %v5831 = vld [vmem:[#allocation2 + $0x88] sm:$0xff]
        %v5832 = vld [vmem:[#allocation2 + $0x90] sm:$0xff]
        %v5833 = vld [vmem:[#allocation2 + $0x98] sm:$0xff]
        %v5834 = vld [vmem:[#allocation2 + $0xa0] sm:$0xff]
        %v5835 = vld [vmem:[#allocation2 + $0xa8] sm:$0xff]
        %v5836 = vld [vmem:[#allocation2 + $0xb0] sm:$0xff]
        %v5837 = vld [vmem:[#allocation2 + $0xb8] sm:$0xff]
        %v5838 = vld [vmem:[#allocation2 + $0xc0] sm:$0xff]
        %v5839 = vld [vmem:[#allocation2 + $0xc8] sm:$0xff]
        %v5840 = vld [vmem:[#allocation2 + $0xd0] sm:$0xff]
        %v5841 = vld [vmem:[#allocation2 + $0xd8] sm:$0xff]
        %v5842 = vld [vmem:[#allocation2 + $0xe0] sm:$0xff]
        %v5843 = vld [vmem:[#allocation2 + $0xe8] sm:$0xff]
        %v5844 = vld [vmem:[#allocation2 + $0xf0] sm:$0xff]
        %v5845 = vld [vmem:[#allocation2 + $0xf8] sm:$0xff]
        %v5846 = vld [vmem:[#allocation2 + $0x100] sm:$0xf]
        %v5847 = vld [vmem:[#allocation2 + $0x108] sm:$0xf]
        %v5848 = vld [vmem:[#allocation2 + $0x110] sm:$0xf]
        %v5849 = vld [vmem:[#allocation2 + $0x118] sm:$0xf]
        %v5850 = vld [vmem:[#allocation2 + $0x120] sm:$0xf]
        %v5851 = vld [vmem:[#allocation2 + $0x128] sm:$0xf]
        %v5852 = vld [vmem:[#allocation2 + $0x130] sm:$0xf]
        %v5853 = vld [vmem:[#allocation2 + $0x138] sm:$0xf]
        %v5854 = vld [vmem:[#allocation2 + $0x140] sm:$0xf]
        %v5855 = vld [vmem:[#allocation2 + $0x148] sm:$0xf]
        %v5856 = vld [vmem:[#allocation2 + $0x150] sm:$0xf]
        %v5857 = vld [vmem:[#allocation2 + $0x158] sm:$0xf]
        %v5858 = vld [vmem:[#allocation2 + $0x160] sm:$0xf]
        %v5859 = vld [vmem:[#allocation2 + $0x168] sm:$0xf]
        %v5860 = vld [vmem:[#allocation2 + $0x170] sm:$0xf]
        %v5861 = vld [vmem:[#allocation2 + $0x178] sm:$0xf]
        %v5862 = vlaneseq
        %v5863 = vshrl.u32 %v5862, 7
        %v5864 = vsub.s32 7, %v5863
        %v5865 = vrot.slane %v282, %v5864
        %5866 = vmatprep.subr.mxu0 %v5815
        %5867 = vmatpush1.xpose.msra.mxu0 %v5814
        %5868 = vmatprep.subr.mxu0 %v5831
        %5869 = vmatpush1.xpose.msra.mxu0 %v5830
        %5870 = vmatprep.subr.mxu0 %v5847
        %5871 = vmatpush1.xpose.msra.mxu0 %v5846
        %5872 = vmatprep.subr.mxu0 0.0
        %5873 = vmatpush1.xpose.msra.mxu0 0.0
        %5874 = vmatprep.subr.mxu0 0.0
        %5875 = vmatpush1.xpose.msra.mxu0 0.0
        %5876 = vmatprep.subr.mxu0 0.0
        %5877 = vmatpush1.xpose.msra.mxu0 0.0
        %5878 = vmatprep.subr.mxu0 0.0
        %5879 = vmatpush1.xpose.msra.mxu0 0.0
        %5880 = vmatprep.subr.mxu0 0.0
        %5881 = vmatpush1.xpose.msra.mxu0 0.0
        %5882 = vmatprep.subr.mxu0 0.0
        %5883 = vmatpush1.xpose.msra.mxu0 0.0
        %5884 = vmatprep.subr.mxu0 0.0
        %5885 = vmatpush1.xpose.msra.mxu0 0.0
        %5886 = vmatprep.subr.mxu0 0.0
        %5887 = vmatpush1.xpose.msra.mxu0 0.0
        %5888 = vmatprep.subr.mxu0 0.0
        %5889 = vmatpush1.xpose.msra.mxu0 0.0
        %5890 = vmatprep.subr.mxu0 0.0
        %5891 = vmatpush1.xpose.msra.mxu0 0.0
        %5892 = vmatprep.subr.mxu0 0.0
        %5893 = vmatpush1.xpose.msra.mxu0 0.0
        %5894 = vmatprep.subr.mxu0 0.0
        %5895 = vmatpush1.xpose.msra.mxu0 0.0
        %5896 = vmatprep.subr.mxu0 0.0
        %5897 = vmatpush1.xpose.msra.mxu0 0.0
        %5898 = vmatprep.subr.mxu0 0.0
        %5899 = vmatpush1.xpose.msra.mxu0 0.0
        %5900 = vmatprep.subr.mxu0 0.0
        %5901 = vmatpush1.xpose.msra.mxu0 0.0
        %5902 = vmatprep.subr.mxu0 0.0
        %5903 = vmatpush1.xpose.msra.mxu0 0.0
        %5904 = vmatprep.subr.mxu0 0.0
        %5905 = vmatpush1.xpose.msra.mxu0 0.0
        %5906 = vmatprep.subr.mxu0 0.0
        %5907 = vmatpush1.xpose.msra.mxu0 0.0
        %5908 = vmatprep.subr.mxu0 0.0
        %5909 = vmatpush1.xpose.msra.mxu0 0.0
        %5910 = vmatprep.subr.mxu0 0.0
        %5911 = vmatpush1.xpose.msra.mxu0 0.0
        %5912 = vmatprep.subr.mxu0 0.0
        %5913 = vmatpush1.xpose.msra.mxu0 0.0
        %5914 = vmatprep.subr.mxu0 0.0
        %5915 = vmatpush1.xpose.msra.mxu0 0.0
        %5916 = vmatprep.subr.mxu0 0.0
        %5917 = vmatpush1.xpose.msra.mxu0 0.0
        %5918 = vmatprep.subr.mxu0 0.0
        %5919 = vmatpush1.xpose.msra.mxu0 0.0
        %5920 = vmatprep.subr.mxu0 0.0
        %5921 = vmatpush1.xpose.msra.mxu0 0.0
        %5922 = vmatprep.subr.mxu0 0.0
        %5923 = vmatpush1.xpose.msra.mxu0 0.0
        %5924 = vmatprep.subr.mxu0 0.0
        %5925 = vmatpush1.xpose.msra.mxu0 0.0
        %5926 = vmatprep.subr.mxu0 0.0
        %5927 = vmatpush1.xpose.msra.mxu0 0.0
        %5928 = vmatprep.subr.mxu0 0.0
        %5929 = vmatpush1.xpose.msra.mxu0 0.0
        %5930 = vmatprep.mubr.f32.mxu0 %v5559
        %5931 = vmatmul.mubr.f32.gmra.mrb[0].mxu0 %v5558
        %v5932 = vpop.f32.mrb[0].mxu0
        %v5933 = vadd.f32 %v5865, %v5932
        %v5934 = vpop.f32.mrb[0].mxu0
        %5935 = vmatprep.mubr.f32.mxu0 %v5575
        %5936 = vmatmul.mubr.f32.gmra.mrb[0].mxu0 %v5574
        %v5937 = vpop.f32.mrb[0].mxu0
        %v5938 = vadd.f32 %v5865, %v5937
        %v5939 = vpop.f32.mrb[0].mxu0
        %5940 = vmatprep.mubr.f32.mxu0 %v5591
        %5941 = vmatmul.mubr.f32.gmra.mrb[0].mxu0 %v5590
        %v5942 = vpop.f32.mrb[0].mxu0
        %v5943 = vadd.f32 %v5865, %v5942
        %v5944 = vpop.f32.mrb[0].mxu0
        %5945 = vmatprep.mubr.f32.mxu0 %v5607
        %5946 = vmatmul.mubr.f32.gmra.mrb[0].mxu0 %v5606
        %v5947 = vpop.f32.mrb[0].mxu0
        %v5948 = vadd.f32 %v5865, %v5947
        %v5949 = vpop.f32.mrb[0].mxu0
        %5950 = vmatprep.mubr.f32.mxu0 %v5623
        %5951 = vmatmul.mubr.f32.gmra.mrb[0].mxu0 %v5622
        %v5952 = vpop.f32.mrb[0].mxu0
        %v5953 = vadd.f32 %v5865, %v5952
        %v5954 = vpop.f32.mrb[0].mxu0
        %5955 = vmatprep.mubr.f32.mxu0 %v5639
        %5956 = vmatmul.mubr.f32.gmra.mrb[0].mxu0 %v5638
        %v5957 = vpop.f32.mrb[0].mxu0
        %v5958 = vadd.f32 %v5865, %v5957
        %v5959 = vpop.f32.mrb[0].mxu0
        %5960 = vmatprep.mubr.f32.mxu0 %v5655
        %5961 = vmatmul.mubr.f32.gmra.mrb[0].mxu0 %v5654
        %v5962 = vpop.f32.mrb[0].mxu0
        %v5963 = vadd.f32 %v5865, %v5962
        %v5964 = vpop.f32.mrb[0].mxu0
        %5965 = vmatprep.mubr.f32.mxu0 %v5671
        %5966 = vmatmul.mubr.f32.gmra.mrb[0].mxu0 %v5670
        %v5967 = vpop.f32.mrb[0].mxu0
        %v5968 = vadd.f32 %v5865, %v5967
        %v5969 = vpop.f32.mrb[0].mxu0
        %5970 = vmatprep.mubr.f32.mxu0 %v5687
        %5971 = vmatmul.mubr.f32.gmra.mrb[0].mxu0 %v5686
        %v5972 = vpop.f32.mrb[0].mxu0
        %v5973 = vadd.f32 %v5865, %v5972
        %v5974 = vpop.f32.mrb[0].mxu0
        %5975 = vmatprep.mubr.f32.mxu0 %v5703
        %5976 = vmatmul.mubr.f32.gmra.mrb[0].mxu0 %v5702
        %v5977 = vpop.f32.mrb[0].mxu0
        %v5978 = vadd.f32 %v5865, %v5977
        %v5979 = vpop.f32.mrb[0].mxu0
        %5980 = vmatprep.mubr.f32.mxu0 %v5719
        %5981 = vmatmul.mubr.f32.gmra.mrb[0].mxu0 %v5718
        %v5982 = vpop.f32.mrb[0].mxu0
        %v5983 = vadd.f32 %v5865, %v5982
        %v5984 = vpop.f32.mrb[0].mxu0
        %5985 = vmatprep.mubr.f32.mxu0 %v5735
        %5986 = vmatmul.mubr.f32.gmra.mrb[0].mxu0 %v5734
        %v5987 = vpop.f32.mrb[0].mxu0
        %v5988 = vadd.f32 %v5865, %v5987
        %v5989 = vpop.f32.mrb[0].mxu0
        %5990 = vmatprep.mubr.f32.mxu0 %v5751
        %5991 = vmatmul.mubr.f32.gmra.mrb[0].mxu0 %v5750
        %v5992 = vpop.f32.mrb[0].mxu0
        %v5993 = vadd.f32 %v5865, %v5992
        %v5994 = vpop.f32.mrb[0].mxu0
        %5995 = vmatprep.mubr.f32.mxu0 %v5767
        %5996 = vmatmul.mubr.f32.gmra.mrb[0].mxu0 %v5766
        %v5997 = vpop.f32.mrb[0].mxu0
        %v5998 = vadd.f32 %v5865, %v5997
        %v5999 = vpop.f32.mrb[0].mxu0
        %6000 = vmatprep.mubr.f32.mxu0 %v5783
        %6001 = vmatmul.mubr.f32.gmra.mrb[0].mxu0 %v5782
        %v6002 = vpop.f32.mrb[0].mxu0
        %v6003 = vadd.f32 %v5865, %v6002
        %v6004 = vpop.f32.mrb[0].mxu0
        %6005 = vmatprep.mubr.f32.mxu0 %v5799
        %6006 = vmatmul.mubr.f32.gmra.mrb[0].mxu0 %v5798
        %v6007 = vpop.f32.mrb[0].mxu0
        %v6008 = vadd.f32 %v5865, %v6007
        %v6009 = vpop.f32.mrb[0].mxu0
        %6010 = vdwg.mxu0
        %6011 = vmatprep.subr.mxu0 %v5817
        %6012 = vmatpush1.xpose.msra.mxu0 %v5816
        %6013 = vmatprep.subr.mxu0 %v5833
        %6014 = vmatpush1.xpose.msra.mxu0 %v5832
        %6015 = vmatprep.subr.mxu0 %v5849
        %6016 = vmatpush1.xpose.msra.mxu0 %v5848
        %6017 = vmatprep.subr.mxu0 0.0
        %6018 = vmatpush1.xpose.msra.mxu0 0.0
        %6019 = vmatprep.subr.mxu0 0.0
        %6020 = vmatpush1.xpose.msra.mxu0 0.0
        %6021 = vmatprep.subr.mxu0 0.0
        %6022 = vmatpush1.xpose.msra.mxu0 0.0
        %6023 = vmatprep.subr.mxu0 0.0
        %6024 = vmatpush1.xpose.msra.mxu0 0.0
        %6025 = vmatprep.subr.mxu0 0.0
        %6026 = vmatpush1.xpose.msra.mxu0 0.0
        %6027 = vmatprep.subr.mxu0 0.0
        %6028 = vmatpush1.xpose.msra.mxu0 0.0
        %6029 = vmatprep.subr.mxu0 0.0
        %6030 = vmatpush1.xpose.msra.mxu0 0.0
        %6031 = vmatprep.subr.mxu0 0.0
        %6032 = vmatpush1.xpose.msra.mxu0 0.0
        %6033 = vmatprep.subr.mxu0 0.0
        %6034 = vmatpush1.xpose.msra.mxu0 0.0
        %6035 = vmatprep.subr.mxu0 0.0
        %6036 = vmatpush1.xpose.msra.mxu0 0.0
        %6037 = vmatprep.subr.mxu0 0.0
        %6038 = vmatpush1.xpose.msra.mxu0 0.0
        %6039 = vmatprep.subr.mxu0 0.0
        %6040 = vmatpush1.xpose.msra.mxu0 0.0
        %6041 = vmatprep.subr.mxu0 0.0
        %6042 = vmatpush1.xpose.msra.mxu0 0.0
        %6043 = vmatprep.subr.mxu0 0.0
        %6044 = vmatpush1.xpose.msra.mxu0 0.0
        %6045 = vmatprep.subr.mxu0 0.0
        %6046 = vmatpush1.xpose.msra.mxu0 0.0
        %6047 = vmatprep.subr.mxu0 0.0
        %6048 = vmatpush1.xpose.msra.mxu0 0.0
        %6049 = vmatprep.subr.mxu0 0.0
        %6050 = vmatpush1.xpose.msra.mxu0 0.0
        %6051 = vmatprep.subr.mxu0 0.0
        %6052 = vmatpush1.xpose.msra.mxu0 0.0
        %6053 = vmatprep.subr.mxu0 0.0
        %6054 = vmatpush1.xpose.msra.mxu0 0.0
        %6055 = vmatprep.subr.mxu0 0.0
        %6056 = vmatpush1.xpose.msra.mxu0 0.0
        %6057 = vmatprep.subr.mxu0 0.0
        %6058 = vmatpush1.xpose.msra.mxu0 0.0
        %6059 = vmatprep.subr.mxu0 0.0
        %6060 = vmatpush1.xpose.msra.mxu0 0.0
        %6061 = vmatprep.subr.mxu0 0.0
        %6062 = vmatpush1.xpose.msra.mxu0 0.0
        %6063 = vmatprep.subr.mxu0 0.0
        %6064 = vmatpush1.xpose.msra.mxu0 0.0
        %6065 = vmatprep.subr.mxu0 0.0
        %6066 = vmatpush1.xpose.msra.mxu0 0.0
        %6067 = vmatprep.subr.mxu0 0.0
        %6068 = vmatpush1.xpose.msra.mxu0 0.0
        %6069 = vmatprep.subr.mxu0 0.0
        %6070 = vmatpush1.xpose.msra.mxu0 0.0
        %6071 = vmatprep.subr.mxu0 0.0
        %6072 = vmatpush1.xpose.msra.mxu0 0.0
        %6073 = vmatprep.subr.mxu0 0.0
        %6074 = vmatpush1.xpose.msra.mxu0 0.0
        %6075 = vmatprep.mubr.f32.mxu0 %v5561
        %6076 = vmatmul.mubr.f32.gmra.mrb[0].mxu0 %v5560
        %v6077 = vpop.f32.mrb[0].mxu0
        %v6078 = vadd.f32 %v5933, %v6077
        %v6079 = vpop.f32.mrb[0].mxu0
        %6080 = vmatprep.mubr.f32.mxu0 %v5577
        %6081 = vmatmul.mubr.f32.gmra.mrb[0].mxu0 %v5576
        %v6082 = vpop.f32.mrb[0].mxu0
        %v6083 = vadd.f32 %v5938, %v6082
        %v6084 = vpop.f32.mrb[0].mxu0
        %6085 = vmatprep.mubr.f32.mxu0 %v5593
        %6086 = vmatmul.mubr.f32.gmra.mrb[0].mxu0 %v5592
        %v6087 = vpop.f32.mrb[0].mxu0
        %v6088 = vadd.f32 %v5943, %v6087
        %v6089 = vpop.f32.mrb[0].mxu0
        %6090 = vmatprep.mubr.f32.mxu0 %v5609
        %6091 = vmatmul.mubr.f32.gmra.mrb[0].mxu0 %v5608
        %v6092 = vpop.f32.mrb[0].mxu0
        %v6093 = vadd.f32 %v5948, %v6092
        %v6094 = vpop.f32.mrb[0].mxu0
        %6095 = vmatprep.mubr.f32.mxu0 %v5625
        %6096 = vmatmul.mubr.f32.gmra.mrb[0].mxu0 %v5624
        %v6097 = vpop.f32.mrb[0].mxu0
        %v6098 = vadd.f32 %v5953, %v6097
        %v6099 = vpop.f32.mrb[0].mxu0
        %6100 = vmatprep.mubr.f32.mxu0 %v5641
        %6101 = vmatmul.mubr.f32.gmra.mrb[0].mxu0 %v5640
        %v6102 = vpop.f32.mrb[0].mxu0
        %v6103 = vadd.f32 %v5958, %v6102
        %v6104 = vpop.f32.mrb[0].mxu0
        %6105 = vmatprep.mubr.f32.mxu0 %v5657
        %6106 = vmatmul.mubr.f32.gmra.mrb[0].mxu0 %v5656
        %v6107 = vpop.f32.mrb[0].mxu0
        %v6108 = vadd.f32 %v5963, %v6107
        %v6109 = vpop.f32.mrb[0].mxu0
        %6110 = vmatprep.mubr.f32.mxu0 %v5673
        %6111 = vmatmul.mubr.f32.gmra.mrb[0].mxu0 %v5672
        %v6112 = vpop.f32.mrb[0].mxu0
        %v6113 = vadd.f32 %v5968, %v6112
        %v6114 = vpop.f32.mrb[0].mxu0
        %6115 = vmatprep.mubr.f32.mxu0 %v5689
        %6116 = vmatmul.mubr.f32.gmra.mrb[0].mxu0 %v5688
        %v6117 = vpop.f32.mrb[0].mxu0
        %v6118 = vadd.f32 %v5973, %v6117
        %v6119 = vpop.f32.mrb[0].mxu0
        %6120 = vmatprep.mubr.f32.mxu0 %v5705
        %6121 = vmatmul.mubr.f32.gmra.mrb[0].mxu0 %v5704
        %v6122 = vpop.f32.mrb[0].mxu0
        %v6123 = vadd.f32 %v5978, %v6122
        %v6124 = vpop.f32.mrb[0].mxu0
        %6125 = vmatprep.mubr.f32.mxu0 %v5721
        %6126 = vmatmul.mubr.f32.gmra.mrb[0].mxu0 %v5720
        %v6127 = vpop.f32.mrb[0].mxu0
        %v6128 = vadd.f32 %v5983, %v6127
        %v6129 = vpop.f32.mrb[0].mxu0
        %6130 = vmatprep.mubr.f32.mxu0 %v5737
        %6131 = vmatmul.mubr.f32.gmra.mrb[0].mxu0 %v5736
        %v6132 = vpop.f32.mrb[0].mxu0
        %v6133 = vadd.f32 %v5988, %v6132
        %v6134 = vpop.f32.mrb[0].mxu0
        %6135 = vmatprep.mubr.f32.mxu0 %v5753
        %6136 = vmatmul.mubr.f32.gmra.mrb[0].mxu0 %v5752
        %v6137 = vpop.f32.mrb[0].mxu0
        %v6138 = vadd.f32 %v5993, %v6137
        %v6139 = vpop.f32.mrb[0].mxu0
        %6140 = vmatprep.mubr.f32.mxu0 %v5769
        %6141 = vmatmul.mubr.f32.gmra.mrb[0].mxu0 %v5768
        %v6142 = vpop.f32.mrb[0].mxu0
        %v6143 = vadd.f32 %v5998, %v6142
        %v6144 = vpop.f32.mrb[0].mxu0
        %6145 = vmatprep.mubr.f32.mxu0 %v5785
        %6146 = vmatmul.mubr.f32.gmra.mrb[0].mxu0 %v5784
        %v6147 = vpop.f32.mrb[0].mxu0
        %v6148 = vadd.f32 %v6003, %v6147
        %v6149 = vpop.f32.mrb[0].mxu0
        %6150 = vmatprep.mubr.f32.mxu0 %v5801
        %6151 = vmatmul.mubr.f32.gmra.mrb[0].mxu0 %v5800
        %v6152 = vpop.f32.mrb[0].mxu0
        %v6153 = vadd.f32 %v6008, %v6152
        %v6154 = vpop.f32.mrb[0].mxu0
        %6155 = vdwg.mxu0
        %6156 = vmatprep.subr.mxu0 %v5819
        %6157 = vmatpush1.xpose.msra.mxu0 %v5818
        %6158 = vmatprep.subr.mxu0 %v5835
        %6159 = vmatpush1.xpose.msra.mxu0 %v5834
        %6160 = vmatprep.subr.mxu0 %v5851
        %6161 = vmatpush1.xpose.msra.mxu0 %v5850
        %6162 = vmatprep.subr.mxu0 0.0
        %6163 = vmatpush1.xpose.msra.mxu0 0.0
        %6164 = vmatprep.subr.mxu0 0.0
        %6165 = vmatpush1.xpose.msra.mxu0 0.0
        %6166 = vmatprep.subr.mxu0 0.0
        %6167 = vmatpush1.xpose.msra.mxu0 0.0
        %6168 = vmatprep.subr.mxu0 0.0
        %6169 = vmatpush1.xpose.msra.mxu0 0.0
        %6170 = vmatprep.subr.mxu0 0.0
        %6171 = vmatpush1.xpose.msra.mxu0 0.0
        %6172 = vmatprep.subr.mxu0 0.0
        %6173 = vmatpush1.xpose.msra.mxu0 0.0
        %6174 = vmatprep.subr.mxu0 0.0
        %6175 = vmatpush1.xpose.msra.mxu0 0.0
        %6176 = vmatprep.subr.mxu0 0.0
        %6177 = vmatpush1.xpose.msra.mxu0 0.0
        %6178 = vmatprep.subr.mxu0 0.0
        %6179 = vmatpush1.xpose.msra.mxu0 0.0
        %6180 = vmatprep.subr.mxu0 0.0
        %6181 = vmatpush1.xpose.msra.mxu0 0.0
        %6182 = vmatprep.subr.mxu0 0.0
        %6183 = vmatpush1.xpose.msra.mxu0 0.0
        %6184 = vmatprep.subr.mxu0 0.0
        %6185 = vmatpush1.xpose.msra.mxu0 0.0
        %6186 = vmatprep.subr.mxu0 0.0
        %6187 = vmatpush1.xpose.msra.mxu0 0.0
        %6188 = vmatprep.subr.mxu0 0.0
        %6189 = vmatpush1.xpose.msra.mxu0 0.0
        %6190 = vmatprep.subr.mxu0 0.0
        %6191 = vmatpush1.xpose.msra.mxu0 0.0
        %6192 = vmatprep.subr.mxu0 0.0
        %6193 = vmatpush1.xpose.msra.mxu0 0.0
        %6194 = vmatprep.subr.mxu0 0.0
        %6195 = vmatpush1.xpose.msra.mxu0 0.0
        %6196 = vmatprep.subr.mxu0 0.0
        %6197 = vmatpush1.xpose.msra.mxu0 0.0
        %6198 = vmatprep.subr.mxu0 0.0
        %6199 = vmatpush1.xpose.msra.mxu0 0.0
        %6200 = vmatprep.subr.mxu0 0.0
        %6201 = vmatpush1.xpose.msra.mxu0 0.0
        %6202 = vmatprep.subr.mxu0 0.0
        %6203 = vmatpush1.xpose.msra.mxu0 0.0
        %6204 = vmatprep.subr.mxu0 0.0
        %6205 = vmatpush1.xpose.msra.mxu0 0.0
        %6206 = vmatprep.subr.mxu0 0.0
        %6207 = vmatpush1.xpose.msra.mxu0 0.0
        %6208 = vmatprep.subr.mxu0 0.0
        %6209 = vmatpush1.xpose.msra.mxu0 0.0
        %6210 = vmatprep.subr.mxu0 0.0
        %6211 = vmatpush1.xpose.msra.mxu0 0.0
        %6212 = vmatprep.subr.mxu0 0.0
        %6213 = vmatpush1.xpose.msra.mxu0 0.0
        %6214 = vmatprep.subr.mxu0 0.0
        %6215 = vmatpush1.xpose.msra.mxu0 0.0
        %6216 = vmatprep.subr.mxu0 0.0
        %6217 = vmatpush1.xpose.msra.mxu0 0.0
        %6218 = vmatprep.subr.mxu0 0.0
        %6219 = vmatpush1.xpose.msra.mxu0 0.0
        %6220 = vmatprep.mubr.f32.mxu0 %v5563
        %6221 = vmatmul.mubr.f32.gmra.mrb[0].mxu0 %v5562
        %v6222 = vpop.f32.mrb[0].mxu0
        %v6223 = vadd.f32 %v6078, %v6222
        %v6224 = vpop.f32.mrb[0].mxu0
        %6225 = vmatprep.mubr.f32.mxu0 %v5579
        %6226 = vmatmul.mubr.f32.gmra.mrb[0].mxu0 %v5578
        %v6227 = vpop.f32.mrb[0].mxu0
        %v6228 = vadd.f32 %v6083, %v6227
        %v6229 = vpop.f32.mrb[0].mxu0
        %6230 = vmatprep.mubr.f32.mxu0 %v5595
        %6231 = vmatmul.mubr.f32.gmra.mrb[0].mxu0 %v5594
        %v6232 = vpop.f32.mrb[0].mxu0
        %v6233 = vadd.f32 %v6088, %v6232
        %v6234 = vpop.f32.mrb[0].mxu0
        %6235 = vmatprep.mubr.f32.mxu0 %v5611
        %6236 = vmatmul.mubr.f32.gmra.mrb[0].mxu0 %v5610
        %v6237 = vpop.f32.mrb[0].mxu0
        %v6238 = vadd.f32 %v6093, %v6237
        %v6239 = vpop.f32.mrb[0].mxu0
        %6240 = vmatprep.mubr.f32.mxu0 %v5627
        %6241 = vmatmul.mubr.f32.gmra.mrb[0].mxu0 %v5626
        %v6242 = vpop.f32.mrb[0].mxu0
        %v6243 = vadd.f32 %v6098, %v6242
        %v6244 = vpop.f32.mrb[0].mxu0
        %6245 = vmatprep.mubr.f32.mxu0 %v5643
        %6246 = vmatmul.mubr.f32.gmra.mrb[0].mxu0 %v5642
        %v6247 = vpop.f32.mrb[0].mxu0
        %v6248 = vadd.f32 %v6103, %v6247
        %v6249 = vpop.f32.mrb[0].mxu0
        %6250 = vmatprep.mubr.f32.mxu0 %v5659
        %6251 = vmatmul.mubr.f32.gmra.mrb[0].mxu0 %v5658
        %v6252 = vpop.f32.mrb[0].mxu0
        %v6253 = vadd.f32 %v6108, %v6252
        %v6254 = vpop.f32.mrb[0].mxu0
        %6255 = vmatprep.mubr.f32.mxu0 %v5675
        %6256 = vmatmul.mubr.f32.gmra.mrb[0].mxu0 %v5674
        %v6257 = vpop.f32.mrb[0].mxu0
        %v6258 = vadd.f32 %v6113, %v6257
        %v6259 = vpop.f32.mrb[0].mxu0
        %6260 = vmatprep.mubr.f32.mxu0 %v5691
        %6261 = vmatmul.mubr.f32.gmra.mrb[0].mxu0 %v5690
        %v6262 = vpop.f32.mrb[0].mxu0
        %v6263 = vadd.f32 %v6118, %v6262
        %v6264 = vpop.f32.mrb[0].mxu0
        %6265 = vmatprep.mubr.f32.mxu0 %v5707
        %6266 = vmatmul.mubr.f32.gmra.mrb[0].mxu0 %v5706
        %v6267 = vpop.f32.mrb[0].mxu0
        %v6268 = vadd.f32 %v6123, %v6267
        %v6269 = vpop.f32.mrb[0].mxu0
        %6270 = vmatprep.mubr.f32.mxu0 %v5723
        %6271 = vmatmul.mubr.f32.gmra.mrb[0].mxu0 %v5722
        %v6272 = vpop.f32.mrb[0].mxu0
        %v6273 = vadd.f32 %v6128, %v6272
        %v6274 = vpop.f32.mrb[0].mxu0
        %6275 = vmatprep.mubr.f32.mxu0 %v5739
        %6276 = vmatmul.mubr.f32.gmra.mrb[0].mxu0 %v5738
        %v6277 = vpop.f32.mrb[0].mxu0
        %v6278 = vadd.f32 %v6133, %v6277
        %v6279 = vpop.f32.mrb[0].mxu0
        %6280 = vmatprep.mubr.f32.mxu0 %v5755
        %6281 = vmatmul.mubr.f32.gmra.mrb[0].mxu0 %v5754
        %v6282 = vpop.f32.mrb[0].mxu0
        %v6283 = vadd.f32 %v6138, %v6282
        %v6284 = vpop.f32.mrb[0].mxu0
        %6285 = vmatprep.mubr.f32.mxu0 %v5771
        %6286 = vmatmul.mubr.f32.gmra.mrb[0].mxu0 %v5770
        %v6287 = vpop.f32.mrb[0].mxu0
        %v6288 = vadd.f32 %v6143, %v6287
        %v6289 = vpop.f32.mrb[0].mxu0
        %6290 = vmatprep.mubr.f32.mxu0 %v5787
        %6291 = vmatmul.mubr.f32.gmra.mrb[0].mxu0 %v5786
        %v6292 = vpop.f32.mrb[0].mxu0
        %v6293 = vadd.f32 %v6148, %v6292
        %v6294 = vpop.f32.mrb[0].mxu0
        %6295 = vmatprep.mubr.f32.mxu0 %v5803
        %6296 = vmatmul.mubr.f32.gmra.mrb[0].mxu0 %v5802
        %v6297 = vpop.f32.mrb[0].mxu0
        %v6298 = vadd.f32 %v6153, %v6297
        %v6299 = vpop.f32.mrb[0].mxu0
        %6300 = vdwg.mxu0
        %6301 = vmatprep.subr.mxu0 %v5821
        %6302 = vmatpush1.xpose.msra.mxu0 %v5820
        %6303 = vmatprep.subr.mxu0 %v5837
        %6304 = vmatpush1.xpose.msra.mxu0 %v5836
        %6305 = vmatprep.subr.mxu0 %v5853
        %6306 = vmatpush1.xpose.msra.mxu0 %v5852
        %6307 = vmatprep.subr.mxu0 0.0
        %6308 = vmatpush1.xpose.msra.mxu0 0.0
        %6309 = vmatprep.subr.mxu0 0.0
        %6310 = vmatpush1.xpose.msra.mxu0 0.0
        %6311 = vmatprep.subr.mxu0 0.0
        %6312 = vmatpush1.xpose.msra.mxu0 0.0
        %6313 = vmatprep.subr.mxu0 0.0
        %6314 = vmatpush1.xpose.msra.mxu0 0.0
        %6315 = vmatprep.subr.mxu0 0.0
        %6316 = vmatpush1.xpose.msra.mxu0 0.0
        %6317 = vmatprep.subr.mxu0 0.0
        %6318 = vmatpush1.xpose.msra.mxu0 0.0
        %6319 = vmatprep.subr.mxu0 0.0
        %6320 = vmatpush1.xpose.msra.mxu0 0.0
        %6321 = vmatprep.subr.mxu0 0.0
        %6322 = vmatpush1.xpose.msra.mxu0 0.0
        %6323 = vmatprep.subr.mxu0 0.0
        %6324 = vmatpush1.xpose.msra.mxu0 0.0
        %6325 = vmatprep.subr.mxu0 0.0
        %6326 = vmatpush1.xpose.msra.mxu0 0.0
        %6327 = vmatprep.subr.mxu0 0.0
        %6328 = vmatpush1.xpose.msra.mxu0 0.0
        %6329 = vmatprep.subr.mxu0 0.0
        %6330 = vmatpush1.xpose.msra.mxu0 0.0
        %6331 = vmatprep.subr.mxu0 0.0
        %6332 = vmatpush1.xpose.msra.mxu0 0.0
        %6333 = vmatprep.subr.mxu0 0.0
        %6334 = vmatpush1.xpose.msra.mxu0 0.0
        %6335 = vmatprep.subr.mxu0 0.0
        %6336 = vmatpush1.xpose.msra.mxu0 0.0
        %6337 = vmatprep.subr.mxu0 0.0
        %6338 = vmatpush1.xpose.msra.mxu0 0.0
        %6339 = vmatprep.subr.mxu0 0.0
        %6340 = vmatpush1.xpose.msra.mxu0 0.0
        %6341 = vmatprep.subr.mxu0 0.0
        %6342 = vmatpush1.xpose.msra.mxu0 0.0
        %6343 = vmatprep.subr.mxu0 0.0
        %6344 = vmatpush1.xpose.msra.mxu0 0.0
        %6345 = vmatprep.subr.mxu0 0.0
        %6346 = vmatpush1.xpose.msra.mxu0 0.0
        %6347 = vmatprep.subr.mxu0 0.0
        %6348 = vmatpush1.xpose.msra.mxu0 0.0
        %6349 = vmatprep.subr.mxu0 0.0
        %6350 = vmatpush1.xpose.msra.mxu0 0.0
        %6351 = vmatprep.subr.mxu0 0.0
        %6352 = vmatpush1.xpose.msra.mxu0 0.0
        %6353 = vmatprep.subr.mxu0 0.0
        %6354 = vmatpush1.xpose.msra.mxu0 0.0
        %6355 = vmatprep.subr.mxu0 0.0
        %6356 = vmatpush1.xpose.msra.mxu0 0.0
        %6357 = vmatprep.subr.mxu0 0.0
        %6358 = vmatpush1.xpose.msra.mxu0 0.0
        %6359 = vmatprep.subr.mxu0 0.0
        %6360 = vmatpush1.xpose.msra.mxu0 0.0
        %6361 = vmatprep.subr.mxu0 0.0
        %6362 = vmatpush1.xpose.msra.mxu0 0.0
        %6363 = vmatprep.subr.mxu0 0.0
        %6364 = vmatpush1.xpose.msra.mxu0 0.0
        %6365 = vmatprep.mubr.f32.mxu0 %v5565
        %6366 = vmatmul.mubr.f32.gmra.mrb[0].mxu0 %v5564
        %v6367 = vpop.f32.mrb[0].mxu0
        %v6368 = vadd.f32 %v6223, %v6367
        %v6369 = vpop.f32.mrb[0].mxu0
        %6370 = vmatprep.mubr.f32.mxu0 %v5581
        %6371 = vmatmul.mubr.f32.gmra.mrb[0].mxu0 %v5580
        %v6372 = vpop.f32.mrb[0].mxu0
        %v6373 = vadd.f32 %v6228, %v6372
        %v6374 = vpop.f32.mrb[0].mxu0
        %6375 = vmatprep.mubr.f32.mxu0 %v5597
        %6376 = vmatmul.mubr.f32.gmra.mrb[0].mxu0 %v5596
        %v6377 = vpop.f32.mrb[0].mxu0
        %v6378 = vadd.f32 %v6233, %v6377
        %v6379 = vpop.f32.mrb[0].mxu0
        %6380 = vmatprep.mubr.f32.mxu0 %v5613
        %6381 = vmatmul.mubr.f32.gmra.mrb[0].mxu0 %v5612
        %v6382 = vpop.f32.mrb[0].mxu0
        %v6383 = vadd.f32 %v6238, %v6382
        %v6384 = vpop.f32.mrb[0].mxu0
        %6385 = vmatprep.mubr.f32.mxu0 %v5629
        %6386 = vmatmul.mubr.f32.gmra.mrb[0].mxu0 %v5628
        %v6387 = vpop.f32.mrb[0].mxu0
        %v6388 = vadd.f32 %v6243, %v6387
        %v6389 = vpop.f32.mrb[0].mxu0
        %6390 = vmatprep.mubr.f32.mxu0 %v5645
        %6391 = vmatmul.mubr.f32.gmra.mrb[0].mxu0 %v5644
        %v6392 = vpop.f32.mrb[0].mxu0
        %v6393 = vadd.f32 %v6248, %v6392
        %v6394 = vpop.f32.mrb[0].mxu0
        %6395 = vmatprep.mubr.f32.mxu0 %v5661
        %6396 = vmatmul.mubr.f32.gmra.mrb[0].mxu0 %v5660
        %v6397 = vpop.f32.mrb[0].mxu0
        %v6398 = vadd.f32 %v6253, %v6397
        %v6399 = vpop.f32.mrb[0].mxu0
        %6400 = vmatprep.mubr.f32.mxu0 %v5677
        %6401 = vmatmul.mubr.f32.gmra.mrb[0].mxu0 %v5676
        %v6402 = vpop.f32.mrb[0].mxu0
        %v6403 = vadd.f32 %v6258, %v6402
        %v6404 = vpop.f32.mrb[0].mxu0
        %6405 = vmatprep.mubr.f32.mxu0 %v5693
        %6406 = vmatmul.mubr.f32.gmra.mrb[0].mxu0 %v5692
        %v6407 = vpop.f32.mrb[0].mxu0
        %v6408 = vadd.f32 %v6263, %v6407
        %v6409 = vpop.f32.mrb[0].mxu0
        %6410 = vmatprep.mubr.f32.mxu0 %v5709
        %6411 = vmatmul.mubr.f32.gmra.mrb[0].mxu0 %v5708
        %v6412 = vpop.f32.mrb[0].mxu0
        %v6413 = vadd.f32 %v6268, %v6412
        %v6414 = vpop.f32.mrb[0].mxu0
        %6415 = vmatprep.mubr.f32.mxu0 %v5725
        %6416 = vmatmul.mubr.f32.gmra.mrb[0].mxu0 %v5724
        %v6417 = vpop.f32.mrb[0].mxu0
        %v6418 = vadd.f32 %v6273, %v6417
        %v6419 = vpop.f32.mrb[0].mxu0
        %6420 = vmatprep.mubr.f32.mxu0 %v5741
        %6421 = vmatmul.mubr.f32.gmra.mrb[0].mxu0 %v5740
        %v6422 = vpop.f32.mrb[0].mxu0
        %v6423 = vadd.f32 %v6278, %v6422
        %v6424 = vpop.f32.mrb[0].mxu0
        %6425 = vmatprep.mubr.f32.mxu0 %v5757
        %6426 = vmatmul.mubr.f32.gmra.mrb[0].mxu0 %v5756
        %v6427 = vpop.f32.mrb[0].mxu0
        %v6428 = vadd.f32 %v6283, %v6427
        %v6429 = vpop.f32.mrb[0].mxu0
        %6430 = vmatprep.mubr.f32.mxu0 %v5773
        %6431 = vmatmul.mubr.f32.gmra.mrb[0].mxu0 %v5772
        %v6432 = vpop.f32.mrb[0].mxu0
        %v6433 = vadd.f32 %v6288, %v6432
        %v6434 = vpop.f32.mrb[0].mxu0
        %6435 = vmatprep.mubr.f32.mxu0 %v5789
        %6436 = vmatmul.mubr.f32.gmra.mrb[0].mxu0 %v5788
        %v6437 = vpop.f32.mrb[0].mxu0
        %v6438 = vadd.f32 %v6293, %v6437
        %v6439 = vpop.f32.mrb[0].mxu0
        %6440 = vmatprep.mubr.f32.mxu0 %v5805
        %6441 = vmatmul.mubr.f32.gmra.mrb[0].mxu0 %v5804
        %v6442 = vpop.f32.mrb[0].mxu0
        %v6443 = vadd.f32 %v6298, %v6442
        %v6444 = vpop.f32.mrb[0].mxu0
        %6445 = vdwg.mxu0
        %6446 = vmatprep.subr.mxu0 %v5823
        %6447 = vmatpush1.xpose.msra.mxu0 %v5822
        %6448 = vmatprep.subr.mxu0 %v5839
        %6449 = vmatpush1.xpose.msra.mxu0 %v5838
        %6450 = vmatprep.subr.mxu0 %v5855
        %6451 = vmatpush1.xpose.msra.mxu0 %v5854
        %6452 = vmatprep.subr.mxu0 0.0
        %6453 = vmatpush1.xpose.msra.mxu0 0.0
        %6454 = vmatprep.subr.mxu0 0.0
        %6455 = vmatpush1.xpose.msra.mxu0 0.0
        %6456 = vmatprep.subr.mxu0 0.0
        %6457 = vmatpush1.xpose.msra.mxu0 0.0
        %6458 = vmatprep.subr.mxu0 0.0
        %6459 = vmatpush1.xpose.msra.mxu0 0.0
        %6460 = vmatprep.subr.mxu0 0.0
        %6461 = vmatpush1.xpose.msra.mxu0 0.0
        %6462 = vmatprep.subr.mxu0 0.0
        %6463 = vmatpush1.xpose.msra.mxu0 0.0
        %6464 = vmatprep.subr.mxu0 0.0
        %6465 = vmatpush1.xpose.msra.mxu0 0.0
        %6466 = vmatprep.subr.mxu0 0.0
        %6467 = vmatpush1.xpose.msra.mxu0 0.0
        %6468 = vmatprep.subr.mxu0 0.0
        %6469 = vmatpush1.xpose.msra.mxu0 0.0
        %6470 = vmatprep.subr.mxu0 0.0
        %6471 = vmatpush1.xpose.msra.mxu0 0.0
        %6472 = vmatprep.subr.mxu0 0.0
        %6473 = vmatpush1.xpose.msra.mxu0 0.0
        %6474 = vmatprep.subr.mxu0 0.0
        %6475 = vmatpush1.xpose.msra.mxu0 0.0
        %6476 = vmatprep.subr.mxu0 0.0
        %6477 = vmatpush1.xpose.msra.mxu0 0.0
        %6478 = vmatprep.subr.mxu0 0.0
        %6479 = vmatpush1.xpose.msra.mxu0 0.0
        %6480 = vmatprep.subr.mxu0 0.0
        %6481 = vmatpush1.xpose.msra.mxu0 0.0
        %6482 = vmatprep.subr.mxu0 0.0
        %6483 = vmatpush1.xpose.msra.mxu0 0.0
        %6484 = vmatprep.subr.mxu0 0.0
        %6485 = vmatpush1.xpose.msra.mxu0 0.0
        %6486 = vmatprep.subr.mxu0 0.0
        %6487 = vmatpush1.xpose.msra.mxu0 0.0
        %6488 = vmatprep.subr.mxu0 0.0
        %6489 = vmatpush1.xpose.msra.mxu0 0.0
        %6490 = vmatprep.subr.mxu0 0.0
        %6491 = vmatpush1.xpose.msra.mxu0 0.0
        %6492 = vmatprep.subr.mxu0 0.0
        %6493 = vmatpush1.xpose.msra.mxu0 0.0
        %6494 = vmatprep.subr.mxu0 0.0
        %6495 = vmatpush1.xpose.msra.mxu0 0.0
        %6496 = vmatprep.subr.mxu0 0.0
        %6497 = vmatpush1.xpose.msra.mxu0 0.0
        %6498 = vmatprep.subr.mxu0 0.0
        %6499 = vmatpush1.xpose.msra.mxu0 0.0
        %6500 = vmatprep.subr.mxu0 0.0
        %6501 = vmatpush1.xpose.msra.mxu0 0.0
        %6502 = vmatprep.subr.mxu0 0.0
        %6503 = vmatpush1.xpose.msra.mxu0 0.0
        %6504 = vmatprep.subr.mxu0 0.0
        %6505 = vmatpush1.xpose.msra.mxu0 0.0
        %6506 = vmatprep.subr.mxu0 0.0
        %6507 = vmatpush1.xpose.msra.mxu0 0.0
        %6508 = vmatprep.subr.mxu0 0.0
        %6509 = vmatpush1.xpose.msra.mxu0 0.0
        %6510 = vmatprep.mubr.f32.mxu0 %v5567
        %6511 = vmatmul.mubr.f32.gmra.mrb[0].mxu0 %v5566
        %v6512 = vpop.f32.mrb[0].mxu0
        %v6513 = vadd.f32 %v6368, %v6512
        %v6514 = vpop.f32.mrb[0].mxu0
        %6515 = vmatprep.mubr.f32.mxu0 %v5583
        %6516 = vmatmul.mubr.f32.gmra.mrb[0].mxu0 %v5582
        %v6517 = vpop.f32.mrb[0].mxu0
        %v6518 = vadd.f32 %v6373, %v6517
        %v6519 = vpop.f32.mrb[0].mxu0
        %6520 = vmatprep.mubr.f32.mxu0 %v5599
        %6521 = vmatmul.mubr.f32.gmra.mrb[0].mxu0 %v5598
        %v6522 = vpop.f32.mrb[0].mxu0
        %v6523 = vadd.f32 %v6378, %v6522
        %v6524 = vpop.f32.mrb[0].mxu0
        %6525 = vmatprep.mubr.f32.mxu0 %v5615
        %6526 = vmatmul.mubr.f32.gmra.mrb[0].mxu0 %v5614
        %v6527 = vpop.f32.mrb[0].mxu0
        %v6528 = vadd.f32 %v6383, %v6527
        %v6529 = vpop.f32.mrb[0].mxu0
        %6530 = vmatprep.mubr.f32.mxu0 %v5631
        %6531 = vmatmul.mubr.f32.gmra.mrb[0].mxu0 %v5630
        %v6532 = vpop.f32.mrb[0].mxu0
        %v6533 = vadd.f32 %v6388, %v6532
        %v6534 = vpop.f32.mrb[0].mxu0
        %6535 = vmatprep.mubr.f32.mxu0 %v5647
        %6536 = vmatmul.mubr.f32.gmra.mrb[0].mxu0 %v5646
        %v6537 = vpop.f32.mrb[0].mxu0
        %v6538 = vadd.f32 %v6393, %v6537
        %v6539 = vpop.f32.mrb[0].mxu0
        %6540 = vmatprep.mubr.f32.mxu0 %v5663
        %6541 = vmatmul.mubr.f32.gmra.mrb[0].mxu0 %v5662
        %v6542 = vpop.f32.mrb[0].mxu0
        %v6543 = vadd.f32 %v6398, %v6542
        %v6544 = vpop.f32.mrb[0].mxu0
        %6545 = vmatprep.mubr.f32.mxu0 %v5679
        %6546 = vmatmul.mubr.f32.gmra.mrb[0].mxu0 %v5678
        %v6547 = vpop.f32.mrb[0].mxu0
        %v6548 = vadd.f32 %v6403, %v6547
        %v6549 = vpop.f32.mrb[0].mxu0
        %6550 = vmatprep.mubr.f32.mxu0 %v5695
        %6551 = vmatmul.mubr.f32.gmra.mrb[0].mxu0 %v5694
        %v6552 = vpop.f32.mrb[0].mxu0
        %v6553 = vadd.f32 %v6408, %v6552
        %v6554 = vpop.f32.mrb[0].mxu0
        %6555 = vmatprep.mubr.f32.mxu0 %v5711
        %6556 = vmatmul.mubr.f32.gmra.mrb[0].mxu0 %v5710
        %v6557 = vpop.f32.mrb[0].mxu0
        %v6558 = vadd.f32 %v6413, %v6557
        %v6559 = vpop.f32.mrb[0].mxu0
        %6560 = vmatprep.mubr.f32.mxu0 %v5727
        %6561 = vmatmul.mubr.f32.gmra.mrb[0].mxu0 %v5726
        %v6562 = vpop.f32.mrb[0].mxu0
        %v6563 = vadd.f32 %v6418, %v6562
        %v6564 = vpop.f32.mrb[0].mxu0
        %6565 = vmatprep.mubr.f32.mxu0 %v5743
        %6566 = vmatmul.mubr.f32.gmra.mrb[0].mxu0 %v5742
        %v6567 = vpop.f32.mrb[0].mxu0
        %v6568 = vadd.f32 %v6423, %v6567
        %v6569 = vpop.f32.mrb[0].mxu0
        %6570 = vmatprep.mubr.f32.mxu0 %v5759
        %6571 = vmatmul.mubr.f32.gmra.mrb[0].mxu0 %v5758
        %v6572 = vpop.f32.mrb[0].mxu0
        %v6573 = vadd.f32 %v6428, %v6572
        %v6574 = vpop.f32.mrb[0].mxu0
        %6575 = vmatprep.mubr.f32.mxu0 %v5775
        %6576 = vmatmul.mubr.f32.gmra.mrb[0].mxu0 %v5774
        %v6577 = vpop.f32.mrb[0].mxu0
        %v6578 = vadd.f32 %v6433, %v6577
        %v6579 = vpop.f32.mrb[0].mxu0
        %6580 = vmatprep.mubr.f32.mxu0 %v5791
        %6581 = vmatmul.mubr.f32.gmra.mrb[0].mxu0 %v5790
        %v6582 = vpop.f32.mrb[0].mxu0
        %v6583 = vadd.f32 %v6438, %v6582
        %v6584 = vpop.f32.mrb[0].mxu0
        %6585 = vmatprep.mubr.f32.mxu0 %v5807
        %6586 = vmatmul.mubr.f32.gmra.mrb[0].mxu0 %v5806
        %v6587 = vpop.f32.mrb[0].mxu0
        %v6588 = vadd.f32 %v6443, %v6587
        %v6589 = vpop.f32.mrb[0].mxu0
        %6590 = vdwg.mxu0
        %6591 = vmatprep.subr.mxu0 %v5825
        %6592 = vmatpush1.xpose.msra.mxu0 %v5824
        %6593 = vmatprep.subr.mxu0 %v5841
        %6594 = vmatpush1.xpose.msra.mxu0 %v5840
        %6595 = vmatprep.subr.mxu0 %v5857
        %6596 = vmatpush1.xpose.msra.mxu0 %v5856
        %6597 = vmatprep.subr.mxu0 0.0
        %6598 = vmatpush1.xpose.msra.mxu0 0.0
        %6599 = vmatprep.subr.mxu0 0.0
        %6600 = vmatpush1.xpose.msra.mxu0 0.0
        %6601 = vmatprep.subr.mxu0 0.0
        %6602 = vmatpush1.xpose.msra.mxu0 0.0
        %6603 = vmatprep.subr.mxu0 0.0
        %6604 = vmatpush1.xpose.msra.mxu0 0.0
        %6605 = vmatprep.subr.mxu0 0.0
        %6606 = vmatpush1.xpose.msra.mxu0 0.0
        %6607 = vmatprep.subr.mxu0 0.0
        %6608 = vmatpush1.xpose.msra.mxu0 0.0
        %6609 = vmatprep.subr.mxu0 0.0
        %6610 = vmatpush1.xpose.msra.mxu0 0.0
        %6611 = vmatprep.subr.mxu0 0.0
        %6612 = vmatpush1.xpose.msra.mxu0 0.0
        %6613 = vmatprep.subr.mxu0 0.0
        %6614 = vmatpush1.xpose.msra.mxu0 0.0
        %6615 = vmatprep.subr.mxu0 0.0
        %6616 = vmatpush1.xpose.msra.mxu0 0.0
        %6617 = vmatprep.subr.mxu0 0.0
        %6618 = vmatpush1.xpose.msra.mxu0 0.0
        %6619 = vmatprep.subr.mxu0 0.0
        %6620 = vmatpush1.xpose.msra.mxu0 0.0
        %6621 = vmatprep.subr.mxu0 0.0
        %6622 = vmatpush1.xpose.msra.mxu0 0.0
        %6623 = vmatprep.subr.mxu0 0.0
        %6624 = vmatpush1.xpose.msra.mxu0 0.0
        %6625 = vmatprep.subr.mxu0 0.0
        %6626 = vmatpush1.xpose.msra.mxu0 0.0
        %6627 = vmatprep.subr.mxu0 0.0
        %6628 = vmatpush1.xpose.msra.mxu0 0.0
        %6629 = vmatprep.subr.mxu0 0.0
        %6630 = vmatpush1.xpose.msra.mxu0 0.0
        %6631 = vmatprep.subr.mxu0 0.0
        %6632 = vmatpush1.xpose.msra.mxu0 0.0
        %6633 = vmatprep.subr.mxu0 0.0
        %6634 = vmatpush1.xpose.msra.mxu0 0.0
        %6635 = vmatprep.subr.mxu0 0.0
        %6636 = vmatpush1.xpose.msra.mxu0 0.0
        %6637 = vmatprep.subr.mxu0 0.0
        %6638 = vmatpush1.xpose.msra.mxu0 0.0
        %6639 = vmatprep.subr.mxu0 0.0
        %6640 = vmatpush1.xpose.msra.mxu0 0.0
        %6641 = vmatprep.subr.mxu0 0.0
        %6642 = vmatpush1.xpose.msra.mxu0 0.0
        %6643 = vmatprep.subr.mxu0 0.0
        %6644 = vmatpush1.xpose.msra.mxu0 0.0
        %6645 = vmatprep.subr.mxu0 0.0
        %6646 = vmatpush1.xpose.msra.mxu0 0.0
        %6647 = vmatprep.subr.mxu0 0.0
        %6648 = vmatpush1.xpose.msra.mxu0 0.0
        %6649 = vmatprep.subr.mxu0 0.0
        %6650 = vmatpush1.xpose.msra.mxu0 0.0
        %6651 = vmatprep.subr.mxu0 0.0
        %6652 = vmatpush1.xpose.msra.mxu0 0.0
        %6653 = vmatprep.subr.mxu0 0.0
        %6654 = vmatpush1.xpose.msra.mxu0 0.0
        %6655 = vmatprep.mubr.f32.mxu0 %v5569
        %6656 = vmatmul.mubr.f32.gmra.mrb[0].mxu0 %v5568
        %v6657 = vpop.f32.mrb[0].mxu0
        %v6658 = vadd.f32 %v6513, %v6657
        %v6659 = vpop.f32.mrb[0].mxu0
        %6660 = vmatprep.mubr.f32.mxu0 %v5585
        %6661 = vmatmul.mubr.f32.gmra.mrb[0].mxu0 %v5584
        %v6662 = vpop.f32.mrb[0].mxu0
        %v6663 = vadd.f32 %v6518, %v6662
        %v6664 = vpop.f32.mrb[0].mxu0
        %6665 = vmatprep.mubr.f32.mxu0 %v5601
        %6666 = vmatmul.mubr.f32.gmra.mrb[0].mxu0 %v5600
        %v6667 = vpop.f32.mrb[0].mxu0
        %v6668 = vadd.f32 %v6523, %v6667
        %v6669 = vpop.f32.mrb[0].mxu0
        %6670 = vmatprep.mubr.f32.mxu0 %v5617
        %6671 = vmatmul.mubr.f32.gmra.mrb[0].mxu0 %v5616
        %v6672 = vpop.f32.mrb[0].mxu0
        %v6673 = vadd.f32 %v6528, %v6672
        %v6674 = vpop.f32.mrb[0].mxu0
        %6675 = vmatprep.mubr.f32.mxu0 %v5633
        %6676 = vmatmul.mubr.f32.gmra.mrb[0].mxu0 %v5632
        %v6677 = vpop.f32.mrb[0].mxu0
        %v6678 = vadd.f32 %v6533, %v6677
        %v6679 = vpop.f32.mrb[0].mxu0
        %6680 = vmatprep.mubr.f32.mxu0 %v5649
        %6681 = vmatmul.mubr.f32.gmra.mrb[0].mxu0 %v5648
        %v6682 = vpop.f32.mrb[0].mxu0
        %v6683 = vadd.f32 %v6538, %v6682
        %v6684 = vpop.f32.mrb[0].mxu0
        %6685 = vmatprep.mubr.f32.mxu0 %v5665
        %6686 = vmatmul.mubr.f32.gmra.mrb[0].mxu0 %v5664
        %v6687 = vpop.f32.mrb[0].mxu0
        %v6688 = vadd.f32 %v6543, %v6687
        %v6689 = vpop.f32.mrb[0].mxu0
        %6690 = vmatprep.mubr.f32.mxu0 %v5681
        %6691 = vmatmul.mubr.f32.gmra.mrb[0].mxu0 %v5680
        %v6692 = vpop.f32.mrb[0].mxu0
        %v6693 = vadd.f32 %v6548, %v6692
        %v6694 = vpop.f32.mrb[0].mxu0
        %6695 = vmatprep.mubr.f32.mxu0 %v5697
        %6696 = vmatmul.mubr.f32.gmra.mrb[0].mxu0 %v5696
        %v6697 = vpop.f32.mrb[0].mxu0
        %v6698 = vadd.f32 %v6553, %v6697
        %v6699 = vpop.f32.mrb[0].mxu0
        %6700 = vmatprep.mubr.f32.mxu0 %v5713
        %6701 = vmatmul.mubr.f32.gmra.mrb[0].mxu0 %v5712
        %v6702 = vpop.f32.mrb[0].mxu0
        %v6703 = vadd.f32 %v6558, %v6702
        %v6704 = vpop.f32.mrb[0].mxu0
        %6705 = vmatprep.mubr.f32.mxu0 %v5729
        %6706 = vmatmul.mubr.f32.gmra.mrb[0].mxu0 %v5728
        %v6707 = vpop.f32.mrb[0].mxu0
        %v6708 = vadd.f32 %v6563, %v6707
        %v6709 = vpop.f32.mrb[0].mxu0
        %6710 = vmatprep.mubr.f32.mxu0 %v5745
        %6711 = vmatmul.mubr.f32.gmra.mrb[0].mxu0 %v5744
        %v6712 = vpop.f32.mrb[0].mxu0
        %v6713 = vadd.f32 %v6568, %v6712
        %v6714 = vpop.f32.mrb[0].mxu0
        %6715 = vmatprep.mubr.f32.mxu0 %v5761
        %6716 = vmatmul.mubr.f32.gmra.mrb[0].mxu0 %v5760
        %v6717 = vpop.f32.mrb[0].mxu0
        %v6718 = vadd.f32 %v6573, %v6717
        %v6719 = vpop.f32.mrb[0].mxu0
        %6720 = vmatprep.mubr.f32.mxu0 %v5777
        %6721 = vmatmul.mubr.f32.gmra.mrb[0].mxu0 %v5776
        %v6722 = vpop.f32.mrb[0].mxu0
        %v6723 = vadd.f32 %v6578, %v6722
        %v6724 = vpop.f32.mrb[0].mxu0
        %6725 = vmatprep.mubr.f32.mxu0 %v5793
        %6726 = vmatmul.mubr.f32.gmra.mrb[0].mxu0 %v5792
        %v6727 = vpop.f32.mrb[0].mxu0
        %v6728 = vadd.f32 %v6583, %v6727
        %v6729 = vpop.f32.mrb[0].mxu0
        %6730 = vmatprep.mubr.f32.mxu0 %v5809
        %6731 = vmatmul.mubr.f32.gmra.mrb[0].mxu0 %v5808
        %v6732 = vpop.f32.mrb[0].mxu0
        %v6733 = vadd.f32 %v6588, %v6732
        %v6734 = vpop.f32.mrb[0].mxu0
        %6735 = vdwg.mxu0
        %6736 = vmatprep.subr.mxu0 %v5827
        %6737 = vmatpush1.xpose.msra.mxu0 %v5826
        %6738 = vmatprep.subr.mxu0 %v5843
        %6739 = vmatpush1.xpose.msra.mxu0 %v5842
        %6740 = vmatprep.subr.mxu0 %v5859
        %6741 = vmatpush1.xpose.msra.mxu0 %v5858
        %6742 = vmatprep.subr.mxu0 0.0
        %6743 = vmatpush1.xpose.msra.mxu0 0.0
        %6744 = vmatprep.subr.mxu0 0.0
        %6745 = vmatpush1.xpose.msra.mxu0 0.0
        %6746 = vmatprep.subr.mxu0 0.0
        %6747 = vmatpush1.xpose.msra.mxu0 0.0
        %6748 = vmatprep.subr.mxu0 0.0
        %6749 = vmatpush1.xpose.msra.mxu0 0.0
        %6750 = vmatprep.subr.mxu0 0.0
        %6751 = vmatpush1.xpose.msra.mxu0 0.0
        %6752 = vmatprep.subr.mxu0 0.0
        %6753 = vmatpush1.xpose.msra.mxu0 0.0
        %6754 = vmatprep.subr.mxu0 0.0
        %6755 = vmatpush1.xpose.msra.mxu0 0.0
        %6756 = vmatprep.subr.mxu0 0.0
        %6757 = vmatpush1.xpose.msra.mxu0 0.0
        %6758 = vmatprep.subr.mxu0 0.0
        %6759 = vmatpush1.xpose.msra.mxu0 0.0
        %6760 = vmatprep.subr.mxu0 0.0
        %6761 = vmatpush1.xpose.msra.mxu0 0.0
        %6762 = vmatprep.subr.mxu0 0.0
        %6763 = vmatpush1.xpose.msra.mxu0 0.0
        %6764 = vmatprep.subr.mxu0 0.0
        %6765 = vmatpush1.xpose.msra.mxu0 0.0
        %6766 = vmatprep.subr.mxu0 0.0
        %6767 = vmatpush1.xpose.msra.mxu0 0.0
        %6768 = vmatprep.subr.mxu0 0.0
        %6769 = vmatpush1.xpose.msra.mxu0 0.0
        %6770 = vmatprep.subr.mxu0 0.0
        %6771 = vmatpush1.xpose.msra.mxu0 0.0
        %6772 = vmatprep.subr.mxu0 0.0
        %6773 = vmatpush1.xpose.msra.mxu0 0.0
        %6774 = vmatprep.subr.mxu0 0.0
        %6775 = vmatpush1.xpose.msra.mxu0 0.0
        %6776 = vmatprep.subr.mxu0 0.0
        %6777 = vmatpush1.xpose.msra.mxu0 0.0
        %6778 = vmatprep.subr.mxu0 0.0
        %6779 = vmatpush1.xpose.msra.mxu0 0.0
        %6780 = vmatprep.subr.mxu0 0.0
        %6781 = vmatpush1.xpose.msra.mxu0 0.0
        %6782 = vmatprep.subr.mxu0 0.0
        %6783 = vmatpush1.xpose.msra.mxu0 0.0
        %6784 = vmatprep.subr.mxu0 0.0
        %6785 = vmatpush1.xpose.msra.mxu0 0.0
        %6786 = vmatprep.subr.mxu0 0.0
        %6787 = vmatpush1.xpose.msra.mxu0 0.0
        %6788 = vmatprep.subr.mxu0 0.0
        %6789 = vmatpush1.xpose.msra.mxu0 0.0
        %6790 = vmatprep.subr.mxu0 0.0
        %6791 = vmatpush1.xpose.msra.mxu0 0.0
        %6792 = vmatprep.subr.mxu0 0.0
        %6793 = vmatpush1.xpose.msra.mxu0 0.0
        %6794 = vmatprep.subr.mxu0 0.0
        %6795 = vmatpush1.xpose.msra.mxu0 0.0
        %6796 = vmatprep.subr.mxu0 0.0
        %6797 = vmatpush1.xpose.msra.mxu0 0.0
        %6798 = vmatprep.subr.mxu0 0.0
        %6799 = vmatpush1.xpose.msra.mxu0 0.0
        %6800 = vmatprep.mubr.f32.mxu0 %v5571
        %6801 = vmatmul.mubr.f32.gmra.mrb[0].mxu0 %v5570
        %v6802 = vpop.f32.mrb[0].mxu0
        %v6803 = vadd.f32 %v6658, %v6802
        %v6804 = vpop.f32.mrb[0].mxu0
        %6805 = vmatprep.mubr.f32.mxu0 %v5587
        %6806 = vmatmul.mubr.f32.gmra.mrb[0].mxu0 %v5586
        %v6807 = vpop.f32.mrb[0].mxu0
        %v6808 = vadd.f32 %v6663, %v6807
        %v6809 = vpop.f32.mrb[0].mxu0
        %6810 = vmatprep.mubr.f32.mxu0 %v5603
        %6811 = vmatmul.mubr.f32.gmra.mrb[0].mxu0 %v5602
        %v6812 = vpop.f32.mrb[0].mxu0
        %v6813 = vadd.f32 %v6668, %v6812
        %v6814 = vpop.f32.mrb[0].mxu0
        %6815 = vmatprep.mubr.f32.mxu0 %v5619
        %6816 = vmatmul.mubr.f32.gmra.mrb[0].mxu0 %v5618
        %v6817 = vpop.f32.mrb[0].mxu0
        %v6818 = vadd.f32 %v6673, %v6817
        %v6819 = vpop.f32.mrb[0].mxu0
        %6820 = vmatprep.mubr.f32.mxu0 %v5635
        %6821 = vmatmul.mubr.f32.gmra.mrb[0].mxu0 %v5634
        %v6822 = vpop.f32.mrb[0].mxu0
        %v6823 = vadd.f32 %v6678, %v6822
        %v6824 = vpop.f32.mrb[0].mxu0
        %6825 = vmatprep.mubr.f32.mxu0 %v5651
        %6826 = vmatmul.mubr.f32.gmra.mrb[0].mxu0 %v5650
        %v6827 = vpop.f32.mrb[0].mxu0
        %v6828 = vadd.f32 %v6683, %v6827
        %v6829 = vpop.f32.mrb[0].mxu0
        %6830 = vmatprep.mubr.f32.mxu0 %v5667
        %6831 = vmatmul.mubr.f32.gmra.mrb[0].mxu0 %v5666
        %v6832 = vpop.f32.mrb[0].mxu0
        %v6833 = vadd.f32 %v6688, %v6832
        %v6834 = vpop.f32.mrb[0].mxu0
        %6835 = vmatprep.mubr.f32.mxu0 %v5683
        %6836 = vmatmul.mubr.f32.gmra.mrb[0].mxu0 %v5682
        %v6837 = vpop.f32.mrb[0].mxu0
        %v6838 = vadd.f32 %v6693, %v6837
        %v6839 = vpop.f32.mrb[0].mxu0
        %6840 = vmatprep.mubr.f32.mxu0 %v5699
        %6841 = vmatmul.mubr.f32.gmra.mrb[0].mxu0 %v5698
        %v6842 = vpop.f32.mrb[0].mxu0
        %v6843 = vadd.f32 %v6698, %v6842
        %v6844 = vpop.f32.mrb[0].mxu0
        %6845 = vmatprep.mubr.f32.mxu0 %v5715
        %6846 = vmatmul.mubr.f32.gmra.mrb[0].mxu0 %v5714
        %v6847 = vpop.f32.mrb[0].mxu0
        %v6848 = vadd.f32 %v6703, %v6847
        %v6849 = vpop.f32.mrb[0].mxu0
        %6850 = vmatprep.mubr.f32.mxu0 %v5731
        %6851 = vmatmul.mubr.f32.gmra.mrb[0].mxu0 %v5730
        %v6852 = vpop.f32.mrb[0].mxu0
        %v6853 = vadd.f32 %v6708, %v6852
        %v6854 = vpop.f32.mrb[0].mxu0
        %6855 = vmatprep.mubr.f32.mxu0 %v5747
        %6856 = vmatmul.mubr.f32.gmra.mrb[0].mxu0 %v5746
        %v6857 = vpop.f32.mrb[0].mxu0
        %v6858 = vadd.f32 %v6713, %v6857
        %v6859 = vpop.f32.mrb[0].mxu0
        %6860 = vmatprep.mubr.f32.mxu0 %v5763
        %6861 = vmatmul.mubr.f32.gmra.mrb[0].mxu0 %v5762
        %v6862 = vpop.f32.mrb[0].mxu0
        %v6863 = vadd.f32 %v6718, %v6862
        %v6864 = vpop.f32.mrb[0].mxu0
        %6865 = vmatprep.mubr.f32.mxu0 %v5779
        %6866 = vmatmul.mubr.f32.gmra.mrb[0].mxu0 %v5778
        %v6867 = vpop.f32.mrb[0].mxu0
        %v6868 = vadd.f32 %v6723, %v6867
        %v6869 = vpop.f32.mrb[0].mxu0
        %6870 = vmatprep.mubr.f32.mxu0 %v5795
        %6871 = vmatmul.mubr.f32.gmra.mrb[0].mxu0 %v5794
        %v6872 = vpop.f32.mrb[0].mxu0
        %v6873 = vadd.f32 %v6728, %v6872
        %v6874 = vpop.f32.mrb[0].mxu0
        %6875 = vmatprep.mubr.f32.mxu0 %v5811
        %6876 = vmatmul.mubr.f32.gmra.mrb[0].mxu0 %v5810
        %v6877 = vpop.f32.mrb[0].mxu0
        %v6878 = vadd.f32 %v6733, %v6877
        %v6879 = vpop.f32.mrb[0].mxu0
        %6880 = vdwg.mxu0
        %6881 = vmatprep.subr.mxu0 %v5829
        %6882 = vmatpush1.xpose.msra.mxu0 %v5828
        %6883 = vmatprep.subr.mxu0 %v5845
        %6884 = vmatpush1.xpose.msra.mxu0 %v5844
        %6885 = vmatprep.subr.mxu0 %v5861
        %6886 = vmatpush1.xpose.msra.mxu0 %v5860
        %6887 = vmatprep.subr.mxu0 0.0
        %6888 = vmatpush1.xpose.msra.mxu0 0.0
        %6889 = vmatprep.subr.mxu0 0.0
        %6890 = vmatpush1.xpose.msra.mxu0 0.0
        %6891 = vmatprep.subr.mxu0 0.0
        %6892 = vmatpush1.xpose.msra.mxu0 0.0
        %6893 = vmatprep.subr.mxu0 0.0
        %6894 = vmatpush1.xpose.msra.mxu0 0.0
        %6895 = vmatprep.subr.mxu0 0.0
        %6896 = vmatpush1.xpose.msra.mxu0 0.0
        %6897 = vmatprep.subr.mxu0 0.0
        %6898 = vmatpush1.xpose.msra.mxu0 0.0
        %6899 = vmatprep.subr.mxu0 0.0
        %6900 = vmatpush1.xpose.msra.mxu0 0.0
        %6901 = vmatprep.subr.mxu0 0.0
        %6902 = vmatpush1.xpose.msra.mxu0 0.0
        %6903 = vmatprep.subr.mxu0 0.0
        %6904 = vmatpush1.xpose.msra.mxu0 0.0
        %6905 = vmatprep.subr.mxu0 0.0
        %6906 = vmatpush1.xpose.msra.mxu0 0.0
        %6907 = vmatprep.subr.mxu0 0.0
        %6908 = vmatpush1.xpose.msra.mxu0 0.0
        %6909 = vmatprep.subr.mxu0 0.0
        %6910 = vmatpush1.xpose.msra.mxu0 0.0
        %6911 = vmatprep.subr.mxu0 0.0
        %6912 = vmatpush1.xpose.msra.mxu0 0.0
        %6913 = vmatprep.subr.mxu0 0.0
        %6914 = vmatpush1.xpose.msra.mxu0 0.0
        %6915 = vmatprep.subr.mxu0 0.0
        %6916 = vmatpush1.xpose.msra.mxu0 0.0
        %6917 = vmatprep.subr.mxu0 0.0
        %6918 = vmatpush1.xpose.msra.mxu0 0.0
        %6919 = vmatprep.subr.mxu0 0.0
        %6920 = vmatpush1.xpose.msra.mxu0 0.0
        %6921 = vmatprep.subr.mxu0 0.0
        %6922 = vmatpush1.xpose.msra.mxu0 0.0
        %6923 = vmatprep.subr.mxu0 0.0
        %6924 = vmatpush1.xpose.msra.mxu0 0.0
        %6925 = vmatprep.subr.mxu0 0.0
        %6926 = vmatpush1.xpose.msra.mxu0 0.0
        %6927 = vmatprep.subr.mxu0 0.0
        %6928 = vmatpush1.xpose.msra.mxu0 0.0
        %6929 = vmatprep.subr.mxu0 0.0
        %6930 = vmatpush1.xpose.msra.mxu0 0.0
        %6931 = vmatprep.subr.mxu0 0.0
        %6932 = vmatpush1.xpose.msra.mxu0 0.0
        %6933 = vmatprep.subr.mxu0 0.0
        %6934 = vmatpush1.xpose.msra.mxu0 0.0
        %6935 = vmatprep.subr.mxu0 0.0
        %6936 = vmatpush1.xpose.msra.mxu0 0.0
        %6937 = vmatprep.subr.mxu0 0.0
        %6938 = vmatpush1.xpose.msra.mxu0 0.0
        %6939 = vmatprep.subr.mxu0 0.0
        %6940 = vmatpush1.xpose.msra.mxu0 0.0
        %6941 = vmatprep.subr.mxu0 0.0
        %6942 = vmatpush1.xpose.msra.mxu0 0.0
        %6943 = vmatprep.subr.mxu0 0.0
        %6944 = vmatpush1.xpose.msra.mxu0 0.0
        %6945 = vmatprep.mubr.f32.mxu0 %v5573
        %6946 = vmatmul.mubr.f32.gmra.mrb[0].mxu0 %v5572
        %v6947 = vpop.f32.mrb[0].mxu0
        %v6948 = vadd.f32 %v6803, %v6947
        %v6949 = vpop.f32.mrb[0].mxu0
        %6950 = vmatprep.mubr.f32.mxu0 %v5589
        %6951 = vmatmul.mubr.f32.gmra.mrb[0].mxu0 %v5588
        %v6952 = vpop.f32.mrb[0].mxu0
        %v6953 = vadd.f32 %v6808, %v6952
        %v6954 = vpop.f32.mrb[0].mxu0
        %6955 = vmatprep.mubr.f32.mxu0 %v5605
        %6956 = vmatmul.mubr.f32.gmra.mrb[0].mxu0 %v5604
        %v6957 = vpop.f32.mrb[0].mxu0
        %v6958 = vadd.f32 %v6813, %v6957
        %v6959 = vpop.f32.mrb[0].mxu0
        %6960 = vmatprep.mubr.f32.mxu0 %v5621
        %6961 = vmatmul.mubr.f32.gmra.mrb[0].mxu0 %v5620
        %v6962 = vpop.f32.mrb[0].mxu0
        %v6963 = vadd.f32 %v6818, %v6962
        %v6964 = vpop.f32.mrb[0].mxu0
        %6965 = vmatprep.mubr.f32.mxu0 %v5637
        %6966 = vmatmul.mubr.f32.gmra.mrb[0].mxu0 %v5636
        %v6967 = vpop.f32.mrb[0].mxu0
        %v6968 = vadd.f32 %v6823, %v6967
        %v6969 = vpop.f32.mrb[0].mxu0
        %6970 = vmatprep.mubr.f32.mxu0 %v5653
        %6971 = vmatmul.mubr.f32.gmra.mrb[0].mxu0 %v5652
        %v6972 = vpop.f32.mrb[0].mxu0
        %v6973 = vadd.f32 %v6828, %v6972
        %v6974 = vpop.f32.mrb[0].mxu0
        %6975 = vmatprep.mubr.f32.mxu0 %v5669
        %6976 = vmatmul.mubr.f32.gmra.mrb[0].mxu0 %v5668
        %v6977 = vpop.f32.mrb[0].mxu0
        %v6978 = vadd.f32 %v6833, %v6977
        %v6979 = vpop.f32.mrb[0].mxu0
        %6980 = vmatprep.mubr.f32.mxu0 %v5685
        %6981 = vmatmul.mubr.f32.gmra.mrb[0].mxu0 %v5684
        %v6982 = vpop.f32.mrb[0].mxu0
        %v6983 = vadd.f32 %v6838, %v6982
        %v6984 = vpop.f32.mrb[0].mxu0
        %6985 = vmatprep.mubr.f32.mxu0 %v5701
        %6986 = vmatmul.mubr.f32.gmra.mrb[0].mxu0 %v5700
        %v6987 = vpop.f32.mrb[0].mxu0
        %v6988 = vadd.f32 %v6843, %v6987
        %v6989 = vpop.f32.mrb[0].mxu0
        %6990 = vmatprep.mubr.f32.mxu0 %v5717
        %6991 = vmatmul.mubr.f32.gmra.mrb[0].mxu0 %v5716
        %v6992 = vpop.f32.mrb[0].mxu0
        %v6993 = vadd.f32 %v6848, %v6992
        %v6994 = vpop.f32.mrb[0].mxu0
        %6995 = vmatprep.mubr.f32.mxu0 %v5733
        %6996 = vmatmul.mubr.f32.gmra.mrb[0].mxu0 %v5732
        %v6997 = vpop.f32.mrb[0].mxu0
        %v6998 = vadd.f32 %v6853, %v6997
        %v6999 = vpop.f32.mrb[0].mxu0
        %7000 = vmatprep.mubr.f32.mxu0 %v5749
        %7001 = vmatmul.mubr.f32.gmra.mrb[0].mxu0 %v5748
        %v7002 = vpop.f32.mrb[0].mxu0
        %v7003 = vadd.f32 %v6858, %v7002
        %v7004 = vpop.f32.mrb[0].mxu0
        %7005 = vmatprep.mubr.f32.mxu0 %v5765
        %7006 = vmatmul.mubr.f32.gmra.mrb[0].mxu0 %v5764
        %v7007 = vpop.f32.mrb[0].mxu0
        %v7008 = vadd.f32 %v6863, %v7007
        %v7009 = vpop.f32.mrb[0].mxu0
        %7010 = vmatprep.mubr.f32.mxu0 %v5781
        %7011 = vmatmul.mubr.f32.gmra.mrb[0].mxu0 %v5780
        %v7012 = vpop.f32.mrb[0].mxu0
        %v7013 = vadd.f32 %v6868, %v7012
        %v7014 = vpop.f32.mrb[0].mxu0
        %7015 = vmatprep.mubr.f32.mxu0 %v5797
        %7016 = vmatmul.mubr.f32.gmra.mrb[0].mxu0 %v5796
        %v7017 = vpop.f32.mrb[0].mxu0
        %v7018 = vadd.f32 %v6873, %v7017
        %v7019 = vpop.f32.mrb[0].mxu0
        %7020 = vmatprep.mubr.f32.mxu0 %v5813
        %7021 = vmatmul.mubr.f32.gmra.mrb[0].mxu0 %v5812
        %v7022 = vpop.f32.mrb[0].mxu0
        %v7023 = vadd.f32 %v6878, %v7022
        %v7024 = vpop.f32.mrb[0].mxu0
        %7025 = vdwg.mxu0
        %v7026 = vadd.f32 %v4026, %v6948
        %v7027 = vadd.f32 %v4027, %v6953
        %v7028 = vadd.f32 %v4028, %v6958
        %v7029 = vadd.f32 %v4029, %v6963
        %v7030 = vadd.f32 %v4030, %v6968
        %v7031 = vadd.f32 %v4031, %v6973
        %v7032 = vadd.f32 %v4032, %v6978
        %v7033 = vadd.f32 %v4033, %v6983
        %v7034 = vadd.f32 %v4034, %v6988
        %v7035 = vadd.f32 %v4035, %v6993
        %v7036 = vadd.f32 %v4036, %v6998
        %v7037 = vadd.f32 %v4037, %v7003
        %v7038 = vadd.f32 %v4038, %v7008
        %v7039 = vadd.f32 %v4039, %v7013
        %v7040 = vadd.f32 %v4040, %v7018
        %v7041 = vadd.f32 %v4041, %v7023
        %v7042 = vsel %vm506, %v7026, 0.0
        %7043 = vadd.xlane.f32.xlu0 %v7042
        %v7044 = vpop.xlane.xlu0 %7043
        %v7045 = vsel %vm506, %v7027, 0.0
        %7046 = vadd.xlane.f32.xlu0 %v7045
        %v7047 = vpop.xlane.xlu0 %7046
        %v7048 = vsel %vm506, %v7028, 0.0
        %7049 = vadd.xlane.f32.xlu0 %v7048
        %v7050 = vpop.xlane.xlu0 %7049
        %v7051 = vsel %vm506, %v7029, 0.0
        %7052 = vadd.xlane.f32.xlu0 %v7051
        %v7053 = vpop.xlane.xlu0 %7052
        %v7054 = vsel %vm506, %v7030, 0.0
        %7055 = vadd.xlane.f32.xlu0 %v7054
        %v7056 = vpop.xlane.xlu0 %7055
        %v7057 = vsel %vm506, %v7031, 0.0
        %7058 = vadd.xlane.f32.xlu0 %v7057
        %v7059 = vpop.xlane.xlu0 %7058
        %v7060 = vsel %vm506, %v7032, 0.0
        %7061 = vadd.xlane.f32.xlu0 %v7060
        %v7062 = vpop.xlane.xlu0 %7061
        %v7063 = vsel %vm506, %v7033, 0.0
        %7064 = vadd.xlane.f32.xlu0 %v7063
        %v7065 = vpop.xlane.xlu0 %7064
        %v7066 = vsel %vm506, %v7034, 0.0
        %7067 = vadd.xlane.f32.xlu0 %v7066
        %v7068 = vpop.xlane.xlu0 %7067
        %v7069 = vsel %vm506, %v7035, 0.0
        %7070 = vadd.xlane.f32.xlu0 %v7069
        %v7071 = vpop.xlane.xlu0 %7070
        %v7072 = vsel %vm506, %v7036, 0.0
        %7073 = vadd.xlane.f32.xlu0 %v7072
        %v7074 = vpop.xlane.xlu0 %7073
        %v7075 = vsel %vm506, %v7037, 0.0
        %7076 = vadd.xlane.f32.xlu0 %v7075
        %v7077 = vpop.xlane.xlu0 %7076
        %v7078 = vsel %vm506, %v7038, 0.0
        %7079 = vadd.xlane.f32.xlu0 %v7078
        %v7080 = vpop.xlane.xlu0 %7079
        %v7081 = vsel %vm506, %v7039, 0.0
        %7082 = vadd.xlane.f32.xlu0 %v7081
        %v7083 = vpop.xlane.xlu0 %7082
        %v7084 = vsel %vm506, %v7040, 0.0
        %7085 = vadd.xlane.f32.xlu0 %v7084
        %v7086 = vpop.xlane.xlu0 %7085
        %v7087 = vsel %vm506, %v7041, 0.0
        %7088 = vadd.xlane.f32.xlu0 %v7087
        %v7089 = vpop.xlane.xlu0 %7088
        %v7090 = vmul.f32 %v7044, %v3841
        %v7091 = vmul.f32 %v7047, %v3841
        %v7092 = vmul.f32 %v7050, %v3841
        %v7093 = vmul.f32 %v7053, %v3841
        %v7094 = vmul.f32 %v7056, %v3841
        %v7095 = vmul.f32 %v7059, %v3841
        %v7096 = vmul.f32 %v7062, %v3841
        %v7097 = vmul.f32 %v7065, %v3841
        %v7098 = vmul.f32 %v7068, %v3841
        %v7099 = vmul.f32 %v7071, %v3841
        %v7100 = vmul.f32 %v7074, %v3841
        %v7101 = vmul.f32 %v7077, %v3841
        %v7102 = vmul.f32 %v7080, %v3841
        %v7103 = vmul.f32 %v7083, %v3841
        %v7104 = vmul.f32 %v7086, %v3841
        %v7105 = vmul.f32 %v7089, %v3841
        %v7106 = vsub.f32 %v7026, %v7090
        %v7107 = vsub.f32 %v7027, %v7091
        %v7108 = vsub.f32 %v7028, %v7092
        %v7109 = vsub.f32 %v7029, %v7093
        %v7110 = vsub.f32 %v7030, %v7094
        %v7111 = vsub.f32 %v7031, %v7095
        %v7112 = vsub.f32 %v7032, %v7096
        %v7113 = vsub.f32 %v7033, %v7097
        %v7114 = vsub.f32 %v7034, %v7098
        %v7115 = vsub.f32 %v7035, %v7099
        %v7116 = vsub.f32 %v7036, %v7100
        %v7117 = vsub.f32 %v7037, %v7101
        %v7118 = vsub.f32 %v7038, %v7102
        %v7119 = vsub.f32 %v7039, %v7103
        %v7120 = vsub.f32 %v7040, %v7104
        %v7121 = vsub.f32 %v7041, %v7105
        %v7122 = vmul.f32 %v7106, %v7106
        %v7123 = vmul.f32 %v7107, %v7107
        %v7124 = vmul.f32 %v7108, %v7108
        %v7125 = vmul.f32 %v7109, %v7109
        %v7126 = vmul.f32 %v7110, %v7110
        %v7127 = vmul.f32 %v7111, %v7111
        %v7128 = vmul.f32 %v7112, %v7112
        %v7129 = vmul.f32 %v7113, %v7113
        %v7130 = vmul.f32 %v7114, %v7114
        %v7131 = vmul.f32 %v7115, %v7115
        %v7132 = vmul.f32 %v7116, %v7116
        %v7133 = vmul.f32 %v7117, %v7117
        %v7134 = vmul.f32 %v7118, %v7118
        %v7135 = vmul.f32 %v7119, %v7119
        %v7136 = vmul.f32 %v7120, %v7120
        %v7137 = vmul.f32 %v7121, %v7121
        %v7138 = vsel %vm506, %v7122, 0.0
        %7139 = vadd.xlane.f32.xlu0 %v7138
        %v7140 = vpop.xlane.xlu0 %7139
        %v7141 = vsel %vm506, %v7123, 0.0
        %7142 = vadd.xlane.f32.xlu0 %v7141
        %v7143 = vpop.xlane.xlu0 %7142
        %v7144 = vsel %vm506, %v7124, 0.0
        %7145 = vadd.xlane.f32.xlu0 %v7144
        %v7146 = vpop.xlane.xlu0 %7145
        %v7147 = vsel %vm506, %v7125, 0.0
        %7148 = vadd.xlane.f32.xlu0 %v7147
        %v7149 = vpop.xlane.xlu0 %7148
        %v7150 = vsel %vm506, %v7126, 0.0
        %7151 = vadd.xlane.f32.xlu0 %v7150
        %v7152 = vpop.xlane.xlu0 %7151
        %v7153 = vsel %vm506, %v7127, 0.0
        %7154 = vadd.xlane.f32.xlu0 %v7153
        %v7155 = vpop.xlane.xlu0 %7154
        %v7156 = vsel %vm506, %v7128, 0.0
        %7157 = vadd.xlane.f32.xlu0 %v7156
        %v7158 = vpop.xlane.xlu0 %7157
        %v7159 = vsel %vm506, %v7129, 0.0
        %7160 = vadd.xlane.f32.xlu0 %v7159
        %v7161 = vpop.xlane.xlu0 %7160
        %v7162 = vsel %vm506, %v7130, 0.0
        %7163 = vadd.xlane.f32.xlu0 %v7162
        %v7164 = vpop.xlane.xlu0 %7163
        %v7165 = vsel %vm506, %v7131, 0.0
        %7166 = vadd.xlane.f32.xlu0 %v7165
        %v7167 = vpop.xlane.xlu0 %7166
        %v7168 = vsel %vm506, %v7132, 0.0
        %7169 = vadd.xlane.f32.xlu0 %v7168
        %v7170 = vpop.xlane.xlu0 %7169
        %v7171 = vsel %vm506, %v7133, 0.0
        %7172 = vadd.xlane.f32.xlu0 %v7171
        %v7173 = vpop.xlane.xlu0 %7172
        %v7174 = vsel %vm506, %v7134, 0.0
        %7175 = vadd.xlane.f32.xlu0 %v7174
        %v7176 = vpop.xlane.xlu0 %7175
        %v7177 = vsel %vm506, %v7135, 0.0
        %7178 = vadd.xlane.f32.xlu0 %v7177
        %v7179 = vpop.xlane.xlu0 %7178
        %v7180 = vsel %vm506, %v7136, 0.0
        %7181 = vadd.xlane.f32.xlu0 %v7180
        %v7182 = vpop.xlane.xlu0 %7181
        %v7183 = vsel %vm506, %v7137, 0.0
        %7184 = vadd.xlane.f32.xlu0 %v7183
        %v7185 = vpop.xlane.xlu0 %7184
        %v7186 = vmul.f32 %v7140, %v3841
        %v7187 = vmul.f32 %v7143, %v3841
        %v7188 = vmul.f32 %v7146, %v3841
        %v7189 = vmul.f32 %v7149, %v3841
        %v7190 = vmul.f32 %v7152, %v3841
        %v7191 = vmul.f32 %v7155, %v3841
        %v7192 = vmul.f32 %v7158, %v3841
        %v7193 = vmul.f32 %v7161, %v3841
        %v7194 = vmul.f32 %v7164, %v3841
        %v7195 = vmul.f32 %v7167, %v3841
        %v7196 = vmul.f32 %v7170, %v3841
        %v7197 = vmul.f32 %v7173, %v3841
        %v7198 = vmul.f32 %v7176, %v3841
        %v7199 = vmul.f32 %v7179, %v3841
        %v7200 = vmul.f32 %v7182, %v3841
        %v7201 = vmul.f32 %v7185, %v3841
        %v7202 = vadd.f32 %v7186, 1e-05
        %v7203 = vadd.f32 %v7187, 1e-05
        %v7204 = vadd.f32 %v7188, 1e-05
        %v7205 = vadd.f32 %v7189, 1e-05
        %v7206 = vadd.f32 %v7190, 1e-05
        %v7207 = vadd.f32 %v7191, 1e-05
        %v7208 = vadd.f32 %v7192, 1e-05
        %v7209 = vadd.f32 %v7193, 1e-05
        %v7210 = vadd.f32 %v7194, 1e-05
        %v7211 = vadd.f32 %v7195, 1e-05
        %v7212 = vadd.f32 %v7196, 1e-05
        %v7213 = vadd.f32 %v7197, 1e-05
        %v7214 = vadd.f32 %v7198, 1e-05
        %v7215 = vadd.f32 %v7199, 1e-05
        %v7216 = vadd.f32 %v7200, 1e-05
        %v7217 = vadd.f32 %v7201, 1e-05
        %v7218 = vrsqrt.pop %v7202
        %v7219 = vrsqrt.pop %v7203
        %v7220 = vrsqrt.pop %v7204
        %v7221 = vrsqrt.pop %v7205
        %v7222 = vrsqrt.pop %v7206
        %v7223 = vrsqrt.pop %v7207
        %v7224 = vrsqrt.pop %v7208
        %v7225 = vrsqrt.pop %v7209
        %v7226 = vrsqrt.pop %v7210
        %v7227 = vrsqrt.pop %v7211
        %v7228 = vrsqrt.pop %v7212
        %v7229 = vrsqrt.pop %v7213
        %v7230 = vrsqrt.pop %v7214
        %v7231 = vrsqrt.pop %v7215
        %v7232 = vrsqrt.pop %v7216
        %v7233 = vrsqrt.pop %v7217
        %v7234 = vmul.f32 %v7106, %v7218
        %v7235 = vmul.f32 %v7107, %v7219
        %v7236 = vmul.f32 %v7108, %v7220
        %v7237 = vmul.f32 %v7109, %v7221
        %v7238 = vmul.f32 %v7110, %v7222
        %v7239 = vmul.f32 %v7111, %v7223
        %v7240 = vmul.f32 %v7112, %v7224
        %v7241 = vmul.f32 %v7113, %v7225
        %v7242 = vmul.f32 %v7114, %v7226
        %v7243 = vmul.f32 %v7115, %v7227
        %v7244 = vmul.f32 %v7116, %v7228
        %v7245 = vmul.f32 %v7117, %v7229
        %v7246 = vmul.f32 %v7118, %v7230
        %v7247 = vmul.f32 %v7119, %v7231
        %v7248 = vmul.f32 %v7120, %v7232
        %v7249 = vmul.f32 %v7121, %v7233
        %v7250 = vlaneseq
        %v7251 = vshrl.u32 %v7250, 7
        %v7252 = vsub.s32 0, %v7251
        %v7253 = vrot.slane %v283, %v7252
        %v7254 = vmul.f32 %v7234, %v7253
        %v7255 = vmul.f32 %v7235, %v7253
        %v7256 = vmul.f32 %v7236, %v7253
        %v7257 = vmul.f32 %v7237, %v7253
        %v7258 = vmul.f32 %v7238, %v7253
        %v7259 = vmul.f32 %v7239, %v7253
        %v7260 = vmul.f32 %v7240, %v7253
        %v7261 = vmul.f32 %v7241, %v7253
        %v7262 = vmul.f32 %v7242, %v7253
        %v7263 = vmul.f32 %v7243, %v7253
        %v7264 = vmul.f32 %v7244, %v7253
        %v7265 = vmul.f32 %v7245, %v7253
        %v7266 = vmul.f32 %v7246, %v7253
        %v7267 = vmul.f32 %v7247, %v7253
        %v7268 = vmul.f32 %v7248, %v7253
        %v7269 = vmul.f32 %v7249, %v7253
        %v7270 = vlaneseq
        %v7271 = vshrl.u32 %v7270, 7
        %v7272 = vsub.s32 1, %v7271
        %v7273 = vrot.slane %v283, %v7272
        %v7274 = vadd.f32 %v7254, %v7273
        %v7275 = vadd.f32 %v7255, %v7273
        %v7276 = vadd.f32 %v7256, %v7273
        %v7277 = vadd.f32 %v7257, %v7273
        %v7278 = vadd.f32 %v7258, %v7273
        %v7279 = vadd.f32 %v7259, %v7273
        %v7280 = vadd.f32 %v7260, %v7273
        %v7281 = vadd.f32 %v7261, %v7273
        %v7282 = vadd.f32 %v7262, %v7273
        %v7283 = vadd.f32 %v7263, %v7273
        %v7284 = vadd.f32 %v7264, %v7273
        %v7285 = vadd.f32 %v7265, %v7273
        %v7286 = vadd.f32 %v7266, %v7273
        %v7287 = vadd.f32 %v7267, %v7273
        %v7288 = vadd.f32 %v7268, %v7273
        %v7289 = vadd.f32 %v7269, %v7273
        %v7290 = vmul.f32 %v7274, 0.5
        %v7291 = vmul.f32 %v7275, 0.5
        %v7292 = vmul.f32 %v7276, 0.5
        %v7293 = vmul.f32 %v7277, 0.5
        %v7294 = vmul.f32 %v7278, 0.5
        %v7295 = vmul.f32 %v7279, 0.5
        %v7296 = vmul.f32 %v7280, 0.5
        %v7297 = vmul.f32 %v7281, 0.5
        %v7298 = vmul.f32 %v7282, 0.5
        %v7299 = vmul.f32 %v7283, 0.5
        %v7300 = vmul.f32 %v7284, 0.5
        %v7301 = vmul.f32 %v7285, 0.5
        %v7302 = vmul.f32 %v7286, 0.5
        %v7303 = vmul.f32 %v7287, 0.5
        %v7304 = vmul.f32 %v7288, 0.5
        %v7305 = vmul.f32 %v7289, 0.5
        %v7306 = vmul.f32 %v7274, 0.70710677
        %v7307 = vmul.f32 %v7275, 0.70710677
        %v7308 = vmul.f32 %v7276, 0.70710677
        %v7309 = vmul.f32 %v7277, 0.70710677
        %v7310 = vmul.f32 %v7278, 0.70710677
        %v7311 = vmul.f32 %v7279, 0.70710677
        %v7312 = vmul.f32 %v7280, 0.70710677
        %v7313 = vmul.f32 %v7281, 0.70710677
        %v7314 = vmul.f32 %v7282, 0.70710677
        %v7315 = vmul.f32 %v7283, 0.70710677
        %v7316 = vmul.f32 %v7284, 0.70710677
        %v7317 = vmul.f32 %v7285, 0.70710677
        %v7318 = vmul.f32 %v7286, 0.70710677
        %v7319 = vmul.f32 %v7287, 0.70710677
        %v7320 = vmul.f32 %v7288, 0.70710677
        %v7321 = vmul.f32 %v7289, 0.70710677
        %v7322 = verf.f32.pop %v7306
        %v7323 = verf.f32.pop %v7307
        %v7324 = verf.f32.pop %v7308
        %v7325 = verf.f32.pop %v7309
        %v7326 = verf.f32.pop %v7310
        %v7327 = verf.f32.pop %v7311
        %v7328 = verf.f32.pop %v7312
        %v7329 = verf.f32.pop %v7313
        %v7330 = verf.f32.pop %v7314
        %v7331 = verf.f32.pop %v7315
        %v7332 = verf.f32.pop %v7316
        %v7333 = verf.f32.pop %v7317
        %v7334 = verf.f32.pop %v7318
        %v7335 = verf.f32.pop %v7319
        %v7336 = verf.f32.pop %v7320
        %v7337 = verf.f32.pop %v7321
        %v7338 = vadd.f32 %v7322, 1.0
        %v7339 = vadd.f32 %v7323, 1.0
        %v7340 = vadd.f32 %v7324, 1.0
        %v7341 = vadd.f32 %v7325, 1.0
        %v7342 = vadd.f32 %v7326, 1.0
        %v7343 = vadd.f32 %v7327, 1.0
        %v7344 = vadd.f32 %v7328, 1.0
        %v7345 = vadd.f32 %v7329, 1.0
        %v7346 = vadd.f32 %v7330, 1.0
        %v7347 = vadd.f32 %v7331, 1.0
        %v7348 = vadd.f32 %v7332, 1.0
        %v7349 = vadd.f32 %v7333, 1.0
        %v7350 = vadd.f32 %v7334, 1.0
        %v7351 = vadd.f32 %v7335, 1.0
        %v7352 = vadd.f32 %v7336, 1.0
        %v7353 = vadd.f32 %v7337, 1.0
        %v7354 = vmul.f32 %v7290, %v7338
        %v7355 = vmul.f32 %v7291, %v7339
        %v7356 = vmul.f32 %v7292, %v7340
        %v7357 = vmul.f32 %v7293, %v7341
        %v7358 = vmul.f32 %v7294, %v7342
        %v7359 = vmul.f32 %v7295, %v7343
        %v7360 = vmul.f32 %v7296, %v7344
        %v7361 = vmul.f32 %v7297, %v7345
        %v7362 = vmul.f32 %v7298, %v7346
        %v7363 = vmul.f32 %v7299, %v7347
        %v7364 = vmul.f32 %v7300, %v7348
        %v7365 = vmul.f32 %v7301, %v7349
        %v7366 = vmul.f32 %v7302, %v7350
        %v7367 = vmul.f32 %v7303, %v7351
        %v7368 = vmul.f32 %v7304, %v7352
        %v7369 = vmul.f32 %v7305, %v7353
        %7371 = vset.pattern.permute.xlu0 0
        %7372 = vperm.xlu0 %7371, %v283
        %v7373 = vpop.permute.xlu0 %7372
        %v7374 = vrot.slane %v283, 2
        %v7375 = vrot.slane %v7373, 3
        %v7377 = vsel %vm506, %v7374, 0
        %v7380 = vsel %vm506, %v7354, 0
        %v7383 = vsel %vm506, %v7355, 0
        %v7386 = vsel %vm506, %v7356, 0
        %v7389 = vsel %vm506, %v7357, 0
        %v7392 = vsel %vm506, %v7358, 0
        %v7395 = vsel %vm506, %v7359, 0
        %v7398 = vsel %vm506, %v7360, 0
        %v7401 = vsel %vm506, %v7361, 0
        %v7404 = vsel %vm506, %v7362, 0
        %v7407 = vsel %vm506, %v7363, 0
        %v7410 = vsel %vm506, %v7364, 0
        %v7413 = vsel %vm506, %v7365, 0
        %v7416 = vsel %vm506, %v7366, 0
        %v7419 = vsel %vm506, %v7367, 0
        %v7422 = vsel %vm506, %v7368, 0
        %v7425 = vsel %vm506, %v7369, 0
        %7427 = vmatprep.subr.mxu0 0.0
        %7428 = vmatpush1.xpose.msra.mxu0 %v7380
        %7429 = vmatprep.subr.mxu0 0.0
        %7430 = vmatpush1.xpose.msra.mxu0 %v7383
        %7431 = vmatprep.subr.mxu0 0.0
        %7432 = vmatpush1.xpose.msra.mxu0 %v7386
        %7433 = vmatprep.subr.mxu0 0.0
        %7434 = vmatpush1.xpose.msra.mxu0 %v7389
        %7435 = vmatprep.subr.mxu0 0.0
        %7436 = vmatpush1.xpose.msra.mxu0 %v7392
        %7437 = vmatprep.subr.mxu0 0.0
        %7438 = vmatpush1.xpose.msra.mxu0 %v7395
        %7439 = vmatprep.subr.mxu0 0.0
        %7440 = vmatpush1.xpose.msra.mxu0 %v7398
        %7441 = vmatprep.subr.mxu0 0.0
        %7442 = vmatpush1.xpose.msra.mxu0 %v7401
        %7443 = vmatprep.subr.mxu0 0.0
        %7444 = vmatpush1.xpose.msra.mxu0 %v7404
        %7445 = vmatprep.subr.mxu0 0.0
        %7446 = vmatpush1.xpose.msra.mxu0 %v7407
        %7447 = vmatprep.subr.mxu0 0.0
        %7448 = vmatpush1.xpose.msra.mxu0 %v7410
        %7449 = vmatprep.subr.mxu0 0.0
        %7450 = vmatpush1.xpose.msra.mxu0 %v7413
        %7451 = vmatprep.subr.mxu0 0.0
        %7452 = vmatpush1.xpose.msra.mxu0 %v7416
        %7453 = vmatprep.subr.mxu0 0.0
        %7454 = vmatpush1.xpose.msra.mxu0 %v7419
        %7455 = vmatprep.subr.mxu0 0.0
        %7456 = vmatpush1.xpose.msra.mxu0 %v7422
        %7457 = vmatprep.subr.mxu0 0.0
        %7458 = vmatpush1.xpose.msra.mxu0 %v7425
        %7459 = vmatprep.subr.mxu0 0.0
        %7460 = vmatpush1.xpose.msra.mxu0 0.0
        %7461 = vmatprep.subr.mxu0 0.0
        %7462 = vmatpush1.xpose.msra.mxu0 0.0
        %7463 = vmatprep.subr.mxu0 0.0
        %7464 = vmatpush1.xpose.msra.mxu0 0.0
        %7465 = vmatprep.subr.mxu0 0.0
        %7466 = vmatpush1.xpose.msra.mxu0 0.0
        %7467 = vmatprep.subr.mxu0 0.0
        %7468 = vmatpush1.xpose.msra.mxu0 0.0
        %7469 = vmatprep.subr.mxu0 0.0
        %7470 = vmatpush1.xpose.msra.mxu0 0.0
        %7471 = vmatprep.subr.mxu0 0.0
        %7472 = vmatpush1.xpose.msra.mxu0 0.0
        %7473 = vmatprep.subr.mxu0 0.0
        %7474 = vmatpush1.xpose.msra.mxu0 0.0
        %7475 = vmatprep.subr.mxu0 0.0
        %7476 = vmatpush1.xpose.msra.mxu0 0.0
        %7477 = vmatprep.subr.mxu0 0.0
        %7478 = vmatpush1.xpose.msra.mxu0 0.0
        %7479 = vmatprep.subr.mxu0 0.0
        %7480 = vmatpush1.xpose.msra.mxu0 0.0
        %7481 = vmatprep.subr.mxu0 0.0
        %7482 = vmatpush1.xpose.msra.mxu0 0.0
        %7483 = vmatprep.subr.mxu0 0.0
        %7484 = vmatpush1.xpose.msra.mxu0 0.0
        %7485 = vmatprep.subr.mxu0 0.0
        %7486 = vmatpush1.xpose.msra.mxu0 0.0
        %7487 = vmatprep.subr.mxu0 0.0
        %7488 = vmatpush1.xpose.msra.mxu0 0.0
        %7489 = vmatprep.subr.mxu0 0.0
        %7490 = vmatpush1.xpose.msra.mxu0 0.0
        %7491 = vmatprep.mubr.f32.mxu0 0.0
        %7492 = vmatmul.mubr.f32.gmra.mrb[0].mxu0 %v7377
        %v7493 = vpop.f32.mrb[0].mxu0
        %v7494 = vadd.f32 %v7375, %v7493
        %v7495 = vpop.f32.mrb[0].mxu0
        %7496 = vdwg.mxu0
        %v7497 = vtanh.pop %v7494
        %v7498 = vxor.u32 %v7497, 2147483648
        %v7499 = vmul.f32 %v7498, 1.442695
        %v7500 = vpow.pop %v7499
        %v7501 = vadd.f32 %v7500, 1.0
        %v7502 = vrcp.pop %v7501
        %v7503 = vmul.f32 1.0, %v7502
        %7504 = vst [vmem:[%s259] sm:$0x1] %v7503
        %s7505 = sand.u32 %s160, 1
        %s7506 = scalar_lea.sflag [#allocation4], %s7505
        %s7507 = sand.u32 %s160, 1
        %s7508 = scalar_lea.vmem [#allocation5], %s7507
        // Predicated region
        $region49: #{tpu_custom_call.1} parent=43 // pred_check
          %p7509 = pneg %p170
        $region50: #{tpu_custom_call.1} parent=43 // pred_check_branch
          %7511 = sbr.rel (%p7509) target = $region52
        $region51: #{tpu_custom_call.1} parent=43 // pred_region
          %s7513 = ssub.s32 16, 16
          %7514 = vsyncadd %s7506, %s7513
          %s7515 = smul.addr %s21, 16
          %s7516 = scalar_lea.hbm %s6, %s7515
          %s7518 = sshll.u32 %s7508, 4
          %s7519 = int_to_ptr.vmem [resolvable:$true] %s7518
          %7521 = dma.vmem_to_hbm [thread:$0]  %s7519, 16, %s7516, %s7506
        $region52: #{tpu_custom_call.1} parent=43 // pred_fallthru
          _
      $region44: #{tpu_custom_call.1} parent=5 // pred_fallthru
        _
      %p7522 = scmp.le.s32.totalorder 2, %s16
      // Predicated region
      $region53: #{tpu_custom_call.1} parent=5 // pred_check
        %p7523 = pneg %p7522
      $region54: #{tpu_custom_call.1} parent=5 // pred_check_branch
        %7525 = sbr.rel (%p7523) target = $region56
      $region55: #{tpu_custom_call.1} parent=5 // pred_region
        %s7526 = ssub.s32 %s16, 2
        // Predicated region
        $region57: #{tpu_custom_call.1} parent=55 // pred_check
          %p7527 = pneg %p176
        $region58: #{tpu_custom_call.1} parent=55 // pred_check_branch
          %7529 = sbr.rel (%p7527) target = $region60
        $region59: #{tpu_custom_call.1} parent=55 // pred_region
          %s7530 = sand.u32 %s161, 1
          %s7531 = scalar_lea.sflag [#allocation4], %s7530
          %s7532 = sand.u32 %s161, 1
          %s7533 = scalar_lea.vmem [#allocation5], %s7532
          %7534 = dma.done %s7531, 16
        $region60: #{tpu_custom_call.1} parent=55 // pred_fallthru
          _
      $region56: #{tpu_custom_call.1} parent=5 // pred_fallthru
        _
    $region6: #{tpu_custom_call.1} parent=1 // loop_footer
      %s20 = sadd.s32 1, %s16
    $region7: #{tpu_custom_call.1} parent=1 // loop_footer_branch
      %15 = sbr.rel target = $region3
    $region8: #{tpu_custom_call.1} parent=1 // loop_exit
      _
    %7535 = vsyncpa [#allocation3], 1
    %s7536 = scalar_lea.sflag [#allocation3], 1
    %7537 = vsyncpa %s7536, 1
    %7538 = vsyncpa [#allocation4], 1
    %s7539 = scalar_lea.sflag [#allocation4], 1
    %7540 = vsyncpa %s7539, 1

</llo_original>
